<compile_context>
chip_gen: v6e
topology: v6e:2x2x1
jax: 0.10.0
libtpu: 0.0.40
codegen_flags: <defaults>
</compile_context>

<pallas_src>
import functools

import jax
import jax.numpy as jnp
import numpy as np
from jax.experimental import pallas as pl
from jax.experimental.pallas import tpu as pltpu


# ----------------------------- in-kernel helpers ----------------------------

def _zero_halo(ref, H, W, stride):
    """Zero only the halo cells of the padded scratch that the 3x3 taps read.

    Interior (rows 1..H, cols 8..W+7) is fully overwritten every iteration, so
    a full-scratch memset is unnecessary.  For stride-2 the bottom row / right
    column are never read and are skipped.  Runs every grid step (VMEM scratch
    is per-core under megacore sharding, so no program_id gating).
    """
    C = ref.shape[-1]
    row0 = jnp.zeros((1, W + 2, C), jnp.float32)
    col0 = jnp.zeros((H, 1, C), jnp.float32)
    ref[pl.ds(0, 1), pl.ds(7, W + 2), :] = row0           # top pad row
    ref[pl.ds(1, H), pl.ds(7, 1), :] = col0               # left pad col
    if stride == 1:
        ref[pl.ds(H + 1, 1), pl.ds(7, W + 2), :] = row0   # bottom pad row
        ref[pl.ds(1, H), pl.ds(W + 8, 1), :] = col0       # right pad col


def _depthwise3x3(hp_ref, h1_3d, w2v, b2v, H, W, stride):
    """Depthwise 3x3 conv (+BN2 bias, +ReLU) via padded VMEM scratch taps."""
    Ho, Wo = H // stride, W // stride
    C = h1_3d.shape[-1]
    lane = slice(None) if C == hp_ref.shape[-1] else pl.ds(0, C)
    hp_ref[pl.ds(1, H), pl.ds(8, W), lane] = h1_3d        # 8-aligned interior
    _zero_halo(hp_ref, H, W, stride)
    acc = jnp.zeros((Ho, Wo, C), jnp.float32)
    # TODO(synk): deinterleave even/odd W columns once at store time so the
    # stride-2 taps become contiguous 8-aligned sublane loads (review item 3).
    for di in range(3):
        for dj in range(3):
            if stride == 1:
                tap = hp_ref[pl.ds(di, Ho), pl.ds(7 + dj, Wo), lane]
            else:
                tap = hp_ref[pl.ds(di, Ho, 2), pl.ds(7 + dj, Wo, 2), lane]
            acc = acc + tap * w2v[di * 3 + dj]
    return jnp.maximum(acc + b2v, 0.0)                    # (Ho, Wo, C)


def _avgpool3x3_s2(xp_ref, x_3d, H, W, Cin):
    """relu(AvgPool2d(3, stride=2, padding=1)(x)) via the same padded trick."""
    Ho, Wo = H // 2, W // 2
    xp_ref[pl.ds(1, H), pl.ds(8, W), pl.ds(0, Cin)] = x_3d
    _zero_halo(xp_ref, H, W, 2)
    acc = jnp.zeros((Ho, Wo, xp_ref.shape[-1]), jnp.float32)
    for di in range(3):
        for dj in range(3):
            acc = acc + xp_ref[pl.ds(di, Ho, 2), pl.ds(7 + dj, Wo, 2), :]
    # count_include_pad semantics: always divide by 9; drop unused lanes once.
    return jnp.maximum(acc * (1.0 / 9.0), 0.0)[:, :, :Cin]


def _to_rows(h2, Ho, Wo, C, tmp_ref):
    """(Ho, Wo, C) -> (Ho*Wo, C) for the conv3 matmul.

    For Wo % 8 == 0 this is a layout-preserving reshape; otherwise regroup
    through plane 0 of the (already consumed) depthwise scratch so we still do
    ONE MXU matmul instead of Ho tiny underfilled ones.
    """
    if Wo % 8 == 0:
        return h2.reshape(Ho * Wo, C)
    for i in range(Ho):
        tmp_ref[0, pl.ds(i * Wo, Wo), pl.ds(0, C)] = h2[i]
    return tmp_ref[0, pl.ds(0, Ho * Wo), pl.ds(0, C)]


def _global_mean(chunk):
    """Global spatial mean -> (1, C)."""
    if chunk.ndim == 3:                                   # (Ho, Wo, C)
        s = chunk[0]
        for i in range(1, chunk.shape[0]):
            s = s + chunk[i]
        n = chunk.shape[0] * chunk.shape[1]
        return jnp.sum(s, axis=0, keepdims=True) * (1.0 / n)
    n = chunk.shape[0]                                    # (Ho*Wo, C)
    return jnp.sum(chunk, axis=0, keepdims=True) * (1.0 / n)


# ------------------------------ the fused kernel -----------------------------

def shufflenet_kernel(*refs, H0, W0, block_cfgs, n_act, n_lin):
    """Whole ShuffleNet forward for one batch element, fully in VMEM."""
    nblk = len(block_cfgs)
    it = iter(refs)
    x_ref, sw_ref, sb_ref = next(it), next(it), next(it)
    blk_refs = [tuple(next(it) for _ in range(6)) for _ in range(nblk)]
    lin_w_refs = [next(it) for _ in range(n_lin)]
    lb_ref = next(it)
    o_ref = next(it)
    hp_ref, xp_ref = next(it), next(it)
    act_refs = [next(it) for _ in range(n_act)]

    # ---- stem: 1x1 conv 3->24 + BN + ReLU (one small MXU matmul) ----
    xin = x_ref[0]                                        # (H0, W0, 3)
    a = jnp.maximum(
        jnp.dot(xin.reshape(H0 * W0, xin.shape[-1]).astype(jnp.bfloat16),
                sw_ref[...], preferred_element_type=jnp.float32)
        + sb_ref[...], 0.0)                               # (H0*W0, 24)
    H, W, C = H0, W0, sw_ref.shape[-1]
    a3d = a.reshape(H, W, C)

    act_i = 0
    head_chunks = None
    for k, cfg in enumerate(block_cfgs):
        w1_ref, b1_ref, w2_ref, b2_ref, w3_ref, b3_ref = blk_refs[k]
        stride, bout, cin, mid_p = (cfg['stride'], cfg['bout'],
                                    cfg['cin'], cfg['mid_p'])
        Ho, Wo = H // stride, W // stride
        is_last = (k == nblk - 1)

        # grouped 1x1 conv + BN1 + ReLU (+ channel shuffle folded into w1)
        h1 = jnp.maximum(
            jnp.dot(a.astype(jnp.bfloat16), w1_ref[...],
                    preferred_element_type=jnp.float32) + b1_ref[...], 0.0)

        # shortcut for stride-2 blocks: relu(AvgPool2d(3, 2, 1)(x))
        short = None
        if stride == 2:
            short = _avgpool3x3_s2(xp_ref, a3d, H, W, cin)    # (Ho, Wo, cin)

        # depthwise 3x3 + BN2 + ReLU
        h2 = _depthwise3x3(hp_ref, h1.reshape(H, W, mid_p),
                           w2_ref[...], b2_ref[...], H, W, stride)

        # grouped 1x1 conv + BN3 (block-diagonal => one dense MXU matmul)
        h2_2d = _to_rows(h2, Ho, Wo, mid_p, hp_ref)
        h3 = jnp.dot(h2_2d.astype(jnp.bfloat16), w3_ref[...],
                     preferred_element_type=jnp.float32) + b3_ref[...]

        if stride == 1:
            a = jnp.maximum(h3 + a, 0.0)                      # residual + ReLU
            H, W, C = Ho, Wo, bout
            a3d = a.reshape(H, W, C)
            if is_last:
                head_chunks = [a]
        else:
            main = jnp.maximum(h3, 0.0)                       # (Ho*Wo, bout)
            if is_last:
                # head consumes main/short separately (lin weight is split)
                head_chunks = [main, short]
            else:
                # channel merge via two slice stores (no lane concat)
                act = act_refs[act_i]
                act_i += 1
                act[:, :, pl.ds(0, bout)] = main.reshape(Ho, Wo, bout)
                act[:, :, pl.ds(bout, cin)] = short
                a3d = act[...]
                H, W, C = Ho, Wo, bout + cin
                a = a3d.reshape(H * W, C)

    # ---- head: global average pool + Linear ----
    logits = lb_ref[...]
    for chunk, lw_ref in zip(head_chunks, lin_w_refs):
        logits = logits + jnp.dot(_global_mean(chunk), lw_ref[...],
                                  preferred_element_type=jnp.float32)
    o_ref[...] = logits.reshape(1, 1, logits.shape[-1])


# ------------------------------- kernel wrapper ------------------------------

def shufflenet_forward(params, x_nchw, *, block_cfgs):
    """NCHW input like PyTorch; the whole network is ONE pallas_call."""
    x = jnp.transpose(x_nchw, (0, 2, 3, 1)).astype(jnp.float32)   # -> NHWC
    N, H0, W0, Cin0 = x.shape
    nblk = len(block_cfgs)
    lin_ws = params['lin_ws']
    num_classes = params['lin_b'].shape[-1]

    inputs = [x, params['stem_w'], params['stem_b']]
    for arrs in params['blocks']:
        inputs += [arrs['w1'], arrs['b1'], arrs['w2'], arrs['b2'],
                   arrs['w3'], arrs['b3']]
    inputs += list(lin_ws) + [params['lin_b']]

    def _rep_spec(a):                      # full array, same block every step
        nd = a.ndim
        return pl.BlockSpec(a.shape, lambda n, _nd=nd: (0,) * _nd)

    in_specs = [pl.BlockSpec((1, H0, W0, Cin0), lambda n: (n, 0, 0, 0))]
    in_specs += [_rep_spec(a) for a in inputs[1:]]

    # Shared padded planes for the depthwise / avg-pool taps + one small
    # activation buffer per stride-2 block that feeds another block.
    dw_lanes = max(c['mid_p'] for c in block_cfgs)
    sc_lanes = max([-(-c['cin'] // 128) * 128
                    for c in block_cfgs if c['stride'] == 2] or [128])
    act_shapes = []
    H, W = H0, W0
    for k, c in enumerate(block_cfgs):
        Ho, Wo = H // c['stride'], W // c['stride']
        if Wo % 8 != 0:
            assert Ho * Wo <= W0 + 16, "regroup scratch too small"
        if c['stride'] == 2 and k != nblk - 1:
            act_shapes.append((Ho, Wo, c['bout'] + c['cin']))
        H, W = Ho, Wo
    scratch = [pltpu.VMEM((H0 + 2, W0 + 16, dw_lanes), jnp.float32),   # dw pad
               pltpu.VMEM((H0 + 2, W0 + 16, sc_lanes), jnp.float32)]   # pool pad
    scratch += [pltpu.VMEM(s, jnp.float32) for s in act_shapes]

    kern = functools.partial(shufflenet_kernel, H0=H0, W0=W0,
                             block_cfgs=tuple(block_cfgs),
                             n_act=len(act_shapes), n_lin=len(lin_ws))

    out = pl.pallas_call(
        kern,
        out_shape=jax.ShapeDtypeStruct((N, 1, num_classes), jnp.float32),
        grid_spec=pltpu.PrefetchScalarGridSpec(
            num_scalar_prefetch=0,
            grid=(N,),
            in_specs=in_specs,
            out_specs=pl.BlockSpec((1, 1, num_classes), lambda n: (n, 0, 0)),
            scratch_shapes=scratch),
        compiler_params=pltpu.CompilerParams(
            dimension_semantics=("parallel",)),
    )(*inputs)
    return out.reshape(N, num_classes)


# --------------------------------- parameters --------------------------------

def _bn(key, C, eps=1e-5):
    k1, k2, k3, k4 = jax.random.split(key, 4)
    gamma = 1.0 + 0.1 * jax.random.normal(k1, (C,), jnp.float32)
    beta = 0.1 * jax.random.normal(k2, (C,), jnp.float32)
    mean = 0.1 * jax.random.normal(k3, (C,), jnp.float32)
    var = 1.0 + 0.1 * jax.random.uniform(k4, (C,), jnp.float32)
    scale = gamma / jnp.sqrt(var + eps)
    bias = beta - mean * scale
    return scale, bias


def _block_diag(w_g):
    """(G, cin_g, cout_g) grouped weight -> dense block-diagonal (Cin, Cout)."""
    G, cin_g, cout_g = w_g.shape
    dense = jnp.zeros((G * cin_g, G * cout_g), jnp.float32)
    for gi in range(G):
        dense = dense.at[gi * cin_g:(gi + 1) * cin_g,
                         gi * cout_g:(gi + 1) * cout_g].set(w_g[gi])
    return dense


def _shuffle_perm(C, g):
    # new[c'] = old[perm[c']]  for  x.view(N,g,C//g,H,W).permute(0,2,1,3,4)
    return np.array([(c % g) * (C // g) + (c // g) for c in range(C)], np.int32)


def bake_block(key, in_planes, bout, stride, groups, wo):
    """Pre-bake one bottleneck: BN folded into weights, shuffle folded into
    conv1 columns, grouped convs as dense block-diagonal matrices, internal
    width zero-padded to 128 lanes, depthwise weights pre-broadcast over Wo."""
    g1 = 1 if in_planes == 24 else groups
    mid = bout // 4
    mid_p = -(-mid // 128) * 128
    k = jax.random.split(key, 6)

    # conv1 (grouped 1x1) + BN1, shuffle folded into the output columns.
    cin_g, cout_g = in_planes // g1, mid // g1
    w1g = (1.0 / np.sqrt(cin_g)) * jax.random.normal(
        k[0], (g1, cin_g, cout_g), jnp.float32)
    s1, b1 = _bn(k[1], mid)
    perm = _shuffle_perm(mid, g1)
    W1 = (_block_diag(w1g) * s1[None, :])[:, perm]
    W1 = jnp.pad(W1, ((0, 0), (0, mid_p - mid)))
    b1 = jnp.pad(b1[perm], (0, mid_p - mid)).reshape(1, mid_p)

    # conv2 (depthwise 3x3) + BN2, pre-broadcast across the block's Wo rows.
    w2 = (1.0 / 3.0) * jax.random.normal(k[2], (mid, 3, 3), jnp.float32)
    s2, b2 = _bn(k[3], mid)
    W2 = jnp.transpose(w2 * s2[:, None, None], (1, 2, 0)).reshape(9, mid)
    W2 = jnp.pad(W2, ((0, 0), (0, mid_p - mid)))
    W2 = jnp.tile(W2.reshape(9, 1, mid_p), (1, wo, 1))
    b2 = jnp.pad(b2, (0, mid_p - mid)).reshape(1, mid_p)

    # conv3 (grouped 1x1, groups = cfg groups) + BN3.
    cin_g3, cout_g3 = mid // groups, bout // groups
    w3g = (1.0 / np.sqrt(cin_g3)) * jax.random.normal(
        k[4], (groups, cin_g3, cout_g3), jnp.float32)
    s3, b3 = _bn(k[5], bout)
    W3 = jnp.pad(_block_diag(w3g) * s3[None, :], ((0, mid_p - mid), (0, 0)))

    arrs = dict(w1=W1.astype(jnp.bfloat16), b1=b1,
                w2=W2, b2=b2,
                w3=W3.astype(jnp.bfloat16), b3=b3.reshape(1, bout))
    cfg = dict(stride=stride, bout=bout, cin=in_planes, mid_p=mid_p)
    return arrs, cfg


def init_params(key, cfg, spatial=32, num_classes=10):
    out_planes = cfg['out_planes']
    num_blocks = cfg['num_blocks']
    groups = cfg['groups']
    keys = jax.random.split(key, 64)
    ki = iter(range(64))

    # stem: 1x1 conv 3->24 + BN folded.
    w0 = (1.0 / np.sqrt(3.0)) * jax.random.normal(keys[next(ki)], (3, 24),
                                                  jnp.float32)
    s0, b0 = _bn(keys[next(ki)], 24)
    params = {'stem_w': (w0 * s0[None, :]).astype(jnp.bfloat16),
              'stem_b': b0.reshape(1, 24)}

    blocks, block_cfgs = [], []
    in_planes, H = 24, spatial
    for op, nb in zip(out_planes, num_blocks):
        for i in range(nb):
            stride = 2 if i == 0 else 1
            cat_planes = in_planes if i == 0 else 0
            Ho = H // stride
            arrs, bcfg = bake_block(keys[next(ki)], in_planes, op - cat_planes,
                                    stride, groups, Ho)
            blocks.append(arrs)
            block_cfgs.append(bcfg)
            in_planes, H = op, Ho
    params['blocks'] = blocks

    c_last = out_planes[-1]
    k1, k2 = jax.random.split(keys[next(ki)])
    lin_w = (1.0 / np.sqrt(c_last)) * jax.random.normal(
        k1, (c_last, num_classes), jnp.float32)
    lin_b = (1.0 / np.sqrt(c_last)) * jax.random.normal(
        k2, (1, num_classes), jnp.float32)
    last = block_cfgs[-1]
    if last['stride'] == 2:
        # split so the last block's [main | shortcut] concat never materialises
        params['lin_ws'] = (lin_w[:last['bout']], lin_w[last['bout']:])
    else:
        params['lin_ws'] = (lin_w,)
    params['lin_b'] = lin_b
    return params, tuple(block_cfgs)


# ------------------------------------ main ------------------------------------

if __name__ == "__main__":
    # Small ShuffleNet config (same structure as the reference, reduced widths).
    cfg = {'out_planes': [40, 80, 160], 'num_blocks': [1, 2, 1], 'groups': 2}

    key = jax.random.PRNGKey(0)
    pkey, xkey = jax.random.split(key)
    params, block_cfgs = init_params(pkey, cfg)

    # CIFAR-style input: NCHW, 3 channels, 32x32.  Batch of 4 keeps both v7x
    # TensorCores busy (2 grid steps per core under "parallel" semantics).
    x = jax.random.normal(xkey, (4, 3, 32, 32), jnp.float32)

    fwd = jax.jit(functools.partial(shufflenet_forward, block_cfgs=block_cfgs))
    logits = jax.block_until_ready(fwd(params, x))
    assert logits.shape == (4, 10)
    assert bool(jnp.all(jnp.isfinite(logits)))
    print("KERNEL_OK")
</pallas_src>

<mosaic_0001>
module attributes {stable_mosaic.version = 11 : i64} {
  func.func @shufflenet_kernel(%arg0: i32, %arg1: memref<1x32x32x3xf32, #tpu.memory_space<vmem>>, %arg2: memref<3x24xbf16, #tpu.memory_space<vmem>>, %arg3: memref<1x24xf32, #tpu.memory_space<vmem>>, %arg4: memref<24x128xbf16, #tpu.memory_space<vmem>>, %arg5: memref<1x128xf32, #tpu.memory_space<vmem>>, %arg6: memref<9x16x128xf32, #tpu.memory_space<vmem>>, %arg7: memref<1x128xf32, #tpu.memory_space<vmem>>, %arg8: memref<128x16xbf16, #tpu.memory_space<vmem>>, %arg9: memref<1x16xf32, #tpu.memory_space<vmem>>, %arg10: memref<40x128xbf16, #tpu.memory_space<vmem>>, %arg11: memref<1x128xf32, #tpu.memory_space<vmem>>, %arg12: memref<9x8x128xf32, #tpu.memory_space<vmem>>, %arg13: memref<1x128xf32, #tpu.memory_space<vmem>>, %arg14: memref<128x40xbf16, #tpu.memory_space<vmem>>, %arg15: memref<1x40xf32, #tpu.memory_space<vmem>>, %arg16: memref<80x128xbf16, #tpu.memory_space<vmem>>, %arg17: memref<1x128xf32, #tpu.memory_space<vmem>>, %arg18: memref<9x8x128xf32, #tpu.memory_space<vmem>>, %arg19: memref<1x128xf32, #tpu.memory_space<vmem>>, %arg20: memref<128x80xbf16, #tpu.memory_space<vmem>>, %arg21: memref<1x80xf32, #tpu.memory_space<vmem>>, %arg22: memref<80x128xbf16, #tpu.memory_space<vmem>>, %arg23: memref<1x128xf32, #tpu.memory_space<vmem>>, %arg24: memref<9x4x128xf32, #tpu.memory_space<vmem>>, %arg25: memref<1x128xf32, #tpu.memory_space<vmem>>, %arg26: memref<128x80xbf16, #tpu.memory_space<vmem>>, %arg27: memref<1x80xf32, #tpu.memory_space<vmem>>, %arg28: memref<80x10xf32, #tpu.memory_space<vmem>>, %arg29: memref<80x10xf32, #tpu.memory_space<vmem>>, %arg30: memref<1x10xf32, #tpu.memory_space<vmem>>, %arg31: memref<1x1x10xf32, #tpu.memory_space<vmem>>, %arg32: memref<34x48x128xf32, #tpu.memory_space<vmem>>, %arg33: memref<34x48x128xf32, #tpu.memory_space<vmem>>, %arg34: memref<16x16x40xf32, #tpu.memory_space<vmem>>, %arg35: memref<8x8x80xf32, #tpu.memory_space<vmem>>) attributes {dimension_semantics = [#tpu.dimension_semantics<parallel>], iteration_bounds = array<i64: 4>, scalar_prefetch = 0 : i64, scratch_operands = 4 : i64, tpu.core_type = #tpu.core_type<tc>, window_params = [{transform_indices = @transform_0, window_bounds = array<i64: 1, 32, 32, 3>}, {pipeline_mode = #tpu.pipeline_mode<synchronous>, transform_indices = @transform_1, window_bounds = array<i64: 3, 24>}, {pipeline_mode = #tpu.pipeline_mode<synchronous>, transform_indices = @transform_2, window_bounds = array<i64: 1, 24>}, {pipeline_mode = #tpu.pipeline_mode<synchronous>, transform_indices = @transform_3, window_bounds = array<i64: 24, 128>}, {pipeline_mode = #tpu.pipeline_mode<synchronous>, transform_indices = @transform_4, window_bounds = array<i64: 1, 128>}, {pipeline_mode = #tpu.pipeline_mode<synchronous>, transform_indices = @transform_5, window_bounds = array<i64: 9, 16, 128>}, {pipeline_mode = #tpu.pipeline_mode<synchronous>, transform_indices = @transform_6, window_bounds = array<i64: 1, 128>}, {pipeline_mode = #tpu.pipeline_mode<synchronous>, transform_indices = @transform_7, window_bounds = array<i64: 128, 16>}, {pipeline_mode = #tpu.pipeline_mode<synchronous>, transform_indices = @transform_8, window_bounds = array<i64: 1, 16>}, {pipeline_mode = #tpu.pipeline_mode<synchronous>, transform_indices = @transform_9, window_bounds = array<i64: 40, 128>}, {pipeline_mode = #tpu.pipeline_mode<synchronous>, transform_indices = @transform_10, window_bounds = array<i64: 1, 128>}, {pipeline_mode = #tpu.pipeline_mode<synchronous>, transform_indices = @transform_11, window_bounds = array<i64: 9, 8, 128>}, {pipeline_mode = #tpu.pipeline_mode<synchronous>, transform_indices = @transform_12, window_bounds = array<i64: 1, 128>}, {pipeline_mode = #tpu.pipeline_mode<synchronous>, transform_indices = @transform_13, window_bounds = array<i64: 128, 40>}, {pipeline_mode = #tpu.pipeline_mode<synchronous>, transform_indices = @transform_14, window_bounds = array<i64: 1, 40>}, {pipeline_mode = #tpu.pipeline_mode<synchronous>, transform_indices = @transform_15, window_bounds = array<i64: 80, 128>}, {pipeline_mode = #tpu.pipeline_mode<synchronous>, transform_indices = @transform_16, window_bounds = array<i64: 1, 128>}, {pipeline_mode = #tpu.pipeline_mode<synchronous>, transform_indices = @transform_17, window_bounds = array<i64: 9, 8, 128>}, {pipeline_mode = #tpu.pipeline_mode<synchronous>, transform_indices = @transform_18, window_bounds = array<i64: 1, 128>}, {pipeline_mode = #tpu.pipeline_mode<synchronous>, transform_indices = @transform_19, window_bounds = array<i64: 128, 80>}, {pipeline_mode = #tpu.pipeline_mode<synchronous>, transform_indices = @transform_20, window_bounds = array<i64: 1, 80>}, {pipeline_mode = #tpu.pipeline_mode<synchronous>, transform_indices = @transform_21, window_bounds = array<i64: 80, 128>}, {pipeline_mode = #tpu.pipeline_mode<synchronous>, transform_indices = @transform_22, window_bounds = array<i64: 1, 128>}, {pipeline_mode = #tpu.pipeline_mode<synchronous>, transform_indices = @transform_23, window_bounds = array<i64: 9, 4, 128>}, {pipeline_mode = #tpu.pipeline_mode<synchronous>, transform_indices = @transform_24, window_bounds = array<i64: 1, 128>}, {pipeline_mode = #tpu.pipeline_mode<synchronous>, transform_indices = @transform_25, window_bounds = array<i64: 128, 80>}, {pipeline_mode = #tpu.pipeline_mode<synchronous>, transform_indices = @transform_26, window_bounds = array<i64: 1, 80>}, {pipeline_mode = #tpu.pipeline_mode<synchronous>, transform_indices = @transform_27, window_bounds = array<i64: 80, 10>}, {pipeline_mode = #tpu.pipeline_mode<synchronous>, transform_indices = @transform_28, window_bounds = array<i64: 80, 10>}, {pipeline_mode = #tpu.pipeline_mode<synchronous>, transform_indices = @transform_29, window_bounds = array<i64: 1, 10>}, {transform_indices = @transform_30, window_bounds = array<i64: 1, 1, 10>}]} {
    %c0 = arith.constant 0 : index
    %c0_0 = arith.constant 0 : index
    %c0_1 = arith.constant 0 : index
    %c0_2 = arith.constant 0 : index
    %0 = vector.load %arg1[%c0, %c0_0, %c0_1, %c0_2] : memref<1x32x32x3xf32, #tpu.memory_space<vmem>>, vector<1x32x32x3xf32>
    %1 = vector.shape_cast %0 : vector<1x32x32x3xf32> to vector<32x32x3xf32>
    %2 = vector.shape_cast %1 : vector<32x32x3xf32> to vector<1024x3xf32>
    %3 = arith.truncf %2 : vector<1024x3xf32> to vector<1024x3xbf16>
    %c0_3 = arith.constant 0 : index
    %c0_4 = arith.constant 0 : index
    %4 = vector.load %arg2[%c0_3, %c0_4] : memref<3x24xbf16, #tpu.memory_space<vmem>>, vector<3x24xbf16>
    %cst = arith.constant dense<0.000000e+00> : vector<1024x24xf32>
    %5 = tpu.matmul %3, %4, %cst {dimension_numbers = #tpu.dot_dimension_numbers<[1], [0], [0], [1], [0, 0, 1, 1], [], []>} : vector<1024x3xbf16>, vector<3x24xbf16>, vector<1024x24xf32> -> vector<1024x24xf32>
    %c0_5 = arith.constant 0 : index
    %c0_6 = arith.constant 0 : index
    %6 = vector.load %arg3[%c0_5, %c0_6] : memref<1x24xf32, #tpu.memory_space<vmem>>, vector<1x24xf32>
    %7 = vector.broadcast %6 : vector<1x24xf32> to vector<1024x24xf32>
    %8 = arith.addf %5, %7 : vector<1024x24xf32>
    %cst_7 = arith.constant 0.000000e+00 : f32
    %9 = vector.broadcast %cst_7 : f32 to vector<1024x24xf32>
    %10 = arith.maximumf %8, %9 : vector<1024x24xf32>
    %11 = vector.shape_cast %10 : vector<1024x24xf32> to vector<32x32x24xf32>
    %12 = arith.truncf %10 : vector<1024x24xf32> to vector<1024x24xbf16>
    %c0_8 = arith.constant 0 : index
    %c0_9 = arith.constant 0 : index
    %13 = vector.load %arg4[%c0_8, %c0_9] : memref<24x128xbf16, #tpu.memory_space<vmem>>, vector<24x128xbf16>
    %cst_10 = arith.constant dense<0.000000e+00> : vector<1024x128xf32>
    %14 = tpu.matmul %12, %13, %cst_10 {dimension_numbers = #tpu.dot_dimension_numbers<[1], [0], [0], [1], [0, 0, 1, 1], [], []>} : vector<1024x24xbf16>, vector<24x128xbf16>, vector<1024x128xf32> -> vector<1024x128xf32>
    %c0_11 = arith.constant 0 : index
    %c0_12 = arith.constant 0 : index
    %15 = vector.load %arg5[%c0_11, %c0_12] : memref<1x128xf32, #tpu.memory_space<vmem>>, vector<1x128xf32>
    %16 = vector.broadcast %15 : vector<1x128xf32> to vector<1024x128xf32>
    %17 = arith.addf %14, %16 : vector<1024x128xf32>
    %cst_13 = arith.constant 0.000000e+00 : f32
    %18 = vector.broadcast %cst_13 : f32 to vector<1024x128xf32>
    %19 = arith.maximumf %17, %18 : vector<1024x128xf32>
    %c1 = arith.constant 1 : index
    %c8 = arith.constant 8 : index
    %c0_14 = arith.constant 0 : index
    %20 = vector.load %arg33[%c1, %c8, %c0_14] : memref<34x48x128xf32, #tpu.memory_space<vmem>>, vector<32x32x24xf32>
    tpu.vector_store %arg33[%c1, %c8, %c0_14], %11 {strides = array<i32>} : memref<34x48x128xf32, #tpu.memory_space<vmem>>, vector<32x32x24xf32>,
    %cst_15 = arith.constant 0.000000e+00 : f32
    %21 = vector.broadcast %cst_15 : f32 to vector<1x34x128xf32>
    %cst_16 = arith.constant 0.000000e+00 : f32
    %22 = vector.broadcast %cst_16 : f32 to vector<32x1x128xf32>
    %c0_17 = arith.constant 0 : index
    %c7 = arith.constant 7 : index
    %c0_18 = arith.constant 0 : index
    %23 = vector.load %arg33[%c0_17, %c7, %c0_18] : memref<34x48x128xf32, #tpu.memory_space<vmem>>, vector<1x34x128xf32>
    tpu.vector_store %arg33[%c0_17, %c7, %c0_18], %21 {strides = array<i32>} : memref<34x48x128xf32, #tpu.memory_space<vmem>>, vector<1x34x128xf32>,
    %c1_19 = arith.constant 1 : index
    %c7_20 = arith.constant 7 : index
    %c0_21 = arith.constant 0 : index
    %24 = vector.load %arg33[%c1_19, %c7_20, %c0_21] : memref<34x48x128xf32, #tpu.memory_space<vmem>>, vector<32x1x128xf32>
    tpu.vector_store %arg33[%c1_19, %c7_20, %c0_21], %22 {strides = array<i32>} : memref<34x48x128xf32, #tpu.memory_space<vmem>>, vector<32x1x128xf32>,
    %cst_22 = arith.constant 0.000000e+00 : f32
    %25 = vector.broadcast %cst_22 : f32 to vector<16x16x128xf32>
    %c0_23 = arith.constant 0 : index
    %c7_24 = arith.constant 7 : index
    %c0_25 = arith.constant 0 : index
    %26 = tpu.strided_load %arg33[%c0_23, %c7_24, %c0_25] {strides = array<i32: 2, 2, 1>} : memref<34x48x128xf32, #tpu.memory_space<vmem>>, vector<16x16x128xf32>
    %27 = arith.addf %25, %26 : vector<16x16x128xf32>
    %c0_26 = arith.constant 0 : index
    %c8_27 = arith.constant 8 : index
    %c0_28 = arith.constant 0 : index
    %28 = tpu.strided_load %arg33[%c0_26, %c8_27, %c0_28] {strides = array<i32: 2, 2, 1>} : memref<34x48x128xf32, #tpu.memory_space<vmem>>, vector<16x16x128xf32>
    %29 = arith.addf %27, %28 : vector<16x16x128xf32>
    %c0_29 = arith.constant 0 : index
    %c9 = arith.constant 9 : index
    %c0_30 = arith.constant 0 : index
    %30 = tpu.strided_load %arg33[%c0_29, %c9, %c0_30] {strides = array<i32: 2, 2, 1>} : memref<34x48x128xf32, #tpu.memory_space<vmem>>, vector<16x16x128xf32>
    %31 = arith.addf %29, %30 : vector<16x16x128xf32>
    %c1_31 = arith.constant 1 : index
    %c7_32 = arith.constant 7 : index
    %c0_33 = arith.constant 0 : index
    %32 = tpu.strided_load %arg33[%c1_31, %c7_32, %c0_33] {strides = array<i32: 2, 2, 1>} : memref<34x48x128xf32, #tpu.memory_space<vmem>>, vector<16x16x128xf32>
    %33 = arith.addf %31, %32 : vector<16x16x128xf32>
    %c1_34 = arith.constant 1 : index
    %c8_35 = arith.constant 8 : index
    %c0_36 = arith.constant 0 : index
    %34 = tpu.strided_load %arg33[%c1_34, %c8_35, %c0_36] {strides = array<i32: 2, 2, 1>} : memref<34x48x128xf32, #tpu.memory_space<vmem>>, vector<16x16x128xf32>
    %35 = arith.addf %33, %34 : vector<16x16x128xf32>
    %c1_37 = arith.constant 1 : index
    %c9_38 = arith.constant 9 : index
    %c0_39 = arith.constant 0 : index
    %36 = tpu.strided_load %arg33[%c1_37, %c9_38, %c0_39] {strides = array<i32: 2, 2, 1>} : memref<34x48x128xf32, #tpu.memory_space<vmem>>, vector<16x16x128xf32>
    %37 = arith.addf %35, %36 : vector<16x16x128xf32>
    %c2 = arith.constant 2 : index
    %c7_40 = arith.constant 7 : index
    %c0_41 = arith.constant 0 : index
    %38 = tpu.strided_load %arg33[%c2, %c7_40, %c0_41] {strides = array<i32: 2, 2, 1>} : memref<34x48x128xf32, #tpu.memory_space<vmem>>, vector<16x16x128xf32>
    %39 = arith.addf %37, %38 : vector<16x16x128xf32>
    %c2_42 = arith.constant 2 : index
    %c8_43 = arith.constant 8 : index
    %c0_44 = arith.constant 0 : index
    %40 = tpu.strided_load %arg33[%c2_42, %c8_43, %c0_44] {strides = array<i32: 2, 2, 1>} : memref<34x48x128xf32, #tpu.memory_space<vmem>>, vector<16x16x128xf32>
    %41 = arith.addf %39, %40 : vector<16x16x128xf32>
    %c2_45 = arith.constant 2 : index
    %c9_46 = arith.constant 9 : index
    %c0_47 = arith.constant 0 : index
    %42 = tpu.strided_load %arg33[%c2_45, %c9_46, %c0_47] {strides = array<i32: 2, 2, 1>} : memref<34x48x128xf32, #tpu.memory_space<vmem>>, vector<16x16x128xf32>
    %43 = arith.addf %41, %42 : vector<16x16x128xf32>
    %cst_48 = arith.constant 0.111111112 : f32
    %44 = vector.broadcast %cst_48 : f32 to vector<16x16x128xf32>
    %45 = arith.mulf %43, %44 : vector<16x16x128xf32>
    %cst_49 = arith.constant 0.000000e+00 : f32
    %46 = vector.broadcast %cst_49 : f32 to vector<16x16x128xf32>
    %47 = arith.maximumf %45, %46 : vector<16x16x128xf32>
    %48 = vector.extract_strided_slice %47 {offsets = [0, 0, 0], sizes = [16, 16, 24], strides = [1, 1, 1]} : vector<16x16x128xf32> to vector<16x16x24xf32>
    %49 = vector.shape_cast %19 : vector<1024x128xf32> to vector<32x32x128xf32>
    %c0_50 = arith.constant 0 : index
    %c0_51 = arith.constant 0 : index
    %c0_52 = arith.constant 0 : index
    %50 = vector.load %arg6[%c0_50, %c0_51, %c0_52] : memref<9x16x128xf32, #tpu.memory_space<vmem>>, vector<9x16x128xf32>
    %c0_53 = arith.constant 0 : index
    %c0_54 = arith.constant 0 : index
    %51 = vector.load %arg7[%c0_53, %c0_54] : memref<1x128xf32, #tpu.memory_space<vmem>>, vector<1x128xf32>
    %c1_55 = arith.constant 1 : index
    %c8_56 = arith.constant 8 : index
    %c0_57 = arith.constant 0 : index
    %52 = vector.load %arg32[%c1_55, %c8_56, %c0_57] : memref<34x48x128xf32, #tpu.memory_space<vmem>>, vector<32x32x128xf32>
    tpu.vector_store %arg32[%c1_55, %c8_56, %c0_57], %49 {strides = array<i32>} : memref<34x48x128xf32, #tpu.memory_space<vmem>>, vector<32x32x128xf32>,
    %cst_58 = arith.constant 0.000000e+00 : f32
    %53 = vector.broadcast %cst_58 : f32 to vector<1x34x128xf32>
    %cst_59 = arith.constant 0.000000e+00 : f32
    %54 = vector.broadcast %cst_59 : f32 to vector<32x1x128xf32>
    %c0_60 = arith.constant 0 : index
    %c7_61 = arith.constant 7 : index
    %c0_62 = arith.constant 0 : index
    %55 = vector.load %arg32[%c0_60, %c7_61, %c0_62] : memref<34x48x128xf32, #tpu.memory_space<vmem>>, vector<1x34x128xf32>
    tpu.vector_store %arg32[%c0_60, %c7_61, %c0_62], %53 {strides = array<i32>} : memref<34x48x128xf32, #tpu.memory_space<vmem>>, vector<1x34x128xf32>,
    %c1_63 = arith.constant 1 : index
    %c7_64 = arith.constant 7 : index
    %c0_65 = arith.constant 0 : index
    %56 = vector.load %arg32[%c1_63, %c7_64, %c0_65] : memref<34x48x128xf32, #tpu.memory_space<vmem>>, vector<32x1x128xf32>
    tpu.vector_store %arg32[%c1_63, %c7_64, %c0_65], %54 {strides = array<i32>} : memref<34x48x128xf32, #tpu.memory_space<vmem>>, vector<32x1x128xf32>,
    %cst_66 = arith.constant 0.000000e+00 : f32
    %57 = vector.broadcast %cst_66 : f32 to vector<16x16x128xf32>
    %c0_67 = arith.constant 0 : index
    %c7_68 = arith.constant 7 : index
    %c0_69 = arith.constant 0 : index
    %58 = tpu.strided_load %arg32[%c0_67, %c7_68, %c0_69] {strides = array<i32: 2, 2, 1>} : memref<34x48x128xf32, #tpu.memory_space<vmem>>, vector<16x16x128xf32>
    %59 = vector.extract_strided_slice %50 {offsets = [0, 0, 0], sizes = [1, 16, 128], strides = [1, 1, 1]} : vector<9x16x128xf32> to vector<1x16x128xf32>
    %60 = vector.shape_cast %59 : vector<1x16x128xf32> to vector<16x128xf32>
    %61 = vector.shape_cast %60 : vector<16x128xf32> to vector<1x16x128xf32>
    %62 = vector.broadcast %61 : vector<1x16x128xf32> to vector<16x16x128xf32>
    %63 = arith.mulf %58, %62 : vector<16x16x128xf32>
    %64 = arith.addf %57, %63 : vector<16x16x128xf32>
    %c0_70 = arith.constant 0 : index
    %c8_71 = arith.constant 8 : index
    %c0_72 = arith.constant 0 : index
    %65 = tpu.strided_load %arg32[%c0_70, %c8_71, %c0_72] {strides = array<i32: 2, 2, 1>} : memref<34x48x128xf32, #tpu.memory_space<vmem>>, vector<16x16x128xf32>
    %66 = vector.extract_strided_slice %50 {offsets = [1, 0, 0], sizes = [1, 16, 128], strides = [1, 1, 1]} : vector<9x16x128xf32> to vector<1x16x128xf32>
    %67 = vector.shape_cast %66 : vector<1x16x128xf32> to vector<16x128xf32>
    %68 = vector.shape_cast %67 : vector<16x128xf32> to vector<1x16x128xf32>
    %69 = vector.broadcast %68 : vector<1x16x128xf32> to vector<16x16x128xf32>
    %70 = arith.mulf %65, %69 : vector<16x16x128xf32>
    %71 = arith.addf %64, %70 : vector<16x16x128xf32>
    %c0_73 = arith.constant 0 : index
    %c9_74 = arith.constant 9 : index
    %c0_75 = arith.constant 0 : index
    %72 = tpu.strided_load %arg32[%c0_73, %c9_74, %c0_75] {strides = array<i32: 2, 2, 1>} : memref<34x48x128xf32, #tpu.memory_space<vmem>>, vector<16x16x128xf32>
    %73 = vector.extract_strided_slice %50 {offsets = [2, 0, 0], sizes = [1, 16, 128], strides = [1, 1, 1]} : vector<9x16x128xf32> to vector<1x16x128xf32>
    %74 = vector.shape_cast %73 : vector<1x16x128xf32> to vector<16x128xf32>
    %75 = vector.shape_cast %74 : vector<16x128xf32> to vector<1x16x128xf32>
    %76 = vector.broadcast %75 : vector<1x16x128xf32> to vector<16x16x128xf32>
    %77 = arith.mulf %72, %76 : vector<16x16x128xf32>
    %78 = arith.addf %71, %77 : vector<16x16x128xf32>
    %c1_76 = arith.constant 1 : index
    %c7_77 = arith.constant 7 : index
    %c0_78 = arith.constant 0 : index
    %79 = tpu.strided_load %arg32[%c1_76, %c7_77, %c0_78] {strides = array<i32: 2, 2, 1>} : memref<34x48x128xf32, #tpu.memory_space<vmem>>, vector<16x16x128xf32>
    %80 = vector.extract_strided_slice %50 {offsets = [3, 0, 0], sizes = [1, 16, 128], strides = [1, 1, 1]} : vector<9x16x128xf32> to vector<1x16x128xf32>
    %81 = vector.shape_cast %80 : vector<1x16x128xf32> to vector<16x128xf32>
    %82 = vector.shape_cast %81 : vector<16x128xf32> to vector<1x16x128xf32>
    %83 = vector.broadcast %82 : vector<1x16x128xf32> to vector<16x16x128xf32>
    %84 = arith.mulf %79, %83 : vector<16x16x128xf32>
    %85 = arith.addf %78, %84 : vector<16x16x128xf32>
    %c1_79 = arith.constant 1 : index
    %c8_80 = arith.constant 8 : index
    %c0_81 = arith.constant 0 : index
    %86 = tpu.strided_load %arg32[%c1_79, %c8_80, %c0_81] {strides = array<i32: 2, 2, 1>} : memref<34x48x128xf32, #tpu.memory_space<vmem>>, vector<16x16x128xf32>
    %87 = vector.extract_strided_slice %50 {offsets = [4, 0, 0], sizes = [1, 16, 128], strides = [1, 1, 1]} : vector<9x16x128xf32> to vector<1x16x128xf32>
    %88 = vector.shape_cast %87 : vector<1x16x128xf32> to vector<16x128xf32>
    %89 = vector.shape_cast %88 : vector<16x128xf32> to vector<1x16x128xf32>
    %90 = vector.broadcast %89 : vector<1x16x128xf32> to vector<16x16x128xf32>
    %91 = arith.mulf %86, %90 : vector<16x16x128xf32>
    %92 = arith.addf %85, %91 : vector<16x16x128xf32>
    %c1_82 = arith.constant 1 : index
    %c9_83 = arith.constant 9 : index
    %c0_84 = arith.constant 0 : index
    %93 = tpu.strided_load %arg32[%c1_82, %c9_83, %c0_84] {strides = array<i32: 2, 2, 1>} : memref<34x48x128xf32, #tpu.memory_space<vmem>>, vector<16x16x128xf32>
    %94 = vector.extract_strided_slice %50 {offsets = [5, 0, 0], sizes = [1, 16, 128], strides = [1, 1, 1]} : vector<9x16x128xf32> to vector<1x16x128xf32>
    %95 = vector.shape_cast %94 : vector<1x16x128xf32> to vector<16x128xf32>
    %96 = vector.shape_cast %95 : vector<16x128xf32> to vector<1x16x128xf32>
    %97 = vector.broadcast %96 : vector<1x16x128xf32> to vector<16x16x128xf32>
    %98 = arith.mulf %93, %97 : vector<16x16x128xf32>
    %99 = arith.addf %92, %98 : vector<16x16x128xf32>
    %c2_85 = arith.constant 2 : index
    %c7_86 = arith.constant 7 : index
    %c0_87 = arith.constant 0 : index
    %100 = tpu.strided_load %arg32[%c2_85, %c7_86, %c0_87] {strides = array<i32: 2, 2, 1>} : memref<34x48x128xf32, #tpu.memory_space<vmem>>, vector<16x16x128xf32>
    %101 = vector.extract_strided_slice %50 {offsets = [6, 0, 0], sizes = [1, 16, 128], strides = [1, 1, 1]} : vector<9x16x128xf32> to vector<1x16x128xf32>
    %102 = vector.shape_cast %101 : vector<1x16x128xf32> to vector<16x128xf32>
    %103 = vector.shape_cast %102 : vector<16x128xf32> to vector<1x16x128xf32>
    %104 = vector.broadcast %103 : vector<1x16x128xf32> to vector<16x16x128xf32>
    %105 = arith.mulf %100, %104 : vector<16x16x128xf32>
    %106 = arith.addf %99, %105 : vector<16x16x128xf32>
    %c2_88 = arith.constant 2 : index
    %c8_89 = arith.constant 8 : index
    %c0_90 = arith.constant 0 : index
    %107 = tpu.strided_load %arg32[%c2_88, %c8_89, %c0_90] {strides = array<i32: 2, 2, 1>} : memref<34x48x128xf32, #tpu.memory_space<vmem>>, vector<16x16x128xf32>
    %108 = vector.extract_strided_slice %50 {offsets = [7, 0, 0], sizes = [1, 16, 128], strides = [1, 1, 1]} : vector<9x16x128xf32> to vector<1x16x128xf32>
    %109 = vector.shape_cast %108 : vector<1x16x128xf32> to vector<16x128xf32>
    %110 = vector.shape_cast %109 : vector<16x128xf32> to vector<1x16x128xf32>
    %111 = vector.broadcast %110 : vector<1x16x128xf32> to vector<16x16x128xf32>
    %112 = arith.mulf %107, %111 : vector<16x16x128xf32>
    %113 = arith.addf %106, %112 : vector<16x16x128xf32>
    %c2_91 = arith.constant 2 : index
    %c9_92 = arith.constant 9 : index
    %c0_93 = arith.constant 0 : index
    %114 = tpu.strided_load %arg32[%c2_91, %c9_92, %c0_93] {strides = array<i32: 2, 2, 1>} : memref<34x48x128xf32, #tpu.memory_space<vmem>>, vector<16x16x128xf32>
    %115 = vector.extract_strided_slice %50 {offsets = [8, 0, 0], sizes = [1, 16, 128], strides = [1, 1, 1]} : vector<9x16x128xf32> to vector<1x16x128xf32>
    %116 = vector.shape_cast %115 : vector<1x16x128xf32> to vector<16x128xf32>
    %117 = vector.shape_cast %116 : vector<16x128xf32> to vector<1x16x128xf32>
    %118 = vector.broadcast %117 : vector<1x16x128xf32> to vector<16x16x128xf32>
    %119 = arith.mulf %114, %118 : vector<16x16x128xf32>
    %120 = arith.addf %113, %119 : vector<16x16x128xf32>
    %121 = vector.shape_cast %51 : vector<1x128xf32> to vector<1x1x128xf32>
    %122 = vector.broadcast %121 : vector<1x1x128xf32> to vector<16x16x128xf32>
    %123 = arith.addf %120, %122 : vector<16x16x128xf32>
    %cst_94 = arith.constant 0.000000e+00 : f32
    %124 = vector.broadcast %cst_94 : f32 to vector<16x16x128xf32>
    %125 = arith.maximumf %123, %124 : vector<16x16x128xf32>
    %126 = vector.shape_cast %125 : vector<16x16x128xf32> to vector<256x128xf32>
    %127 = arith.truncf %126 : vector<256x128xf32> to vector<256x128xbf16>
    %c0_95 = arith.constant 0 : index
    %c0_96 = arith.constant 0 : index
    %128 = vector.load %arg8[%c0_95, %c0_96] : memref<128x16xbf16, #tpu.memory_space<vmem>>, vector<128x16xbf16>
    %cst_97 = arith.constant dense<0.000000e+00> : vector<256x16xf32>
    %129 = tpu.matmul %127, %128, %cst_97 {dimension_numbers = #tpu.dot_dimension_numbers<[1], [0], [0], [1], [0, 0, 1, 1], [], []>} : vector<256x128xbf16>, vector<128x16xbf16>, vector<256x16xf32> -> vector<256x16xf32>
    %c0_98 = arith.constant 0 : index
    %c0_99 = arith.constant 0 : index
    %130 = vector.load %arg9[%c0_98, %c0_99] : memref<1x16xf32, #tpu.memory_space<vmem>>, vector<1x16xf32>
    %131 = vector.broadcast %130 : vector<1x16xf32> to vector<256x16xf32>
    %132 = arith.addf %129, %131 : vector<256x16xf32>
    %cst_100 = arith.constant 0.000000e+00 : f32
    %133 = vector.broadcast %cst_100 : f32 to vector<256x16xf32>
    %134 = arith.maximumf %132, %133 : vector<256x16xf32>
    %135 = vector.shape_cast %134 : vector<256x16xf32> to vector<16x16x16xf32>
    %c0_101 = arith.constant 0 : index
    %c0_102 = arith.constant 0 : index
    %c0_103 = arith.constant 0 : index
    %136 = vector.load %arg34[%c0_101, %c0_102, %c0_103] : memref<16x16x40xf32, #tpu.memory_space<vmem>>, vector<16x16x16xf32>
    tpu.vector_store %arg34[%c0_101, %c0_102, %c0_103], %135 {strides = array<i32>} : memref<16x16x40xf32, #tpu.memory_space<vmem>>, vector<16x16x16xf32>,
    %c0_104 = arith.constant 0 : index
    %c0_105 = arith.constant 0 : index
    %c16 = arith.constant 16 : index
    %137 = vector.load %arg34[%c0_104, %c0_105, %c16] : memref<16x16x40xf32, #tpu.memory_space<vmem>>, vector<16x16x24xf32>
    tpu.vector_store %arg34[%c0_104, %c0_105, %c16], %48 {strides = array<i32>} : memref<16x16x40xf32, #tpu.memory_space<vmem>>, vector<16x16x24xf32>,
    %c0_106 = arith.constant 0 : index
    %c0_107 = arith.constant 0 : index
    %c0_108 = arith.constant 0 : index
    %138 = vector.load %arg34[%c0_106, %c0_107, %c0_108] : memref<16x16x40xf32, #tpu.memory_space<vmem>>, vector<16x16x40xf32>
    %139 = vector.shape_cast %138 : vector<16x16x40xf32> to vector<256x40xf32>
    %140 = arith.truncf %139 : vector<256x40xf32> to vector<256x40xbf16>
    %c0_109 = arith.constant 0 : index
    %c0_110 = arith.constant 0 : index
    %141 = vector.load %arg10[%c0_109, %c0_110] : memref<40x128xbf16, #tpu.memory_space<vmem>>, vector<40x128xbf16>
    %cst_111 = arith.constant dense<0.000000e+00> : vector<256x128xf32>
    %142 = tpu.matmul %140, %141, %cst_111 {dimension_numbers = #tpu.dot_dimension_numbers<[1], [0], [0], [1], [0, 0, 1, 1], [], []>} : vector<256x40xbf16>, vector<40x128xbf16>, vector<256x128xf32> -> vector<256x128xf32>
    %c0_112 = arith.constant 0 : index
    %c0_113 = arith.constant 0 : index
    %143 = vector.load %arg11[%c0_112, %c0_113] : memref<1x128xf32, #tpu.memory_space<vmem>>, vector<1x128xf32>
    %144 = vector.broadcast %143 : vector<1x128xf32> to vector<256x128xf32>
    %145 = arith.addf %142, %144 : vector<256x128xf32>
    %cst_114 = arith.constant 0.000000e+00 : f32
    %146 = vector.broadcast %cst_114 : f32 to vector<256x128xf32>
    %147 = arith.maximumf %145, %146 : vector<256x128xf32>
    %c1_115 = arith.constant 1 : index
    %c8_116 = arith.constant 8 : index
    %c0_117 = arith.constant 0 : index
    %148 = vector.load %arg33[%c1_115, %c8_116, %c0_117] : memref<34x48x128xf32, #tpu.memory_space<vmem>>, vector<16x16x40xf32>
    tpu.vector_store %arg33[%c1_115, %c8_116, %c0_117], %138 {strides = array<i32>} : memref<34x48x128xf32, #tpu.memory_space<vmem>>, vector<16x16x40xf32>,
    %cst_118 = arith.constant 0.000000e+00 : f32
    %149 = vector.broadcast %cst_118 : f32 to vector<1x18x128xf32>
    %cst_119 = arith.constant 0.000000e+00 : f32
    %150 = vector.broadcast %cst_119 : f32 to vector<16x1x128xf32>
    %c0_120 = arith.constant 0 : index
    %c7_121 = arith.constant 7 : index
    %c0_122 = arith.constant 0 : index
    %151 = vector.load %arg33[%c0_120, %c7_121, %c0_122] : memref<34x48x128xf32, #tpu.memory_space<vmem>>, vector<1x18x128xf32>
    tpu.vector_store %arg33[%c0_120, %c7_121, %c0_122], %149 {strides = array<i32>} : memref<34x48x128xf32, #tpu.memory_space<vmem>>, vector<1x18x128xf32>,
    %c1_123 = arith.constant 1 : index
    %c7_124 = arith.constant 7 : index
    %c0_125 = arith.constant 0 : index
    %152 = vector.load %arg33[%c1_123, %c7_124, %c0_125] : memref<34x48x128xf32, #tpu.memory_space<vmem>>, vector<16x1x128xf32>
    tpu.vector_store %arg33[%c1_123, %c7_124, %c0_125], %150 {strides = array<i32>} : memref<34x48x128xf32, #tpu.memory_space<vmem>>, vector<16x1x128xf32>,
    %cst_126 = arith.constant 0.000000e+00 : f32
    %153 = vector.broadcast %cst_126 : f32 to vector<8x8x128xf32>
    %c0_127 = arith.constant 0 : index
    %c7_128 = arith.constant 7 : index
    %c0_129 = arith.constant 0 : index
    %154 = tpu.strided_load %arg33[%c0_127, %c7_128, %c0_129] {strides = array<i32: 2, 2, 1>} : memref<34x48x128xf32, #tpu.memory_space<vmem>>, vector<8x8x128xf32>
    %155 = arith.addf %153, %154 : vector<8x8x128xf32>
    %c0_130 = arith.constant 0 : index
    %c8_131 = arith.constant 8 : index
    %c0_132 = arith.constant 0 : index
    %156 = tpu.strided_load %arg33[%c0_130, %c8_131, %c0_132] {strides = array<i32: 2, 2, 1>} : memref<34x48x128xf32, #tpu.memory_space<vmem>>, vector<8x8x128xf32>
    %157 = arith.addf %155, %156 : vector<8x8x128xf32>
    %c0_133 = arith.constant 0 : index
    %c9_134 = arith.constant 9 : index
    %c0_135 = arith.constant 0 : index
    %158 = tpu.strided_load %arg33[%c0_133, %c9_134, %c0_135] {strides = array<i32: 2, 2, 1>} : memref<34x48x128xf32, #tpu.memory_space<vmem>>, vector<8x8x128xf32>
    %159 = arith.addf %157, %158 : vector<8x8x128xf32>
    %c1_136 = arith.constant 1 : index
    %c7_137 = arith.constant 7 : index
    %c0_138 = arith.constant 0 : index
    %160 = tpu.strided_load %arg33[%c1_136, %c7_137, %c0_138] {strides = array<i32: 2, 2, 1>} : memref<34x48x128xf32, #tpu.memory_space<vmem>>, vector<8x8x128xf32>
    %161 = arith.addf %159, %160 : vector<8x8x128xf32>
    %c1_139 = arith.constant 1 : index
    %c8_140 = arith.constant 8 : index
    %c0_141 = arith.constant 0 : index
    %162 = tpu.strided_load %arg33[%c1_139, %c8_140, %c0_141] {strides = array<i32: 2, 2, 1>} : memref<34x48x128xf32, #tpu.memory_space<vmem>>, vector<8x8x128xf32>
    %163 = arith.addf %161, %162 : vector<8x8x128xf32>
    %c1_142 = arith.constant 1 : index
    %c9_143 = arith.constant 9 : index
    %c0_144 = arith.constant 0 : index
    %164 = tpu.strided_load %arg33[%c1_142, %c9_143, %c0_144] {strides = array<i32: 2, 2, 1>} : memref<34x48x128xf32, #tpu.memory_space<vmem>>, vector<8x8x128xf32>
    %165 = arith.addf %163, %164 : vector<8x8x128xf32>
    %c2_145 = arith.constant 2 : index
    %c7_146 = arith.constant 7 : index
    %c0_147 = arith.constant 0 : index
    %166 = tpu.strided_load %arg33[%c2_145, %c7_146, %c0_147] {strides = array<i32: 2, 2, 1>} : memref<34x48x128xf32, #tpu.memory_space<vmem>>, vector<8x8x128xf32>
    %167 = arith.addf %165, %166 : vector<8x8x128xf32>
    %c2_148 = arith.constant 2 : index
    %c8_149 = arith.constant 8 : index
    %c0_150 = arith.constant 0 : index
    %168 = tpu.strided_load %arg33[%c2_148, %c8_149, %c0_150] {strides = array<i32: 2, 2, 1>} : memref<34x48x128xf32, #tpu.memory_space<vmem>>, vector<8x8x128xf32>
    %169 = arith.addf %167, %168 : vector<8x8x128xf32>
    %c2_151 = arith.constant 2 : index
    %c9_152 = arith.constant 9 : index
    %c0_153 = arith.constant 0 : index
    %170 = tpu.strided_load %arg33[%c2_151, %c9_152, %c0_153] {strides = array<i32: 2, 2, 1>} : memref<34x48x128xf32, #tpu.memory_space<vmem>>, vector<8x8x128xf32>
    %171 = arith.addf %169, %170 : vector<8x8x128xf32>
    %cst_154 = arith.constant 0.111111112 : f32
    %172 = vector.broadcast %cst_154 : f32 to vector<8x8x128xf32>
    %173 = arith.mulf %171, %172 : vector<8x8x128xf32>
    %cst_155 = arith.constant 0.000000e+00 : f32
    %174 = vector.broadcast %cst_155 : f32 to vector<8x8x128xf32>
    %175 = arith.maximumf %173, %174 : vector<8x8x128xf32>
    %176 = vector.extract_strided_slice %175 {offsets = [0, 0, 0], sizes = [8, 8, 40], strides = [1, 1, 1]} : vector<8x8x128xf32> to vector<8x8x40xf32>
    %177 = vector.shape_cast %147 : vector<256x128xf32> to vector<16x16x128xf32>
    %c0_156 = arith.constant 0 : index
    %c0_157 = arith.constant 0 : index
    %c0_158 = arith.constant 0 : index
    %178 = vector.load %arg12[%c0_156, %c0_157, %c0_158] : memref<9x8x128xf32, #tpu.memory_space<vmem>>, vector<9x8x128xf32>
    %c0_159 = arith.constant 0 : index
    %c0_160 = arith.constant 0 : index
    %179 = vector.load %arg13[%c0_159, %c0_160] : memref<1x128xf32, #tpu.memory_space<vmem>>, vector<1x128xf32>
    %c1_161 = arith.constant 1 : index
    %c8_162 = arith.constant 8 : index
    %c0_163 = arith.constant 0 : index
    %180 = vector.load %arg32[%c1_161, %c8_162, %c0_163] : memref<34x48x128xf32, #tpu.memory_space<vmem>>, vector<16x16x128xf32>
    tpu.vector_store %arg32[%c1_161, %c8_162, %c0_163], %177 {strides = array<i32>} : memref<34x48x128xf32, #tpu.memory_space<vmem>>, vector<16x16x128xf32>,
    %cst_164 = arith.constant 0.000000e+00 : f32
    %181 = vector.broadcast %cst_164 : f32 to vector<1x18x128xf32>
    %cst_165 = arith.constant 0.000000e+00 : f32
    %182 = vector.broadcast %cst_165 : f32 to vector<16x1x128xf32>
    %c0_166 = arith.constant 0 : index
    %c7_167 = arith.constant 7 : index
    %c0_168 = arith.constant 0 : index
    %183 = vector.load %arg32[%c0_166, %c7_167, %c0_168] : memref<34x48x128xf32, #tpu.memory_space<vmem>>, vector<1x18x128xf32>
    tpu.vector_store %arg32[%c0_166, %c7_167, %c0_168], %181 {strides = array<i32>} : memref<34x48x128xf32, #tpu.memory_space<vmem>>, vector<1x18x128xf32>,
    %c1_169 = arith.constant 1 : index
    %c7_170 = arith.constant 7 : index
    %c0_171 = arith.constant 0 : index
    %184 = vector.load %arg32[%c1_169, %c7_170, %c0_171] : memref<34x48x128xf32, #tpu.memory_space<vmem>>, vector<16x1x128xf32>
    tpu.vector_store %arg32[%c1_169, %c7_170, %c0_171], %182 {strides = array<i32>} : memref<34x48x128xf32, #tpu.memory_space<vmem>>, vector<16x1x128xf32>,
    %cst_172 = arith.constant 0.000000e+00 : f32
    %185 = vector.broadcast %cst_172 : f32 to vector<8x8x128xf32>
    %c0_173 = arith.constant 0 : index
    %c7_174 = arith.constant 7 : index
    %c0_175 = arith.constant 0 : index
    %186 = tpu.strided_load %arg32[%c0_173, %c7_174, %c0_175] {strides = array<i32: 2, 2, 1>} : memref<34x48x128xf32, #tpu.memory_space<vmem>>, vector<8x8x128xf32>
    %187 = vector.extract_strided_slice %178 {offsets = [0, 0, 0], sizes = [1, 8, 128], strides = [1, 1, 1]} : vector<9x8x128xf32> to vector<1x8x128xf32>
    %188 = vector.shape_cast %187 : vector<1x8x128xf32> to vector<8x128xf32>
    %189 = vector.shape_cast %188 : vector<8x128xf32> to vector<1x8x128xf32>
    %190 = vector.broadcast %189 : vector<1x8x128xf32> to vector<8x8x128xf32>
    %191 = arith.mulf %186, %190 : vector<8x8x128xf32>
    %192 = arith.addf %185, %191 : vector<8x8x128xf32>
    %c0_176 = arith.constant 0 : index
    %c8_177 = arith.constant 8 : index
    %c0_178 = arith.constant 0 : index
    %193 = tpu.strided_load %arg32[%c0_176, %c8_177, %c0_178] {strides = array<i32: 2, 2, 1>} : memref<34x48x128xf32, #tpu.memory_space<vmem>>, vector<8x8x128xf32>
    %194 = vector.extract_strided_slice %178 {offsets = [1, 0, 0], sizes = [1, 8, 128], strides = [1, 1, 1]} : vector<9x8x128xf32> to vector<1x8x128xf32>
    %195 = vector.shape_cast %194 : vector<1x8x128xf32> to vector<8x128xf32>
    %196 = vector.shape_cast %195 : vector<8x128xf32> to vector<1x8x128xf32>
    %197 = vector.broadcast %196 : vector<1x8x128xf32> to vector<8x8x128xf32>
    %198 = arith.mulf %193, %197 : vector<8x8x128xf32>
    %199 = arith.addf %192, %198 : vector<8x8x128xf32>
    %c0_179 = arith.constant 0 : index
    %c9_180 = arith.constant 9 : index
    %c0_181 = arith.constant 0 : index
    %200 = tpu.strided_load %arg32[%c0_179, %c9_180, %c0_181] {strides = array<i32: 2, 2, 1>} : memref<34x48x128xf32, #tpu.memory_space<vmem>>, vector<8x8x128xf32>
    %201 = vector.extract_strided_slice %178 {offsets = [2, 0, 0], sizes = [1, 8, 128], strides = [1, 1, 1]} : vector<9x8x128xf32> to vector<1x8x128xf32>
    %202 = vector.shape_cast %201 : vector<1x8x128xf32> to vector<8x128xf32>
    %203 = vector.shape_cast %202 : vector<8x128xf32> to vector<1x8x128xf32>
    %204 = vector.broadcast %203 : vector<1x8x128xf32> to vector<8x8x128xf32>
    %205 = arith.mulf %200, %204 : vector<8x8x128xf32>
    %206 = arith.addf %199, %205 : vector<8x8x128xf32>
    %c1_182 = arith.constant 1 : index
    %c7_183 = arith.constant 7 : index
    %c0_184 = arith.constant 0 : index
    %207 = tpu.strided_load %arg32[%c1_182, %c7_183, %c0_184] {strides = array<i32: 2, 2, 1>} : memref<34x48x128xf32, #tpu.memory_space<vmem>>, vector<8x8x128xf32>
    %208 = vector.extract_strided_slice %178 {offsets = [3, 0, 0], sizes = [1, 8, 128], strides = [1, 1, 1]} : vector<9x8x128xf32> to vector<1x8x128xf32>
    %209 = vector.shape_cast %208 : vector<1x8x128xf32> to vector<8x128xf32>
    %210 = vector.shape_cast %209 : vector<8x128xf32> to vector<1x8x128xf32>
    %211 = vector.broadcast %210 : vector<1x8x128xf32> to vector<8x8x128xf32>
    %212 = arith.mulf %207, %211 : vector<8x8x128xf32>
    %213 = arith.addf %206, %212 : vector<8x8x128xf32>
    %c1_185 = arith.constant 1 : index
    %c8_186 = arith.constant 8 : index
    %c0_187 = arith.constant 0 : index
    %214 = tpu.strided_load %arg32[%c1_185, %c8_186, %c0_187] {strides = array<i32: 2, 2, 1>} : memref<34x48x128xf32, #tpu.memory_space<vmem>>, vector<8x8x128xf32>
    %215 = vector.extract_strided_slice %178 {offsets = [4, 0, 0], sizes = [1, 8, 128], strides = [1, 1, 1]} : vector<9x8x128xf32> to vector<1x8x128xf32>
    %216 = vector.shape_cast %215 : vector<1x8x128xf32> to vector<8x128xf32>
    %217 = vector.shape_cast %216 : vector<8x128xf32> to vector<1x8x128xf32>
    %218 = vector.broadcast %217 : vector<1x8x128xf32> to vector<8x8x128xf32>
    %219 = arith.mulf %214, %218 : vector<8x8x128xf32>
    %220 = arith.addf %213, %219 : vector<8x8x128xf32>
    %c1_188 = arith.constant 1 : index
    %c9_189 = arith.constant 9 : index
    %c0_190 = arith.constant 0 : index
    %221 = tpu.strided_load %arg32[%c1_188, %c9_189, %c0_190] {strides = array<i32: 2, 2, 1>} : memref<34x48x128xf32, #tpu.memory_space<vmem>>, vector<8x8x128xf32>
    %222 = vector.extract_strided_slice %178 {offsets = [5, 0, 0], sizes = [1, 8, 128], strides = [1, 1, 1]} : vector<9x8x128xf32> to vector<1x8x128xf32>
    %223 = vector.shape_cast %222 : vector<1x8x128xf32> to vector<8x128xf32>
    %224 = vector.shape_cast %223 : vector<8x128xf32> to vector<1x8x128xf32>
    %225 = vector.broadcast %224 : vector<1x8x128xf32> to vector<8x8x128xf32>
    %226 = arith.mulf %221, %225 : vector<8x8x128xf32>
    %227 = arith.addf %220, %226 : vector<8x8x128xf32>
    %c2_191 = arith.constant 2 : index
    %c7_192 = arith.constant 7 : index
    %c0_193 = arith.constant 0 : index
    %228 = tpu.strided_load %arg32[%c2_191, %c7_192, %c0_193] {strides = array<i32: 2, 2, 1>} : memref<34x48x128xf32, #tpu.memory_space<vmem>>, vector<8x8x128xf32>
    %229 = vector.extract_strided_slice %178 {offsets = [6, 0, 0], sizes = [1, 8, 128], strides = [1, 1, 1]} : vector<9x8x128xf32> to vector<1x8x128xf32>
    %230 = vector.shape_cast %229 : vector<1x8x128xf32> to vector<8x128xf32>
    %231 = vector.shape_cast %230 : vector<8x128xf32> to vector<1x8x128xf32>
    %232 = vector.broadcast %231 : vector<1x8x128xf32> to vector<8x8x128xf32>
    %233 = arith.mulf %228, %232 : vector<8x8x128xf32>
    %234 = arith.addf %227, %233 : vector<8x8x128xf32>
    %c2_194 = arith.constant 2 : index
    %c8_195 = arith.constant 8 : index
    %c0_196 = arith.constant 0 : index
    %235 = tpu.strided_load %arg32[%c2_194, %c8_195, %c0_196] {strides = array<i32: 2, 2, 1>} : memref<34x48x128xf32, #tpu.memory_space<vmem>>, vector<8x8x128xf32>
    %236 = vector.extract_strided_slice %178 {offsets = [7, 0, 0], sizes = [1, 8, 128], strides = [1, 1, 1]} : vector<9x8x128xf32> to vector<1x8x128xf32>
    %237 = vector.shape_cast %236 : vector<1x8x128xf32> to vector<8x128xf32>
    %238 = vector.shape_cast %237 : vector<8x128xf32> to vector<1x8x128xf32>
    %239 = vector.broadcast %238 : vector<1x8x128xf32> to vector<8x8x128xf32>
    %240 = arith.mulf %235, %239 : vector<8x8x128xf32>
    %241 = arith.addf %234, %240 : vector<8x8x128xf32>
    %c2_197 = arith.constant 2 : index
    %c9_198 = arith.constant 9 : index
    %c0_199 = arith.constant 0 : index
    %242 = tpu.strided_load %arg32[%c2_197, %c9_198, %c0_199] {strides = array<i32: 2, 2, 1>} : memref<34x48x128xf32, #tpu.memory_space<vmem>>, vector<8x8x128xf32>
    %243 = vector.extract_strided_slice %178 {offsets = [8, 0, 0], sizes = [1, 8, 128], strides = [1, 1, 1]} : vector<9x8x128xf32> to vector<1x8x128xf32>
    %244 = vector.shape_cast %243 : vector<1x8x128xf32> to vector<8x128xf32>
    %245 = vector.shape_cast %244 : vector<8x128xf32> to vector<1x8x128xf32>
    %246 = vector.broadcast %245 : vector<1x8x128xf32> to vector<8x8x128xf32>
    %247 = arith.mulf %242, %246 : vector<8x8x128xf32>
    %248 = arith.addf %241, %247 : vector<8x8x128xf32>
    %249 = vector.shape_cast %179 : vector<1x128xf32> to vector<1x1x128xf32>
    %250 = vector.broadcast %249 : vector<1x1x128xf32> to vector<8x8x128xf32>
    %251 = arith.addf %248, %250 : vector<8x8x128xf32>
    %cst_200 = arith.constant 0.000000e+00 : f32
    %252 = vector.broadcast %cst_200 : f32 to vector<8x8x128xf32>
    %253 = arith.maximumf %251, %252 : vector<8x8x128xf32>
    %254 = vector.shape_cast %253 : vector<8x8x128xf32> to vector<64x128xf32>
    %255 = arith.truncf %254 : vector<64x128xf32> to vector<64x128xbf16>
    %c0_201 = arith.constant 0 : index
    %c0_202 = arith.constant 0 : index
    %256 = vector.load %arg14[%c0_201, %c0_202] : memref<128x40xbf16, #tpu.memory_space<vmem>>, vector<128x40xbf16>
    %cst_203 = arith.constant dense<0.000000e+00> : vector<64x40xf32>
    %257 = tpu.matmul %255, %256, %cst_203 {dimension_numbers = #tpu.dot_dimension_numbers<[1], [0], [0], [1], [0, 0, 1, 1], [], []>} : vector<64x128xbf16>, vector<128x40xbf16>, vector<64x40xf32> -> vector<64x40xf32>
    %c0_204 = arith.constant 0 : index
    %c0_205 = arith.constant 0 : index
    %258 = vector.load %arg15[%c0_204, %c0_205] : memref<1x40xf32, #tpu.memory_space<vmem>>, vector<1x40xf32>
    %259 = vector.broadcast %258 : vector<1x40xf32> to vector<64x40xf32>
    %260 = arith.addf %257, %259 : vector<64x40xf32>
    %cst_206 = arith.constant 0.000000e+00 : f32
    %261 = vector.broadcast %cst_206 : f32 to vector<64x40xf32>
    %262 = arith.maximumf %260, %261 : vector<64x40xf32>
    %263 = vector.shape_cast %262 : vector<64x40xf32> to vector<8x8x40xf32>
    %c0_207 = arith.constant 0 : index
    %c0_208 = arith.constant 0 : index
    %c0_209 = arith.constant 0 : index
    %264 = vector.load %arg35[%c0_207, %c0_208, %c0_209] : memref<8x8x80xf32, #tpu.memory_space<vmem>>, vector<8x8x40xf32>
    tpu.vector_store %arg35[%c0_207, %c0_208, %c0_209], %263 {strides = array<i32>} : memref<8x8x80xf32, #tpu.memory_space<vmem>>, vector<8x8x40xf32>,
    %c0_210 = arith.constant 0 : index
    %c0_211 = arith.constant 0 : index
    %c40 = arith.constant 40 : index
    %265 = vector.load %arg35[%c0_210, %c0_211, %c40] : memref<8x8x80xf32, #tpu.memory_space<vmem>>, vector<8x8x40xf32>
    tpu.vector_store %arg35[%c0_210, %c0_211, %c40], %176 {strides = array<i32>} : memref<8x8x80xf32, #tpu.memory_space<vmem>>, vector<8x8x40xf32>,
    %c0_212 = arith.constant 0 : index
    %c0_213 = arith.constant 0 : index
    %c0_214 = arith.constant 0 : index
    %266 = vector.load %arg35[%c0_212, %c0_213, %c0_214] : memref<8x8x80xf32, #tpu.memory_space<vmem>>, vector<8x8x80xf32>
    %267 = vector.shape_cast %266 : vector<8x8x80xf32> to vector<64x80xf32>
    %268 = arith.truncf %267 : vector<64x80xf32> to vector<64x80xbf16>
    %c0_215 = arith.constant 0 : index
    %c0_216 = arith.constant 0 : index
    %269 = vector.load %arg16[%c0_215, %c0_216] : memref<80x128xbf16, #tpu.memory_space<vmem>>, vector<80x128xbf16>
    %cst_217 = arith.constant dense<0.000000e+00> : vector<64x128xf32>
    %270 = tpu.matmul %268, %269, %cst_217 {dimension_numbers = #tpu.dot_dimension_numbers<[1], [0], [0], [1], [0, 0, 1, 1], [], []>} : vector<64x80xbf16>, vector<80x128xbf16>, vector<64x128xf32> -> vector<64x128xf32>
    %c0_218 = arith.constant 0 : index
    %c0_219 = arith.constant 0 : index
    %271 = vector.load %arg17[%c0_218, %c0_219] : memref<1x128xf32, #tpu.memory_space<vmem>>, vector<1x128xf32>
    %272 = vector.broadcast %271 : vector<1x128xf32> to vector<64x128xf32>
    %273 = arith.addf %270, %272 : vector<64x128xf32>
    %cst_220 = arith.constant 0.000000e+00 : f32
    %274 = vector.broadcast %cst_220 : f32 to vector<64x128xf32>
    %275 = arith.maximumf %273, %274 : vector<64x128xf32>
    %276 = vector.shape_cast %275 : vector<64x128xf32> to vector<8x8x128xf32>
    %c0_221 = arith.constant 0 : index
    %c0_222 = arith.constant 0 : index
    %c0_223 = arith.constant 0 : index
    %277 = vector.load %arg18[%c0_221, %c0_222, %c0_223] : memref<9x8x128xf32, #tpu.memory_space<vmem>>, vector<9x8x128xf32>
    %c0_224 = arith.constant 0 : index
    %c0_225 = arith.constant 0 : index
    %278 = vector.load %arg19[%c0_224, %c0_225] : memref<1x128xf32, #tpu.memory_space<vmem>>, vector<1x128xf32>
    %c1_226 = arith.constant 1 : index
    %c8_227 = arith.constant 8 : index
    %c0_228 = arith.constant 0 : index
    %279 = vector.load %arg32[%c1_226, %c8_227, %c0_228] : memref<34x48x128xf32, #tpu.memory_space<vmem>>, vector<8x8x128xf32>
    tpu.vector_store %arg32[%c1_226, %c8_227, %c0_228], %276 {strides = array<i32>} : memref<34x48x128xf32, #tpu.memory_space<vmem>>, vector<8x8x128xf32>,
    %cst_229 = arith.constant 0.000000e+00 : f32
    %280 = vector.broadcast %cst_229 : f32 to vector<1x10x128xf32>
    %cst_230 = arith.constant 0.000000e+00 : f32
    %281 = vector.broadcast %cst_230 : f32 to vector<8x1x128xf32>
    %c0_231 = arith.constant 0 : index
    %c7_232 = arith.constant 7 : index
    %c0_233 = arith.constant 0 : index
    %282 = vector.load %arg32[%c0_231, %c7_232, %c0_233] : memref<34x48x128xf32, #tpu.memory_space<vmem>>, vector<1x10x128xf32>
    tpu.vector_store %arg32[%c0_231, %c7_232, %c0_233], %280 {strides = array<i32>} : memref<34x48x128xf32, #tpu.memory_space<vmem>>, vector<1x10x128xf32>,
    %c1_234 = arith.constant 1 : index
    %c7_235 = arith.constant 7 : index
    %c0_236 = arith.constant 0 : index
    %283 = vector.load %arg32[%c1_234, %c7_235, %c0_236] : memref<34x48x128xf32, #tpu.memory_space<vmem>>, vector<8x1x128xf32>
    tpu.vector_store %arg32[%c1_234, %c7_235, %c0_236], %281 {strides = array<i32>} : memref<34x48x128xf32, #tpu.memory_space<vmem>>, vector<8x1x128xf32>,
    %c9_237 = arith.constant 9 : index
    %c7_238 = arith.constant 7 : index
    %c0_239 = arith.constant 0 : index
    %284 = vector.load %arg32[%c9_237, %c7_238, %c0_239] : memref<34x48x128xf32, #tpu.memory_space<vmem>>, vector<1x10x128xf32>
    tpu.vector_store %arg32[%c9_237, %c7_238, %c0_239], %280 {strides = array<i32>} : memref<34x48x128xf32, #tpu.memory_space<vmem>>, vector<1x10x128xf32>,
    %c1_240 = arith.constant 1 : index
    %c16_241 = arith.constant 16 : index
    %c0_242 = arith.constant 0 : index
    %285 = vector.load %arg32[%c1_240, %c16_241, %c0_242] : memref<34x48x128xf32, #tpu.memory_space<vmem>>, vector<8x1x128xf32>
    tpu.vector_store %arg32[%c1_240, %c16_241, %c0_242], %281 {strides = array<i32>} : memref<34x48x128xf32, #tpu.memory_space<vmem>>, vector<8x1x128xf32>,
    %cst_243 = arith.constant 0.000000e+00 : f32
    %286 = vector.broadcast %cst_243 : f32 to vector<8x8x128xf32>
    %c0_244 = arith.constant 0 : index
    %c7_245 = arith.constant 7 : index
    %c0_246 = arith.constant 0 : index
    %287 = vector.load %arg32[%c0_244, %c7_245, %c0_246] : memref<34x48x128xf32, #tpu.memory_space<vmem>>, vector<8x8x128xf32>
    %288 = vector.extract_strided_slice %277 {offsets = [0, 0, 0], sizes = [1, 8, 128], strides = [1, 1, 1]} : vector<9x8x128xf32> to vector<1x8x128xf32>
    %289 = vector.shape_cast %288 : vector<1x8x128xf32> to vector<8x128xf32>
    %290 = vector.shape_cast %289 : vector<8x128xf32> to vector<1x8x128xf32>
    %291 = vector.broadcast %290 : vector<1x8x128xf32> to vector<8x8x128xf32>
    %292 = arith.mulf %287, %291 : vector<8x8x128xf32>
    %293 = arith.addf %286, %292 : vector<8x8x128xf32>
    %c0_247 = arith.constant 0 : index
    %c8_248 = arith.constant 8 : index
    %c0_249 = arith.constant 0 : index
    %294 = vector.load %arg32[%c0_247, %c8_248, %c0_249] : memref<34x48x128xf32, #tpu.memory_space<vmem>>, vector<8x8x128xf32>
    %295 = vector.extract_strided_slice %277 {offsets = [1, 0, 0], sizes = [1, 8, 128], strides = [1, 1, 1]} : vector<9x8x128xf32> to vector<1x8x128xf32>
    %296 = vector.shape_cast %295 : vector<1x8x128xf32> to vector<8x128xf32>
    %297 = vector.shape_cast %296 : vector<8x128xf32> to vector<1x8x128xf32>
    %298 = vector.broadcast %297 : vector<1x8x128xf32> to vector<8x8x128xf32>
    %299 = arith.mulf %294, %298 : vector<8x8x128xf32>
    %300 = arith.addf %293, %299 : vector<8x8x128xf32>
    %c0_250 = arith.constant 0 : index
    %c9_251 = arith.constant 9 : index
    %c0_252 = arith.constant 0 : index
    %301 = vector.load %arg32[%c0_250, %c9_251, %c0_252] : memref<34x48x128xf32, #tpu.memory_space<vmem>>, vector<8x8x128xf32>
    %302 = vector.extract_strided_slice %277 {offsets = [2, 0, 0], sizes = [1, 8, 128], strides = [1, 1, 1]} : vector<9x8x128xf32> to vector<1x8x128xf32>
    %303 = vector.shape_cast %302 : vector<1x8x128xf32> to vector<8x128xf32>
    %304 = vector.shape_cast %303 : vector<8x128xf32> to vector<1x8x128xf32>
    %305 = vector.broadcast %304 : vector<1x8x128xf32> to vector<8x8x128xf32>
    %306 = arith.mulf %301, %305 : vector<8x8x128xf32>
    %307 = arith.addf %300, %306 : vector<8x8x128xf32>
    %c1_253 = arith.constant 1 : index
    %c7_254 = arith.constant 7 : index
    %c0_255 = arith.constant 0 : index
    %308 = vector.load %arg32[%c1_253, %c7_254, %c0_255] : memref<34x48x128xf32, #tpu.memory_space<vmem>>, vector<8x8x128xf32>
    %309 = vector.extract_strided_slice %277 {offsets = [3, 0, 0], sizes = [1, 8, 128], strides = [1, 1, 1]} : vector<9x8x128xf32> to vector<1x8x128xf32>
    %310 = vector.shape_cast %309 : vector<1x8x128xf32> to vector<8x128xf32>
    %311 = vector.shape_cast %310 : vector<8x128xf32> to vector<1x8x128xf32>
    %312 = vector.broadcast %311 : vector<1x8x128xf32> to vector<8x8x128xf32>
    %313 = arith.mulf %308, %312 : vector<8x8x128xf32>
    %314 = arith.addf %307, %313 : vector<8x8x128xf32>
    %c1_256 = arith.constant 1 : index
    %c8_257 = arith.constant 8 : index
    %c0_258 = arith.constant 0 : index
    %315 = vector.load %arg32[%c1_256, %c8_257, %c0_258] : memref<34x48x128xf32, #tpu.memory_space<vmem>>, vector<8x8x128xf32>
    %316 = vector.extract_strided_slice %277 {offsets = [4, 0, 0], sizes = [1, 8, 128], strides = [1, 1, 1]} : vector<9x8x128xf32> to vector<1x8x128xf32>
    %317 = vector.shape_cast %316 : vector<1x8x128xf32> to vector<8x128xf32>
    %318 = vector.shape_cast %317 : vector<8x128xf32> to vector<1x8x128xf32>
    %319 = vector.broadcast %318 : vector<1x8x128xf32> to vector<8x8x128xf32>
    %320 = arith.mulf %315, %319 : vector<8x8x128xf32>
    %321 = arith.addf %314, %320 : vector<8x8x128xf32>
    %c1_259 = arith.constant 1 : index
    %c9_260 = arith.constant 9 : index
    %c0_261 = arith.constant 0 : index
    %322 = vector.load %arg32[%c1_259, %c9_260, %c0_261] : memref<34x48x128xf32, #tpu.memory_space<vmem>>, vector<8x8x128xf32>
    %323 = vector.extract_strided_slice %277 {offsets = [5, 0, 0], sizes = [1, 8, 128], strides = [1, 1, 1]} : vector<9x8x128xf32> to vector<1x8x128xf32>
    %324 = vector.shape_cast %323 : vector<1x8x128xf32> to vector<8x128xf32>
    %325 = vector.shape_cast %324 : vector<8x128xf32> to vector<1x8x128xf32>
    %326 = vector.broadcast %325 : vector<1x8x128xf32> to vector<8x8x128xf32>
    %327 = arith.mulf %322, %326 : vector<8x8x128xf32>
    %328 = arith.addf %321, %327 : vector<8x8x128xf32>
    %c2_262 = arith.constant 2 : index
    %c7_263 = arith.constant 7 : index
    %c0_264 = arith.constant 0 : index
    %329 = vector.load %arg32[%c2_262, %c7_263, %c0_264] : memref<34x48x128xf32, #tpu.memory_space<vmem>>, vector<8x8x128xf32>
    %330 = vector.extract_strided_slice %277 {offsets = [6, 0, 0], sizes = [1, 8, 128], strides = [1, 1, 1]} : vector<9x8x128xf32> to vector<1x8x128xf32>
    %331 = vector.shape_cast %330 : vector<1x8x128xf32> to vector<8x128xf32>
    %332 = vector.shape_cast %331 : vector<8x128xf32> to vector<1x8x128xf32>
    %333 = vector.broadcast %332 : vector<1x8x128xf32> to vector<8x8x128xf32>
    %334 = arith.mulf %329, %333 : vector<8x8x128xf32>
    %335 = arith.addf %328, %334 : vector<8x8x128xf32>
    %c2_265 = arith.constant 2 : index
    %c8_266 = arith.constant 8 : index
    %c0_267 = arith.constant 0 : index
    %336 = vector.load %arg32[%c2_265, %c8_266, %c0_267] : memref<34x48x128xf32, #tpu.memory_space<vmem>>, vector<8x8x128xf32>
    %337 = vector.extract_strided_slice %277 {offsets = [7, 0, 0], sizes = [1, 8, 128], strides = [1, 1, 1]} : vector<9x8x128xf32> to vector<1x8x128xf32>
    %338 = vector.shape_cast %337 : vector<1x8x128xf32> to vector<8x128xf32>
    %339 = vector.shape_cast %338 : vector<8x128xf32> to vector<1x8x128xf32>
    %340 = vector.broadcast %339 : vector<1x8x128xf32> to vector<8x8x128xf32>
    %341 = arith.mulf %336, %340 : vector<8x8x128xf32>
    %342 = arith.addf %335, %341 : vector<8x8x128xf32>
    %c2_268 = arith.constant 2 : index
    %c9_269 = arith.constant 9 : index
    %c0_270 = arith.constant 0 : index
    %343 = vector.load %arg32[%c2_268, %c9_269, %c0_270] : memref<34x48x128xf32, #tpu.memory_space<vmem>>, vector<8x8x128xf32>
    %344 = vector.extract_strided_slice %277 {offsets = [8, 0, 0], sizes = [1, 8, 128], strides = [1, 1, 1]} : vector<9x8x128xf32> to vector<1x8x128xf32>
    %345 = vector.shape_cast %344 : vector<1x8x128xf32> to vector<8x128xf32>
    %346 = vector.shape_cast %345 : vector<8x128xf32> to vector<1x8x128xf32>
    %347 = vector.broadcast %346 : vector<1x8x128xf32> to vector<8x8x128xf32>
    %348 = arith.mulf %343, %347 : vector<8x8x128xf32>
    %349 = arith.addf %342, %348 : vector<8x8x128xf32>
    %350 = vector.shape_cast %278 : vector<1x128xf32> to vector<1x1x128xf32>
    %351 = vector.broadcast %350 : vector<1x1x128xf32> to vector<8x8x128xf32>
    %352 = arith.addf %349, %351 : vector<8x8x128xf32>
    %cst_271 = arith.constant 0.000000e+00 : f32
    %353 = vector.broadcast %cst_271 : f32 to vector<8x8x128xf32>
    %354 = arith.maximumf %352, %353 : vector<8x8x128xf32>
    %355 = vector.shape_cast %354 : vector<8x8x128xf32> to vector<64x128xf32>
    %356 = arith.truncf %355 : vector<64x128xf32> to vector<64x128xbf16>
    %c0_272 = arith.constant 0 : index
    %c0_273 = arith.constant 0 : index
    %357 = vector.load %arg20[%c0_272, %c0_273] : memref<128x80xbf16, #tpu.memory_space<vmem>>, vector<128x80xbf16>
    %cst_274 = arith.constant dense<0.000000e+00> : vector<64x80xf32>
    %358 = tpu.matmul %356, %357, %cst_274 {dimension_numbers = #tpu.dot_dimension_numbers<[1], [0], [0], [1], [0, 0, 1, 1], [], []>} : vector<64x128xbf16>, vector<128x80xbf16>, vector<64x80xf32> -> vector<64x80xf32>
    %c0_275 = arith.constant 0 : index
    %c0_276 = arith.constant 0 : index
    %359 = vector.load %arg21[%c0_275, %c0_276] : memref<1x80xf32, #tpu.memory_space<vmem>>, vector<1x80xf32>
    %360 = vector.broadcast %359 : vector<1x80xf32> to vector<64x80xf32>
    %361 = arith.addf %358, %360 : vector<64x80xf32>
    %362 = arith.addf %361, %267 : vector<64x80xf32>
    %cst_277 = arith.constant 0.000000e+00 : f32
    %363 = vector.broadcast %cst_277 : f32 to vector<64x80xf32>
    %364 = arith.maximumf %362, %363 : vector<64x80xf32>
    %365 = vector.shape_cast %364 : vector<64x80xf32> to vector<8x8x80xf32>
    %366 = arith.truncf %364 : vector<64x80xf32> to vector<64x80xbf16>
    %c0_278 = arith.constant 0 : index
    %c0_279 = arith.constant 0 : index
    %367 = vector.load %arg22[%c0_278, %c0_279] : memref<80x128xbf16, #tpu.memory_space<vmem>>, vector<80x128xbf16>
    %cst_280 = arith.constant dense<0.000000e+00> : vector<64x128xf32>
    %368 = tpu.matmul %366, %367, %cst_280 {dimension_numbers = #tpu.dot_dimension_numbers<[1], [0], [0], [1], [0, 0, 1, 1], [], []>} : vector<64x80xbf16>, vector<80x128xbf16>, vector<64x128xf32> -> vector<64x128xf32>
    %c0_281 = arith.constant 0 : index
    %c0_282 = arith.constant 0 : index
    %369 = vector.load %arg23[%c0_281, %c0_282] : memref<1x128xf32, #tpu.memory_space<vmem>>, vector<1x128xf32>
    %370 = vector.broadcast %369 : vector<1x128xf32> to vector<64x128xf32>
    %371 = arith.addf %368, %370 : vector<64x128xf32>
    %cst_283 = arith.constant 0.000000e+00 : f32
    %372 = vector.broadcast %cst_283 : f32 to vector<64x128xf32>
    %373 = arith.maximumf %371, %372 : vector<64x128xf32>
    %c1_284 = arith.constant 1 : index
    %c8_285 = arith.constant 8 : index
    %c0_286 = arith.constant 0 : index
    %374 = vector.load %arg33[%c1_284, %c8_285, %c0_286] : memref<34x48x128xf32, #tpu.memory_space<vmem>>, vector<8x8x80xf32>
    tpu.vector_store %arg33[%c1_284, %c8_285, %c0_286], %365 {strides = array<i32>} : memref<34x48x128xf32, #tpu.memory_space<vmem>>, vector<8x8x80xf32>,
    %cst_287 = arith.constant 0.000000e+00 : f32
    %375 = vector.broadcast %cst_287 : f32 to vector<1x10x128xf32>
    %cst_288 = arith.constant 0.000000e+00 : f32
    %376 = vector.broadcast %cst_288 : f32 to vector<8x1x128xf32>
    %c0_289 = arith.constant 0 : index
    %c7_290 = arith.constant 7 : index
    %c0_291 = arith.constant 0 : index
    %377 = vector.load %arg33[%c0_289, %c7_290, %c0_291] : memref<34x48x128xf32, #tpu.memory_space<vmem>>, vector<1x10x128xf32>
    tpu.vector_store %arg33[%c0_289, %c7_290, %c0_291], %375 {strides = array<i32>} : memref<34x48x128xf32, #tpu.memory_space<vmem>>, vector<1x10x128xf32>,
    %c1_292 = arith.constant 1 : index
    %c7_293 = arith.constant 7 : index
    %c0_294 = arith.constant 0 : index
    %378 = vector.load %arg33[%c1_292, %c7_293, %c0_294] : memref<34x48x128xf32, #tpu.memory_space<vmem>>, vector<8x1x128xf32>
    tpu.vector_store %arg33[%c1_292, %c7_293, %c0_294], %376 {strides = array<i32>} : memref<34x48x128xf32, #tpu.memory_space<vmem>>, vector<8x1x128xf32>,
    %cst_295 = arith.constant 0.000000e+00 : f32
    %379 = vector.broadcast %cst_295 : f32 to vector<4x4x128xf32>
    %c0_296 = arith.constant 0 : index
    %c7_297 = arith.constant 7 : index
    %c0_298 = arith.constant 0 : index
    %380 = tpu.strided_load %arg33[%c0_296, %c7_297, %c0_298] {strides = array<i32: 2, 2, 1>} : memref<34x48x128xf32, #tpu.memory_space<vmem>>, vector<4x4x128xf32>
    %381 = arith.addf %379, %380 : vector<4x4x128xf32>
    %c0_299 = arith.constant 0 : index
    %c8_300 = arith.constant 8 : index
    %c0_301 = arith.constant 0 : index
    %382 = tpu.strided_load %arg33[%c0_299, %c8_300, %c0_301] {strides = array<i32: 2, 2, 1>} : memref<34x48x128xf32, #tpu.memory_space<vmem>>, vector<4x4x128xf32>
    %383 = arith.addf %381, %382 : vector<4x4x128xf32>
    %c0_302 = arith.constant 0 : index
    %c9_303 = arith.constant 9 : index
    %c0_304 = arith.constant 0 : index
    %384 = tpu.strided_load %arg33[%c0_302, %c9_303, %c0_304] {strides = array<i32: 2, 2, 1>} : memref<34x48x128xf32, #tpu.memory_space<vmem>>, vector<4x4x128xf32>
    %385 = arith.addf %383, %384 : vector<4x4x128xf32>
    %c1_305 = arith.constant 1 : index
    %c7_306 = arith.constant 7 : index
    %c0_307 = arith.constant 0 : index
    %386 = tpu.strided_load %arg33[%c1_305, %c7_306, %c0_307] {strides = array<i32: 2, 2, 1>} : memref<34x48x128xf32, #tpu.memory_space<vmem>>, vector<4x4x128xf32>
    %387 = arith.addf %385, %386 : vector<4x4x128xf32>
    %c1_308 = arith.constant 1 : index
    %c8_309 = arith.constant 8 : index
    %c0_310 = arith.constant 0 : index
    %388 = tpu.strided_load %arg33[%c1_308, %c8_309, %c0_310] {strides = array<i32: 2, 2, 1>} : memref<34x48x128xf32, #tpu.memory_space<vmem>>, vector<4x4x128xf32>
    %389 = arith.addf %387, %388 : vector<4x4x128xf32>
    %c1_311 = arith.constant 1 : index
    %c9_312 = arith.constant 9 : index
    %c0_313 = arith.constant 0 : index
    %390 = tpu.strided_load %arg33[%c1_311, %c9_312, %c0_313] {strides = array<i32: 2, 2, 1>} : memref<34x48x128xf32, #tpu.memory_space<vmem>>, vector<4x4x128xf32>
    %391 = arith.addf %389, %390 : vector<4x4x128xf32>
    %c2_314 = arith.constant 2 : index
    %c7_315 = arith.constant 7 : index
    %c0_316 = arith.constant 0 : index
    %392 = tpu.strided_load %arg33[%c2_314, %c7_315, %c0_316] {strides = array<i32: 2, 2, 1>} : memref<34x48x128xf32, #tpu.memory_space<vmem>>, vector<4x4x128xf32>
    %393 = arith.addf %391, %392 : vector<4x4x128xf32>
    %c2_317 = arith.constant 2 : index
    %c8_318 = arith.constant 8 : index
    %c0_319 = arith.constant 0 : index
    %394 = tpu.strided_load %arg33[%c2_317, %c8_318, %c0_319] {strides = array<i32: 2, 2, 1>} : memref<34x48x128xf32, #tpu.memory_space<vmem>>, vector<4x4x128xf32>
    %395 = arith.addf %393, %394 : vector<4x4x128xf32>
    %c2_320 = arith.constant 2 : index
    %c9_321 = arith.constant 9 : index
    %c0_322 = arith.constant 0 : index
    %396 = tpu.strided_load %arg33[%c2_320, %c9_321, %c0_322] {strides = array<i32: 2, 2, 1>} : memref<34x48x128xf32, #tpu.memory_space<vmem>>, vector<4x4x128xf32>
    %397 = arith.addf %395, %396 : vector<4x4x128xf32>
    %cst_323 = arith.constant 0.111111112 : f32
    %398 = vector.broadcast %cst_323 : f32 to vector<4x4x128xf32>
    %399 = arith.mulf %397, %398 : vector<4x4x128xf32>
    %cst_324 = arith.constant 0.000000e+00 : f32
    %400 = vector.broadcast %cst_324 : f32 to vector<4x4x128xf32>
    %401 = arith.maximumf %399, %400 : vector<4x4x128xf32>
    %402 = vector.extract_strided_slice %401 {offsets = [0, 0, 0], sizes = [4, 4, 80], strides = [1, 1, 1]} : vector<4x4x128xf32> to vector<4x4x80xf32>
    %403 = vector.shape_cast %373 : vector<64x128xf32> to vector<8x8x128xf32>
    %c0_325 = arith.constant 0 : index
    %c0_326 = arith.constant 0 : index
    %c0_327 = arith.constant 0 : index
    %404 = vector.load %arg24[%c0_325, %c0_326, %c0_327] : memref<9x4x128xf32, #tpu.memory_space<vmem>>, vector<9x4x128xf32>
    %c0_328 = arith.constant 0 : index
    %c0_329 = arith.constant 0 : index
    %405 = vector.load %arg25[%c0_328, %c0_329] : memref<1x128xf32, #tpu.memory_space<vmem>>, vector<1x128xf32>
    %c1_330 = arith.constant 1 : index
    %c8_331 = arith.constant 8 : index
    %c0_332 = arith.constant 0 : index
    %406 = vector.load %arg32[%c1_330, %c8_331, %c0_332] : memref<34x48x128xf32, #tpu.memory_space<vmem>>, vector<8x8x128xf32>
    tpu.vector_store %arg32[%c1_330, %c8_331, %c0_332], %403 {strides = array<i32>} : memref<34x48x128xf32, #tpu.memory_space<vmem>>, vector<8x8x128xf32>,
    %cst_333 = arith.constant 0.000000e+00 : f32
    %407 = vector.broadcast %cst_333 : f32 to vector<1x10x128xf32>
    %cst_334 = arith.constant 0.000000e+00 : f32
    %408 = vector.broadcast %cst_334 : f32 to vector<8x1x128xf32>
    %c0_335 = arith.constant 0 : index
    %c7_336 = arith.constant 7 : index
    %c0_337 = arith.constant 0 : index
    %409 = vector.load %arg32[%c0_335, %c7_336, %c0_337] : memref<34x48x128xf32, #tpu.memory_space<vmem>>, vector<1x10x128xf32>
    tpu.vector_store %arg32[%c0_335, %c7_336, %c0_337], %407 {strides = array<i32>} : memref<34x48x128xf32, #tpu.memory_space<vmem>>, vector<1x10x128xf32>,
    %c1_338 = arith.constant 1 : index
    %c7_339 = arith.constant 7 : index
    %c0_340 = arith.constant 0 : index
    %410 = vector.load %arg32[%c1_338, %c7_339, %c0_340] : memref<34x48x128xf32, #tpu.memory_space<vmem>>, vector<8x1x128xf32>
    tpu.vector_store %arg32[%c1_338, %c7_339, %c0_340], %408 {strides = array<i32>} : memref<34x48x128xf32, #tpu.memory_space<vmem>>, vector<8x1x128xf32>,
    %cst_341 = arith.constant 0.000000e+00 : f32
    %411 = vector.broadcast %cst_341 : f32 to vector<4x4x128xf32>
    %c0_342 = arith.constant 0 : index
    %c7_343 = arith.constant 7 : index
    %c0_344 = arith.constant 0 : index
    %412 = tpu.strided_load %arg32[%c0_342, %c7_343, %c0_344] {strides = array<i32: 2, 2, 1>} : memref<34x48x128xf32, #tpu.memory_space<vmem>>, vector<4x4x128xf32>
    %413 = vector.extract_strided_slice %404 {offsets = [0, 0, 0], sizes = [1, 4, 128], strides = [1, 1, 1]} : vector<9x4x128xf32> to vector<1x4x128xf32>
    %414 = vector.shape_cast %413 : vector<1x4x128xf32> to vector<4x128xf32>
    %415 = vector.shape_cast %414 : vector<4x128xf32> to vector<1x4x128xf32>
    %416 = vector.broadcast %415 : vector<1x4x128xf32> to vector<4x4x128xf32>
    %417 = arith.mulf %412, %416 : vector<4x4x128xf32>
    %418 = arith.addf %411, %417 : vector<4x4x128xf32>
    %c0_345 = arith.constant 0 : index
    %c8_346 = arith.constant 8 : index
    %c0_347 = arith.constant 0 : index
    %419 = tpu.strided_load %arg32[%c0_345, %c8_346, %c0_347] {strides = array<i32: 2, 2, 1>} : memref<34x48x128xf32, #tpu.memory_space<vmem>>, vector<4x4x128xf32>
    %420 = vector.extract_strided_slice %404 {offsets = [1, 0, 0], sizes = [1, 4, 128], strides = [1, 1, 1]} : vector<9x4x128xf32> to vector<1x4x128xf32>
    %421 = vector.shape_cast %420 : vector<1x4x128xf32> to vector<4x128xf32>
    %422 = vector.shape_cast %421 : vector<4x128xf32> to vector<1x4x128xf32>
    %423 = vector.broadcast %422 : vector<1x4x128xf32> to vector<4x4x128xf32>
    %424 = arith.mulf %419, %423 : vector<4x4x128xf32>
    %425 = arith.addf %418, %424 : vector<4x4x128xf32>
    %c0_348 = arith.constant 0 : index
    %c9_349 = arith.constant 9 : index
    %c0_350 = arith.constant 0 : index
    %426 = tpu.strided_load %arg32[%c0_348, %c9_349, %c0_350] {strides = array<i32: 2, 2, 1>} : memref<34x48x128xf32, #tpu.memory_space<vmem>>, vector<4x4x128xf32>
    %427 = vector.extract_strided_slice %404 {offsets = [2, 0, 0], sizes = [1, 4, 128], strides = [1, 1, 1]} : vector<9x4x128xf32> to vector<1x4x128xf32>
    %428 = vector.shape_cast %427 : vector<1x4x128xf32> to vector<4x128xf32>
    %429 = vector.shape_cast %428 : vector<4x128xf32> to vector<1x4x128xf32>
    %430 = vector.broadcast %429 : vector<1x4x128xf32> to vector<4x4x128xf32>
    %431 = arith.mulf %426, %430 : vector<4x4x128xf32>
    %432 = arith.addf %425, %431 : vector<4x4x128xf32>
    %c1_351 = arith.constant 1 : index
    %c7_352 = arith.constant 7 : index
    %c0_353 = arith.constant 0 : index
    %433 = tpu.strided_load %arg32[%c1_351, %c7_352, %c0_353] {strides = array<i32: 2, 2, 1>} : memref<34x48x128xf32, #tpu.memory_space<vmem>>, vector<4x4x128xf32>
    %434 = vector.extract_strided_slice %404 {offsets = [3, 0, 0], sizes = [1, 4, 128], strides = [1, 1, 1]} : vector<9x4x128xf32> to vector<1x4x128xf32>
    %435 = vector.shape_cast %434 : vector<1x4x128xf32> to vector<4x128xf32>
    %436 = vector.shape_cast %435 : vector<4x128xf32> to vector<1x4x128xf32>
    %437 = vector.broadcast %436 : vector<1x4x128xf32> to vector<4x4x128xf32>
    %438 = arith.mulf %433, %437 : vector<4x4x128xf32>
    %439 = arith.addf %432, %438 : vector<4x4x128xf32>
    %c1_354 = arith.constant 1 : index
    %c8_355 = arith.constant 8 : index
    %c0_356 = arith.constant 0 : index
    %440 = tpu.strided_load %arg32[%c1_354, %c8_355, %c0_356] {strides = array<i32: 2, 2, 1>} : memref<34x48x128xf32, #tpu.memory_space<vmem>>, vector<4x4x128xf32>
    %441 = vector.extract_strided_slice %404 {offsets = [4, 0, 0], sizes = [1, 4, 128], strides = [1, 1, 1]} : vector<9x4x128xf32> to vector<1x4x128xf32>
    %442 = vector.shape_cast %441 : vector<1x4x128xf32> to vector<4x128xf32>
    %443 = vector.shape_cast %442 : vector<4x128xf32> to vector<1x4x128xf32>
    %444 = vector.broadcast %443 : vector<1x4x128xf32> to vector<4x4x128xf32>
    %445 = arith.mulf %440, %444 : vector<4x4x128xf32>
    %446 = arith.addf %439, %445 : vector<4x4x128xf32>
    %c1_357 = arith.constant 1 : index
    %c9_358 = arith.constant 9 : index
    %c0_359 = arith.constant 0 : index
    %447 = tpu.strided_load %arg32[%c1_357, %c9_358, %c0_359] {strides = array<i32: 2, 2, 1>} : memref<34x48x128xf32, #tpu.memory_space<vmem>>, vector<4x4x128xf32>
    %448 = vector.extract_strided_slice %404 {offsets = [5, 0, 0], sizes = [1, 4, 128], strides = [1, 1, 1]} : vector<9x4x128xf32> to vector<1x4x128xf32>
    %449 = vector.shape_cast %448 : vector<1x4x128xf32> to vector<4x128xf32>
    %450 = vector.shape_cast %449 : vector<4x128xf32> to vector<1x4x128xf32>
    %451 = vector.broadcast %450 : vector<1x4x128xf32> to vector<4x4x128xf32>
    %452 = arith.mulf %447, %451 : vector<4x4x128xf32>
    %453 = arith.addf %446, %452 : vector<4x4x128xf32>
    %c2_360 = arith.constant 2 : index
    %c7_361 = arith.constant 7 : index
    %c0_362 = arith.constant 0 : index
    %454 = tpu.strided_load %arg32[%c2_360, %c7_361, %c0_362] {strides = array<i32: 2, 2, 1>} : memref<34x48x128xf32, #tpu.memory_space<vmem>>, vector<4x4x128xf32>
    %455 = vector.extract_strided_slice %404 {offsets = [6, 0, 0], sizes = [1, 4, 128], strides = [1, 1, 1]} : vector<9x4x128xf32> to vector<1x4x128xf32>
    %456 = vector.shape_cast %455 : vector<1x4x128xf32> to vector<4x128xf32>
    %457 = vector.shape_cast %456 : vector<4x128xf32> to vector<1x4x128xf32>
    %458 = vector.broadcast %457 : vector<1x4x128xf32> to vector<4x4x128xf32>
    %459 = arith.mulf %454, %458 : vector<4x4x128xf32>
    %460 = arith.addf %453, %459 : vector<4x4x128xf32>
    %c2_363 = arith.constant 2 : index
    %c8_364 = arith.constant 8 : index
    %c0_365 = arith.constant 0 : index
    %461 = tpu.strided_load %arg32[%c2_363, %c8_364, %c0_365] {strides = array<i32: 2, 2, 1>} : memref<34x48x128xf32, #tpu.memory_space<vmem>>, vector<4x4x128xf32>
    %462 = vector.extract_strided_slice %404 {offsets = [7, 0, 0], sizes = [1, 4, 128], strides = [1, 1, 1]} : vector<9x4x128xf32> to vector<1x4x128xf32>
    %463 = vector.shape_cast %462 : vector<1x4x128xf32> to vector<4x128xf32>
    %464 = vector.shape_cast %463 : vector<4x128xf32> to vector<1x4x128xf32>
    %465 = vector.broadcast %464 : vector<1x4x128xf32> to vector<4x4x128xf32>
    %466 = arith.mulf %461, %465 : vector<4x4x128xf32>
    %467 = arith.addf %460, %466 : vector<4x4x128xf32>
    %c2_366 = arith.constant 2 : index
    %c9_367 = arith.constant 9 : index
    %c0_368 = arith.constant 0 : index
    %468 = tpu.strided_load %arg32[%c2_366, %c9_367, %c0_368] {strides = array<i32: 2, 2, 1>} : memref<34x48x128xf32, #tpu.memory_space<vmem>>, vector<4x4x128xf32>
    %469 = vector.extract_strided_slice %404 {offsets = [8, 0, 0], sizes = [1, 4, 128], strides = [1, 1, 1]} : vector<9x4x128xf32> to vector<1x4x128xf32>
    %470 = vector.shape_cast %469 : vector<1x4x128xf32> to vector<4x128xf32>
    %471 = vector.shape_cast %470 : vector<4x128xf32> to vector<1x4x128xf32>
    %472 = vector.broadcast %471 : vector<1x4x128xf32> to vector<4x4x128xf32>
    %473 = arith.mulf %468, %472 : vector<4x4x128xf32>
    %474 = arith.addf %467, %473 : vector<4x4x128xf32>
    %475 = vector.shape_cast %405 : vector<1x128xf32> to vector<1x1x128xf32>
    %476 = vector.broadcast %475 : vector<1x1x128xf32> to vector<4x4x128xf32>
    %477 = arith.addf %474, %476 : vector<4x4x128xf32>
    %cst_369 = arith.constant 0.000000e+00 : f32
    %478 = vector.broadcast %cst_369 : f32 to vector<4x4x128xf32>
    %479 = arith.maximumf %477, %478 : vector<4x4x128xf32>
    %480 = vector.extract_strided_slice %479 {offsets = [0, 0, 0], sizes = [1, 4, 128], strides = [1, 1, 1]} : vector<4x4x128xf32> to vector<1x4x128xf32>
    %481 = vector.shape_cast %480 : vector<1x4x128xf32> to vector<4x128xf32>
    %c0_370 = arith.constant 0 : index
    %c0_371 = arith.constant 0 : index
    %c0_372 = arith.constant 0 : index
    %482 = vector.load %arg32[%c0_370, %c0_371, %c0_372] : memref<34x48x128xf32, #tpu.memory_space<vmem>>, vector<1x4x128xf32>
    %483 = vector.shape_cast %482 : vector<1x4x128xf32> to vector<4x128xf32>
    %484 = vector.shape_cast %481 : vector<4x128xf32> to vector<1x4x128xf32>
    tpu.vector_store %arg32[%c0_370, %c0_371, %c0_372], %484 {strides = array<i32>} : memref<34x48x128xf32, #tpu.memory_space<vmem>>, vector<1x4x128xf32>,
    %485 = vector.extract_strided_slice %479 {offsets = [1, 0, 0], sizes = [1, 4, 128], strides = [1, 1, 1]} : vector<4x4x128xf32> to vector<1x4x128xf32>
    %486 = vector.shape_cast %485 : vector<1x4x128xf32> to vector<4x128xf32>
    %c0_373 = arith.constant 0 : index
    %c4 = arith.constant 4 : index
    %c0_374 = arith.constant 0 : index
    %487 = vector.load %arg32[%c0_373, %c4, %c0_374] : memref<34x48x128xf32, #tpu.memory_space<vmem>>, vector<1x4x128xf32>
    %488 = vector.shape_cast %487 : vector<1x4x128xf32> to vector<4x128xf32>
    %489 = vector.shape_cast %486 : vector<4x128xf32> to vector<1x4x128xf32>
    tpu.vector_store %arg32[%c0_373, %c4, %c0_374], %489 {strides = array<i32>} : memref<34x48x128xf32, #tpu.memory_space<vmem>>, vector<1x4x128xf32>,
    %490 = vector.extract_strided_slice %479 {offsets = [2, 0, 0], sizes = [1, 4, 128], strides = [1, 1, 1]} : vector<4x4x128xf32> to vector<1x4x128xf32>
    %491 = vector.shape_cast %490 : vector<1x4x128xf32> to vector<4x128xf32>
    %c0_375 = arith.constant 0 : index
    %c8_376 = arith.constant 8 : index
    %c0_377 = arith.constant 0 : index
    %492 = vector.load %arg32[%c0_375, %c8_376, %c0_377] : memref<34x48x128xf32, #tpu.memory_space<vmem>>, vector<1x4x128xf32>
    %493 = vector.shape_cast %492 : vector<1x4x128xf32> to vector<4x128xf32>
    %494 = vector.shape_cast %491 : vector<4x128xf32> to vector<1x4x128xf32>
    tpu.vector_store %arg32[%c0_375, %c8_376, %c0_377], %494 {strides = array<i32>} : memref<34x48x128xf32, #tpu.memory_space<vmem>>, vector<1x4x128xf32>,
    %495 = vector.extract_strided_slice %479 {offsets = [3, 0, 0], sizes = [1, 4, 128], strides = [1, 1, 1]} : vector<4x4x128xf32> to vector<1x4x128xf32>
    %496 = vector.shape_cast %495 : vector<1x4x128xf32> to vector<4x128xf32>
    %c0_378 = arith.constant 0 : index
    %c12 = arith.constant 12 : index
    %c0_379 = arith.constant 0 : index
    %497 = vector.load %arg32[%c0_378, %c12, %c0_379] : memref<34x48x128xf32, #tpu.memory_space<vmem>>, vector<1x4x128xf32>
    %498 = vector.shape_cast %497 : vector<1x4x128xf32> to vector<4x128xf32>
    %499 = vector.shape_cast %496 : vector<4x128xf32> to vector<1x4x128xf32>
    tpu.vector_store %arg32[%c0_378, %c12, %c0_379], %499 {strides = array<i32>} : memref<34x48x128xf32, #tpu.memory_space<vmem>>, vector<1x4x128xf32>,
    %c0_380 = arith.constant 0 : index
    %c0_381 = arith.constant 0 : index
    %c0_382 = arith.constant 0 : index
    %500 = vector.load %arg32[%c0_380, %c0_381, %c0_382] : memref<34x48x128xf32, #tpu.memory_space<vmem>>, vector<1x16x128xf32>
    %501 = vector.shape_cast %500 : vector<1x16x128xf32> to vector<16x128xf32>
    %502 = arith.truncf %501 : vector<16x128xf32> to vector<16x128xbf16>
    %c0_383 = arith.constant 0 : index
    %c0_384 = arith.constant 0 : index
    %503 = vector.load %arg26[%c0_383, %c0_384] : memref<128x80xbf16, #tpu.memory_space<vmem>>, vector<128x80xbf16>
    %cst_385 = arith.constant dense<0.000000e+00> : vector<16x80xf32>
    %504 = tpu.matmul %502, %503, %cst_385 {dimension_numbers = #tpu.dot_dimension_numbers<[1], [0], [0], [1], [0, 0, 1, 1], [], []>} : vector<16x128xbf16>, vector<128x80xbf16>, vector<16x80xf32> -> vector<16x80xf32>
    %c0_386 = arith.constant 0 : index
    %c0_387 = arith.constant 0 : index
    %505 = vector.load %arg27[%c0_386, %c0_387] : memref<1x80xf32, #tpu.memory_space<vmem>>, vector<1x80xf32>
    %506 = vector.broadcast %505 : vector<1x80xf32> to vector<16x80xf32>
    %507 = arith.addf %504, %506 : vector<16x80xf32>
    %cst_388 = arith.constant 0.000000e+00 : f32
    %508 = vector.broadcast %cst_388 : f32 to vector<16x80xf32>
    %509 = arith.maximumf %507, %508 : vector<16x80xf32>
    %c0_389 = arith.constant 0 : index
    %c0_390 = arith.constant 0 : index
    %510 = vector.load %arg30[%c0_389, %c0_390] : memref<1x10xf32, #tpu.memory_space<vmem>>, vector<1x10xf32>
    %cst_391 = arith.constant dense<0.000000e+00> : vector<80xf32>
    %511 = vector.multi_reduction <add>, %509, %cst_391 [0] : vector<16x80xf32> to vector<80xf32>
    %512 = vector.shape_cast %511 : vector<80xf32> to vector<1x80xf32>
    %cst_392 = arith.constant 6.250000e-02 : f32
    %513 = vector.broadcast %cst_392 : f32 to vector<1x80xf32>
    %514 = arith.mulf %512, %513 : vector<1x80xf32>
    %c0_393 = arith.constant 0 : index
    %c0_394 = arith.constant 0 : index
    %515 = vector.load %arg28[%c0_393, %c0_394] : memref<80x10xf32, #tpu.memory_space<vmem>>, vector<80x10xf32>
    %cst_395 = arith.constant dense<0.000000e+00> : vector<1x10xf32>
    %516 = tpu.matmul %514, %515, %cst_395 {dimension_numbers = #tpu.dot_dimension_numbers<[1], [0], [0], [1], [0, 0, 1, 1], [], []>} : vector<1x80xf32>, vector<80x10xf32>, vector<1x10xf32> -> vector<1x10xf32>
    %517 = arith.addf %510, %516 : vector<1x10xf32>
    %518 = vector.extract_strided_slice %402 {offsets = [0, 0, 0], sizes = [1, 4, 80], strides = [1, 1, 1]} : vector<4x4x80xf32> to vector<1x4x80xf32>
    %519 = vector.shape_cast %518 : vector<1x4x80xf32> to vector<4x80xf32>
    %520 = vector.extract_strided_slice %402 {offsets = [1, 0, 0], sizes = [1, 4, 80], strides = [1, 1, 1]} : vector<4x4x80xf32> to vector<1x4x80xf32>
    %521 = vector.shape_cast %520 : vector<1x4x80xf32> to vector<4x80xf32>
    %522 = arith.addf %519, %521 : vector<4x80xf32>
    %523 = vector.extract_strided_slice %402 {offsets = [2, 0, 0], sizes = [1, 4, 80], strides = [1, 1, 1]} : vector<4x4x80xf32> to vector<1x4x80xf32>
    %524 = vector.shape_cast %523 : vector<1x4x80xf32> to vector<4x80xf32>
    %525 = arith.addf %522, %524 : vector<4x80xf32>
    %526 = vector.extract_strided_slice %402 {offsets = [3, 0, 0], sizes = [1, 4, 80], strides = [1, 1, 1]} : vector<4x4x80xf32> to vector<1x4x80xf32>
    %527 = vector.shape_cast %526 : vector<1x4x80xf32> to vector<4x80xf32>
    %528 = arith.addf %525, %527 : vector<4x80xf32>
    %cst_396 = arith.constant dense<0.000000e+00> : vector<80xf32>
    %529 = vector.multi_reduction <add>, %528, %cst_396 [0] : vector<4x80xf32> to vector<80xf32>
    %530 = vector.shape_cast %529 : vector<80xf32> to vector<1x80xf32>
    %cst_397 = arith.constant 6.250000e-02 : f32
    %531 = vector.broadcast %cst_397 : f32 to vector<1x80xf32>
    %532 = arith.mulf %530, %531 : vector<1x80xf32>
    %c0_398 = arith.constant 0 : index
    %c0_399 = arith.constant 0 : index
    %533 = vector.load %arg29[%c0_398, %c0_399] : memref<80x10xf32, #tpu.memory_space<vmem>>, vector<80x10xf32>
    %cst_400 = arith.constant dense<0.000000e+00> : vector<1x10xf32>
    %534 = tpu.matmul %532, %533, %cst_400 {dimension_numbers = #tpu.dot_dimension_numbers<[1], [0], [0], [1], [0, 0, 1, 1], [], []>} : vector<1x80xf32>, vector<80x10xf32>, vector<1x10xf32> -> vector<1x10xf32>
    %535 = arith.addf %517, %534 : vector<1x10xf32>
    %536 = vector.shape_cast %535 : vector<1x10xf32> to vector<1x1x10xf32>
    %c0_401 = arith.constant 0 : index
    %c0_402 = arith.constant 0 : index
    %c0_403 = arith.constant 0 : index
    %537 = vector.load %arg31[%c0_401, %c0_402, %c0_403] : memref<1x1x10xf32, #tpu.memory_space<vmem>>, vector<1x1x10xf32>
    tpu.vector_store %arg31[%c0_401, %c0_402, %c0_403], %536 {strides = array<i32>} : memref<1x1x10xf32, #tpu.memory_space<vmem>>, vector<1x1x10xf32>,
    return
  }
  func.func @transform_0(%arg0: i32) -> (i32, i32, i32, i32) {
    %c0_i32 = arith.constant 0 : i32
    %c0_i32_0 = arith.constant 0 : i32
    %c0_i32_1 = arith.constant 0 : i32
    %c0_i32_2 = arith.constant 0 : i32
    return %arg0, %c0_i32, %c0_i32_0, %c0_i32_1 : i32, i32, i32, i32
  }
  func.func @transform_1(%arg0: i32) -> (i32, i32) {
    %c0_i32 = arith.constant 0 : i32
    %c0_i32_0 = arith.constant 0 : i32
    %c0_i32_1 = arith.constant 0 : i32
    return %c0_i32, %c0_i32_0 : i32, i32
  }
  func.func @transform_2(%arg0: i32) -> (i32, i32) {
    %c0_i32 = arith.constant 0 : i32
    %c0_i32_0 = arith.constant 0 : i32
    %c0_i32_1 = arith.constant 0 : i32
    return %c0_i32, %c0_i32_0 : i32, i32
  }
  func.func @transform_3(%arg0: i32) -> (i32, i32) {
    %c0_i32 = arith.constant 0 : i32
    %c0_i32_0 = arith.constant 0 : i32
    %c0_i32_1 = arith.constant 0 : i32
    return %c0_i32, %c0_i32_0 : i32, i32
  }
  func.func @transform_4(%arg0: i32) -> (i32, i32) {
    %c0_i32 = arith.constant 0 : i32
    %c0_i32_0 = arith.constant 0 : i32
    %c0_i32_1 = arith.constant 0 : i32
    return %c0_i32, %c0_i32_0 : i32, i32
  }
  func.func @transform_5(%arg0: i32) -> (i32, i32, i32) {
    %c0_i32 = arith.constant 0 : i32
    %c0_i32_0 = arith.constant 0 : i32
    %c0_i32_1 = arith.constant 0 : i32
    %c0_i32_2 = arith.constant 0 : i32
    return %c0_i32, %c0_i32_0, %c0_i32_1 : i32, i32, i32
  }
  func.func @transform_6(%arg0: i32) -> (i32, i32) {
    %c0_i32 = arith.constant 0 : i32
    %c0_i32_0 = arith.constant 0 : i32
    %c0_i32_1 = arith.constant 0 : i32
    return %c0_i32, %c0_i32_0 : i32, i32
  }
  func.func @transform_7(%arg0: i32) -> (i32, i32) {
    %c0_i32 = arith.constant 0 : i32
    %c0_i32_0 = arith.constant 0 : i32
    %c0_i32_1 = arith.constant 0 : i32
    return %c0_i32, %c0_i32_0 : i32, i32
  }
  func.func @transform_8(%arg0: i32) -> (i32, i32) {
    %c0_i32 = arith.constant 0 : i32
    %c0_i32_0 = arith.constant 0 : i32
    %c0_i32_1 = arith.constant 0 : i32
    return %c0_i32, %c0_i32_0 : i32, i32
  }
  func.func @transform_9(%arg0: i32) -> (i32, i32) {
    %c0_i32 = arith.constant 0 : i32
    %c0_i32_0 = arith.constant 0 : i32
    %c0_i32_1 = arith.constant 0 : i32
    return %c0_i32, %c0_i32_0 : i32, i32
  }
  func.func @transform_10(%arg0: i32) -> (i32, i32) {
    %c0_i32 = arith.constant 0 : i32
    %c0_i32_0 = arith.constant 0 : i32
    %c0_i32_1 = arith.constant 0 : i32
    return %c0_i32, %c0_i32_0 : i32, i32
  }
  func.func @transform_11(%arg0: i32) -> (i32, i32, i32) {
    %c0_i32 = arith.constant 0 : i32
    %c0_i32_0 = arith.constant 0 : i32
    %c0_i32_1 = arith.constant 0 : i32
    %c0_i32_2 = arith.constant 0 : i32
    return %c0_i32, %c0_i32_0, %c0_i32_1 : i32, i32, i32
  }
  func.func @transform_12(%arg0: i32) -> (i32, i32) {
    %c0_i32 = arith.constant 0 : i32
    %c0_i32_0 = arith.constant 0 : i32
    %c0_i32_1 = arith.constant 0 : i32
    return %c0_i32, %c0_i32_0 : i32, i32
  }
  func.func @transform_13(%arg0: i32) -> (i32, i32) {
    %c0_i32 = arith.constant 0 : i32
    %c0_i32_0 = arith.constant 0 : i32
    %c0_i32_1 = arith.constant 0 : i32
    return %c0_i32, %c0_i32_0 : i32, i32
  }
  func.func @transform_14(%arg0: i32) -> (i32, i32) {
    %c0_i32 = arith.constant 0 : i32
    %c0_i32_0 = arith.constant 0 : i32
    %c0_i32_1 = arith.constant 0 : i32
    return %c0_i32, %c0_i32_0 : i32, i32
  }
  func.func @transform_15(%arg0: i32) -> (i32, i32) {
    %c0_i32 = arith.constant 0 : i32
    %c0_i32_0 = arith.constant 0 : i32
    %c0_i32_1 = arith.constant 0 : i32
    return %c0_i32, %c0_i32_0 : i32, i32
  }
  func.func @transform_16(%arg0: i32) -> (i32, i32) {
    %c0_i32 = arith.constant 0 : i32
    %c0_i32_0 = arith.constant 0 : i32
    %c0_i32_1 = arith.constant 0 : i32
    return %c0_i32, %c0_i32_0 : i32, i32
  }
  func.func @transform_17(%arg0: i32) -> (i32, i32, i32) {
    %c0_i32 = arith.constant 0 : i32
    %c0_i32_0 = arith.constant 0 : i32
    %c0_i32_1 = arith.constant 0 : i32
    %c0_i32_2 = arith.constant 0 : i32
    return %c0_i32, %c0_i32_0, %c0_i32_1 : i32, i32, i32
  }
  func.func @transform_18(%arg0: i32) -> (i32, i32) {
    %c0_i32 = arith.constant 0 : i32
    %c0_i32_0 = arith.constant 0 : i32
    %c0_i32_1 = arith.constant 0 : i32
    return %c0_i32, %c0_i32_0 : i32, i32
  }
  func.func @transform_19(%arg0: i32) -> (i32, i32) {
    %c0_i32 = arith.constant 0 : i32
    %c0_i32_0 = arith.constant 0 : i32
    %c0_i32_1 = arith.constant 0 : i32
    return %c0_i32, %c0_i32_0 : i32, i32
  }
  func.func @transform_20(%arg0: i32) -> (i32, i32) {
    %c0_i32 = arith.constant 0 : i32
    %c0_i32_0 = arith.constant 0 : i32
    %c0_i32_1 = arith.constant 0 : i32
    return %c0_i32, %c0_i32_0 : i32, i32
  }
  func.func @transform_21(%arg0: i32) -> (i32, i32) {
    %c0_i32 = arith.constant 0 : i32
    %c0_i32_0 = arith.constant 0 : i32
    %c0_i32_1 = arith.constant 0 : i32
    return %c0_i32, %c0_i32_0 : i32, i32
  }
  func.func @transform_22(%arg0: i32) -> (i32, i32) {
    %c0_i32 = arith.constant 0 : i32
    %c0_i32_0 = arith.constant 0 : i32
    %c0_i32_1 = arith.constant 0 : i32
    return %c0_i32, %c0_i32_0 : i32, i32
  }
  func.func @transform_23(%arg0: i32) -> (i32, i32, i32) {
    %c0_i32 = arith.constant 0 : i32
    %c0_i32_0 = arith.constant 0 : i32
    %c0_i32_1 = arith.constant 0 : i32
    %c0_i32_2 = arith.constant 0 : i32
    return %c0_i32, %c0_i32_0, %c0_i32_1 : i32, i32, i32
  }
  func.func @transform_24(%arg0: i32) -> (i32, i32) {
    %c0_i32 = arith.constant 0 : i32
    %c0_i32_0 = arith.constant 0 : i32
    %c0_i32_1 = arith.constant 0 : i32
    return %c0_i32, %c0_i32_0 : i32, i32
  }
  func.func @transform_25(%arg0: i32) -> (i32, i32) {
    %c0_i32 = arith.constant 0 : i32
    %c0_i32_0 = arith.constant 0 : i32
    %c0_i32_1 = arith.constant 0 : i32
    return %c0_i32, %c0_i32_0 : i32, i32
  }
  func.func @transform_26(%arg0: i32) -> (i32, i32) {
    %c0_i32 = arith.constant 0 : i32
    %c0_i32_0 = arith.constant 0 : i32
    %c0_i32_1 = arith.constant 0 : i32
    return %c0_i32, %c0_i32_0 : i32, i32
  }
  func.func @transform_27(%arg0: i32) -> (i32, i32) {
    %c0_i32 = arith.constant 0 : i32
    %c0_i32_0 = arith.constant 0 : i32
    %c0_i32_1 = arith.constant 0 : i32
    return %c0_i32, %c0_i32_0 : i32, i32
  }
  func.func @transform_28(%arg0: i32) -> (i32, i32) {
    %c0_i32 = arith.constant 0 : i32
    %c0_i32_0 = arith.constant 0 : i32
    %c0_i32_1 = arith.constant 0 : i32
    return %c0_i32, %c0_i32_0 : i32, i32
  }
  func.func @transform_29(%arg0: i32) -> (i32, i32) {
    %c0_i32 = arith.constant 0 : i32
    %c0_i32_0 = arith.constant 0 : i32
    %c0_i32_1 = arith.constant 0 : i32
    return %c0_i32, %c0_i32_0 : i32, i32
  }
  func.func @transform_30(%arg0: i32) -> (i32, i32, i32) {
    %c0_i32 = arith.constant 0 : i32
    %c0_i32_0 = arith.constant 0 : i32
    %c0_i32_1 = arith.constant 0 : i32
    return %arg0, %c0_i32, %c0_i32_0 : i32, i32, i32
  }
}

</mosaic_0001>

<llo_original>
// kernel: shufflenet_forward.1
$region0: #{shufflenet_forward.1}
  #allocation0 [shape = 'u32[]', space=smem, size = 0x4, offset = 0x4, fixed_abs, tag = 'smem constant byte address 0x4 - core index']
  #allocation1 [shape = 'u32[144,128]{1,0:T(1,128)}', space=vmem, size = 0x12000, scoped, tag = 'internal scratch']
  #allocation2 [shape = 'f32[34,48,128]{2,1,0:T(8,128)}', space=vmem, size = 0xcc000, scoped, tag = 'scratch operand']
  #allocation3 [shape = 'f32[34,48,128]{2,1,0:T(8,128)}', space=vmem, size = 0xcc000, scoped, tag = 'scratch operand']
  #allocation4 [shape = 'f32[16,16,40]{2,1,0:T(8,128)}', space=vmem, size = 0x20000, scoped, tag = 'scratch operand']
  #allocation5 [shape = 'f32[8,8,80]{2,1,0:T(8,128)}', space=vmem, size = 0x8000, scoped, tag = 'scratch operand']
  %s0 = inlined_call_operand.smem [shape: u32[31], index: -1, kind: input, shape index: {}]
  %s1 = sld [smem:[%s0]]
  %s2 = scalar_lea.smem %s0, 1
  %s3 = sld [smem:[%s2]]
  %s4 = scalar_lea.smem %s0, 2
  %s5 = sld [smem:[%s4]]
  %s6 = scalar_lea.smem %s0, 3
  %s7 = sld [smem:[%s6]]
  %s8 = scalar_lea.smem %s0, 4
  %s9 = sld [smem:[%s8]]
  %s10 = scalar_lea.smem %s0, 5
  %s11 = sld [smem:[%s10]]
  %s12 = scalar_lea.smem %s0, 6
  %s13 = sld [smem:[%s12]]
  %s14 = scalar_lea.smem %s0, 7
  %s15 = sld [smem:[%s14]]
  %s16 = scalar_lea.smem %s0, 8
  %s17 = sld [smem:[%s16]]
  %s18 = scalar_lea.smem %s0, 9
  %s19 = sld [smem:[%s18]]
  %s20 = scalar_lea.smem %s0, 10
  %s21 = sld [smem:[%s20]]
  %s22 = scalar_lea.smem %s0, 11
  %s23 = sld [smem:[%s22]]
  %s24 = scalar_lea.smem %s0, 12
  %s25 = sld [smem:[%s24]]
  %s26 = scalar_lea.smem %s0, 13
  %s27 = sld [smem:[%s26]]
  %s28 = scalar_lea.smem %s0, 14
  %s29 = sld [smem:[%s28]]
  %s30 = scalar_lea.smem %s0, 15
  %s31 = sld [smem:[%s30]]
  %s32 = scalar_lea.smem %s0, 16
  %s33 = sld [smem:[%s32]]
  %s34 = scalar_lea.smem %s0, 17
  %s35 = sld [smem:[%s34]]
  %s36 = scalar_lea.smem %s0, 18
  %s37 = sld [smem:[%s36]]
  %s38 = scalar_lea.smem %s0, 19
  %s39 = sld [smem:[%s38]]
  %s40 = scalar_lea.smem %s0, 20
  %s41 = sld [smem:[%s40]]
  %s42 = scalar_lea.smem %s0, 21
  %s43 = sld [smem:[%s42]]
  %s44 = scalar_lea.smem %s0, 22
  %s45 = sld [smem:[%s44]]
  %s46 = scalar_lea.smem %s0, 23
  %s47 = sld [smem:[%s46]]
  %s48 = scalar_lea.smem %s0, 24
  %s49 = sld [smem:[%s48]]
  %s50 = scalar_lea.smem %s0, 25
  %s51 = sld [smem:[%s50]]
  %s52 = scalar_lea.smem %s0, 26
  %s53 = sld [smem:[%s52]]
  %s54 = scalar_lea.smem %s0, 27
  %s55 = sld [smem:[%s54]]
  %s56 = scalar_lea.smem %s0, 28
  %s57 = sld [smem:[%s56]]
  %s58 = scalar_lea.smem %s0, 29
  %s59 = sld [smem:[%s58]]
  %s60 = scalar_lea.smem %s0, 30
  %s61 = sld [smem:[%s60]]
  %s62 = sld [smem:[#allocation0]]
  $region153: #{shufflenet_forward.1} parent=0
    _
  %s64 = ssub.s32 1, %s62
  %s65 = scalar_select 0, %s64, %s62
  $region1: #{shufflenet_forward.1} parent=0
    #allocation6 [shape = 'u8[1024]{0}', space=vmem, size = 0x400, scoped, tag = 'output window, operand 0']
    #allocation7 [shape = 's32[2]{0}', space=sflag, size = 0x8, scoped, tag = 'scoped memory for shufflenet_forward.1']
    %66 = vsyncpa [#allocation7], 0
    %s67 = scalar_lea.sflag [#allocation7], 1
    %68 = vsyncpa %s67, 0
    loop: start=0, step=1, limit=6
    $region2: #{shufflenet_forward.1} parent=1 // loop_pre_header
      _
    $region3: #{shufflenet_forward.1} parent=1 // loop_header
      %s70 = sphi 0, %s74
      %p71 = scmp.ge.s32.totalorder %s70, 6
      %s80 = sphi 0, %s82
      %s83 = sphi 0, %s80
      %s84 = sphi 0, %s83
      %s100 = sphi 0, %s84
      %s104 = sphi 0, %s104
      %s106 = sphi 0, %s104
      %s107 = sphi 0, %s106
      %s121 = sphi 0, %s107
      %s125 = sphi 0, %s125
      %s127 = sphi 0, %s125
      %s128 = sphi 0, %s127
      %s142 = sphi 0, %s128
      %s146 = sphi 0, %s146
      %s148 = sphi 0, %s146
      %s149 = sphi 0, %s148
      %s163 = sphi 0, %s149
      %s167 = sphi 0, %s167
      %s169 = sphi 0, %s167
      %s170 = sphi 0, %s169
      %s184 = sphi 0, %s170
      %s188 = sphi 0, %s188
      %s190 = sphi 0, %s188
      %s191 = sphi 0, %s190
      %s205 = sphi 0, %s191
      %s209 = sphi 0, %s209
      %s211 = sphi 0, %s209
      %s212 = sphi 0, %s211
      %s226 = sphi 0, %s212
      %s230 = sphi 0, %s230
      %s232 = sphi 0, %s230
      %s233 = sphi 0, %s232
      %s247 = sphi 0, %s233
      %s251 = sphi 0, %s251
      %s253 = sphi 0, %s251
      %s254 = sphi 0, %s253
      %s268 = sphi 0, %s254
      %s272 = sphi 0, %s272
      %s274 = sphi 0, %s272
      %s275 = sphi 0, %s274
      %s289 = sphi 0, %s275
      %s293 = sphi 0, %s293
      %s295 = sphi 0, %s293
      %s296 = sphi 0, %s295
      %s310 = sphi 0, %s296
      %s314 = sphi 0, %s314
      %s316 = sphi 0, %s314
      %s317 = sphi 0, %s316
      %s331 = sphi 0, %s317
      %s335 = sphi 0, %s335
      %s337 = sphi 0, %s335
      %s338 = sphi 0, %s337
      %s352 = sphi 0, %s338
      %s356 = sphi 0, %s356
      %s358 = sphi 0, %s356
      %s359 = sphi 0, %s358
      %s373 = sphi 0, %s359
      %s377 = sphi 0, %s377
      %s379 = sphi 0, %s377
      %s380 = sphi 0, %s379
      %s394 = sphi 0, %s380
      %s398 = sphi 0, %s398
      %s400 = sphi 0, %s398
      %s401 = sphi 0, %s400
      %s415 = sphi 0, %s401
      %s419 = sphi 0, %s419
      %s421 = sphi 0, %s419
      %s422 = sphi 0, %s421
      %s436 = sphi 0, %s422
      %s440 = sphi 0, %s440
      %s442 = sphi 0, %s440
      %s443 = sphi 0, %s442
      %s457 = sphi 0, %s443
      %s461 = sphi 0, %s461
      %s463 = sphi 0, %s461
      %s464 = sphi 0, %s463
      %s478 = sphi 0, %s464
      %s482 = sphi 0, %s482
      %s484 = sphi 0, %s482
      %s485 = sphi 0, %s484
      %s499 = sphi 0, %s485
      %s503 = sphi 0, %s503
      %s505 = sphi 0, %s503
      %s506 = sphi 0, %s505
      %s520 = sphi 0, %s506
      %s524 = sphi 0, %s524
      %s526 = sphi 0, %s524
      %s527 = sphi 0, %s526
      %s541 = sphi 0, %s527
      %s545 = sphi 0, %s545
      %s547 = sphi 0, %s545
      %s548 = sphi 0, %s547
      %s562 = sphi 0, %s548
      %s566 = sphi 0, %s566
      %s568 = sphi 0, %s566
      %s569 = sphi 0, %s568
      %s583 = sphi 0, %s569
      %s587 = sphi 0, %s587
      %s589 = sphi 0, %s587
      %s590 = sphi 0, %s589
      %s604 = sphi 0, %s590
      %s608 = sphi 0, %s608
      %s610 = sphi 0, %s608
      %s611 = sphi 0, %s610
      %s625 = sphi 0, %s611
      %s629 = sphi 0, %s629
      %s631 = sphi 0, %s629
      %s632 = sphi 0, %s631
      %s646 = sphi 0, %s632
      %s650 = sphi 0, %s650
      %s652 = sphi 0, %s650
      %s653 = sphi 0, %s652
      %s667 = sphi 0, %s653
      %s671 = sphi 0, %s671
      %s673 = sphi 0, %s671
      %s674 = sphi 0, %s673
      %s688 = sphi 0, %s674
      %s692 = sphi 0, %s692
      %s694 = sphi 0, %s692
      %s695 = sphi 0, %s694
      %s709 = sphi 0, %s695
      %s715 = sphi 0, %s717
      %s718 = sphi 0, %s715
      %s719 = sphi 0, %s718
      %s735 = sphi 0, %s719
    $region4: #{shufflenet_forward.1} parent=1 // loop_header_branch
      %73 = sbr.rel (%p71) target = $region8
    $region5: #{shufflenet_forward.1} parent=1 // loop_body
      %s75 = ssub.s32 %s70, 1
      %s76 = ssub.s32 %s70, 2
      %s77 = sadd.s32 %s70, 1
      %s78 = ssub.s32 %s70, %s77
      %p79 = scmp.eq.s32.totalorder %s78, 0
      %s81 = sadd.s32 %s80, 1
      %s82 = scalar_select %p79, %s80, %s81
      %p85 = pneg %p79
      %p86 = scmp.eq.s32.totalorder %s70, 3
      %p87 = por %p85, %p86
      %p88 = scmp.ne.s32.totalorder %s80, %s83
      %p89 = scmp.eq.s32.totalorder %s70, 0
      %p90 = por %p88, %p89
      %p91 = scmp.ne.s32.totalorder %s80, %s83
      %p92 = scmp.eq.s32.totalorder %s75, 3
      %p93 = por %p91, %p92
      %p94 = scmp.ne.s32.totalorder %s83, %s84
      %p95 = scmp.eq.s32.totalorder %s75, 0
      %p96 = por %p94, %p95
      %p97 = scmp.ne.s32.totalorder %s83, %s84
      %p98 = scmp.eq.s32.totalorder %s76, 3
      %p99 = por %p97, %p98
      %p101 = scmp.ne.s32.totalorder %s84, %s100
      %p102 = scmp.eq.s32.totalorder %s76, 0
      %p103 = por %p101, %p102
      %s105 = sadd.s32 %s104, 1
      %p108 = scmp.eq.s32.totalorder %s70, 3
      %p109 = scmp.ne.s32.totalorder %s104, %s106
      %p110 = scmp.eq.s32.totalorder %s70, 0
      %p111 = por %p109, %p110
      %p112 = scmp.ne.s32.totalorder %s104, %s106
      %p113 = scmp.eq.s32.totalorder %s75, 3
      %p114 = por %p112, %p113
      %p115 = scmp.ne.s32.totalorder %s106, %s107
      %p116 = scmp.eq.s32.totalorder %s75, 0
      %p117 = por %p115, %p116
      %p118 = scmp.ne.s32.totalorder %s106, %s107
      %p119 = scmp.eq.s32.totalorder %s76, 3
      %p120 = por %p118, %p119
      %p122 = scmp.ne.s32.totalorder %s107, %s121
      %p123 = scmp.eq.s32.totalorder %s76, 0
      %p124 = por %p122, %p123
      %s126 = sadd.s32 %s125, 1
      %p129 = scmp.eq.s32.totalorder %s70, 3
      %p130 = scmp.ne.s32.totalorder %s125, %s127
      %p131 = scmp.eq.s32.totalorder %s70, 0
      %p132 = por %p130, %p131
      %p133 = scmp.ne.s32.totalorder %s125, %s127
      %p134 = scmp.eq.s32.totalorder %s75, 3
      %p135 = por %p133, %p134
      %p136 = scmp.ne.s32.totalorder %s127, %s128
      %p137 = scmp.eq.s32.totalorder %s75, 0
      %p138 = por %p136, %p137
      %p139 = scmp.ne.s32.totalorder %s127, %s128
      %p140 = scmp.eq.s32.totalorder %s76, 3
      %p141 = por %p139, %p140
      %p143 = scmp.ne.s32.totalorder %s128, %s142
      %p144 = scmp.eq.s32.totalorder %s76, 0
      %p145 = por %p143, %p144
      %s147 = sadd.s32 %s146, 1
      %p150 = scmp.eq.s32.totalorder %s70, 3
      %p151 = scmp.ne.s32.totalorder %s146, %s148
      %p152 = scmp.eq.s32.totalorder %s70, 0
      %p153 = por %p151, %p152
      %p154 = scmp.ne.s32.totalorder %s146, %s148
      %p155 = scmp.eq.s32.totalorder %s75, 3
      %p156 = por %p154, %p155
      %p157 = scmp.ne.s32.totalorder %s148, %s149
      %p158 = scmp.eq.s32.totalorder %s75, 0
      %p159 = por %p157, %p158
      %p160 = scmp.ne.s32.totalorder %s148, %s149
      %p161 = scmp.eq.s32.totalorder %s76, 3
      %p162 = por %p160, %p161
      %p164 = scmp.ne.s32.totalorder %s149, %s163
      %p165 = scmp.eq.s32.totalorder %s76, 0
      %p166 = por %p164, %p165
      %s168 = sadd.s32 %s167, 1
      %p171 = scmp.eq.s32.totalorder %s70, 3
      %p172 = scmp.ne.s32.totalorder %s167, %s169
      %p173 = scmp.eq.s32.totalorder %s70, 0
      %p174 = por %p172, %p173
      %p175 = scmp.ne.s32.totalorder %s167, %s169
      %p176 = scmp.eq.s32.totalorder %s75, 3
      %p177 = por %p175, %p176
      %p178 = scmp.ne.s32.totalorder %s169, %s170
      %p179 = scmp.eq.s32.totalorder %s75, 0
      %p180 = por %p178, %p179
      %p181 = scmp.ne.s32.totalorder %s169, %s170
      %p182 = scmp.eq.s32.totalorder %s76, 3
      %p183 = por %p181, %p182
      %p185 = scmp.ne.s32.totalorder %s170, %s184
      %p186 = scmp.eq.s32.totalorder %s76, 0
      %p187 = por %p185, %p186
      %s189 = sadd.s32 %s188, 1
      %p192 = scmp.eq.s32.totalorder %s70, 3
      %p193 = scmp.ne.s32.totalorder %s188, %s190
      %p194 = scmp.eq.s32.totalorder %s70, 0
      %p195 = por %p193, %p194
      %p196 = scmp.ne.s32.totalorder %s188, %s190
      %p197 = scmp.eq.s32.totalorder %s75, 3
      %p198 = por %p196, %p197
      %p199 = scmp.ne.s32.totalorder %s190, %s191
      %p200 = scmp.eq.s32.totalorder %s75, 0
      %p201 = por %p199, %p200
      %p202 = scmp.ne.s32.totalorder %s190, %s191
      %p203 = scmp.eq.s32.totalorder %s76, 3
      %p204 = por %p202, %p203
      %p206 = scmp.ne.s32.totalorder %s191, %s205
      %p207 = scmp.eq.s32.totalorder %s76, 0
      %p208 = por %p206, %p207
      %s210 = sadd.s32 %s209, 1
      %p213 = scmp.eq.s32.totalorder %s70, 3
      %p214 = scmp.ne.s32.totalorder %s209, %s211
      %p215 = scmp.eq.s32.totalorder %s70, 0
      %p216 = por %p214, %p215
      %p217 = scmp.ne.s32.totalorder %s209, %s211
      %p218 = scmp.eq.s32.totalorder %s75, 3
      %p219 = por %p217, %p218
      %p220 = scmp.ne.s32.totalorder %s211, %s212
      %p221 = scmp.eq.s32.totalorder %s75, 0
      %p222 = por %p220, %p221
      %p223 = scmp.ne.s32.totalorder %s211, %s212
      %p224 = scmp.eq.s32.totalorder %s76, 3
      %p225 = por %p223, %p224
      %p227 = scmp.ne.s32.totalorder %s212, %s226
      %p228 = scmp.eq.s32.totalorder %s76, 0
      %p229 = por %p227, %p228
      %s231 = sadd.s32 %s230, 1
      %p234 = scmp.eq.s32.totalorder %s70, 3
      %p235 = scmp.ne.s32.totalorder %s230, %s232
      %p236 = scmp.eq.s32.totalorder %s70, 0
      %p237 = por %p235, %p236
      %p238 = scmp.ne.s32.totalorder %s230, %s232
      %p239 = scmp.eq.s32.totalorder %s75, 3
      %p240 = por %p238, %p239
      %p241 = scmp.ne.s32.totalorder %s232, %s233
      %p242 = scmp.eq.s32.totalorder %s75, 0
      %p243 = por %p241, %p242
      %p244 = scmp.ne.s32.totalorder %s232, %s233
      %p245 = scmp.eq.s32.totalorder %s76, 3
      %p246 = por %p244, %p245
      %p248 = scmp.ne.s32.totalorder %s233, %s247
      %p249 = scmp.eq.s32.totalorder %s76, 0
      %p250 = por %p248, %p249
      %s252 = sadd.s32 %s251, 1
      %p255 = scmp.eq.s32.totalorder %s70, 3
      %p256 = scmp.ne.s32.totalorder %s251, %s253
      %p257 = scmp.eq.s32.totalorder %s70, 0
      %p258 = por %p256, %p257
      %p259 = scmp.ne.s32.totalorder %s251, %s253
      %p260 = scmp.eq.s32.totalorder %s75, 3
      %p261 = por %p259, %p260
      %p262 = scmp.ne.s32.totalorder %s253, %s254
      %p263 = scmp.eq.s32.totalorder %s75, 0
      %p264 = por %p262, %p263
      %p265 = scmp.ne.s32.totalorder %s253, %s254
      %p266 = scmp.eq.s32.totalorder %s76, 3
      %p267 = por %p265, %p266
      %p269 = scmp.ne.s32.totalorder %s254, %s268
      %p270 = scmp.eq.s32.totalorder %s76, 0
      %p271 = por %p269, %p270
      %s273 = sadd.s32 %s272, 1
      %p276 = scmp.eq.s32.totalorder %s70, 3
      %p277 = scmp.ne.s32.totalorder %s272, %s274
      %p278 = scmp.eq.s32.totalorder %s70, 0
      %p279 = por %p277, %p278
      %p280 = scmp.ne.s32.totalorder %s272, %s274
      %p281 = scmp.eq.s32.totalorder %s75, 3
      %p282 = por %p280, %p281
      %p283 = scmp.ne.s32.totalorder %s274, %s275
      %p284 = scmp.eq.s32.totalorder %s75, 0
      %p285 = por %p283, %p284
      %p286 = scmp.ne.s32.totalorder %s274, %s275
      %p287 = scmp.eq.s32.totalorder %s76, 3
      %p288 = por %p286, %p287
      %p290 = scmp.ne.s32.totalorder %s275, %s289
      %p291 = scmp.eq.s32.totalorder %s76, 0
      %p292 = por %p290, %p291
      %s294 = sadd.s32 %s293, 1
      %p297 = scmp.eq.s32.totalorder %s70, 3
      %p298 = scmp.ne.s32.totalorder %s293, %s295
      %p299 = scmp.eq.s32.totalorder %s70, 0
      %p300 = por %p298, %p299
      %p301 = scmp.ne.s32.totalorder %s293, %s295
      %p302 = scmp.eq.s32.totalorder %s75, 3
      %p303 = por %p301, %p302
      %p304 = scmp.ne.s32.totalorder %s295, %s296
      %p305 = scmp.eq.s32.totalorder %s75, 0
      %p306 = por %p304, %p305
      %p307 = scmp.ne.s32.totalorder %s295, %s296
      %p308 = scmp.eq.s32.totalorder %s76, 3
      %p309 = por %p307, %p308
      %p311 = scmp.ne.s32.totalorder %s296, %s310
      %p312 = scmp.eq.s32.totalorder %s76, 0
      %p313 = por %p311, %p312
      %s315 = sadd.s32 %s314, 1
      %p318 = scmp.eq.s32.totalorder %s70, 3
      %p319 = scmp.ne.s32.totalorder %s314, %s316
      %p320 = scmp.eq.s32.totalorder %s70, 0
      %p321 = por %p319, %p320
      %p322 = scmp.ne.s32.totalorder %s314, %s316
      %p323 = scmp.eq.s32.totalorder %s75, 3
      %p324 = por %p322, %p323
      %p325 = scmp.ne.s32.totalorder %s316, %s317
      %p326 = scmp.eq.s32.totalorder %s75, 0
      %p327 = por %p325, %p326
      %p328 = scmp.ne.s32.totalorder %s316, %s317
      %p329 = scmp.eq.s32.totalorder %s76, 3
      %p330 = por %p328, %p329
      %p332 = scmp.ne.s32.totalorder %s317, %s331
      %p333 = scmp.eq.s32.totalorder %s76, 0
      %p334 = por %p332, %p333
      %s336 = sadd.s32 %s335, 1
      %p339 = scmp.eq.s32.totalorder %s70, 3
      %p340 = scmp.ne.s32.totalorder %s335, %s337
      %p341 = scmp.eq.s32.totalorder %s70, 0
      %p342 = por %p340, %p341
      %p343 = scmp.ne.s32.totalorder %s335, %s337
      %p344 = scmp.eq.s32.totalorder %s75, 3
      %p345 = por %p343, %p344
      %p346 = scmp.ne.s32.totalorder %s337, %s338
      %p347 = scmp.eq.s32.totalorder %s75, 0
      %p348 = por %p346, %p347
      %p349 = scmp.ne.s32.totalorder %s337, %s338
      %p350 = scmp.eq.s32.totalorder %s76, 3
      %p351 = por %p349, %p350
      %p353 = scmp.ne.s32.totalorder %s338, %s352
      %p354 = scmp.eq.s32.totalorder %s76, 0
      %p355 = por %p353, %p354
      %s357 = sadd.s32 %s356, 1
      %p360 = scmp.eq.s32.totalorder %s70, 3
      %p361 = scmp.ne.s32.totalorder %s356, %s358
      %p362 = scmp.eq.s32.totalorder %s70, 0
      %p363 = por %p361, %p362
      %p364 = scmp.ne.s32.totalorder %s356, %s358
      %p365 = scmp.eq.s32.totalorder %s75, 3
      %p366 = por %p364, %p365
      %p367 = scmp.ne.s32.totalorder %s358, %s359
      %p368 = scmp.eq.s32.totalorder %s75, 0
      %p369 = por %p367, %p368
      %p370 = scmp.ne.s32.totalorder %s358, %s359
      %p371 = scmp.eq.s32.totalorder %s76, 3
      %p372 = por %p370, %p371
      %p374 = scmp.ne.s32.totalorder %s359, %s373
      %p375 = scmp.eq.s32.totalorder %s76, 0
      %p376 = por %p374, %p375
      %s378 = sadd.s32 %s377, 1
      %p381 = scmp.eq.s32.totalorder %s70, 3
      %p382 = scmp.ne.s32.totalorder %s377, %s379
      %p383 = scmp.eq.s32.totalorder %s70, 0
      %p384 = por %p382, %p383
      %p385 = scmp.ne.s32.totalorder %s377, %s379
      %p386 = scmp.eq.s32.totalorder %s75, 3
      %p387 = por %p385, %p386
      %p388 = scmp.ne.s32.totalorder %s379, %s380
      %p389 = scmp.eq.s32.totalorder %s75, 0
      %p390 = por %p388, %p389
      %p391 = scmp.ne.s32.totalorder %s379, %s380
      %p392 = scmp.eq.s32.totalorder %s76, 3
      %p393 = por %p391, %p392
      %p395 = scmp.ne.s32.totalorder %s380, %s394
      %p396 = scmp.eq.s32.totalorder %s76, 0
      %p397 = por %p395, %p396
      %s399 = sadd.s32 %s398, 1
      %p402 = scmp.eq.s32.totalorder %s70, 3
      %p403 = scmp.ne.s32.totalorder %s398, %s400
      %p404 = scmp.eq.s32.totalorder %s70, 0
      %p405 = por %p403, %p404
      %p406 = scmp.ne.s32.totalorder %s398, %s400
      %p407 = scmp.eq.s32.totalorder %s75, 3
      %p408 = por %p406, %p407
      %p409 = scmp.ne.s32.totalorder %s400, %s401
      %p410 = scmp.eq.s32.totalorder %s75, 0
      %p411 = por %p409, %p410
      %p412 = scmp.ne.s32.totalorder %s400, %s401
      %p413 = scmp.eq.s32.totalorder %s76, 3
      %p414 = por %p412, %p413
      %p416 = scmp.ne.s32.totalorder %s401, %s415
      %p417 = scmp.eq.s32.totalorder %s76, 0
      %p418 = por %p416, %p417
      %s420 = sadd.s32 %s419, 1
      %p423 = scmp.eq.s32.totalorder %s70, 3
      %p424 = scmp.ne.s32.totalorder %s419, %s421
      %p425 = scmp.eq.s32.totalorder %s70, 0
      %p426 = por %p424, %p425
      %p427 = scmp.ne.s32.totalorder %s419, %s421
      %p428 = scmp.eq.s32.totalorder %s75, 3
      %p429 = por %p427, %p428
      %p430 = scmp.ne.s32.totalorder %s421, %s422
      %p431 = scmp.eq.s32.totalorder %s75, 0
      %p432 = por %p430, %p431
      %p433 = scmp.ne.s32.totalorder %s421, %s422
      %p434 = scmp.eq.s32.totalorder %s76, 3
      %p435 = por %p433, %p434
      %p437 = scmp.ne.s32.totalorder %s422, %s436
      %p438 = scmp.eq.s32.totalorder %s76, 0
      %p439 = por %p437, %p438
      %s441 = sadd.s32 %s440, 1
      %p444 = scmp.eq.s32.totalorder %s70, 3
      %p445 = scmp.ne.s32.totalorder %s440, %s442
      %p446 = scmp.eq.s32.totalorder %s70, 0
      %p447 = por %p445, %p446
      %p448 = scmp.ne.s32.totalorder %s440, %s442
      %p449 = scmp.eq.s32.totalorder %s75, 3
      %p450 = por %p448, %p449
      %p451 = scmp.ne.s32.totalorder %s442, %s443
      %p452 = scmp.eq.s32.totalorder %s75, 0
      %p453 = por %p451, %p452
      %p454 = scmp.ne.s32.totalorder %s442, %s443
      %p455 = scmp.eq.s32.totalorder %s76, 3
      %p456 = por %p454, %p455
      %p458 = scmp.ne.s32.totalorder %s443, %s457
      %p459 = scmp.eq.s32.totalorder %s76, 0
      %p460 = por %p458, %p459
      %s462 = sadd.s32 %s461, 1
      %p465 = scmp.eq.s32.totalorder %s70, 3
      %p466 = scmp.ne.s32.totalorder %s461, %s463
      %p467 = scmp.eq.s32.totalorder %s70, 0
      %p468 = por %p466, %p467
      %p469 = scmp.ne.s32.totalorder %s461, %s463
      %p470 = scmp.eq.s32.totalorder %s75, 3
      %p471 = por %p469, %p470
      %p472 = scmp.ne.s32.totalorder %s463, %s464
      %p473 = scmp.eq.s32.totalorder %s75, 0
      %p474 = por %p472, %p473
      %p475 = scmp.ne.s32.totalorder %s463, %s464
      %p476 = scmp.eq.s32.totalorder %s76, 3
      %p477 = por %p475, %p476
      %p479 = scmp.ne.s32.totalorder %s464, %s478
      %p480 = scmp.eq.s32.totalorder %s76, 0
      %p481 = por %p479, %p480
      %s483 = sadd.s32 %s482, 1
      %p486 = scmp.eq.s32.totalorder %s70, 3
      %p487 = scmp.ne.s32.totalorder %s482, %s484
      %p488 = scmp.eq.s32.totalorder %s70, 0
      %p489 = por %p487, %p488
      %p490 = scmp.ne.s32.totalorder %s482, %s484
      %p491 = scmp.eq.s32.totalorder %s75, 3
      %p492 = por %p490, %p491
      %p493 = scmp.ne.s32.totalorder %s484, %s485
      %p494 = scmp.eq.s32.totalorder %s75, 0
      %p495 = por %p493, %p494
      %p496 = scmp.ne.s32.totalorder %s484, %s485
      %p497 = scmp.eq.s32.totalorder %s76, 3
      %p498 = por %p496, %p497
      %p500 = scmp.ne.s32.totalorder %s485, %s499
      %p501 = scmp.eq.s32.totalorder %s76, 0
      %p502 = por %p500, %p501
      %s504 = sadd.s32 %s503, 1
      %p507 = scmp.eq.s32.totalorder %s70, 3
      %p508 = scmp.ne.s32.totalorder %s503, %s505
      %p509 = scmp.eq.s32.totalorder %s70, 0
      %p510 = por %p508, %p509
      %p511 = scmp.ne.s32.totalorder %s503, %s505
      %p512 = scmp.eq.s32.totalorder %s75, 3
      %p513 = por %p511, %p512
      %p514 = scmp.ne.s32.totalorder %s505, %s506
      %p515 = scmp.eq.s32.totalorder %s75, 0
      %p516 = por %p514, %p515
      %p517 = scmp.ne.s32.totalorder %s505, %s506
      %p518 = scmp.eq.s32.totalorder %s76, 3
      %p519 = por %p517, %p518
      %p521 = scmp.ne.s32.totalorder %s506, %s520
      %p522 = scmp.eq.s32.totalorder %s76, 0
      %p523 = por %p521, %p522
      %s525 = sadd.s32 %s524, 1
      %p528 = scmp.eq.s32.totalorder %s70, 3
      %p529 = scmp.ne.s32.totalorder %s524, %s526
      %p530 = scmp.eq.s32.totalorder %s70, 0
      %p531 = por %p529, %p530
      %p532 = scmp.ne.s32.totalorder %s524, %s526
      %p533 = scmp.eq.s32.totalorder %s75, 3
      %p534 = por %p532, %p533
      %p535 = scmp.ne.s32.totalorder %s526, %s527
      %p536 = scmp.eq.s32.totalorder %s75, 0
      %p537 = por %p535, %p536
      %p538 = scmp.ne.s32.totalorder %s526, %s527
      %p539 = scmp.eq.s32.totalorder %s76, 3
      %p540 = por %p538, %p539
      %p542 = scmp.ne.s32.totalorder %s527, %s541
      %p543 = scmp.eq.s32.totalorder %s76, 0
      %p544 = por %p542, %p543
      %s546 = sadd.s32 %s545, 1
      %p549 = scmp.eq.s32.totalorder %s70, 3
      %p550 = scmp.ne.s32.totalorder %s545, %s547
      %p551 = scmp.eq.s32.totalorder %s70, 0
      %p552 = por %p550, %p551
      %p553 = scmp.ne.s32.totalorder %s545, %s547
      %p554 = scmp.eq.s32.totalorder %s75, 3
      %p555 = por %p553, %p554
      %p556 = scmp.ne.s32.totalorder %s547, %s548
      %p557 = scmp.eq.s32.totalorder %s75, 0
      %p558 = por %p556, %p557
      %p559 = scmp.ne.s32.totalorder %s547, %s548
      %p560 = scmp.eq.s32.totalorder %s76, 3
      %p561 = por %p559, %p560
      %p563 = scmp.ne.s32.totalorder %s548, %s562
      %p564 = scmp.eq.s32.totalorder %s76, 0
      %p565 = por %p563, %p564
      %s567 = sadd.s32 %s566, 1
      %p570 = scmp.eq.s32.totalorder %s70, 3
      %p571 = scmp.ne.s32.totalorder %s566, %s568
      %p572 = scmp.eq.s32.totalorder %s70, 0
      %p573 = por %p571, %p572
      %p574 = scmp.ne.s32.totalorder %s566, %s568
      %p575 = scmp.eq.s32.totalorder %s75, 3
      %p576 = por %p574, %p575
      %p577 = scmp.ne.s32.totalorder %s568, %s569
      %p578 = scmp.eq.s32.totalorder %s75, 0
      %p579 = por %p577, %p578
      %p580 = scmp.ne.s32.totalorder %s568, %s569
      %p581 = scmp.eq.s32.totalorder %s76, 3
      %p582 = por %p580, %p581
      %p584 = scmp.ne.s32.totalorder %s569, %s583
      %p585 = scmp.eq.s32.totalorder %s76, 0
      %p586 = por %p584, %p585
      %s588 = sadd.s32 %s587, 1
      %p591 = scmp.eq.s32.totalorder %s70, 3
      %p592 = scmp.ne.s32.totalorder %s587, %s589
      %p593 = scmp.eq.s32.totalorder %s70, 0
      %p594 = por %p592, %p593
      %p595 = scmp.ne.s32.totalorder %s587, %s589
      %p596 = scmp.eq.s32.totalorder %s75, 3
      %p597 = por %p595, %p596
      %p598 = scmp.ne.s32.totalorder %s589, %s590
      %p599 = scmp.eq.s32.totalorder %s75, 0
      %p600 = por %p598, %p599
      %p601 = scmp.ne.s32.totalorder %s589, %s590
      %p602 = scmp.eq.s32.totalorder %s76, 3
      %p603 = por %p601, %p602
      %p605 = scmp.ne.s32.totalorder %s590, %s604
      %p606 = scmp.eq.s32.totalorder %s76, 0
      %p607 = por %p605, %p606
      %s609 = sadd.s32 %s608, 1
      %p612 = scmp.eq.s32.totalorder %s70, 3
      %p613 = scmp.ne.s32.totalorder %s608, %s610
      %p614 = scmp.eq.s32.totalorder %s70, 0
      %p615 = por %p613, %p614
      %p616 = scmp.ne.s32.totalorder %s608, %s610
      %p617 = scmp.eq.s32.totalorder %s75, 3
      %p618 = por %p616, %p617
      %p619 = scmp.ne.s32.totalorder %s610, %s611
      %p620 = scmp.eq.s32.totalorder %s75, 0
      %p621 = por %p619, %p620
      %p622 = scmp.ne.s32.totalorder %s610, %s611
      %p623 = scmp.eq.s32.totalorder %s76, 3
      %p624 = por %p622, %p623
      %p626 = scmp.ne.s32.totalorder %s611, %s625
      %p627 = scmp.eq.s32.totalorder %s76, 0
      %p628 = por %p626, %p627
      %s630 = sadd.s32 %s629, 1
      %p633 = scmp.eq.s32.totalorder %s70, 3
      %p634 = scmp.ne.s32.totalorder %s629, %s631
      %p635 = scmp.eq.s32.totalorder %s70, 0
      %p636 = por %p634, %p635
      %p637 = scmp.ne.s32.totalorder %s629, %s631
      %p638 = scmp.eq.s32.totalorder %s75, 3
      %p639 = por %p637, %p638
      %p640 = scmp.ne.s32.totalorder %s631, %s632
      %p641 = scmp.eq.s32.totalorder %s75, 0
      %p642 = por %p640, %p641
      %p643 = scmp.ne.s32.totalorder %s631, %s632
      %p644 = scmp.eq.s32.totalorder %s76, 3
      %p645 = por %p643, %p644
      %p647 = scmp.ne.s32.totalorder %s632, %s646
      %p648 = scmp.eq.s32.totalorder %s76, 0
      %p649 = por %p647, %p648
      %s651 = sadd.s32 %s650, 1
      %p654 = scmp.eq.s32.totalorder %s70, 3
      %p655 = scmp.ne.s32.totalorder %s650, %s652
      %p656 = scmp.eq.s32.totalorder %s70, 0
      %p657 = por %p655, %p656
      %p658 = scmp.ne.s32.totalorder %s650, %s652
      %p659 = scmp.eq.s32.totalorder %s75, 3
      %p660 = por %p658, %p659
      %p661 = scmp.ne.s32.totalorder %s652, %s653
      %p662 = scmp.eq.s32.totalorder %s75, 0
      %p663 = por %p661, %p662
      %p664 = scmp.ne.s32.totalorder %s652, %s653
      %p665 = scmp.eq.s32.totalorder %s76, 3
      %p666 = por %p664, %p665
      %p668 = scmp.ne.s32.totalorder %s653, %s667
      %p669 = scmp.eq.s32.totalorder %s76, 0
      %p670 = por %p668, %p669
      %s672 = sadd.s32 %s671, 1
      %p675 = scmp.eq.s32.totalorder %s70, 3
      %p676 = scmp.ne.s32.totalorder %s671, %s673
      %p677 = scmp.eq.s32.totalorder %s70, 0
      %p678 = por %p676, %p677
      %p679 = scmp.ne.s32.totalorder %s671, %s673
      %p680 = scmp.eq.s32.totalorder %s75, 3
      %p681 = por %p679, %p680
      %p682 = scmp.ne.s32.totalorder %s673, %s674
      %p683 = scmp.eq.s32.totalorder %s75, 0
      %p684 = por %p682, %p683
      %p685 = scmp.ne.s32.totalorder %s673, %s674
      %p686 = scmp.eq.s32.totalorder %s76, 3
      %p687 = por %p685, %p686
      %p689 = scmp.ne.s32.totalorder %s674, %s688
      %p690 = scmp.eq.s32.totalorder %s76, 0
      %p691 = por %p689, %p690
      %s693 = sadd.s32 %s692, 1
      %p696 = scmp.eq.s32.totalorder %s70, 3
      %p697 = scmp.ne.s32.totalorder %s692, %s694
      %p698 = scmp.eq.s32.totalorder %s70, 0
      %p699 = por %p697, %p698
      %p700 = scmp.ne.s32.totalorder %s692, %s694
      %p701 = scmp.eq.s32.totalorder %s75, 3
      %p702 = por %p700, %p701
      %p703 = scmp.ne.s32.totalorder %s694, %s695
      %p704 = scmp.eq.s32.totalorder %s75, 0
      %p705 = por %p703, %p704
      %p706 = scmp.ne.s32.totalorder %s694, %s695
      %p707 = scmp.eq.s32.totalorder %s76, 3
      %p708 = por %p706, %p707
      %p710 = scmp.ne.s32.totalorder %s695, %s709
      %p711 = scmp.eq.s32.totalorder %s76, 0
      %p712 = por %p710, %p711
      %s713 = ssub.s32 %s70, %s77
      %p714 = scmp.eq.s32.totalorder %s713, 0
      %s716 = sadd.s32 %s715, 1
      %s717 = scalar_select %p714, %s715, %s716
      %p720 = pneg %p714
      %p721 = scmp.eq.s32.totalorder %s70, 3
      %p722 = por %p720, %p721
      %p723 = scmp.ne.s32.totalorder %s715, %s718
      %p724 = scmp.eq.s32.totalorder %s70, 0
      %p725 = por %p723, %p724
      %p726 = scmp.ne.s32.totalorder %s715, %s718
      %p727 = scmp.eq.s32.totalorder %s75, 3
      %p728 = por %p726, %p727
      %p729 = scmp.ne.s32.totalorder %s718, %s719
      %p730 = scmp.eq.s32.totalorder %s75, 0
      %p731 = por %p729, %p730
      %p732 = scmp.ne.s32.totalorder %s718, %s719
      %p733 = scmp.eq.s32.totalorder %s76, 3
      %p734 = por %p732, %p733
      %p736 = scmp.ne.s32.totalorder %s719, %s735
      %p737 = scmp.eq.s32.totalorder %s76, 0
      %p738 = por %p736, %p737
      %p739 = scmp.le.s32.totalorder 1, %s70
      %p740 = scmp.lt.s32.totalorder %s70, 5
      %p741 = pnand %p739, %p740
      %p742 = pneg %p741
      // Predicated region
      $region9: #{shufflenet_forward.1} parent=5 // pred_check
        _
      $region10: #{shufflenet_forward.1} parent=5 // pred_check_branch
        %744 = sbr.rel (%p741) target = $region12
      $region11: #{shufflenet_forward.1} parent=5 // pred_region
        %s745 = ssub.s32 %s70, 1
        // Predicated region
        $region13: #{shufflenet_forward.1} parent=11 // pred_check
          %p746 = pneg %p117
        $region14: #{shufflenet_forward.1} parent=11 // pred_check_branch
          %748 = sbr.rel (%p746) target = $region16
        $region15: #{shufflenet_forward.1} parent=11 // pred_region
          _
        $region16: #{shufflenet_forward.1} parent=11 // pred_fallthru
          _
        // Predicated region
        $region17: #{shufflenet_forward.1} parent=11 // pred_check
          %p749 = pneg %p138
        $region18: #{shufflenet_forward.1} parent=11 // pred_check_branch
          %751 = sbr.rel (%p749) target = $region20
        $region19: #{shufflenet_forward.1} parent=11 // pred_region
          _
        $region20: #{shufflenet_forward.1} parent=11 // pred_fallthru
          _
        // Predicated region
        $region21: #{shufflenet_forward.1} parent=11 // pred_check
          %p752 = pneg %p159
        $region22: #{shufflenet_forward.1} parent=11 // pred_check_branch
          %754 = sbr.rel (%p752) target = $region24
        $region23: #{shufflenet_forward.1} parent=11 // pred_region
          _
        $region24: #{shufflenet_forward.1} parent=11 // pred_fallthru
          _
        // Predicated region
        $region25: #{shufflenet_forward.1} parent=11 // pred_check
          %p755 = pneg %p180
        $region26: #{shufflenet_forward.1} parent=11 // pred_check_branch
          %757 = sbr.rel (%p755) target = $region28
        $region27: #{shufflenet_forward.1} parent=11 // pred_region
          _
        $region28: #{shufflenet_forward.1} parent=11 // pred_fallthru
          _
        // Predicated region
        $region29: #{shufflenet_forward.1} parent=11 // pred_check
          %p758 = pneg %p201
        $region30: #{shufflenet_forward.1} parent=11 // pred_check_branch
          %760 = sbr.rel (%p758) target = $region32
        $region31: #{shufflenet_forward.1} parent=11 // pred_region
          _
        $region32: #{shufflenet_forward.1} parent=11 // pred_fallthru
          _
        // Predicated region
        $region33: #{shufflenet_forward.1} parent=11 // pred_check
          %p761 = pneg %p222
        $region34: #{shufflenet_forward.1} parent=11 // pred_check_branch
          %763 = sbr.rel (%p761) target = $region36
        $region35: #{shufflenet_forward.1} parent=11 // pred_region
          _
        $region36: #{shufflenet_forward.1} parent=11 // pred_fallthru
          _
        // Predicated region
        $region37: #{shufflenet_forward.1} parent=11 // pred_check
          %p764 = pneg %p243
        $region38: #{shufflenet_forward.1} parent=11 // pred_check_branch
          %766 = sbr.rel (%p764) target = $region40
        $region39: #{shufflenet_forward.1} parent=11 // pred_region
          _
        $region40: #{shufflenet_forward.1} parent=11 // pred_fallthru
          _
        // Predicated region
        $region41: #{shufflenet_forward.1} parent=11 // pred_check
          %p767 = pneg %p264
        $region42: #{shufflenet_forward.1} parent=11 // pred_check_branch
          %769 = sbr.rel (%p767) target = $region44
        $region43: #{shufflenet_forward.1} parent=11 // pred_region
          _
        $region44: #{shufflenet_forward.1} parent=11 // pred_fallthru
          _
        // Predicated region
        $region45: #{shufflenet_forward.1} parent=11 // pred_check
          %p770 = pneg %p285
        $region46: #{shufflenet_forward.1} parent=11 // pred_check_branch
          %772 = sbr.rel (%p770) target = $region48
        $region47: #{shufflenet_forward.1} parent=11 // pred_region
          _
        $region48: #{shufflenet_forward.1} parent=11 // pred_fallthru
          _
        // Predicated region
        $region49: #{shufflenet_forward.1} parent=11 // pred_check
          %p773 = pneg %p306
        $region50: #{shufflenet_forward.1} parent=11 // pred_check_branch
          %775 = sbr.rel (%p773) target = $region52
        $region51: #{shufflenet_forward.1} parent=11 // pred_region
          _
        $region52: #{shufflenet_forward.1} parent=11 // pred_fallthru
          _
        // Predicated region
        $region53: #{shufflenet_forward.1} parent=11 // pred_check
          %p776 = pneg %p327
        $region54: #{shufflenet_forward.1} parent=11 // pred_check_branch
          %778 = sbr.rel (%p776) target = $region56
        $region55: #{shufflenet_forward.1} parent=11 // pred_region
          _
        $region56: #{shufflenet_forward.1} parent=11 // pred_fallthru
          _
        // Predicated region
        $region57: #{shufflenet_forward.1} parent=11 // pred_check
          %p779 = pneg %p348
        $region58: #{shufflenet_forward.1} parent=11 // pred_check_branch
          %781 = sbr.rel (%p779) target = $region60
        $region59: #{shufflenet_forward.1} parent=11 // pred_region
          _
        $region60: #{shufflenet_forward.1} parent=11 // pred_fallthru
          _
        // Predicated region
        $region61: #{shufflenet_forward.1} parent=11 // pred_check
          %p782 = pneg %p369
        $region62: #{shufflenet_forward.1} parent=11 // pred_check_branch
          %784 = sbr.rel (%p782) target = $region64
        $region63: #{shufflenet_forward.1} parent=11 // pred_region
          _
        $region64: #{shufflenet_forward.1} parent=11 // pred_fallthru
          _
        // Predicated region
        $region65: #{shufflenet_forward.1} parent=11 // pred_check
          %p785 = pneg %p390
        $region66: #{shufflenet_forward.1} parent=11 // pred_check_branch
          %787 = sbr.rel (%p785) target = $region68
        $region67: #{shufflenet_forward.1} parent=11 // pred_region
          _
        $region68: #{shufflenet_forward.1} parent=11 // pred_fallthru
          _
        // Predicated region
        $region69: #{shufflenet_forward.1} parent=11 // pred_check
          %p788 = pneg %p411
        $region70: #{shufflenet_forward.1} parent=11 // pred_check_branch
          %790 = sbr.rel (%p788) target = $region72
        $region71: #{shufflenet_forward.1} parent=11 // pred_region
          _
        $region72: #{shufflenet_forward.1} parent=11 // pred_fallthru
          _
        // Predicated region
        $region73: #{shufflenet_forward.1} parent=11 // pred_check
          %p791 = pneg %p432
        $region74: #{shufflenet_forward.1} parent=11 // pred_check_branch
          %793 = sbr.rel (%p791) target = $region76
        $region75: #{shufflenet_forward.1} parent=11 // pred_region
          _
        $region76: #{shufflenet_forward.1} parent=11 // pred_fallthru
          _
        // Predicated region
        $region77: #{shufflenet_forward.1} parent=11 // pred_check
          %p794 = pneg %p453
        $region78: #{shufflenet_forward.1} parent=11 // pred_check_branch
          %796 = sbr.rel (%p794) target = $region80
        $region79: #{shufflenet_forward.1} parent=11 // pred_region
          _
        $region80: #{shufflenet_forward.1} parent=11 // pred_fallthru
          _
        // Predicated region
        $region81: #{shufflenet_forward.1} parent=11 // pred_check
          %p797 = pneg %p474
        $region82: #{shufflenet_forward.1} parent=11 // pred_check_branch
          %799 = sbr.rel (%p797) target = $region84
        $region83: #{shufflenet_forward.1} parent=11 // pred_region
          _
        $region84: #{shufflenet_forward.1} parent=11 // pred_fallthru
          _
        // Predicated region
        $region85: #{shufflenet_forward.1} parent=11 // pred_check
          %p800 = pneg %p495
        $region86: #{shufflenet_forward.1} parent=11 // pred_check_branch
          %802 = sbr.rel (%p800) target = $region88
        $region87: #{shufflenet_forward.1} parent=11 // pred_region
          _
        $region88: #{shufflenet_forward.1} parent=11 // pred_fallthru
          _
        // Predicated region
        $region89: #{shufflenet_forward.1} parent=11 // pred_check
          %p803 = pneg %p516
        $region90: #{shufflenet_forward.1} parent=11 // pred_check_branch
          %805 = sbr.rel (%p803) target = $region92
        $region91: #{shufflenet_forward.1} parent=11 // pred_region
          _
        $region92: #{shufflenet_forward.1} parent=11 // pred_fallthru
          _
        // Predicated region
        $region93: #{shufflenet_forward.1} parent=11 // pred_check
          %p806 = pneg %p537
        $region94: #{shufflenet_forward.1} parent=11 // pred_check_branch
          %808 = sbr.rel (%p806) target = $region96
        $region95: #{shufflenet_forward.1} parent=11 // pred_region
          _
        $region96: #{shufflenet_forward.1} parent=11 // pred_fallthru
          _
        // Predicated region
        $region97: #{shufflenet_forward.1} parent=11 // pred_check
          %p809 = pneg %p558
        $region98: #{shufflenet_forward.1} parent=11 // pred_check_branch
          %811 = sbr.rel (%p809) target = $region100
        $region99: #{shufflenet_forward.1} parent=11 // pred_region
          _
        $region100: #{shufflenet_forward.1} parent=11 // pred_fallthru
          _
        // Predicated region
        $region101: #{shufflenet_forward.1} parent=11 // pred_check
          %p812 = pneg %p579
        $region102: #{shufflenet_forward.1} parent=11 // pred_check_branch
          %814 = sbr.rel (%p812) target = $region104
        $region103: #{shufflenet_forward.1} parent=11 // pred_region
          _
        $region104: #{shufflenet_forward.1} parent=11 // pred_fallthru
          _
        // Predicated region
        $region105: #{shufflenet_forward.1} parent=11 // pred_check
          %p815 = pneg %p600
        $region106: #{shufflenet_forward.1} parent=11 // pred_check_branch
          %817 = sbr.rel (%p815) target = $region108
        $region107: #{shufflenet_forward.1} parent=11 // pred_region
          _
        $region108: #{shufflenet_forward.1} parent=11 // pred_fallthru
          _
        // Predicated region
        $region109: #{shufflenet_forward.1} parent=11 // pred_check
          %p818 = pneg %p621
        $region110: #{shufflenet_forward.1} parent=11 // pred_check_branch
          %820 = sbr.rel (%p818) target = $region112
        $region111: #{shufflenet_forward.1} parent=11 // pred_region
          _
        $region112: #{shufflenet_forward.1} parent=11 // pred_fallthru
          _
        // Predicated region
        $region113: #{shufflenet_forward.1} parent=11 // pred_check
          %p821 = pneg %p642
        $region114: #{shufflenet_forward.1} parent=11 // pred_check_branch
          %823 = sbr.rel (%p821) target = $region116
        $region115: #{shufflenet_forward.1} parent=11 // pred_region
          _
        $region116: #{shufflenet_forward.1} parent=11 // pred_fallthru
          _
        // Predicated region
        $region117: #{shufflenet_forward.1} parent=11 // pred_check
          %p824 = pneg %p663
        $region118: #{shufflenet_forward.1} parent=11 // pred_check_branch
          %826 = sbr.rel (%p824) target = $region120
        $region119: #{shufflenet_forward.1} parent=11 // pred_region
          _
        $region120: #{shufflenet_forward.1} parent=11 // pred_fallthru
          _
        // Predicated region
        $region121: #{shufflenet_forward.1} parent=11 // pred_check
          %p827 = pneg %p684
        $region122: #{shufflenet_forward.1} parent=11 // pred_check_branch
          %829 = sbr.rel (%p827) target = $region124
        $region123: #{shufflenet_forward.1} parent=11 // pred_region
          _
        $region124: #{shufflenet_forward.1} parent=11 // pred_fallthru
          _
        // Predicated region
        $region125: #{shufflenet_forward.1} parent=11 // pred_check
          %p830 = pneg %p705
        $region126: #{shufflenet_forward.1} parent=11 // pred_check_branch
          %832 = sbr.rel (%p830) target = $region128
        $region127: #{shufflenet_forward.1} parent=11 // pred_region
          _
        $region128: #{shufflenet_forward.1} parent=11 // pred_fallthru
          _
      $region12: #{shufflenet_forward.1} parent=5 // pred_fallthru
        _
      %p833 = scmp.lt.s32.totalorder %s70, 4
      // Predicated region
      $region129: #{shufflenet_forward.1} parent=5 // pred_check
        %p834 = pneg %p833
      $region130: #{shufflenet_forward.1} parent=5 // pred_check_branch
        %836 = sbr.rel (%p834) target = $region132
      $region131: #{shufflenet_forward.1} parent=5 // pred_region
        // Predicated region
        $region133: #{shufflenet_forward.1} parent=131 // pred_check
          %p837 = pneg %p90
        $region134: #{shufflenet_forward.1} parent=131 // pred_check_branch
          %839 = sbr.rel (%p837) target = $region136
        $region135: #{shufflenet_forward.1} parent=131 // pred_region
          %p840 = scmp.lt.s32.totalorder %s70, 3
          %s841 = scalar_select %p840, %s70, 3
          %s842 = smul.addr %s841, 128
          %s843 = smul.addr %s842, 8
          %s844 = scalar_lea.vmem %s1, %s843
        $region136: #{shufflenet_forward.1} parent=131 // pred_fallthru
          _
      $region132: #{shufflenet_forward.1} parent=5 // pred_fallthru
        _
      %p845 = scmp.le.s32.totalorder 1, %s70
      %p846 = scmp.lt.s32.totalorder %s70, 5
      %p847 = pnand %p845, %p846
      %p848 = pneg %p847
      // Predicated region
      $region137: #{shufflenet_forward.1} parent=5 // pred_check
        _
      $region138: #{shufflenet_forward.1} parent=5 // pred_check_branch
        %850 = sbr.rel (%p847) target = $region140
      $region139: #{shufflenet_forward.1} parent=5 // pred_region
        %s851 = ssub.s32 %s70, 1
        %p852 = scmp.lt.s32.totalorder %s75, 3
        %s853 = scalar_select %p852, %s75, 3
        %s854 = smul.addr %s853, 128
        %s855 = smul.addr %s854, 8
        %s856 = scalar_lea.vmem %s1, %s855
        %p857 = pneg %p96
        %p858 = pneg %p93
        %p859 = pneg %p117
        %p860 = pneg %p114
        %p861 = pneg %p138
        %p862 = pneg %p135
        %p863 = pneg %p159
        %p864 = pneg %p156
        %p865 = pneg %p180
        %p866 = pneg %p177
        %p867 = pneg %p201
        %p868 = pneg %p198
        %p869 = pneg %p222
        %p870 = pneg %p219
        %p871 = pneg %p243
        %p872 = pneg %p240
        %p873 = pneg %p264
        %p874 = pneg %p261
        %p875 = pneg %p285
        %p876 = pneg %p282
        %p877 = pneg %p306
        %p878 = pneg %p303
        %p879 = pneg %p327
        %p880 = pneg %p324
        %p881 = pneg %p348
        %p882 = pneg %p345
        %p883 = pneg %p369
        %p884 = pneg %p366
        %p885 = pneg %p390
        %p886 = pneg %p387
        %p887 = pneg %p411
        %p888 = pneg %p408
        %p889 = pneg %p432
        %p890 = pneg %p429
        %p891 = pneg %p453
        %p892 = pneg %p450
        %p893 = pneg %p474
        %p894 = pneg %p471
        %p895 = pneg %p495
        %p896 = pneg %p492
        %p897 = pneg %p516
        %p898 = pneg %p513
        %p899 = pneg %p537
        %p900 = pneg %p534
        %p901 = pneg %p558
        %p902 = pneg %p555
        %p903 = pneg %p579
        %p904 = pneg %p576
        %p905 = pneg %p600
        %p906 = pneg %p597
        %p907 = pneg %p621
        %p908 = pneg %p618
        %p909 = pneg %p642
        %p910 = pneg %p639
        %p911 = pneg %p663
        %p912 = pneg %p660
        %p913 = pneg %p684
        %p914 = pneg %p681
        %p915 = pneg %p705
        %p916 = pneg %p702
        %p917 = pneg %p731
        %p918 = pneg %p728
        %s919 = sand.u32 %s718, 1
        %s920 = scalar_lea.sflag [#allocation7], %s919
        %s921 = sand.u32 %s718, 1
        %s922 = scalar_lea.vmem [#allocation6], %s921
        %p923 = scmp.lt.s32.totalorder %s75, 3
        %s924 = scalar_select %p923, %s75, 3
        %s925 = smul.addr %s924, 128
        %s926 = smul.addr %s925, 8
        %s927 = scalar_lea.vmem %s1, %s926
        %v929 = vld [vmem:[%s927] sm:$0xff]
        %v930 = vld [vmem:[%s927 + $0x8] sm:$0xff]
        %v931 = vld [vmem:[%s927 + $0x10] sm:$0xff]
        %v932 = vld [vmem:[%s927 + $0x18] sm:$0xff]
        %v933 = vld [vmem:[%s927 + $0x20] sm:$0xff]
        %v934 = vld [vmem:[%s927 + $0x28] sm:$0xff]
        %v935 = vld [vmem:[%s927 + $0x30] sm:$0xff]
        %v936 = vld [vmem:[%s927 + $0x38] sm:$0xff]
        %v937 = vld [vmem:[%s927 + $0x40] sm:$0xff]
        %v938 = vld [vmem:[%s927 + $0x48] sm:$0xff]
        %v939 = vld [vmem:[%s927 + $0x50] sm:$0xff]
        %v940 = vld [vmem:[%s927 + $0x58] sm:$0xff]
        %v941 = vld [vmem:[%s927 + $0x60] sm:$0xff]
        %v942 = vld [vmem:[%s927 + $0x68] sm:$0xff]
        %v943 = vld [vmem:[%s927 + $0x70] sm:$0xff]
        %v944 = vld [vmem:[%s927 + $0x78] sm:$0xff]
        %v945 = vld [vmem:[%s927 + $0x80] sm:$0xff]
        %v946 = vld [vmem:[%s927 + $0x88] sm:$0xff]
        %v947 = vld [vmem:[%s927 + $0x90] sm:$0xff]
        %v948 = vld [vmem:[%s927 + $0x98] sm:$0xff]
        %v949 = vld [vmem:[%s927 + $0xa0] sm:$0xff]
        %v950 = vld [vmem:[%s927 + $0xa8] sm:$0xff]
        %v951 = vld [vmem:[%s927 + $0xb0] sm:$0xff]
        %v952 = vld [vmem:[%s927 + $0xb8] sm:$0xff]
        %v953 = vld [vmem:[%s927 + $0xc0] sm:$0xff]
        %v954 = vld [vmem:[%s927 + $0xc8] sm:$0xff]
        %v955 = vld [vmem:[%s927 + $0xd0] sm:$0xff]
        %v956 = vld [vmem:[%s927 + $0xd8] sm:$0xff]
        %v957 = vld [vmem:[%s927 + $0xe0] sm:$0xff]
        %v958 = vld [vmem:[%s927 + $0xe8] sm:$0xff]
        %v959 = vld [vmem:[%s927 + $0xf0] sm:$0xff]
        %v960 = vld [vmem:[%s927 + $0xf8] sm:$0xff]
        %v961 = vld [vmem:[%s927 + $0x100] sm:$0xff]
        %v962 = vld [vmem:[%s927 + $0x108] sm:$0xff]
        %v963 = vld [vmem:[%s927 + $0x110] sm:$0xff]
        %v964 = vld [vmem:[%s927 + $0x118] sm:$0xff]
        %v965 = vld [vmem:[%s927 + $0x120] sm:$0xff]
        %v966 = vld [vmem:[%s927 + $0x128] sm:$0xff]
        %v967 = vld [vmem:[%s927 + $0x130] sm:$0xff]
        %v968 = vld [vmem:[%s927 + $0x138] sm:$0xff]
        %v969 = vld [vmem:[%s927 + $0x140] sm:$0xff]
        %v970 = vld [vmem:[%s927 + $0x148] sm:$0xff]
        %v971 = vld [vmem:[%s927 + $0x150] sm:$0xff]
        %v972 = vld [vmem:[%s927 + $0x158] sm:$0xff]
        %v973 = vld [vmem:[%s927 + $0x160] sm:$0xff]
        %v974 = vld [vmem:[%s927 + $0x168] sm:$0xff]
        %v975 = vld [vmem:[%s927 + $0x170] sm:$0xff]
        %v976 = vld [vmem:[%s927 + $0x178] sm:$0xff]
        %v977 = vld [vmem:[%s927 + $0x180] sm:$0xff]
        %v978 = vld [vmem:[%s927 + $0x188] sm:$0xff]
        %v979 = vld [vmem:[%s927 + $0x190] sm:$0xff]
        %v980 = vld [vmem:[%s927 + $0x198] sm:$0xff]
        %v981 = vld [vmem:[%s927 + $0x1a0] sm:$0xff]
        %v982 = vld [vmem:[%s927 + $0x1a8] sm:$0xff]
        %v983 = vld [vmem:[%s927 + $0x1b0] sm:$0xff]
        %v984 = vld [vmem:[%s927 + $0x1b8] sm:$0xff]
        %v985 = vld [vmem:[%s927 + $0x1c0] sm:$0xff]
        %v986 = vld [vmem:[%s927 + $0x1c8] sm:$0xff]
        %v987 = vld [vmem:[%s927 + $0x1d0] sm:$0xff]
        %v988 = vld [vmem:[%s927 + $0x1d8] sm:$0xff]
        %v989 = vld [vmem:[%s927 + $0x1e0] sm:$0xff]
        %v990 = vld [vmem:[%s927 + $0x1e8] sm:$0xff]
        %v991 = vld [vmem:[%s927 + $0x1f0] sm:$0xff]
        %v992 = vld [vmem:[%s927 + $0x1f8] sm:$0xff]
        %v993 = vld [vmem:[%s927 + $0x200] sm:$0xff]
        %v994 = vld [vmem:[%s927 + $0x208] sm:$0xff]
        %v995 = vld [vmem:[%s927 + $0x210] sm:$0xff]
        %v996 = vld [vmem:[%s927 + $0x218] sm:$0xff]
        %v997 = vld [vmem:[%s927 + $0x220] sm:$0xff]
        %v998 = vld [vmem:[%s927 + $0x228] sm:$0xff]
        %v999 = vld [vmem:[%s927 + $0x230] sm:$0xff]
        %v1000 = vld [vmem:[%s927 + $0x238] sm:$0xff]
        %v1001 = vld [vmem:[%s927 + $0x240] sm:$0xff]
        %v1002 = vld [vmem:[%s927 + $0x248] sm:$0xff]
        %v1003 = vld [vmem:[%s927 + $0x250] sm:$0xff]
        %v1004 = vld [vmem:[%s927 + $0x258] sm:$0xff]
        %v1005 = vld [vmem:[%s927 + $0x260] sm:$0xff]
        %v1006 = vld [vmem:[%s927 + $0x268] sm:$0xff]
        %v1007 = vld [vmem:[%s927 + $0x270] sm:$0xff]
        %v1008 = vld [vmem:[%s927 + $0x278] sm:$0xff]
        %v1009 = vld [vmem:[%s927 + $0x280] sm:$0xff]
        %v1010 = vld [vmem:[%s927 + $0x288] sm:$0xff]
        %v1011 = vld [vmem:[%s927 + $0x290] sm:$0xff]
        %v1012 = vld [vmem:[%s927 + $0x298] sm:$0xff]
        %v1013 = vld [vmem:[%s927 + $0x2a0] sm:$0xff]
        %v1014 = vld [vmem:[%s927 + $0x2a8] sm:$0xff]
        %v1015 = vld [vmem:[%s927 + $0x2b0] sm:$0xff]
        %v1016 = vld [vmem:[%s927 + $0x2b8] sm:$0xff]
        %v1017 = vld [vmem:[%s927 + $0x2c0] sm:$0xff]
        %v1018 = vld [vmem:[%s927 + $0x2c8] sm:$0xff]
        %v1019 = vld [vmem:[%s927 + $0x2d0] sm:$0xff]
        %v1020 = vld [vmem:[%s927 + $0x2d8] sm:$0xff]
        %v1021 = vld [vmem:[%s927 + $0x2e0] sm:$0xff]
        %v1022 = vld [vmem:[%s927 + $0x2e8] sm:$0xff]
        %v1023 = vld [vmem:[%s927 + $0x2f0] sm:$0xff]
        %v1024 = vld [vmem:[%s927 + $0x2f8] sm:$0xff]
        %v1025 = vld [vmem:[%s927 + $0x300] sm:$0xff]
        %v1026 = vld [vmem:[%s927 + $0x308] sm:$0xff]
        %v1027 = vld [vmem:[%s927 + $0x310] sm:$0xff]
        %v1028 = vld [vmem:[%s927 + $0x318] sm:$0xff]
        %v1029 = vld [vmem:[%s927 + $0x320] sm:$0xff]
        %v1030 = vld [vmem:[%s927 + $0x328] sm:$0xff]
        %v1031 = vld [vmem:[%s927 + $0x330] sm:$0xff]
        %v1032 = vld [vmem:[%s927 + $0x338] sm:$0xff]
        %v1033 = vld [vmem:[%s927 + $0x340] sm:$0xff]
        %v1034 = vld [vmem:[%s927 + $0x348] sm:$0xff]
        %v1035 = vld [vmem:[%s927 + $0x350] sm:$0xff]
        %v1036 = vld [vmem:[%s927 + $0x358] sm:$0xff]
        %v1037 = vld [vmem:[%s927 + $0x360] sm:$0xff]
        %v1038 = vld [vmem:[%s927 + $0x368] sm:$0xff]
        %v1039 = vld [vmem:[%s927 + $0x370] sm:$0xff]
        %v1040 = vld [vmem:[%s927 + $0x378] sm:$0xff]
        %v1041 = vld [vmem:[%s927 + $0x380] sm:$0xff]
        %v1042 = vld [vmem:[%s927 + $0x388] sm:$0xff]
        %v1043 = vld [vmem:[%s927 + $0x390] sm:$0xff]
        %v1044 = vld [vmem:[%s927 + $0x398] sm:$0xff]
        %v1045 = vld [vmem:[%s927 + $0x3a0] sm:$0xff]
        %v1046 = vld [vmem:[%s927 + $0x3a8] sm:$0xff]
        %v1047 = vld [vmem:[%s927 + $0x3b0] sm:$0xff]
        %v1048 = vld [vmem:[%s927 + $0x3b8] sm:$0xff]
        %v1049 = vld [vmem:[%s927 + $0x3c0] sm:$0xff]
        %v1050 = vld [vmem:[%s927 + $0x3c8] sm:$0xff]
        %v1051 = vld [vmem:[%s927 + $0x3d0] sm:$0xff]
        %v1052 = vld [vmem:[%s927 + $0x3d8] sm:$0xff]
        %v1053 = vld [vmem:[%s927 + $0x3e0] sm:$0xff]
        %v1054 = vld [vmem:[%s927 + $0x3e8] sm:$0xff]
        %v1055 = vld [vmem:[%s927 + $0x3f0] sm:$0xff]
        %v1056 = vld [vmem:[%s927 + $0x3f8] sm:$0xff]
        %v1057 = vpack.c.bf16 %v930, %v929
        %v1058 = vpack.c.bf16 %v932, %v931
        %v1059 = vpack.c.bf16 %v934, %v933
        %v1060 = vpack.c.bf16 %v936, %v935
        %v1061 = vpack.c.bf16 %v938, %v937
        %v1062 = vpack.c.bf16 %v940, %v939
        %v1063 = vpack.c.bf16 %v942, %v941
        %v1064 = vpack.c.bf16 %v944, %v943
        %v1065 = vpack.c.bf16 %v946, %v945
        %v1066 = vpack.c.bf16 %v948, %v947
        %v1067 = vpack.c.bf16 %v950, %v949
        %v1068 = vpack.c.bf16 %v952, %v951
        %v1069 = vpack.c.bf16 %v954, %v953
        %v1070 = vpack.c.bf16 %v956, %v955
        %v1071 = vpack.c.bf16 %v958, %v957
        %v1072 = vpack.c.bf16 %v960, %v959
        %v1073 = vpack.c.bf16 %v962, %v961
        %v1074 = vpack.c.bf16 %v964, %v963
        %v1075 = vpack.c.bf16 %v966, %v965
        %v1076 = vpack.c.bf16 %v968, %v967
        %v1077 = vpack.c.bf16 %v970, %v969
        %v1078 = vpack.c.bf16 %v972, %v971
        %v1079 = vpack.c.bf16 %v974, %v973
        %v1080 = vpack.c.bf16 %v976, %v975
        %v1081 = vpack.c.bf16 %v978, %v977
        %v1082 = vpack.c.bf16 %v980, %v979
        %v1083 = vpack.c.bf16 %v982, %v981
        %v1084 = vpack.c.bf16 %v984, %v983
        %v1085 = vpack.c.bf16 %v986, %v985
        %v1086 = vpack.c.bf16 %v988, %v987
        %v1087 = vpack.c.bf16 %v990, %v989
        %v1088 = vpack.c.bf16 %v992, %v991
        %v1089 = vpack.c.bf16 %v994, %v993
        %v1090 = vpack.c.bf16 %v996, %v995
        %v1091 = vpack.c.bf16 %v998, %v997
        %v1092 = vpack.c.bf16 %v1000, %v999
        %v1093 = vpack.c.bf16 %v1002, %v1001
        %v1094 = vpack.c.bf16 %v1004, %v1003
        %v1095 = vpack.c.bf16 %v1006, %v1005
        %v1096 = vpack.c.bf16 %v1008, %v1007
        %v1097 = vpack.c.bf16 %v1010, %v1009
        %v1098 = vpack.c.bf16 %v1012, %v1011
        %v1099 = vpack.c.bf16 %v1014, %v1013
        %v1100 = vpack.c.bf16 %v1016, %v1015
        %v1101 = vpack.c.bf16 %v1018, %v1017
        %v1102 = vpack.c.bf16 %v1020, %v1019
        %v1103 = vpack.c.bf16 %v1022, %v1021
        %v1104 = vpack.c.bf16 %v1024, %v1023
        %v1105 = vpack.c.bf16 %v1026, %v1025
        %v1106 = vpack.c.bf16 %v1028, %v1027
        %v1107 = vpack.c.bf16 %v1030, %v1029
        %v1108 = vpack.c.bf16 %v1032, %v1031
        %v1109 = vpack.c.bf16 %v1034, %v1033
        %v1110 = vpack.c.bf16 %v1036, %v1035
        %v1111 = vpack.c.bf16 %v1038, %v1037
        %v1112 = vpack.c.bf16 %v1040, %v1039
        %v1113 = vpack.c.bf16 %v1042, %v1041
        %v1114 = vpack.c.bf16 %v1044, %v1043
        %v1115 = vpack.c.bf16 %v1046, %v1045
        %v1116 = vpack.c.bf16 %v1048, %v1047
        %v1117 = vpack.c.bf16 %v1050, %v1049
        %v1118 = vpack.c.bf16 %v1052, %v1051
        %v1119 = vpack.c.bf16 %v1054, %v1053
        %v1120 = vpack.c.bf16 %v1056, %v1055
        %v1121 = vld [vmem:[%s3] sm:$0x3]
        %v1122 = vld [vmem:[%s5] sm:$0x1]
        %v1124 = vlaneseq
        %v1125 = vshrl.u32 %v1124, 7
        %v1126 = vsub.s32 0, %v1125
        %v1127 = vrot.slane %v1122, %v1126
        %vm1129 = vcmask 23552
        %v1131 = vsel %vm1129, %v1057, 0
        %v1134 = vsel %vm1129, %v1058, 0
        %v1137 = vsel %vm1129, %v1059, 0
        %v1140 = vsel %vm1129, %v1060, 0
        %v1143 = vsel %vm1129, %v1061, 0
        %v1146 = vsel %vm1129, %v1062, 0
        %v1149 = vsel %vm1129, %v1063, 0
        %v1152 = vsel %vm1129, %v1064, 0
        %v1155 = vsel %vm1129, %v1065, 0
        %v1158 = vsel %vm1129, %v1066, 0
        %v1161 = vsel %vm1129, %v1067, 0
        %v1164 = vsel %vm1129, %v1068, 0
        %v1167 = vsel %vm1129, %v1069, 0
        %v1170 = vsel %vm1129, %v1070, 0
        %v1173 = vsel %vm1129, %v1071, 0
        %v1176 = vsel %vm1129, %v1072, 0
        %v1179 = vsel %vm1129, %v1073, 0
        %v1182 = vsel %vm1129, %v1074, 0
        %v1185 = vsel %vm1129, %v1075, 0
        %v1188 = vsel %vm1129, %v1076, 0
        %v1191 = vsel %vm1129, %v1077, 0
        %v1194 = vsel %vm1129, %v1078, 0
        %v1197 = vsel %vm1129, %v1079, 0
        %v1200 = vsel %vm1129, %v1080, 0
        %v1203 = vsel %vm1129, %v1081, 0
        %v1206 = vsel %vm1129, %v1082, 0
        %v1209 = vsel %vm1129, %v1083, 0
        %v1212 = vsel %vm1129, %v1084, 0
        %v1215 = vsel %vm1129, %v1085, 0
        %v1218 = vsel %vm1129, %v1086, 0
        %v1221 = vsel %vm1129, %v1087, 0
        %v1224 = vsel %vm1129, %v1088, 0
        %v1227 = vsel %vm1129, %v1089, 0
        %v1230 = vsel %vm1129, %v1090, 0
        %v1233 = vsel %vm1129, %v1091, 0
        %v1236 = vsel %vm1129, %v1092, 0
        %v1239 = vsel %vm1129, %v1093, 0
        %v1242 = vsel %vm1129, %v1094, 0
        %v1245 = vsel %vm1129, %v1095, 0
        %v1248 = vsel %vm1129, %v1096, 0
        %v1251 = vsel %vm1129, %v1097, 0
        %v1254 = vsel %vm1129, %v1098, 0
        %v1257 = vsel %vm1129, %v1099, 0
        %v1260 = vsel %vm1129, %v1100, 0
        %v1263 = vsel %vm1129, %v1101, 0
        %v1266 = vsel %vm1129, %v1102, 0
        %v1269 = vsel %vm1129, %v1103, 0
        %v1272 = vsel %vm1129, %v1104, 0
        %v1275 = vsel %vm1129, %v1105, 0
        %v1278 = vsel %vm1129, %v1106, 0
        %v1281 = vsel %vm1129, %v1107, 0
        %v1284 = vsel %vm1129, %v1108, 0
        %v1287 = vsel %vm1129, %v1109, 0
        %v1290 = vsel %vm1129, %v1110, 0
        %v1293 = vsel %vm1129, %v1111, 0
        %v1296 = vsel %vm1129, %v1112, 0
        %v1299 = vsel %vm1129, %v1113, 0
        %v1302 = vsel %vm1129, %v1114, 0
        %v1305 = vsel %vm1129, %v1115, 0
        %v1308 = vsel %vm1129, %v1116, 0
        %v1311 = vsel %vm1129, %v1117, 0
        %v1314 = vsel %vm1129, %v1118, 0
        %v1317 = vsel %vm1129, %v1119, 0
        %v1320 = vsel %vm1129, %v1120, 0
        %vm1322 = vcmask 1040384
        %vm1323 = vcmask 1041408
        %v1324 = vsel %vm1322, 4294967295, 65535
        %v1325 = vsel %vm1323, %v1324, 0
        %v1327 = vand.u32 %v1121, %v1325
        %1329 = vmatprep.subr.bf16.mxu0 0
        %1330 = vmatpush1.bf16.msra.mxu0 0
        %1331 = vmatprep.subr.bf16.mxu0 0
        %1332 = vmatpush1.bf16.msra.mxu0 0
        %1333 = vmatprep.subr.bf16.mxu0 0
        %1334 = vmatpush1.bf16.msra.mxu0 0
        %1335 = vmatprep.subr.bf16.mxu0 0
        %1336 = vmatpush1.bf16.msra.mxu0 0
        %1337 = vmatprep.subr.bf16.mxu0 0
        %1338 = vmatpush1.bf16.msra.mxu0 0
        %1339 = vmatprep.subr.bf16.mxu0 0
        %1340 = vmatpush1.bf16.msra.mxu0 0
        %1341 = vmatprep.subr.bf16.mxu0 0
        %1342 = vmatpush1.bf16.msra.mxu0 0
        %1343 = vmatprep.subr.bf16.mxu0 0
        %1344 = vmatpush1.bf16.msra.mxu0 %v1327
        %1345 = vmatprep.subr.bf16.mxu0 0
        %1346 = vmatpush2.bf16.msra.mxu0 0
        %1347 = vmatprep.subr.bf16.mxu0 0
        %1348 = vmatpush2.bf16.msra.mxu0 0
        %1349 = vmatprep.subr.bf16.mxu0 0
        %1350 = vmatpush2.bf16.msra.mxu0 0
        %1351 = vmatprep.subr.bf16.mxu0 0
        %1352 = vmatpush2.bf16.msra.mxu0 0
        %1353 = vmatprep.subr.bf16.mxu0 0
        %1354 = vmatpush2.bf16.msra.mxu0 0
        %1355 = vmatprep.subr.bf16.mxu0 0
        %1356 = vmatpush2.bf16.msra.mxu0 0
        %1357 = vmatprep.subr.bf16.mxu0 0
        %1358 = vmatpush2.bf16.msra.mxu0 0
        %1359 = vmatprep.subr.bf16.mxu0 0
        %1360 = vmatpush2.bf16.msra.mxu0 0
        %1361 = vmatprep.mubr.bf16.mxu0 0
        %1362 = vmatmul.mubr.bf16.gmra.mxu0 %v1131
        %v1363 = vpop.f32.mrf.mxu0
        %v1364 = vadd.f32 %v1127, %v1363
        %v1365 = vpop.f32.mrf.mxu0
        %v1366 = vpop.f32.mrf.mxu0
        %v1367 = vadd.f32 %v1127, %v1366
        %v1368 = vpop.f32.mrf.mxu0
        %1369 = vmatprep.mubr.bf16.mxu0 0
        %1370 = vmatmul.mubr.bf16.gmra.mxu0 %v1134
        %v1371 = vpop.f32.mrf.mxu0
        %v1372 = vadd.f32 %v1127, %v1371
        %v1373 = vpop.f32.mrf.mxu0
        %v1374 = vpop.f32.mrf.mxu0
        %v1375 = vadd.f32 %v1127, %v1374
        %v1376 = vpop.f32.mrf.mxu0
        %1377 = vmatprep.mubr.bf16.mxu0 0
        %1378 = vmatmul.mubr.bf16.gmra.mxu0 %v1137
        %v1379 = vpop.f32.mrf.mxu0
        %v1380 = vadd.f32 %v1127, %v1379
        %v1381 = vpop.f32.mrf.mxu0
        %v1382 = vpop.f32.mrf.mxu0
        %v1383 = vadd.f32 %v1127, %v1382
        %v1384 = vpop.f32.mrf.mxu0
        %1385 = vmatprep.mubr.bf16.mxu0 0
        %1386 = vmatmul.mubr.bf16.gmra.mxu0 %v1140
        %v1387 = vpop.f32.mrf.mxu0
        %v1388 = vadd.f32 %v1127, %v1387
        %v1389 = vpop.f32.mrf.mxu0
        %v1390 = vpop.f32.mrf.mxu0
        %v1391 = vadd.f32 %v1127, %v1390
        %v1392 = vpop.f32.mrf.mxu0
        %1393 = vmatprep.mubr.bf16.mxu0 0
        %1394 = vmatmul.mubr.bf16.gmra.mxu0 %v1143
        %v1395 = vpop.f32.mrf.mxu0
        %v1396 = vadd.f32 %v1127, %v1395
        %v1397 = vpop.f32.mrf.mxu0
        %v1398 = vpop.f32.mrf.mxu0
        %v1399 = vadd.f32 %v1127, %v1398
        %v1400 = vpop.f32.mrf.mxu0
        %1401 = vmatprep.mubr.bf16.mxu0 0
        %1402 = vmatmul.mubr.bf16.gmra.mxu0 %v1146
        %v1403 = vpop.f32.mrf.mxu0
        %v1404 = vadd.f32 %v1127, %v1403
        %v1405 = vpop.f32.mrf.mxu0
        %v1406 = vpop.f32.mrf.mxu0
        %v1407 = vadd.f32 %v1127, %v1406
        %v1408 = vpop.f32.mrf.mxu0
        %1409 = vmatprep.mubr.bf16.mxu0 0
        %1410 = vmatmul.mubr.bf16.gmra.mxu0 %v1149
        %v1411 = vpop.f32.mrf.mxu0
        %v1412 = vadd.f32 %v1127, %v1411
        %v1413 = vpop.f32.mrf.mxu0
        %v1414 = vpop.f32.mrf.mxu0
        %v1415 = vadd.f32 %v1127, %v1414
        %v1416 = vpop.f32.mrf.mxu0
        %1417 = vmatprep.mubr.bf16.mxu0 0
        %1418 = vmatmul.mubr.bf16.gmra.mxu0 %v1152
        %v1419 = vpop.f32.mrf.mxu0
        %v1420 = vadd.f32 %v1127, %v1419
        %v1421 = vpop.f32.mrf.mxu0
        %v1422 = vpop.f32.mrf.mxu0
        %v1423 = vadd.f32 %v1127, %v1422
        %v1424 = vpop.f32.mrf.mxu0
        %1425 = vmatprep.mubr.bf16.mxu0 0
        %1426 = vmatmul.mubr.bf16.gmra.mxu0 %v1155
        %v1427 = vpop.f32.mrf.mxu0
        %v1428 = vadd.f32 %v1127, %v1427
        %v1429 = vpop.f32.mrf.mxu0
        %v1430 = vpop.f32.mrf.mxu0
        %v1431 = vadd.f32 %v1127, %v1430
        %v1432 = vpop.f32.mrf.mxu0
        %1433 = vmatprep.mubr.bf16.mxu0 0
        %1434 = vmatmul.mubr.bf16.gmra.mxu0 %v1158
        %v1435 = vpop.f32.mrf.mxu0
        %v1436 = vadd.f32 %v1127, %v1435
        %v1437 = vpop.f32.mrf.mxu0
        %v1438 = vpop.f32.mrf.mxu0
        %v1439 = vadd.f32 %v1127, %v1438
        %v1440 = vpop.f32.mrf.mxu0
        %1441 = vmatprep.mubr.bf16.mxu0 0
        %1442 = vmatmul.mubr.bf16.gmra.mxu0 %v1161
        %v1443 = vpop.f32.mrf.mxu0
        %v1444 = vadd.f32 %v1127, %v1443
        %v1445 = vpop.f32.mrf.mxu0
        %v1446 = vpop.f32.mrf.mxu0
        %v1447 = vadd.f32 %v1127, %v1446
        %v1448 = vpop.f32.mrf.mxu0
        %1449 = vmatprep.mubr.bf16.mxu0 0
        %1450 = vmatmul.mubr.bf16.gmra.mxu0 %v1164
        %v1451 = vpop.f32.mrf.mxu0
        %v1452 = vadd.f32 %v1127, %v1451
        %v1453 = vpop.f32.mrf.mxu0
        %v1454 = vpop.f32.mrf.mxu0
        %v1455 = vadd.f32 %v1127, %v1454
        %v1456 = vpop.f32.mrf.mxu0
        %1457 = vmatprep.mubr.bf16.mxu0 0
        %1458 = vmatmul.mubr.bf16.gmra.mxu0 %v1167
        %v1459 = vpop.f32.mrf.mxu0
        %v1460 = vadd.f32 %v1127, %v1459
        %v1461 = vpop.f32.mrf.mxu0
        %v1462 = vpop.f32.mrf.mxu0
        %v1463 = vadd.f32 %v1127, %v1462
        %v1464 = vpop.f32.mrf.mxu0
        %1465 = vmatprep.mubr.bf16.mxu0 0
        %1466 = vmatmul.mubr.bf16.gmra.mxu0 %v1170
        %v1467 = vpop.f32.mrf.mxu0
        %v1468 = vadd.f32 %v1127, %v1467
        %v1469 = vpop.f32.mrf.mxu0
        %v1470 = vpop.f32.mrf.mxu0
        %v1471 = vadd.f32 %v1127, %v1470
        %v1472 = vpop.f32.mrf.mxu0
        %1473 = vmatprep.mubr.bf16.mxu0 0
        %1474 = vmatmul.mubr.bf16.gmra.mxu0 %v1173
        %v1475 = vpop.f32.mrf.mxu0
        %v1476 = vadd.f32 %v1127, %v1475
        %v1477 = vpop.f32.mrf.mxu0
        %v1478 = vpop.f32.mrf.mxu0
        %v1479 = vadd.f32 %v1127, %v1478
        %v1480 = vpop.f32.mrf.mxu0
        %1481 = vmatprep.mubr.bf16.mxu0 0
        %1482 = vmatmul.mubr.bf16.gmra.mxu0 %v1176
        %v1483 = vpop.f32.mrf.mxu0
        %v1484 = vadd.f32 %v1127, %v1483
        %v1485 = vpop.f32.mrf.mxu0
        %v1486 = vpop.f32.mrf.mxu0
        %v1487 = vadd.f32 %v1127, %v1486
        %v1488 = vpop.f32.mrf.mxu0
        %1489 = vmatprep.mubr.bf16.mxu0 0
        %1490 = vmatmul.mubr.bf16.gmra.mxu0 %v1179
        %v1491 = vpop.f32.mrf.mxu0
        %v1492 = vadd.f32 %v1127, %v1491
        %v1493 = vpop.f32.mrf.mxu0
        %v1494 = vpop.f32.mrf.mxu0
        %v1495 = vadd.f32 %v1127, %v1494
        %v1496 = vpop.f32.mrf.mxu0
        %1497 = vmatprep.mubr.bf16.mxu0 0
        %1498 = vmatmul.mubr.bf16.gmra.mxu0 %v1182
        %v1499 = vpop.f32.mrf.mxu0
        %v1500 = vadd.f32 %v1127, %v1499
        %v1501 = vpop.f32.mrf.mxu0
        %v1502 = vpop.f32.mrf.mxu0
        %v1503 = vadd.f32 %v1127, %v1502
        %v1504 = vpop.f32.mrf.mxu0
        %1505 = vmatprep.mubr.bf16.mxu0 0
        %1506 = vmatmul.mubr.bf16.gmra.mxu0 %v1185
        %v1507 = vpop.f32.mrf.mxu0
        %v1508 = vadd.f32 %v1127, %v1507
        %v1509 = vpop.f32.mrf.mxu0
        %v1510 = vpop.f32.mrf.mxu0
        %v1511 = vadd.f32 %v1127, %v1510
        %v1512 = vpop.f32.mrf.mxu0
        %1513 = vmatprep.mubr.bf16.mxu0 0
        %1514 = vmatmul.mubr.bf16.gmra.mxu0 %v1188
        %v1515 = vpop.f32.mrf.mxu0
        %v1516 = vadd.f32 %v1127, %v1515
        %v1517 = vpop.f32.mrf.mxu0
        %v1518 = vpop.f32.mrf.mxu0
        %v1519 = vadd.f32 %v1127, %v1518
        %v1520 = vpop.f32.mrf.mxu0
        %1521 = vmatprep.mubr.bf16.mxu0 0
        %1522 = vmatmul.mubr.bf16.gmra.mxu0 %v1191
        %v1523 = vpop.f32.mrf.mxu0
        %v1524 = vadd.f32 %v1127, %v1523
        %v1525 = vpop.f32.mrf.mxu0
        %v1526 = vpop.f32.mrf.mxu0
        %v1527 = vadd.f32 %v1127, %v1526
        %v1528 = vpop.f32.mrf.mxu0
        %1529 = vmatprep.mubr.bf16.mxu0 0
        %1530 = vmatmul.mubr.bf16.gmra.mxu0 %v1194
        %v1531 = vpop.f32.mrf.mxu0
        %v1532 = vadd.f32 %v1127, %v1531
        %v1533 = vpop.f32.mrf.mxu0
        %v1534 = vpop.f32.mrf.mxu0
        %v1535 = vadd.f32 %v1127, %v1534
        %v1536 = vpop.f32.mrf.mxu0
        %1537 = vmatprep.mubr.bf16.mxu0 0
        %1538 = vmatmul.mubr.bf16.gmra.mxu0 %v1197
        %v1539 = vpop.f32.mrf.mxu0
        %v1540 = vadd.f32 %v1127, %v1539
        %v1541 = vpop.f32.mrf.mxu0
        %v1542 = vpop.f32.mrf.mxu0
        %v1543 = vadd.f32 %v1127, %v1542
        %v1544 = vpop.f32.mrf.mxu0
        %1545 = vmatprep.mubr.bf16.mxu0 0
        %1546 = vmatmul.mubr.bf16.gmra.mxu0 %v1200
        %v1547 = vpop.f32.mrf.mxu0
        %v1548 = vadd.f32 %v1127, %v1547
        %v1549 = vpop.f32.mrf.mxu0
        %v1550 = vpop.f32.mrf.mxu0
        %v1551 = vadd.f32 %v1127, %v1550
        %v1552 = vpop.f32.mrf.mxu0
        %1553 = vmatprep.mubr.bf16.mxu0 0
        %1554 = vmatmul.mubr.bf16.gmra.mxu0 %v1203
        %v1555 = vpop.f32.mrf.mxu0
        %v1556 = vadd.f32 %v1127, %v1555
        %v1557 = vpop.f32.mrf.mxu0
        %v1558 = vpop.f32.mrf.mxu0
        %v1559 = vadd.f32 %v1127, %v1558
        %v1560 = vpop.f32.mrf.mxu0
        %1561 = vmatprep.mubr.bf16.mxu0 0
        %1562 = vmatmul.mubr.bf16.gmra.mxu0 %v1206
        %v1563 = vpop.f32.mrf.mxu0
        %v1564 = vadd.f32 %v1127, %v1563
        %v1565 = vpop.f32.mrf.mxu0
        %v1566 = vpop.f32.mrf.mxu0
        %v1567 = vadd.f32 %v1127, %v1566
        %v1568 = vpop.f32.mrf.mxu0
        %1569 = vmatprep.mubr.bf16.mxu0 0
        %1570 = vmatmul.mubr.bf16.gmra.mxu0 %v1209
        %v1571 = vpop.f32.mrf.mxu0
        %v1572 = vadd.f32 %v1127, %v1571
        %v1573 = vpop.f32.mrf.mxu0
        %v1574 = vpop.f32.mrf.mxu0
        %v1575 = vadd.f32 %v1127, %v1574
        %v1576 = vpop.f32.mrf.mxu0
        %1577 = vmatprep.mubr.bf16.mxu0 0
        %1578 = vmatmul.mubr.bf16.gmra.mxu0 %v1212
        %v1579 = vpop.f32.mrf.mxu0
        %v1580 = vadd.f32 %v1127, %v1579
        %v1581 = vpop.f32.mrf.mxu0
        %v1582 = vpop.f32.mrf.mxu0
        %v1583 = vadd.f32 %v1127, %v1582
        %v1584 = vpop.f32.mrf.mxu0
        %1585 = vmatprep.mubr.bf16.mxu0 0
        %1586 = vmatmul.mubr.bf16.gmra.mxu0 %v1215
        %v1587 = vpop.f32.mrf.mxu0
        %v1588 = vadd.f32 %v1127, %v1587
        %v1589 = vpop.f32.mrf.mxu0
        %v1590 = vpop.f32.mrf.mxu0
        %v1591 = vadd.f32 %v1127, %v1590
        %v1592 = vpop.f32.mrf.mxu0
        %1593 = vmatprep.mubr.bf16.mxu0 0
        %1594 = vmatmul.mubr.bf16.gmra.mxu0 %v1218
        %v1595 = vpop.f32.mrf.mxu0
        %v1596 = vadd.f32 %v1127, %v1595
        %v1597 = vpop.f32.mrf.mxu0
        %v1598 = vpop.f32.mrf.mxu0
        %v1599 = vadd.f32 %v1127, %v1598
        %v1600 = vpop.f32.mrf.mxu0
        %1601 = vmatprep.mubr.bf16.mxu0 0
        %1602 = vmatmul.mubr.bf16.gmra.mxu0 %v1221
        %v1603 = vpop.f32.mrf.mxu0
        %v1604 = vadd.f32 %v1127, %v1603
        %v1605 = vpop.f32.mrf.mxu0
        %v1606 = vpop.f32.mrf.mxu0
        %v1607 = vadd.f32 %v1127, %v1606
        %v1608 = vpop.f32.mrf.mxu0
        %1609 = vmatprep.mubr.bf16.mxu0 0
        %1610 = vmatmul.mubr.bf16.gmra.mxu0 %v1224
        %v1611 = vpop.f32.mrf.mxu0
        %v1612 = vadd.f32 %v1127, %v1611
        %v1613 = vpop.f32.mrf.mxu0
        %v1614 = vpop.f32.mrf.mxu0
        %v1615 = vadd.f32 %v1127, %v1614
        %v1616 = vpop.f32.mrf.mxu0
        %1617 = vmatprep.mubr.bf16.mxu0 0
        %1618 = vmatmul.mubr.bf16.gmra.mxu0 %v1227
        %v1619 = vpop.f32.mrf.mxu0
        %v1620 = vadd.f32 %v1127, %v1619
        %v1621 = vpop.f32.mrf.mxu0
        %v1622 = vpop.f32.mrf.mxu0
        %v1623 = vadd.f32 %v1127, %v1622
        %v1624 = vpop.f32.mrf.mxu0
        %1625 = vmatprep.mubr.bf16.mxu0 0
        %1626 = vmatmul.mubr.bf16.gmra.mxu0 %v1230
        %v1627 = vpop.f32.mrf.mxu0
        %v1628 = vadd.f32 %v1127, %v1627
        %v1629 = vpop.f32.mrf.mxu0
        %v1630 = vpop.f32.mrf.mxu0
        %v1631 = vadd.f32 %v1127, %v1630
        %v1632 = vpop.f32.mrf.mxu0
        %1633 = vmatprep.mubr.bf16.mxu0 0
        %1634 = vmatmul.mubr.bf16.gmra.mxu0 %v1233
        %v1635 = vpop.f32.mrf.mxu0
        %v1636 = vadd.f32 %v1127, %v1635
        %v1637 = vpop.f32.mrf.mxu0
        %v1638 = vpop.f32.mrf.mxu0
        %v1639 = vadd.f32 %v1127, %v1638
        %v1640 = vpop.f32.mrf.mxu0
        %1641 = vmatprep.mubr.bf16.mxu0 0
        %1642 = vmatmul.mubr.bf16.gmra.mxu0 %v1236
        %v1643 = vpop.f32.mrf.mxu0
        %v1644 = vadd.f32 %v1127, %v1643
        %v1645 = vpop.f32.mrf.mxu0
        %v1646 = vpop.f32.mrf.mxu0
        %v1647 = vadd.f32 %v1127, %v1646
        %v1648 = vpop.f32.mrf.mxu0
        %1649 = vmatprep.mubr.bf16.mxu0 0
        %1650 = vmatmul.mubr.bf16.gmra.mxu0 %v1239
        %v1651 = vpop.f32.mrf.mxu0
        %v1652 = vadd.f32 %v1127, %v1651
        %v1653 = vpop.f32.mrf.mxu0
        %v1654 = vpop.f32.mrf.mxu0
        %v1655 = vadd.f32 %v1127, %v1654
        %v1656 = vpop.f32.mrf.mxu0
        %1657 = vmatprep.mubr.bf16.mxu0 0
        %1658 = vmatmul.mubr.bf16.gmra.mxu0 %v1242
        %v1659 = vpop.f32.mrf.mxu0
        %v1660 = vadd.f32 %v1127, %v1659
        %v1661 = vpop.f32.mrf.mxu0
        %v1662 = vpop.f32.mrf.mxu0
        %v1663 = vadd.f32 %v1127, %v1662
        %v1664 = vpop.f32.mrf.mxu0
        %1665 = vmatprep.mubr.bf16.mxu0 0
        %1666 = vmatmul.mubr.bf16.gmra.mxu0 %v1245
        %v1667 = vpop.f32.mrf.mxu0
        %v1668 = vadd.f32 %v1127, %v1667
        %v1669 = vpop.f32.mrf.mxu0
        %v1670 = vpop.f32.mrf.mxu0
        %v1671 = vadd.f32 %v1127, %v1670
        %v1672 = vpop.f32.mrf.mxu0
        %1673 = vmatprep.mubr.bf16.mxu0 0
        %1674 = vmatmul.mubr.bf16.gmra.mxu0 %v1248
        %v1675 = vpop.f32.mrf.mxu0
        %v1676 = vadd.f32 %v1127, %v1675
        %v1677 = vpop.f32.mrf.mxu0
        %v1678 = vpop.f32.mrf.mxu0
        %v1679 = vadd.f32 %v1127, %v1678
        %v1680 = vpop.f32.mrf.mxu0
        %1681 = vmatprep.mubr.bf16.mxu0 0
        %1682 = vmatmul.mubr.bf16.gmra.mxu0 %v1251
        %v1683 = vpop.f32.mrf.mxu0
        %v1684 = vadd.f32 %v1127, %v1683
        %v1685 = vpop.f32.mrf.mxu0
        %v1686 = vpop.f32.mrf.mxu0
        %v1687 = vadd.f32 %v1127, %v1686
        %v1688 = vpop.f32.mrf.mxu0
        %1689 = vmatprep.mubr.bf16.mxu0 0
        %1690 = vmatmul.mubr.bf16.gmra.mxu0 %v1254
        %v1691 = vpop.f32.mrf.mxu0
        %v1692 = vadd.f32 %v1127, %v1691
        %v1693 = vpop.f32.mrf.mxu0
        %v1694 = vpop.f32.mrf.mxu0
        %v1695 = vadd.f32 %v1127, %v1694
        %v1696 = vpop.f32.mrf.mxu0
        %1697 = vmatprep.mubr.bf16.mxu0 0
        %1698 = vmatmul.mubr.bf16.gmra.mxu0 %v1257
        %v1699 = vpop.f32.mrf.mxu0
        %v1700 = vadd.f32 %v1127, %v1699
        %v1701 = vpop.f32.mrf.mxu0
        %v1702 = vpop.f32.mrf.mxu0
        %v1703 = vadd.f32 %v1127, %v1702
        %v1704 = vpop.f32.mrf.mxu0
        %1705 = vmatprep.mubr.bf16.mxu0 0
        %1706 = vmatmul.mubr.bf16.gmra.mxu0 %v1260
        %v1707 = vpop.f32.mrf.mxu0
        %v1708 = vadd.f32 %v1127, %v1707
        %v1709 = vpop.f32.mrf.mxu0
        %v1710 = vpop.f32.mrf.mxu0
        %v1711 = vadd.f32 %v1127, %v1710
        %v1712 = vpop.f32.mrf.mxu0
        %1713 = vmatprep.mubr.bf16.mxu0 0
        %1714 = vmatmul.mubr.bf16.gmra.mxu0 %v1263
        %v1715 = vpop.f32.mrf.mxu0
        %v1716 = vadd.f32 %v1127, %v1715
        %v1717 = vpop.f32.mrf.mxu0
        %v1718 = vpop.f32.mrf.mxu0
        %v1719 = vadd.f32 %v1127, %v1718
        %v1720 = vpop.f32.mrf.mxu0
        %1721 = vmatprep.mubr.bf16.mxu0 0
        %1722 = vmatmul.mubr.bf16.gmra.mxu0 %v1266
        %v1723 = vpop.f32.mrf.mxu0
        %v1724 = vadd.f32 %v1127, %v1723
        %v1725 = vpop.f32.mrf.mxu0
        %v1726 = vpop.f32.mrf.mxu0
        %v1727 = vadd.f32 %v1127, %v1726
        %v1728 = vpop.f32.mrf.mxu0
        %1729 = vmatprep.mubr.bf16.mxu0 0
        %1730 = vmatmul.mubr.bf16.gmra.mxu0 %v1269
        %v1731 = vpop.f32.mrf.mxu0
        %v1732 = vadd.f32 %v1127, %v1731
        %v1733 = vpop.f32.mrf.mxu0
        %v1734 = vpop.f32.mrf.mxu0
        %v1735 = vadd.f32 %v1127, %v1734
        %v1736 = vpop.f32.mrf.mxu0
        %1737 = vmatprep.mubr.bf16.mxu0 0
        %1738 = vmatmul.mubr.bf16.gmra.mxu0 %v1272
        %v1739 = vpop.f32.mrf.mxu0
        %v1740 = vadd.f32 %v1127, %v1739
        %v1741 = vpop.f32.mrf.mxu0
        %v1742 = vpop.f32.mrf.mxu0
        %v1743 = vadd.f32 %v1127, %v1742
        %v1744 = vpop.f32.mrf.mxu0
        %1745 = vmatprep.mubr.bf16.mxu0 0
        %1746 = vmatmul.mubr.bf16.gmra.mxu0 %v1275
        %v1747 = vpop.f32.mrf.mxu0
        %v1748 = vadd.f32 %v1127, %v1747
        %v1749 = vpop.f32.mrf.mxu0
        %v1750 = vpop.f32.mrf.mxu0
        %v1751 = vadd.f32 %v1127, %v1750
        %v1752 = vpop.f32.mrf.mxu0
        %1753 = vmatprep.mubr.bf16.mxu0 0
        %1754 = vmatmul.mubr.bf16.gmra.mxu0 %v1278
        %v1755 = vpop.f32.mrf.mxu0
        %v1756 = vadd.f32 %v1127, %v1755
        %v1757 = vpop.f32.mrf.mxu0
        %v1758 = vpop.f32.mrf.mxu0
        %v1759 = vadd.f32 %v1127, %v1758
        %v1760 = vpop.f32.mrf.mxu0
        %1761 = vmatprep.mubr.bf16.mxu0 0
        %1762 = vmatmul.mubr.bf16.gmra.mxu0 %v1281
        %v1763 = vpop.f32.mrf.mxu0
        %v1764 = vadd.f32 %v1127, %v1763
        %v1765 = vpop.f32.mrf.mxu0
        %v1766 = vpop.f32.mrf.mxu0
        %v1767 = vadd.f32 %v1127, %v1766
        %v1768 = vpop.f32.mrf.mxu0
        %1769 = vmatprep.mubr.bf16.mxu0 0
        %1770 = vmatmul.mubr.bf16.gmra.mxu0 %v1284
        %v1771 = vpop.f32.mrf.mxu0
        %v1772 = vadd.f32 %v1127, %v1771
        %v1773 = vpop.f32.mrf.mxu0
        %v1774 = vpop.f32.mrf.mxu0
        %v1775 = vadd.f32 %v1127, %v1774
        %v1776 = vpop.f32.mrf.mxu0
        %1777 = vmatprep.mubr.bf16.mxu0 0
        %1778 = vmatmul.mubr.bf16.gmra.mxu0 %v1287
        %v1779 = vpop.f32.mrf.mxu0
        %v1780 = vadd.f32 %v1127, %v1779
        %v1781 = vpop.f32.mrf.mxu0
        %v1782 = vpop.f32.mrf.mxu0
        %v1783 = vadd.f32 %v1127, %v1782
        %v1784 = vpop.f32.mrf.mxu0
        %1785 = vmatprep.mubr.bf16.mxu0 0
        %1786 = vmatmul.mubr.bf16.gmra.mxu0 %v1290
        %v1787 = vpop.f32.mrf.mxu0
        %v1788 = vadd.f32 %v1127, %v1787
        %v1789 = vpop.f32.mrf.mxu0
        %v1790 = vpop.f32.mrf.mxu0
        %v1791 = vadd.f32 %v1127, %v1790
        %v1792 = vpop.f32.mrf.mxu0
        %1793 = vmatprep.mubr.bf16.mxu0 0
        %1794 = vmatmul.mubr.bf16.gmra.mxu0 %v1293
        %v1795 = vpop.f32.mrf.mxu0
        %v1796 = vadd.f32 %v1127, %v1795
        %v1797 = vpop.f32.mrf.mxu0
        %v1798 = vpop.f32.mrf.mxu0
        %v1799 = vadd.f32 %v1127, %v1798
        %v1800 = vpop.f32.mrf.mxu0
        %1801 = vmatprep.mubr.bf16.mxu0 0
        %1802 = vmatmul.mubr.bf16.gmra.mxu0 %v1296
        %v1803 = vpop.f32.mrf.mxu0
        %v1804 = vadd.f32 %v1127, %v1803
        %v1805 = vpop.f32.mrf.mxu0
        %v1806 = vpop.f32.mrf.mxu0
        %v1807 = vadd.f32 %v1127, %v1806
        %v1808 = vpop.f32.mrf.mxu0
        %1809 = vmatprep.mubr.bf16.mxu0 0
        %1810 = vmatmul.mubr.bf16.gmra.mxu0 %v1299
        %v1811 = vpop.f32.mrf.mxu0
        %v1812 = vadd.f32 %v1127, %v1811
        %v1813 = vpop.f32.mrf.mxu0
        %v1814 = vpop.f32.mrf.mxu0
        %v1815 = vadd.f32 %v1127, %v1814
        %v1816 = vpop.f32.mrf.mxu0
        %1817 = vmatprep.mubr.bf16.mxu0 0
        %1818 = vmatmul.mubr.bf16.gmra.mxu0 %v1302
        %v1819 = vpop.f32.mrf.mxu0
        %v1820 = vadd.f32 %v1127, %v1819
        %v1821 = vpop.f32.mrf.mxu0
        %v1822 = vpop.f32.mrf.mxu0
        %v1823 = vadd.f32 %v1127, %v1822
        %v1824 = vpop.f32.mrf.mxu0
        %1825 = vmatprep.mubr.bf16.mxu0 0
        %1826 = vmatmul.mubr.bf16.gmra.mxu0 %v1305
        %v1827 = vpop.f32.mrf.mxu0
        %v1828 = vadd.f32 %v1127, %v1827
        %v1829 = vpop.f32.mrf.mxu0
        %v1830 = vpop.f32.mrf.mxu0
        %v1831 = vadd.f32 %v1127, %v1830
        %v1832 = vpop.f32.mrf.mxu0
        %1833 = vmatprep.mubr.bf16.mxu0 0
        %1834 = vmatmul.mubr.bf16.gmra.mxu0 %v1308
        %v1835 = vpop.f32.mrf.mxu0
        %v1836 = vadd.f32 %v1127, %v1835
        %v1837 = vpop.f32.mrf.mxu0
        %v1838 = vpop.f32.mrf.mxu0
        %v1839 = vadd.f32 %v1127, %v1838
        %v1840 = vpop.f32.mrf.mxu0
        %1841 = vmatprep.mubr.bf16.mxu0 0
        %1842 = vmatmul.mubr.bf16.gmra.mxu0 %v1311
        %v1843 = vpop.f32.mrf.mxu0
        %v1844 = vadd.f32 %v1127, %v1843
        %v1845 = vpop.f32.mrf.mxu0
        %v1846 = vpop.f32.mrf.mxu0
        %v1847 = vadd.f32 %v1127, %v1846
        %v1848 = vpop.f32.mrf.mxu0
        %1849 = vmatprep.mubr.bf16.mxu0 0
        %1850 = vmatmul.mubr.bf16.gmra.mxu0 %v1314
        %v1851 = vpop.f32.mrf.mxu0
        %v1852 = vadd.f32 %v1127, %v1851
        %v1853 = vpop.f32.mrf.mxu0
        %v1854 = vpop.f32.mrf.mxu0
        %v1855 = vadd.f32 %v1127, %v1854
        %v1856 = vpop.f32.mrf.mxu0
        %1857 = vmatprep.mubr.bf16.mxu0 0
        %1858 = vmatmul.mubr.bf16.gmra.mxu0 %v1317
        %v1859 = vpop.f32.mrf.mxu0
        %v1860 = vadd.f32 %v1127, %v1859
        %v1861 = vpop.f32.mrf.mxu0
        %v1862 = vpop.f32.mrf.mxu0
        %v1863 = vadd.f32 %v1127, %v1862
        %v1864 = vpop.f32.mrf.mxu0
        %1865 = vmatprep.mubr.bf16.mxu0 0
        %1866 = vmatmul.mubr.bf16.gmra.mxu0 %v1320
        %v1867 = vpop.f32.mrf.mxu0
        %v1868 = vadd.f32 %v1127, %v1867
        %v1869 = vpop.f32.mrf.mxu0
        %v1870 = vpop.f32.mrf.mxu0
        %v1871 = vadd.f32 %v1127, %v1870
        %v1872 = vpop.f32.mrf.mxu0
        %1873 = vdwg.mxu0
        %v1874 = vmax.f32 %v1364, 0.0
        %v1875 = vmax.f32 %v1367, 0.0
        %v1876 = vmax.f32 %v1372, 0.0
        %v1877 = vmax.f32 %v1375, 0.0
        %v1878 = vmax.f32 %v1380, 0.0
        %v1879 = vmax.f32 %v1383, 0.0
        %v1880 = vmax.f32 %v1388, 0.0
        %v1881 = vmax.f32 %v1391, 0.0
        %v1882 = vmax.f32 %v1396, 0.0
        %v1883 = vmax.f32 %v1399, 0.0
        %v1884 = vmax.f32 %v1404, 0.0
        %v1885 = vmax.f32 %v1407, 0.0
        %v1886 = vmax.f32 %v1412, 0.0
        %v1887 = vmax.f32 %v1415, 0.0
        %v1888 = vmax.f32 %v1420, 0.0
        %v1889 = vmax.f32 %v1423, 0.0
        %v1890 = vmax.f32 %v1428, 0.0
        %v1891 = vmax.f32 %v1431, 0.0
        %v1892 = vmax.f32 %v1436, 0.0
        %v1893 = vmax.f32 %v1439, 0.0
        %v1894 = vmax.f32 %v1444, 0.0
        %v1895 = vmax.f32 %v1447, 0.0
        %v1896 = vmax.f32 %v1452, 0.0
        %v1897 = vmax.f32 %v1455, 0.0
        %v1898 = vmax.f32 %v1460, 0.0
        %v1899 = vmax.f32 %v1463, 0.0
        %v1900 = vmax.f32 %v1468, 0.0
        %v1901 = vmax.f32 %v1471, 0.0
        %v1902 = vmax.f32 %v1476, 0.0
        %v1903 = vmax.f32 %v1479, 0.0
        %v1904 = vmax.f32 %v1484, 0.0
        %v1905 = vmax.f32 %v1487, 0.0
        %v1906 = vmax.f32 %v1492, 0.0
        %v1907 = vmax.f32 %v1495, 0.0
        %v1908 = vmax.f32 %v1500, 0.0
        %v1909 = vmax.f32 %v1503, 0.0
        %v1910 = vmax.f32 %v1508, 0.0
        %v1911 = vmax.f32 %v1511, 0.0
        %v1912 = vmax.f32 %v1516, 0.0
        %v1913 = vmax.f32 %v1519, 0.0
        %v1914 = vmax.f32 %v1524, 0.0
        %v1915 = vmax.f32 %v1527, 0.0
        %v1916 = vmax.f32 %v1532, 0.0
        %v1917 = vmax.f32 %v1535, 0.0
        %v1918 = vmax.f32 %v1540, 0.0
        %v1919 = vmax.f32 %v1543, 0.0
        %v1920 = vmax.f32 %v1548, 0.0
        %v1921 = vmax.f32 %v1551, 0.0
        %v1922 = vmax.f32 %v1556, 0.0
        %v1923 = vmax.f32 %v1559, 0.0
        %v1924 = vmax.f32 %v1564, 0.0
        %v1925 = vmax.f32 %v1567, 0.0
        %v1926 = vmax.f32 %v1572, 0.0
        %v1927 = vmax.f32 %v1575, 0.0
        %v1928 = vmax.f32 %v1580, 0.0
        %v1929 = vmax.f32 %v1583, 0.0
        %v1930 = vmax.f32 %v1588, 0.0
        %v1931 = vmax.f32 %v1591, 0.0
        %v1932 = vmax.f32 %v1596, 0.0
        %v1933 = vmax.f32 %v1599, 0.0
        %v1934 = vmax.f32 %v1604, 0.0
        %v1935 = vmax.f32 %v1607, 0.0
        %v1936 = vmax.f32 %v1612, 0.0
        %v1937 = vmax.f32 %v1615, 0.0
        %v1938 = vmax.f32 %v1620, 0.0
        %v1939 = vmax.f32 %v1623, 0.0
        %v1940 = vmax.f32 %v1628, 0.0
        %v1941 = vmax.f32 %v1631, 0.0
        %v1942 = vmax.f32 %v1636, 0.0
        %v1943 = vmax.f32 %v1639, 0.0
        %v1944 = vmax.f32 %v1644, 0.0
        %v1945 = vmax.f32 %v1647, 0.0
        %v1946 = vmax.f32 %v1652, 0.0
        %v1947 = vmax.f32 %v1655, 0.0
        %v1948 = vmax.f32 %v1660, 0.0
        %v1949 = vmax.f32 %v1663, 0.0
        %v1950 = vmax.f32 %v1668, 0.0
        %v1951 = vmax.f32 %v1671, 0.0
        %v1952 = vmax.f32 %v1676, 0.0
        %v1953 = vmax.f32 %v1679, 0.0
        %v1954 = vmax.f32 %v1684, 0.0
        %v1955 = vmax.f32 %v1687, 0.0
        %v1956 = vmax.f32 %v1692, 0.0
        %v1957 = vmax.f32 %v1695, 0.0
        %v1958 = vmax.f32 %v1700, 0.0
        %v1959 = vmax.f32 %v1703, 0.0
        %v1960 = vmax.f32 %v1708, 0.0
        %v1961 = vmax.f32 %v1711, 0.0
        %v1962 = vmax.f32 %v1716, 0.0
        %v1963 = vmax.f32 %v1719, 0.0
        %v1964 = vmax.f32 %v1724, 0.0
        %v1965 = vmax.f32 %v1727, 0.0
        %v1966 = vmax.f32 %v1732, 0.0
        %v1967 = vmax.f32 %v1735, 0.0
        %v1968 = vmax.f32 %v1740, 0.0
        %v1969 = vmax.f32 %v1743, 0.0
        %v1970 = vmax.f32 %v1748, 0.0
        %v1971 = vmax.f32 %v1751, 0.0
        %v1972 = vmax.f32 %v1756, 0.0
        %v1973 = vmax.f32 %v1759, 0.0
        %v1974 = vmax.f32 %v1764, 0.0
        %v1975 = vmax.f32 %v1767, 0.0
        %v1976 = vmax.f32 %v1772, 0.0
        %v1977 = vmax.f32 %v1775, 0.0
        %v1978 = vmax.f32 %v1780, 0.0
        %v1979 = vmax.f32 %v1783, 0.0
        %v1980 = vmax.f32 %v1788, 0.0
        %v1981 = vmax.f32 %v1791, 0.0
        %v1982 = vmax.f32 %v1796, 0.0
        %v1983 = vmax.f32 %v1799, 0.0
        %v1984 = vmax.f32 %v1804, 0.0
        %v1985 = vmax.f32 %v1807, 0.0
        %v1986 = vmax.f32 %v1812, 0.0
        %v1987 = vmax.f32 %v1815, 0.0
        %v1988 = vmax.f32 %v1820, 0.0
        %v1989 = vmax.f32 %v1823, 0.0
        %v1990 = vmax.f32 %v1828, 0.0
        %v1991 = vmax.f32 %v1831, 0.0
        %v1992 = vmax.f32 %v1836, 0.0
        %v1993 = vmax.f32 %v1839, 0.0
        %v1994 = vmax.f32 %v1844, 0.0
        %v1995 = vmax.f32 %v1847, 0.0
        %v1996 = vmax.f32 %v1852, 0.0
        %v1997 = vmax.f32 %v1855, 0.0
        %v1998 = vmax.f32 %v1860, 0.0
        %v1999 = vmax.f32 %v1863, 0.0
        %v2000 = vmax.f32 %v1868, 0.0
        %v2001 = vmax.f32 %v1871, 0.0
        %v2002 = vpack.c.bf16 %v1875, %v1874
        %v2003 = vpack.c.bf16 %v1877, %v1876
        %v2004 = vpack.c.bf16 %v1879, %v1878
        %v2005 = vpack.c.bf16 %v1881, %v1880
        %v2006 = vpack.c.bf16 %v1883, %v1882
        %v2007 = vpack.c.bf16 %v1885, %v1884
        %v2008 = vpack.c.bf16 %v1887, %v1886
        %v2009 = vpack.c.bf16 %v1889, %v1888
        %v2010 = vpack.c.bf16 %v1891, %v1890
        %v2011 = vpack.c.bf16 %v1893, %v1892
        %v2012 = vpack.c.bf16 %v1895, %v1894
        %v2013 = vpack.c.bf16 %v1897, %v1896
        %v2014 = vpack.c.bf16 %v1899, %v1898
        %v2015 = vpack.c.bf16 %v1901, %v1900
        %v2016 = vpack.c.bf16 %v1903, %v1902
        %v2017 = vpack.c.bf16 %v1905, %v1904
        %v2018 = vpack.c.bf16 %v1907, %v1906
        %v2019 = vpack.c.bf16 %v1909, %v1908
        %v2020 = vpack.c.bf16 %v1911, %v1910
        %v2021 = vpack.c.bf16 %v1913, %v1912
        %v2022 = vpack.c.bf16 %v1915, %v1914
        %v2023 = vpack.c.bf16 %v1917, %v1916
        %v2024 = vpack.c.bf16 %v1919, %v1918
        %v2025 = vpack.c.bf16 %v1921, %v1920
        %v2026 = vpack.c.bf16 %v1923, %v1922
        %v2027 = vpack.c.bf16 %v1925, %v1924
        %v2028 = vpack.c.bf16 %v1927, %v1926
        %v2029 = vpack.c.bf16 %v1929, %v1928
        %v2030 = vpack.c.bf16 %v1931, %v1930
        %v2031 = vpack.c.bf16 %v1933, %v1932
        %v2032 = vpack.c.bf16 %v1935, %v1934
        %v2033 = vpack.c.bf16 %v1937, %v1936
        %v2034 = vpack.c.bf16 %v1939, %v1938
        %v2035 = vpack.c.bf16 %v1941, %v1940
        %v2036 = vpack.c.bf16 %v1943, %v1942
        %v2037 = vpack.c.bf16 %v1945, %v1944
        %v2038 = vpack.c.bf16 %v1947, %v1946
        %v2039 = vpack.c.bf16 %v1949, %v1948
        %v2040 = vpack.c.bf16 %v1951, %v1950
        %v2041 = vpack.c.bf16 %v1953, %v1952
        %v2042 = vpack.c.bf16 %v1955, %v1954
        %v2043 = vpack.c.bf16 %v1957, %v1956
        %v2044 = vpack.c.bf16 %v1959, %v1958
        %v2045 = vpack.c.bf16 %v1961, %v1960
        %v2046 = vpack.c.bf16 %v1963, %v1962
        %v2047 = vpack.c.bf16 %v1965, %v1964
        %v2048 = vpack.c.bf16 %v1967, %v1966
        %v2049 = vpack.c.bf16 %v1969, %v1968
        %v2050 = vpack.c.bf16 %v1971, %v1970
        %v2051 = vpack.c.bf16 %v1973, %v1972
        %v2052 = vpack.c.bf16 %v1975, %v1974
        %v2053 = vpack.c.bf16 %v1977, %v1976
        %v2054 = vpack.c.bf16 %v1979, %v1978
        %v2055 = vpack.c.bf16 %v1981, %v1980
        %v2056 = vpack.c.bf16 %v1983, %v1982
        %v2057 = vpack.c.bf16 %v1985, %v1984
        %v2058 = vpack.c.bf16 %v1987, %v1986
        %v2059 = vpack.c.bf16 %v1989, %v1988
        %v2060 = vpack.c.bf16 %v1991, %v1990
        %v2061 = vpack.c.bf16 %v1993, %v1992
        %v2062 = vpack.c.bf16 %v1995, %v1994
        %v2063 = vpack.c.bf16 %v1997, %v1996
        %v2064 = vpack.c.bf16 %v1999, %v1998
        %v2065 = vpack.c.bf16 %v2001, %v2000
        %v2066 = vld [vmem:[%s7] sm:$0xf]
        %v2067 = vld [vmem:[%s7 + $0x4] sm:$0xf]
        %v2068 = vld [vmem:[%s7 + $0x8] sm:$0xf]
        %v2069 = vld [vmem:[%s9] sm:$0x1]
        %v2071 = vlaneseq
        %v2072 = vshrl.u32 %v2071, 7
        %v2073 = vsub.s32 0, %v2072
        %v2074 = vrot.slane %v2069, %v2073
        %v2079 = vunpack.c.l.b16 %v2066
        %v2080 = vunpack.c.l.b16 %v2067
        %v2081 = vunpack.c.l.b16 %v2068
        %v2082 = vpack.c.b16 %v2080, %v2079
        %v2083 = vpack.c.b16 %v2081, %v2081
        %vm2085 = vcmask 195584
        %v2087 = vsel %vm2085, %v2002, 0
        %v2090 = vsel %vm2085, %v2003, 0
        %v2093 = vsel %vm2085, %v2004, 0
        %v2096 = vsel %vm2085, %v2005, 0
        %v2099 = vsel %vm2085, %v2006, 0
        %v2102 = vsel %vm2085, %v2007, 0
        %v2105 = vsel %vm2085, %v2008, 0
        %v2108 = vsel %vm2085, %v2009, 0
        %v2111 = vsel %vm2085, %v2010, 0
        %v2114 = vsel %vm2085, %v2011, 0
        %v2117 = vsel %vm2085, %v2012, 0
        %v2120 = vsel %vm2085, %v2013, 0
        %v2123 = vsel %vm2085, %v2014, 0
        %v2126 = vsel %vm2085, %v2015, 0
        %v2129 = vsel %vm2085, %v2016, 0
        %v2132 = vsel %vm2085, %v2017, 0
        %v2135 = vsel %vm2085, %v2018, 0
        %v2138 = vsel %vm2085, %v2019, 0
        %v2141 = vsel %vm2085, %v2020, 0
        %v2144 = vsel %vm2085, %v2021, 0
        %v2147 = vsel %vm2085, %v2022, 0
        %v2150 = vsel %vm2085, %v2023, 0
        %v2153 = vsel %vm2085, %v2024, 0
        %v2156 = vsel %vm2085, %v2025, 0
        %v2159 = vsel %vm2085, %v2026, 0
        %v2162 = vsel %vm2085, %v2027, 0
        %v2165 = vsel %vm2085, %v2028, 0
        %v2168 = vsel %vm2085, %v2029, 0
        %v2171 = vsel %vm2085, %v2030, 0
        %v2174 = vsel %vm2085, %v2031, 0
        %v2177 = vsel %vm2085, %v2032, 0
        %v2180 = vsel %vm2085, %v2033, 0
        %v2183 = vsel %vm2085, %v2034, 0
        %v2186 = vsel %vm2085, %v2035, 0
        %v2189 = vsel %vm2085, %v2036, 0
        %v2192 = vsel %vm2085, %v2037, 0
        %v2195 = vsel %vm2085, %v2038, 0
        %v2198 = vsel %vm2085, %v2039, 0
        %v2201 = vsel %vm2085, %v2040, 0
        %v2204 = vsel %vm2085, %v2041, 0
        %v2207 = vsel %vm2085, %v2042, 0
        %v2210 = vsel %vm2085, %v2043, 0
        %v2213 = vsel %vm2085, %v2044, 0
        %v2216 = vsel %vm2085, %v2045, 0
        %v2219 = vsel %vm2085, %v2046, 0
        %v2222 = vsel %vm2085, %v2047, 0
        %v2225 = vsel %vm2085, %v2048, 0
        %v2228 = vsel %vm2085, %v2049, 0
        %v2231 = vsel %vm2085, %v2050, 0
        %v2234 = vsel %vm2085, %v2051, 0
        %v2237 = vsel %vm2085, %v2052, 0
        %v2240 = vsel %vm2085, %v2053, 0
        %v2243 = vsel %vm2085, %v2054, 0
        %v2246 = vsel %vm2085, %v2055, 0
        %v2249 = vsel %vm2085, %v2056, 0
        %v2252 = vsel %vm2085, %v2057, 0
        %v2255 = vsel %vm2085, %v2058, 0
        %v2258 = vsel %vm2085, %v2059, 0
        %v2261 = vsel %vm2085, %v2060, 0
        %v2264 = vsel %vm2085, %v2061, 0
        %v2267 = vsel %vm2085, %v2062, 0
        %v2270 = vsel %vm2085, %v2063, 0
        %v2273 = vsel %vm2085, %v2064, 0
        %v2276 = vsel %vm2085, %v2065, 0
        %vm2278 = vcmask 1043456
        %v2280 = vsel %vm2278, %v2083, 0
        %2282 = vmatprep.subr.bf16.mxu0 0
        %2283 = vmatpush1.bf16.msra.mxu0 0
        %2284 = vmatprep.subr.bf16.mxu0 0
        %2285 = vmatpush1.bf16.msra.mxu0 0
        %2286 = vmatprep.subr.bf16.mxu0 0
        %2287 = vmatpush1.bf16.msra.mxu0 0
        %2288 = vmatprep.subr.bf16.mxu0 0
        %2289 = vmatpush1.bf16.msra.mxu0 0
        %2290 = vmatprep.subr.bf16.mxu0 0
        %2291 = vmatpush1.bf16.msra.mxu0 0
        %2292 = vmatprep.subr.bf16.mxu0 0
        %2293 = vmatpush1.bf16.msra.mxu0 0
        %2294 = vmatprep.subr.bf16.mxu0 0
        %2295 = vmatpush1.bf16.msra.mxu0 %v2280
        %2296 = vmatprep.subr.bf16.mxu0 0
        %2297 = vmatpush1.bf16.msra.mxu0 %v2082
        %2298 = vmatprep.subr.bf16.mxu0 0
        %2299 = vmatpush2.bf16.msra.mxu0 0
        %2300 = vmatprep.subr.bf16.mxu0 0
        %2301 = vmatpush2.bf16.msra.mxu0 0
        %2302 = vmatprep.subr.bf16.mxu0 0
        %2303 = vmatpush2.bf16.msra.mxu0 0
        %2304 = vmatprep.subr.bf16.mxu0 0
        %2305 = vmatpush2.bf16.msra.mxu0 0
        %2306 = vmatprep.subr.bf16.mxu0 0
        %2307 = vmatpush2.bf16.msra.mxu0 0
        %2308 = vmatprep.subr.bf16.mxu0 0
        %2309 = vmatpush2.bf16.msra.mxu0 0
        %2310 = vmatprep.subr.bf16.mxu0 0
        %2311 = vmatpush2.bf16.msra.mxu0 0
        %2312 = vmatprep.subr.bf16.mxu0 0
        %2313 = vmatpush2.bf16.msra.mxu0 0
        %2314 = vmatprep.mubr.bf16.mxu0 0
        %2315 = vmatmul.mubr.bf16.gmra.mxu0 %v2087
        %v2316 = vpop.f32.mrf.mxu0
        %v2317 = vadd.f32 %v2074, %v2316
        %v2318 = vpop.f32.mrf.mxu0
        %v2319 = vpop.f32.mrf.mxu0
        %v2320 = vadd.f32 %v2074, %v2319
        %v2321 = vpop.f32.mrf.mxu0
        %2322 = vmatprep.mubr.bf16.mxu0 0
        %2323 = vmatmul.mubr.bf16.gmra.mxu0 %v2090
        %v2324 = vpop.f32.mrf.mxu0
        %v2325 = vadd.f32 %v2074, %v2324
        %v2326 = vpop.f32.mrf.mxu0
        %v2327 = vpop.f32.mrf.mxu0
        %v2328 = vadd.f32 %v2074, %v2327
        %v2329 = vpop.f32.mrf.mxu0
        %2330 = vmatprep.mubr.bf16.mxu0 0
        %2331 = vmatmul.mubr.bf16.gmra.mxu0 %v2093
        %v2332 = vpop.f32.mrf.mxu0
        %v2333 = vadd.f32 %v2074, %v2332
        %v2334 = vpop.f32.mrf.mxu0
        %v2335 = vpop.f32.mrf.mxu0
        %v2336 = vadd.f32 %v2074, %v2335
        %v2337 = vpop.f32.mrf.mxu0
        %2338 = vmatprep.mubr.bf16.mxu0 0
        %2339 = vmatmul.mubr.bf16.gmra.mxu0 %v2096
        %v2340 = vpop.f32.mrf.mxu0
        %v2341 = vadd.f32 %v2074, %v2340
        %v2342 = vpop.f32.mrf.mxu0
        %v2343 = vpop.f32.mrf.mxu0
        %v2344 = vadd.f32 %v2074, %v2343
        %v2345 = vpop.f32.mrf.mxu0
        %2346 = vmatprep.mubr.bf16.mxu0 0
        %2347 = vmatmul.mubr.bf16.gmra.mxu0 %v2099
        %v2348 = vpop.f32.mrf.mxu0
        %v2349 = vadd.f32 %v2074, %v2348
        %v2350 = vpop.f32.mrf.mxu0
        %v2351 = vpop.f32.mrf.mxu0
        %v2352 = vadd.f32 %v2074, %v2351
        %v2353 = vpop.f32.mrf.mxu0
        %2354 = vmatprep.mubr.bf16.mxu0 0
        %2355 = vmatmul.mubr.bf16.gmra.mxu0 %v2102
        %v2356 = vpop.f32.mrf.mxu0
        %v2357 = vadd.f32 %v2074, %v2356
        %v2358 = vpop.f32.mrf.mxu0
        %v2359 = vpop.f32.mrf.mxu0
        %v2360 = vadd.f32 %v2074, %v2359
        %v2361 = vpop.f32.mrf.mxu0
        %2362 = vmatprep.mubr.bf16.mxu0 0
        %2363 = vmatmul.mubr.bf16.gmra.mxu0 %v2105
        %v2364 = vpop.f32.mrf.mxu0
        %v2365 = vadd.f32 %v2074, %v2364
        %v2366 = vpop.f32.mrf.mxu0
        %v2367 = vpop.f32.mrf.mxu0
        %v2368 = vadd.f32 %v2074, %v2367
        %v2369 = vpop.f32.mrf.mxu0
        %2370 = vmatprep.mubr.bf16.mxu0 0
        %2371 = vmatmul.mubr.bf16.gmra.mxu0 %v2108
        %v2372 = vpop.f32.mrf.mxu0
        %v2373 = vadd.f32 %v2074, %v2372
        %v2374 = vpop.f32.mrf.mxu0
        %v2375 = vpop.f32.mrf.mxu0
        %v2376 = vadd.f32 %v2074, %v2375
        %v2377 = vpop.f32.mrf.mxu0
        %2378 = vmatprep.mubr.bf16.mxu0 0
        %2379 = vmatmul.mubr.bf16.gmra.mxu0 %v2111
        %v2380 = vpop.f32.mrf.mxu0
        %v2381 = vadd.f32 %v2074, %v2380
        %v2382 = vpop.f32.mrf.mxu0
        %v2383 = vpop.f32.mrf.mxu0
        %v2384 = vadd.f32 %v2074, %v2383
        %v2385 = vpop.f32.mrf.mxu0
        %2386 = vmatprep.mubr.bf16.mxu0 0
        %2387 = vmatmul.mubr.bf16.gmra.mxu0 %v2114
        %v2388 = vpop.f32.mrf.mxu0
        %v2389 = vadd.f32 %v2074, %v2388
        %v2390 = vpop.f32.mrf.mxu0
        %v2391 = vpop.f32.mrf.mxu0
        %v2392 = vadd.f32 %v2074, %v2391
        %v2393 = vpop.f32.mrf.mxu0
        %2394 = vmatprep.mubr.bf16.mxu0 0
        %2395 = vmatmul.mubr.bf16.gmra.mxu0 %v2117
        %v2396 = vpop.f32.mrf.mxu0
        %v2397 = vadd.f32 %v2074, %v2396
        %v2398 = vpop.f32.mrf.mxu0
        %v2399 = vpop.f32.mrf.mxu0
        %v2400 = vadd.f32 %v2074, %v2399
        %v2401 = vpop.f32.mrf.mxu0
        %2402 = vmatprep.mubr.bf16.mxu0 0
        %2403 = vmatmul.mubr.bf16.gmra.mxu0 %v2120
        %v2404 = vpop.f32.mrf.mxu0
        %v2405 = vadd.f32 %v2074, %v2404
        %v2406 = vpop.f32.mrf.mxu0
        %v2407 = vpop.f32.mrf.mxu0
        %v2408 = vadd.f32 %v2074, %v2407
        %v2409 = vpop.f32.mrf.mxu0
        %2410 = vmatprep.mubr.bf16.mxu0 0
        %2411 = vmatmul.mubr.bf16.gmra.mxu0 %v2123
        %v2412 = vpop.f32.mrf.mxu0
        %v2413 = vadd.f32 %v2074, %v2412
        %v2414 = vpop.f32.mrf.mxu0
        %v2415 = vpop.f32.mrf.mxu0
        %v2416 = vadd.f32 %v2074, %v2415
        %v2417 = vpop.f32.mrf.mxu0
        %2418 = vmatprep.mubr.bf16.mxu0 0
        %2419 = vmatmul.mubr.bf16.gmra.mxu0 %v2126
        %v2420 = vpop.f32.mrf.mxu0
        %v2421 = vadd.f32 %v2074, %v2420
        %v2422 = vpop.f32.mrf.mxu0
        %v2423 = vpop.f32.mrf.mxu0
        %v2424 = vadd.f32 %v2074, %v2423
        %v2425 = vpop.f32.mrf.mxu0
        %2426 = vmatprep.mubr.bf16.mxu0 0
        %2427 = vmatmul.mubr.bf16.gmra.mxu0 %v2129
        %v2428 = vpop.f32.mrf.mxu0
        %v2429 = vadd.f32 %v2074, %v2428
        %v2430 = vpop.f32.mrf.mxu0
        %v2431 = vpop.f32.mrf.mxu0
        %v2432 = vadd.f32 %v2074, %v2431
        %v2433 = vpop.f32.mrf.mxu0
        %2434 = vmatprep.mubr.bf16.mxu0 0
        %2435 = vmatmul.mubr.bf16.gmra.mxu0 %v2132
        %v2436 = vpop.f32.mrf.mxu0
        %v2437 = vadd.f32 %v2074, %v2436
        %v2438 = vpop.f32.mrf.mxu0
        %v2439 = vpop.f32.mrf.mxu0
        %v2440 = vadd.f32 %v2074, %v2439
        %v2441 = vpop.f32.mrf.mxu0
        %2442 = vmatprep.mubr.bf16.mxu0 0
        %2443 = vmatmul.mubr.bf16.gmra.mxu0 %v2135
        %v2444 = vpop.f32.mrf.mxu0
        %v2445 = vadd.f32 %v2074, %v2444
        %v2446 = vpop.f32.mrf.mxu0
        %v2447 = vpop.f32.mrf.mxu0
        %v2448 = vadd.f32 %v2074, %v2447
        %v2449 = vpop.f32.mrf.mxu0
        %2450 = vmatprep.mubr.bf16.mxu0 0
        %2451 = vmatmul.mubr.bf16.gmra.mxu0 %v2138
        %v2452 = vpop.f32.mrf.mxu0
        %v2453 = vadd.f32 %v2074, %v2452
        %v2454 = vpop.f32.mrf.mxu0
        %v2455 = vpop.f32.mrf.mxu0
        %v2456 = vadd.f32 %v2074, %v2455
        %v2457 = vpop.f32.mrf.mxu0
        %2458 = vmatprep.mubr.bf16.mxu0 0
        %2459 = vmatmul.mubr.bf16.gmra.mxu0 %v2141
        %v2460 = vpop.f32.mrf.mxu0
        %v2461 = vadd.f32 %v2074, %v2460
        %v2462 = vpop.f32.mrf.mxu0
        %v2463 = vpop.f32.mrf.mxu0
        %v2464 = vadd.f32 %v2074, %v2463
        %v2465 = vpop.f32.mrf.mxu0
        %2466 = vmatprep.mubr.bf16.mxu0 0
        %2467 = vmatmul.mubr.bf16.gmra.mxu0 %v2144
        %v2468 = vpop.f32.mrf.mxu0
        %v2469 = vadd.f32 %v2074, %v2468
        %v2470 = vpop.f32.mrf.mxu0
        %v2471 = vpop.f32.mrf.mxu0
        %v2472 = vadd.f32 %v2074, %v2471
        %v2473 = vpop.f32.mrf.mxu0
        %2474 = vmatprep.mubr.bf16.mxu0 0
        %2475 = vmatmul.mubr.bf16.gmra.mxu0 %v2147
        %v2476 = vpop.f32.mrf.mxu0
        %v2477 = vadd.f32 %v2074, %v2476
        %v2478 = vpop.f32.mrf.mxu0
        %v2479 = vpop.f32.mrf.mxu0
        %v2480 = vadd.f32 %v2074, %v2479
        %v2481 = vpop.f32.mrf.mxu0
        %2482 = vmatprep.mubr.bf16.mxu0 0
        %2483 = vmatmul.mubr.bf16.gmra.mxu0 %v2150
        %v2484 = vpop.f32.mrf.mxu0
        %v2485 = vadd.f32 %v2074, %v2484
        %v2486 = vpop.f32.mrf.mxu0
        %v2487 = vpop.f32.mrf.mxu0
        %v2488 = vadd.f32 %v2074, %v2487
        %v2489 = vpop.f32.mrf.mxu0
        %2490 = vmatprep.mubr.bf16.mxu0 0
        %2491 = vmatmul.mubr.bf16.gmra.mxu0 %v2153
        %v2492 = vpop.f32.mrf.mxu0
        %v2493 = vadd.f32 %v2074, %v2492
        %v2494 = vpop.f32.mrf.mxu0
        %v2495 = vpop.f32.mrf.mxu0
        %v2496 = vadd.f32 %v2074, %v2495
        %v2497 = vpop.f32.mrf.mxu0
        %2498 = vmatprep.mubr.bf16.mxu0 0
        %2499 = vmatmul.mubr.bf16.gmra.mxu0 %v2156
        %v2500 = vpop.f32.mrf.mxu0
        %v2501 = vadd.f32 %v2074, %v2500
        %v2502 = vpop.f32.mrf.mxu0
        %v2503 = vpop.f32.mrf.mxu0
        %v2504 = vadd.f32 %v2074, %v2503
        %v2505 = vpop.f32.mrf.mxu0
        %2506 = vmatprep.mubr.bf16.mxu0 0
        %2507 = vmatmul.mubr.bf16.gmra.mxu0 %v2159
        %v2508 = vpop.f32.mrf.mxu0
        %v2509 = vadd.f32 %v2074, %v2508
        %v2510 = vpop.f32.mrf.mxu0
        %v2511 = vpop.f32.mrf.mxu0
        %v2512 = vadd.f32 %v2074, %v2511
        %v2513 = vpop.f32.mrf.mxu0
        %2514 = vmatprep.mubr.bf16.mxu0 0
        %2515 = vmatmul.mubr.bf16.gmra.mxu0 %v2162
        %v2516 = vpop.f32.mrf.mxu0
        %v2517 = vadd.f32 %v2074, %v2516
        %v2518 = vpop.f32.mrf.mxu0
        %v2519 = vpop.f32.mrf.mxu0
        %v2520 = vadd.f32 %v2074, %v2519
        %v2521 = vpop.f32.mrf.mxu0
        %2522 = vmatprep.mubr.bf16.mxu0 0
        %2523 = vmatmul.mubr.bf16.gmra.mxu0 %v2165
        %v2524 = vpop.f32.mrf.mxu0
        %v2525 = vadd.f32 %v2074, %v2524
        %v2526 = vpop.f32.mrf.mxu0
        %v2527 = vpop.f32.mrf.mxu0
        %v2528 = vadd.f32 %v2074, %v2527
        %v2529 = vpop.f32.mrf.mxu0
        %2530 = vmatprep.mubr.bf16.mxu0 0
        %2531 = vmatmul.mubr.bf16.gmra.mxu0 %v2168
        %v2532 = vpop.f32.mrf.mxu0
        %v2533 = vadd.f32 %v2074, %v2532
        %v2534 = vpop.f32.mrf.mxu0
        %v2535 = vpop.f32.mrf.mxu0
        %v2536 = vadd.f32 %v2074, %v2535
        %v2537 = vpop.f32.mrf.mxu0
        %2538 = vmatprep.mubr.bf16.mxu0 0
        %2539 = vmatmul.mubr.bf16.gmra.mxu0 %v2171
        %v2540 = vpop.f32.mrf.mxu0
        %v2541 = vadd.f32 %v2074, %v2540
        %v2542 = vpop.f32.mrf.mxu0
        %v2543 = vpop.f32.mrf.mxu0
        %v2544 = vadd.f32 %v2074, %v2543
        %v2545 = vpop.f32.mrf.mxu0
        %2546 = vmatprep.mubr.bf16.mxu0 0
        %2547 = vmatmul.mubr.bf16.gmra.mxu0 %v2174
        %v2548 = vpop.f32.mrf.mxu0
        %v2549 = vadd.f32 %v2074, %v2548
        %v2550 = vpop.f32.mrf.mxu0
        %v2551 = vpop.f32.mrf.mxu0
        %v2552 = vadd.f32 %v2074, %v2551
        %v2553 = vpop.f32.mrf.mxu0
        %2554 = vmatprep.mubr.bf16.mxu0 0
        %2555 = vmatmul.mubr.bf16.gmra.mxu0 %v2177
        %v2556 = vpop.f32.mrf.mxu0
        %v2557 = vadd.f32 %v2074, %v2556
        %v2558 = vpop.f32.mrf.mxu0
        %v2559 = vpop.f32.mrf.mxu0
        %v2560 = vadd.f32 %v2074, %v2559
        %v2561 = vpop.f32.mrf.mxu0
        %2562 = vmatprep.mubr.bf16.mxu0 0
        %2563 = vmatmul.mubr.bf16.gmra.mxu0 %v2180
        %v2564 = vpop.f32.mrf.mxu0
        %v2565 = vadd.f32 %v2074, %v2564
        %v2566 = vpop.f32.mrf.mxu0
        %v2567 = vpop.f32.mrf.mxu0
        %v2568 = vadd.f32 %v2074, %v2567
        %v2569 = vpop.f32.mrf.mxu0
        %2570 = vmatprep.mubr.bf16.mxu0 0
        %2571 = vmatmul.mubr.bf16.gmra.mxu0 %v2183
        %v2572 = vpop.f32.mrf.mxu0
        %v2573 = vadd.f32 %v2074, %v2572
        %v2574 = vpop.f32.mrf.mxu0
        %v2575 = vpop.f32.mrf.mxu0
        %v2576 = vadd.f32 %v2074, %v2575
        %v2577 = vpop.f32.mrf.mxu0
        %2578 = vmatprep.mubr.bf16.mxu0 0
        %2579 = vmatmul.mubr.bf16.gmra.mxu0 %v2186
        %v2580 = vpop.f32.mrf.mxu0
        %v2581 = vadd.f32 %v2074, %v2580
        %v2582 = vpop.f32.mrf.mxu0
        %v2583 = vpop.f32.mrf.mxu0
        %v2584 = vadd.f32 %v2074, %v2583
        %v2585 = vpop.f32.mrf.mxu0
        %2586 = vmatprep.mubr.bf16.mxu0 0
        %2587 = vmatmul.mubr.bf16.gmra.mxu0 %v2189
        %v2588 = vpop.f32.mrf.mxu0
        %v2589 = vadd.f32 %v2074, %v2588
        %v2590 = vpop.f32.mrf.mxu0
        %v2591 = vpop.f32.mrf.mxu0
        %v2592 = vadd.f32 %v2074, %v2591
        %v2593 = vpop.f32.mrf.mxu0
        %2594 = vmatprep.mubr.bf16.mxu0 0
        %2595 = vmatmul.mubr.bf16.gmra.mxu0 %v2192
        %v2596 = vpop.f32.mrf.mxu0
        %v2597 = vadd.f32 %v2074, %v2596
        %v2598 = vpop.f32.mrf.mxu0
        %v2599 = vpop.f32.mrf.mxu0
        %v2600 = vadd.f32 %v2074, %v2599
        %v2601 = vpop.f32.mrf.mxu0
        %2602 = vmatprep.mubr.bf16.mxu0 0
        %2603 = vmatmul.mubr.bf16.gmra.mxu0 %v2195
        %v2604 = vpop.f32.mrf.mxu0
        %v2605 = vadd.f32 %v2074, %v2604
        %v2606 = vpop.f32.mrf.mxu0
        %v2607 = vpop.f32.mrf.mxu0
        %v2608 = vadd.f32 %v2074, %v2607
        %v2609 = vpop.f32.mrf.mxu0
        %2610 = vmatprep.mubr.bf16.mxu0 0
        %2611 = vmatmul.mubr.bf16.gmra.mxu0 %v2198
        %v2612 = vpop.f32.mrf.mxu0
        %v2613 = vadd.f32 %v2074, %v2612
        %v2614 = vpop.f32.mrf.mxu0
        %v2615 = vpop.f32.mrf.mxu0
        %v2616 = vadd.f32 %v2074, %v2615
        %v2617 = vpop.f32.mrf.mxu0
        %2618 = vmatprep.mubr.bf16.mxu0 0
        %2619 = vmatmul.mubr.bf16.gmra.mxu0 %v2201
        %v2620 = vpop.f32.mrf.mxu0
        %v2621 = vadd.f32 %v2074, %v2620
        %v2622 = vpop.f32.mrf.mxu0
        %v2623 = vpop.f32.mrf.mxu0
        %v2624 = vadd.f32 %v2074, %v2623
        %v2625 = vpop.f32.mrf.mxu0
        %2626 = vmatprep.mubr.bf16.mxu0 0
        %2627 = vmatmul.mubr.bf16.gmra.mxu0 %v2204
        %v2628 = vpop.f32.mrf.mxu0
        %v2629 = vadd.f32 %v2074, %v2628
        %v2630 = vpop.f32.mrf.mxu0
        %v2631 = vpop.f32.mrf.mxu0
        %v2632 = vadd.f32 %v2074, %v2631
        %v2633 = vpop.f32.mrf.mxu0
        %2634 = vmatprep.mubr.bf16.mxu0 0
        %2635 = vmatmul.mubr.bf16.gmra.mxu0 %v2207
        %v2636 = vpop.f32.mrf.mxu0
        %v2637 = vadd.f32 %v2074, %v2636
        %v2638 = vpop.f32.mrf.mxu0
        %v2639 = vpop.f32.mrf.mxu0
        %v2640 = vadd.f32 %v2074, %v2639
        %v2641 = vpop.f32.mrf.mxu0
        %2642 = vmatprep.mubr.bf16.mxu0 0
        %2643 = vmatmul.mubr.bf16.gmra.mxu0 %v2210
        %v2644 = vpop.f32.mrf.mxu0
        %v2645 = vadd.f32 %v2074, %v2644
        %v2646 = vpop.f32.mrf.mxu0
        %v2647 = vpop.f32.mrf.mxu0
        %v2648 = vadd.f32 %v2074, %v2647
        %v2649 = vpop.f32.mrf.mxu0
        %2650 = vmatprep.mubr.bf16.mxu0 0
        %2651 = vmatmul.mubr.bf16.gmra.mxu0 %v2213
        %v2652 = vpop.f32.mrf.mxu0
        %v2653 = vadd.f32 %v2074, %v2652
        %v2654 = vpop.f32.mrf.mxu0
        %v2655 = vpop.f32.mrf.mxu0
        %v2656 = vadd.f32 %v2074, %v2655
        %v2657 = vpop.f32.mrf.mxu0
        %2658 = vmatprep.mubr.bf16.mxu0 0
        %2659 = vmatmul.mubr.bf16.gmra.mxu0 %v2216
        %v2660 = vpop.f32.mrf.mxu0
        %v2661 = vadd.f32 %v2074, %v2660
        %v2662 = vpop.f32.mrf.mxu0
        %v2663 = vpop.f32.mrf.mxu0
        %v2664 = vadd.f32 %v2074, %v2663
        %v2665 = vpop.f32.mrf.mxu0
        %2666 = vmatprep.mubr.bf16.mxu0 0
        %2667 = vmatmul.mubr.bf16.gmra.mxu0 %v2219
        %v2668 = vpop.f32.mrf.mxu0
        %v2669 = vadd.f32 %v2074, %v2668
        %v2670 = vpop.f32.mrf.mxu0
        %v2671 = vpop.f32.mrf.mxu0
        %v2672 = vadd.f32 %v2074, %v2671
        %v2673 = vpop.f32.mrf.mxu0
        %2674 = vmatprep.mubr.bf16.mxu0 0
        %2675 = vmatmul.mubr.bf16.gmra.mxu0 %v2222
        %v2676 = vpop.f32.mrf.mxu0
        %v2677 = vadd.f32 %v2074, %v2676
        %v2678 = vpop.f32.mrf.mxu0
        %v2679 = vpop.f32.mrf.mxu0
        %v2680 = vadd.f32 %v2074, %v2679
        %v2681 = vpop.f32.mrf.mxu0
        %2682 = vmatprep.mubr.bf16.mxu0 0
        %2683 = vmatmul.mubr.bf16.gmra.mxu0 %v2225
        %v2684 = vpop.f32.mrf.mxu0
        %v2685 = vadd.f32 %v2074, %v2684
        %v2686 = vpop.f32.mrf.mxu0
        %v2687 = vpop.f32.mrf.mxu0
        %v2688 = vadd.f32 %v2074, %v2687
        %v2689 = vpop.f32.mrf.mxu0
        %2690 = vmatprep.mubr.bf16.mxu0 0
        %2691 = vmatmul.mubr.bf16.gmra.mxu0 %v2228
        %v2692 = vpop.f32.mrf.mxu0
        %v2693 = vadd.f32 %v2074, %v2692
        %v2694 = vpop.f32.mrf.mxu0
        %v2695 = vpop.f32.mrf.mxu0
        %v2696 = vadd.f32 %v2074, %v2695
        %v2697 = vpop.f32.mrf.mxu0
        %2698 = vmatprep.mubr.bf16.mxu0 0
        %2699 = vmatmul.mubr.bf16.gmra.mxu0 %v2231
        %v2700 = vpop.f32.mrf.mxu0
        %v2701 = vadd.f32 %v2074, %v2700
        %v2702 = vpop.f32.mrf.mxu0
        %v2703 = vpop.f32.mrf.mxu0
        %v2704 = vadd.f32 %v2074, %v2703
        %v2705 = vpop.f32.mrf.mxu0
        %2706 = vmatprep.mubr.bf16.mxu0 0
        %2707 = vmatmul.mubr.bf16.gmra.mxu0 %v2234
        %v2708 = vpop.f32.mrf.mxu0
        %v2709 = vadd.f32 %v2074, %v2708
        %v2710 = vpop.f32.mrf.mxu0
        %v2711 = vpop.f32.mrf.mxu0
        %v2712 = vadd.f32 %v2074, %v2711
        %v2713 = vpop.f32.mrf.mxu0
        %2714 = vmatprep.mubr.bf16.mxu0 0
        %2715 = vmatmul.mubr.bf16.gmra.mxu0 %v2237
        %v2716 = vpop.f32.mrf.mxu0
        %v2717 = vadd.f32 %v2074, %v2716
        %v2718 = vpop.f32.mrf.mxu0
        %v2719 = vpop.f32.mrf.mxu0
        %v2720 = vadd.f32 %v2074, %v2719
        %v2721 = vpop.f32.mrf.mxu0
        %2722 = vmatprep.mubr.bf16.mxu0 0
        %2723 = vmatmul.mubr.bf16.gmra.mxu0 %v2240
        %v2724 = vpop.f32.mrf.mxu0
        %v2725 = vadd.f32 %v2074, %v2724
        %v2726 = vpop.f32.mrf.mxu0
        %v2727 = vpop.f32.mrf.mxu0
        %v2728 = vadd.f32 %v2074, %v2727
        %v2729 = vpop.f32.mrf.mxu0
        %2730 = vmatprep.mubr.bf16.mxu0 0
        %2731 = vmatmul.mubr.bf16.gmra.mxu0 %v2243
        %v2732 = vpop.f32.mrf.mxu0
        %v2733 = vadd.f32 %v2074, %v2732
        %v2734 = vpop.f32.mrf.mxu0
        %v2735 = vpop.f32.mrf.mxu0
        %v2736 = vadd.f32 %v2074, %v2735
        %v2737 = vpop.f32.mrf.mxu0
        %2738 = vmatprep.mubr.bf16.mxu0 0
        %2739 = vmatmul.mubr.bf16.gmra.mxu0 %v2246
        %v2740 = vpop.f32.mrf.mxu0
        %v2741 = vadd.f32 %v2074, %v2740
        %v2742 = vpop.f32.mrf.mxu0
        %v2743 = vpop.f32.mrf.mxu0
        %v2744 = vadd.f32 %v2074, %v2743
        %v2745 = vpop.f32.mrf.mxu0
        %2746 = vmatprep.mubr.bf16.mxu0 0
        %2747 = vmatmul.mubr.bf16.gmra.mxu0 %v2249
        %v2748 = vpop.f32.mrf.mxu0
        %v2749 = vadd.f32 %v2074, %v2748
        %v2750 = vpop.f32.mrf.mxu0
        %v2751 = vpop.f32.mrf.mxu0
        %v2752 = vadd.f32 %v2074, %v2751
        %v2753 = vpop.f32.mrf.mxu0
        %2754 = vmatprep.mubr.bf16.mxu0 0
        %2755 = vmatmul.mubr.bf16.gmra.mxu0 %v2252
        %v2756 = vpop.f32.mrf.mxu0
        %v2757 = vadd.f32 %v2074, %v2756
        %v2758 = vpop.f32.mrf.mxu0
        %v2759 = vpop.f32.mrf.mxu0
        %v2760 = vadd.f32 %v2074, %v2759
        %v2761 = vpop.f32.mrf.mxu0
        %2762 = vmatprep.mubr.bf16.mxu0 0
        %2763 = vmatmul.mubr.bf16.gmra.mxu0 %v2255
        %v2764 = vpop.f32.mrf.mxu0
        %v2765 = vadd.f32 %v2074, %v2764
        %v2766 = vpop.f32.mrf.mxu0
        %v2767 = vpop.f32.mrf.mxu0
        %v2768 = vadd.f32 %v2074, %v2767
        %v2769 = vpop.f32.mrf.mxu0
        %2770 = vmatprep.mubr.bf16.mxu0 0
        %2771 = vmatmul.mubr.bf16.gmra.mxu0 %v2258
        %v2772 = vpop.f32.mrf.mxu0
        %v2773 = vadd.f32 %v2074, %v2772
        %v2774 = vpop.f32.mrf.mxu0
        %v2775 = vpop.f32.mrf.mxu0
        %v2776 = vadd.f32 %v2074, %v2775
        %v2777 = vpop.f32.mrf.mxu0
        %2778 = vmatprep.mubr.bf16.mxu0 0
        %2779 = vmatmul.mubr.bf16.gmra.mxu0 %v2261
        %v2780 = vpop.f32.mrf.mxu0
        %v2781 = vadd.f32 %v2074, %v2780
        %v2782 = vpop.f32.mrf.mxu0
        %v2783 = vpop.f32.mrf.mxu0
        %v2784 = vadd.f32 %v2074, %v2783
        %v2785 = vpop.f32.mrf.mxu0
        %2786 = vmatprep.mubr.bf16.mxu0 0
        %2787 = vmatmul.mubr.bf16.gmra.mxu0 %v2264
        %v2788 = vpop.f32.mrf.mxu0
        %v2789 = vadd.f32 %v2074, %v2788
        %v2790 = vpop.f32.mrf.mxu0
        %v2791 = vpop.f32.mrf.mxu0
        %v2792 = vadd.f32 %v2074, %v2791
        %v2793 = vpop.f32.mrf.mxu0
        %2794 = vmatprep.mubr.bf16.mxu0 0
        %2795 = vmatmul.mubr.bf16.gmra.mxu0 %v2267
        %v2796 = vpop.f32.mrf.mxu0
        %v2797 = vadd.f32 %v2074, %v2796
        %v2798 = vpop.f32.mrf.mxu0
        %v2799 = vpop.f32.mrf.mxu0
        %v2800 = vadd.f32 %v2074, %v2799
        %v2801 = vpop.f32.mrf.mxu0
        %2802 = vmatprep.mubr.bf16.mxu0 0
        %2803 = vmatmul.mubr.bf16.gmra.mxu0 %v2270
        %v2804 = vpop.f32.mrf.mxu0
        %v2805 = vadd.f32 %v2074, %v2804
        %v2806 = vpop.f32.mrf.mxu0
        %v2807 = vpop.f32.mrf.mxu0
        %v2808 = vadd.f32 %v2074, %v2807
        %v2809 = vpop.f32.mrf.mxu0
        %2810 = vmatprep.mubr.bf16.mxu0 0
        %2811 = vmatmul.mubr.bf16.gmra.mxu0 %v2273
        %v2812 = vpop.f32.mrf.mxu0
        %v2813 = vadd.f32 %v2074, %v2812
        %v2814 = vpop.f32.mrf.mxu0
        %v2815 = vpop.f32.mrf.mxu0
        %v2816 = vadd.f32 %v2074, %v2815
        %v2817 = vpop.f32.mrf.mxu0
        %2818 = vmatprep.mubr.bf16.mxu0 0
        %2819 = vmatmul.mubr.bf16.gmra.mxu0 %v2276
        %v2820 = vpop.f32.mrf.mxu0
        %v2821 = vadd.f32 %v2074, %v2820
        %v2822 = vpop.f32.mrf.mxu0
        %v2823 = vpop.f32.mrf.mxu0
        %v2824 = vadd.f32 %v2074, %v2823
        %v2825 = vpop.f32.mrf.mxu0
        %2826 = vdwg.mxu0
        %v2827 = vmax.f32 %v2317, 0.0
        %v2828 = vmax.f32 %v2320, 0.0
        %v2829 = vmax.f32 %v2325, 0.0
        %v2830 = vmax.f32 %v2328, 0.0
        %v2831 = vmax.f32 %v2333, 0.0
        %v2832 = vmax.f32 %v2336, 0.0
        %v2833 = vmax.f32 %v2341, 0.0
        %v2834 = vmax.f32 %v2344, 0.0
        %v2835 = vmax.f32 %v2349, 0.0
        %v2836 = vmax.f32 %v2352, 0.0
        %v2837 = vmax.f32 %v2357, 0.0
        %v2838 = vmax.f32 %v2360, 0.0
        %v2839 = vmax.f32 %v2365, 0.0
        %v2840 = vmax.f32 %v2368, 0.0
        %v2841 = vmax.f32 %v2373, 0.0
        %v2842 = vmax.f32 %v2376, 0.0
        %v2843 = vmax.f32 %v2381, 0.0
        %v2844 = vmax.f32 %v2384, 0.0
        %v2845 = vmax.f32 %v2389, 0.0
        %v2846 = vmax.f32 %v2392, 0.0
        %v2847 = vmax.f32 %v2397, 0.0
        %v2848 = vmax.f32 %v2400, 0.0
        %v2849 = vmax.f32 %v2405, 0.0
        %v2850 = vmax.f32 %v2408, 0.0
        %v2851 = vmax.f32 %v2413, 0.0
        %v2852 = vmax.f32 %v2416, 0.0
        %v2853 = vmax.f32 %v2421, 0.0
        %v2854 = vmax.f32 %v2424, 0.0
        %v2855 = vmax.f32 %v2429, 0.0
        %v2856 = vmax.f32 %v2432, 0.0
        %v2857 = vmax.f32 %v2437, 0.0
        %v2858 = vmax.f32 %v2440, 0.0
        %v2859 = vmax.f32 %v2445, 0.0
        %v2860 = vmax.f32 %v2448, 0.0
        %v2861 = vmax.f32 %v2453, 0.0
        %v2862 = vmax.f32 %v2456, 0.0
        %v2863 = vmax.f32 %v2461, 0.0
        %v2864 = vmax.f32 %v2464, 0.0
        %v2865 = vmax.f32 %v2469, 0.0
        %v2866 = vmax.f32 %v2472, 0.0
        %v2867 = vmax.f32 %v2477, 0.0
        %v2868 = vmax.f32 %v2480, 0.0
        %v2869 = vmax.f32 %v2485, 0.0
        %v2870 = vmax.f32 %v2488, 0.0
        %v2871 = vmax.f32 %v2493, 0.0
        %v2872 = vmax.f32 %v2496, 0.0
        %v2873 = vmax.f32 %v2501, 0.0
        %v2874 = vmax.f32 %v2504, 0.0
        %v2875 = vmax.f32 %v2509, 0.0
        %v2876 = vmax.f32 %v2512, 0.0
        %v2877 = vmax.f32 %v2517, 0.0
        %v2878 = vmax.f32 %v2520, 0.0
        %v2879 = vmax.f32 %v2525, 0.0
        %v2880 = vmax.f32 %v2528, 0.0
        %v2881 = vmax.f32 %v2533, 0.0
        %v2882 = vmax.f32 %v2536, 0.0
        %v2883 = vmax.f32 %v2541, 0.0
        %v2884 = vmax.f32 %v2544, 0.0
        %v2885 = vmax.f32 %v2549, 0.0
        %v2886 = vmax.f32 %v2552, 0.0
        %v2887 = vmax.f32 %v2557, 0.0
        %v2888 = vmax.f32 %v2560, 0.0
        %v2889 = vmax.f32 %v2565, 0.0
        %v2890 = vmax.f32 %v2568, 0.0
        %v2891 = vmax.f32 %v2573, 0.0
        %v2892 = vmax.f32 %v2576, 0.0
        %v2893 = vmax.f32 %v2581, 0.0
        %v2894 = vmax.f32 %v2584, 0.0
        %v2895 = vmax.f32 %v2589, 0.0
        %v2896 = vmax.f32 %v2592, 0.0
        %v2897 = vmax.f32 %v2597, 0.0
        %v2898 = vmax.f32 %v2600, 0.0
        %v2899 = vmax.f32 %v2605, 0.0
        %v2900 = vmax.f32 %v2608, 0.0
        %v2901 = vmax.f32 %v2613, 0.0
        %v2902 = vmax.f32 %v2616, 0.0
        %v2903 = vmax.f32 %v2621, 0.0
        %v2904 = vmax.f32 %v2624, 0.0
        %v2905 = vmax.f32 %v2629, 0.0
        %v2906 = vmax.f32 %v2632, 0.0
        %v2907 = vmax.f32 %v2637, 0.0
        %v2908 = vmax.f32 %v2640, 0.0
        %v2909 = vmax.f32 %v2645, 0.0
        %v2910 = vmax.f32 %v2648, 0.0
        %v2911 = vmax.f32 %v2653, 0.0
        %v2912 = vmax.f32 %v2656, 0.0
        %v2913 = vmax.f32 %v2661, 0.0
        %v2914 = vmax.f32 %v2664, 0.0
        %v2915 = vmax.f32 %v2669, 0.0
        %v2916 = vmax.f32 %v2672, 0.0
        %v2917 = vmax.f32 %v2677, 0.0
        %v2918 = vmax.f32 %v2680, 0.0
        %v2919 = vmax.f32 %v2685, 0.0
        %v2920 = vmax.f32 %v2688, 0.0
        %v2921 = vmax.f32 %v2693, 0.0
        %v2922 = vmax.f32 %v2696, 0.0
        %v2923 = vmax.f32 %v2701, 0.0
        %v2924 = vmax.f32 %v2704, 0.0
        %v2925 = vmax.f32 %v2709, 0.0
        %v2926 = vmax.f32 %v2712, 0.0
        %v2927 = vmax.f32 %v2717, 0.0
        %v2928 = vmax.f32 %v2720, 0.0
        %v2929 = vmax.f32 %v2725, 0.0
        %v2930 = vmax.f32 %v2728, 0.0
        %v2931 = vmax.f32 %v2733, 0.0
        %v2932 = vmax.f32 %v2736, 0.0
        %v2933 = vmax.f32 %v2741, 0.0
        %v2934 = vmax.f32 %v2744, 0.0
        %v2935 = vmax.f32 %v2749, 0.0
        %v2936 = vmax.f32 %v2752, 0.0
        %v2937 = vmax.f32 %v2757, 0.0
        %v2938 = vmax.f32 %v2760, 0.0
        %v2939 = vmax.f32 %v2765, 0.0
        %v2940 = vmax.f32 %v2768, 0.0
        %v2941 = vmax.f32 %v2773, 0.0
        %v2942 = vmax.f32 %v2776, 0.0
        %v2943 = vmax.f32 %v2781, 0.0
        %v2944 = vmax.f32 %v2784, 0.0
        %v2945 = vmax.f32 %v2789, 0.0
        %v2946 = vmax.f32 %v2792, 0.0
        %v2947 = vmax.f32 %v2797, 0.0
        %v2948 = vmax.f32 %v2800, 0.0
        %v2949 = vmax.f32 %v2805, 0.0
        %v2950 = vmax.f32 %v2808, 0.0
        %v2951 = vmax.f32 %v2813, 0.0
        %v2952 = vmax.f32 %v2816, 0.0
        %v2953 = vmax.f32 %v2821, 0.0
        %v2954 = vmax.f32 %v2824, 0.0
        %s2955 = scalar_lea.vmem [#allocation3], 48
        %2956 = vst.msk [vmem:[%s2955 + $0x8] sm:$0xff] %vm2085, %v1874
        %2957 = vst.msk [vmem:[%s2955 + $0x10] sm:$0xff] %vm2085, %v1875
        %2958 = vst.msk [vmem:[%s2955 + $0x18] sm:$0xff] %vm2085, %v1876
        %2959 = vst.msk [vmem:[%s2955 + $0x20] sm:$0xff] %vm2085, %v1877
        %2960 = vst.msk [vmem:[%s2955 + $0x38] sm:$0xff] %vm2085, %v1878
        %2961 = vst.msk [vmem:[%s2955 + $0x40] sm:$0xff] %vm2085, %v1879
        %2962 = vst.msk [vmem:[%s2955 + $0x48] sm:$0xff] %vm2085, %v1880
        %2963 = vst.msk [vmem:[%s2955 + $0x50] sm:$0xff] %vm2085, %v1881
        %2964 = vst.msk [vmem:[%s2955 + $0x68] sm:$0xff] %vm2085, %v1882
        %2965 = vst.msk [vmem:[%s2955 + $0x70] sm:$0xff] %vm2085, %v1883
        %2966 = vst.msk [vmem:[%s2955 + $0x78] sm:$0xff] %vm2085, %v1884
        %2967 = vst.msk [vmem:[%s2955 + $0x80] sm:$0xff] %vm2085, %v1885
        %2968 = vst.msk [vmem:[%s2955 + $0x98] sm:$0xff] %vm2085, %v1886
        %2969 = vst.msk [vmem:[%s2955 + $0xa0] sm:$0xff] %vm2085, %v1887
        %2970 = vst.msk [vmem:[%s2955 + $0xa8] sm:$0xff] %vm2085, %v1888
        %2971 = vst.msk [vmem:[%s2955 + $0xb0] sm:$0xff] %vm2085, %v1889
        %2972 = vst.msk [vmem:[%s2955 + $0xc8] sm:$0xff] %vm2085, %v1890
        %2973 = vst.msk [vmem:[%s2955 + $0xd0] sm:$0xff] %vm2085, %v1891
        %2974 = vst.msk [vmem:[%s2955 + $0xd8] sm:$0xff] %vm2085, %v1892
        %2975 = vst.msk [vmem:[%s2955 + $0xe0] sm:$0xff] %vm2085, %v1893
        %2976 = vst.msk [vmem:[%s2955 + $0xf8] sm:$0xff] %vm2085, %v1894
        %2977 = vst.msk [vmem:[%s2955 + $0x100] sm:$0xff] %vm2085, %v1895
        %2978 = vst.msk [vmem:[%s2955 + $0x108] sm:$0xff] %vm2085, %v1896
        %2979 = vst.msk [vmem:[%s2955 + $0x110] sm:$0xff] %vm2085, %v1897
        %2980 = vst.msk [vmem:[%s2955 + $0x128] sm:$0xff] %vm2085, %v1898
        %2981 = vst.msk [vmem:[%s2955 + $0x130] sm:$0xff] %vm2085, %v1899
        %2982 = vst.msk [vmem:[%s2955 + $0x138] sm:$0xff] %vm2085, %v1900
        %2983 = vst.msk [vmem:[%s2955 + $0x140] sm:$0xff] %vm2085, %v1901
        %2984 = vst.msk [vmem:[%s2955 + $0x158] sm:$0xff] %vm2085, %v1902
        %2985 = vst.msk [vmem:[%s2955 + $0x160] sm:$0xff] %vm2085, %v1903
        %2986 = vst.msk [vmem:[%s2955 + $0x168] sm:$0xff] %vm2085, %v1904
        %2987 = vst.msk [vmem:[%s2955 + $0x170] sm:$0xff] %vm2085, %v1905
        %2988 = vst.msk [vmem:[%s2955 + $0x188] sm:$0xff] %vm2085, %v1906
        %2989 = vst.msk [vmem:[%s2955 + $0x190] sm:$0xff] %vm2085, %v1907
        %2990 = vst.msk [vmem:[%s2955 + $0x198] sm:$0xff] %vm2085, %v1908
        %2991 = vst.msk [vmem:[%s2955 + $0x1a0] sm:$0xff] %vm2085, %v1909
        %2992 = vst.msk [vmem:[%s2955 + $0x1b8] sm:$0xff] %vm2085, %v1910
        %2993 = vst.msk [vmem:[%s2955 + $0x1c0] sm:$0xff] %vm2085, %v1911
        %2994 = vst.msk [vmem:[%s2955 + $0x1c8] sm:$0xff] %vm2085, %v1912
        %2995 = vst.msk [vmem:[%s2955 + $0x1d0] sm:$0xff] %vm2085, %v1913
        %2996 = vst.msk [vmem:[%s2955 + $0x1e8] sm:$0xff] %vm2085, %v1914
        %2997 = vst.msk [vmem:[%s2955 + $0x1f0] sm:$0xff] %vm2085, %v1915
        %2998 = vst.msk [vmem:[%s2955 + $0x1f8] sm:$0xff] %vm2085, %v1916
        %2999 = vst.msk [vmem:[%s2955 + $0x200] sm:$0xff] %vm2085, %v1917
        %3000 = vst.msk [vmem:[%s2955 + $0x218] sm:$0xff] %vm2085, %v1918
        %3001 = vst.msk [vmem:[%s2955 + $0x220] sm:$0xff] %vm2085, %v1919
        %3002 = vst.msk [vmem:[%s2955 + $0x228] sm:$0xff] %vm2085, %v1920
        %3003 = vst.msk [vmem:[%s2955 + $0x230] sm:$0xff] %vm2085, %v1921
        %3004 = vst.msk [vmem:[%s2955 + $0x248] sm:$0xff] %vm2085, %v1922
        %3005 = vst.msk [vmem:[%s2955 + $0x250] sm:$0xff] %vm2085, %v1923
        %3006 = vst.msk [vmem:[%s2955 + $0x258] sm:$0xff] %vm2085, %v1924
        %3007 = vst.msk [vmem:[%s2955 + $0x260] sm:$0xff] %vm2085, %v1925
        %3008 = vst.msk [vmem:[%s2955 + $0x278] sm:$0xff] %vm2085, %v1926
        %3009 = vst.msk [vmem:[%s2955 + $0x280] sm:$0xff] %vm2085, %v1927
        %3010 = vst.msk [vmem:[%s2955 + $0x288] sm:$0xff] %vm2085, %v1928
        %3011 = vst.msk [vmem:[%s2955 + $0x290] sm:$0xff] %vm2085, %v1929
        %3012 = vst.msk [vmem:[%s2955 + $0x2a8] sm:$0xff] %vm2085, %v1930
        %3013 = vst.msk [vmem:[%s2955 + $0x2b0] sm:$0xff] %vm2085, %v1931
        %3014 = vst.msk [vmem:[%s2955 + $0x2b8] sm:$0xff] %vm2085, %v1932
        %3015 = vst.msk [vmem:[%s2955 + $0x2c0] sm:$0xff] %vm2085, %v1933
        %3016 = vst.msk [vmem:[%s2955 + $0x2d8] sm:$0xff] %vm2085, %v1934
        %3017 = vst.msk [vmem:[%s2955 + $0x2e0] sm:$0xff] %vm2085, %v1935
        %3018 = vst.msk [vmem:[%s2955 + $0x2e8] sm:$0xff] %vm2085, %v1936
        %3019 = vst.msk [vmem:[%s2955 + $0x2f0] sm:$0xff] %vm2085, %v1937
        %3020 = vst.msk [vmem:[%s2955 + $0x308] sm:$0xff] %vm2085, %v1938
        %3021 = vst.msk [vmem:[%s2955 + $0x310] sm:$0xff] %vm2085, %v1939
        %3022 = vst.msk [vmem:[%s2955 + $0x318] sm:$0xff] %vm2085, %v1940
        %3023 = vst.msk [vmem:[%s2955 + $0x320] sm:$0xff] %vm2085, %v1941
        %3024 = vst.msk [vmem:[%s2955 + $0x338] sm:$0xff] %vm2085, %v1942
        %3025 = vst.msk [vmem:[%s2955 + $0x340] sm:$0xff] %vm2085, %v1943
        %3026 = vst.msk [vmem:[%s2955 + $0x348] sm:$0xff] %vm2085, %v1944
        %3027 = vst.msk [vmem:[%s2955 + $0x350] sm:$0xff] %vm2085, %v1945
        %3028 = vst.msk [vmem:[%s2955 + $0x368] sm:$0xff] %vm2085, %v1946
        %3029 = vst.msk [vmem:[%s2955 + $0x370] sm:$0xff] %vm2085, %v1947
        %3030 = vst.msk [vmem:[%s2955 + $0x378] sm:$0xff] %vm2085, %v1948
        %3031 = vst.msk [vmem:[%s2955 + $0x380] sm:$0xff] %vm2085, %v1949
        %3032 = vst.msk [vmem:[%s2955 + $0x398] sm:$0xff] %vm2085, %v1950
        %3033 = vst.msk [vmem:[%s2955 + $0x3a0] sm:$0xff] %vm2085, %v1951
        %3034 = vst.msk [vmem:[%s2955 + $0x3a8] sm:$0xff] %vm2085, %v1952
        %3035 = vst.msk [vmem:[%s2955 + $0x3b0] sm:$0xff] %vm2085, %v1953
        %3036 = vst.msk [vmem:[%s2955 + $0x3c8] sm:$0xff] %vm2085, %v1954
        %3037 = vst.msk [vmem:[%s2955 + $0x3d0] sm:$0xff] %vm2085, %v1955
        %3038 = vst.msk [vmem:[%s2955 + $0x3d8] sm:$0xff] %vm2085, %v1956
        %3039 = vst.msk [vmem:[%s2955 + $0x3e0] sm:$0xff] %vm2085, %v1957
        %3040 = vst.msk [vmem:[%s2955 + $0x3f8] sm:$0xff] %vm2085, %v1958
        %3041 = vst.msk [vmem:[%s2955 + $0x400] sm:$0xff] %vm2085, %v1959
        %3042 = vst.msk [vmem:[%s2955 + $0x408] sm:$0xff] %vm2085, %v1960
        %3043 = vst.msk [vmem:[%s2955 + $0x410] sm:$0xff] %vm2085, %v1961
        %3044 = vst.msk [vmem:[%s2955 + $0x428] sm:$0xff] %vm2085, %v1962
        %3045 = vst.msk [vmem:[%s2955 + $0x430] sm:$0xff] %vm2085, %v1963
        %3046 = vst.msk [vmem:[%s2955 + $0x438] sm:$0xff] %vm2085, %v1964
        %3047 = vst.msk [vmem:[%s2955 + $0x440] sm:$0xff] %vm2085, %v1965
        %3048 = vst.msk [vmem:[%s2955 + $0x458] sm:$0xff] %vm2085, %v1966
        %3049 = vst.msk [vmem:[%s2955 + $0x460] sm:$0xff] %vm2085, %v1967
        %3050 = vst.msk [vmem:[%s2955 + $0x468] sm:$0xff] %vm2085, %v1968
        %3051 = vst.msk [vmem:[%s2955 + $0x470] sm:$0xff] %vm2085, %v1969
        %3052 = vst.msk [vmem:[%s2955 + $0x488] sm:$0xff] %vm2085, %v1970
        %3053 = vst.msk [vmem:[%s2955 + $0x490] sm:$0xff] %vm2085, %v1971
        %3054 = vst.msk [vmem:[%s2955 + $0x498] sm:$0xff] %vm2085, %v1972
        %3055 = vst.msk [vmem:[%s2955 + $0x4a0] sm:$0xff] %vm2085, %v1973
        %3056 = vst.msk [vmem:[%s2955 + $0x4b8] sm:$0xff] %vm2085, %v1974
        %3057 = vst.msk [vmem:[%s2955 + $0x4c0] sm:$0xff] %vm2085, %v1975
        %3058 = vst.msk [vmem:[%s2955 + $0x4c8] sm:$0xff] %vm2085, %v1976
        %3059 = vst.msk [vmem:[%s2955 + $0x4d0] sm:$0xff] %vm2085, %v1977
        %3060 = vst.msk [vmem:[%s2955 + $0x4e8] sm:$0xff] %vm2085, %v1978
        %3061 = vst.msk [vmem:[%s2955 + $0x4f0] sm:$0xff] %vm2085, %v1979
        %3062 = vst.msk [vmem:[%s2955 + $0x4f8] sm:$0xff] %vm2085, %v1980
        %3063 = vst.msk [vmem:[%s2955 + $0x500] sm:$0xff] %vm2085, %v1981
        %3064 = vst.msk [vmem:[%s2955 + $0x518] sm:$0xff] %vm2085, %v1982
        %3065 = vst.msk [vmem:[%s2955 + $0x520] sm:$0xff] %vm2085, %v1983
        %3066 = vst.msk [vmem:[%s2955 + $0x528] sm:$0xff] %vm2085, %v1984
        %3067 = vst.msk [vmem:[%s2955 + $0x530] sm:$0xff] %vm2085, %v1985
        %3068 = vst.msk [vmem:[%s2955 + $0x548] sm:$0xff] %vm2085, %v1986
        %3069 = vst.msk [vmem:[%s2955 + $0x550] sm:$0xff] %vm2085, %v1987
        %3070 = vst.msk [vmem:[%s2955 + $0x558] sm:$0xff] %vm2085, %v1988
        %3071 = vst.msk [vmem:[%s2955 + $0x560] sm:$0xff] %vm2085, %v1989
        %3072 = vst.msk [vmem:[%s2955 + $0x578] sm:$0xff] %vm2085, %v1990
        %3073 = vst.msk [vmem:[%s2955 + $0x580] sm:$0xff] %vm2085, %v1991
        %3074 = vst.msk [vmem:[%s2955 + $0x588] sm:$0xff] %vm2085, %v1992
        %3075 = vst.msk [vmem:[%s2955 + $0x590] sm:$0xff] %vm2085, %v1993
        %3076 = vst.msk [vmem:[%s2955 + $0x5a8] sm:$0xff] %vm2085, %v1994
        %3077 = vst.msk [vmem:[%s2955 + $0x5b0] sm:$0xff] %vm2085, %v1995
        %3078 = vst.msk [vmem:[%s2955 + $0x5b8] sm:$0xff] %vm2085, %v1996
        %3079 = vst.msk [vmem:[%s2955 + $0x5c0] sm:$0xff] %vm2085, %v1997
        %3080 = vst.msk [vmem:[%s2955 + $0x5d8] sm:$0xff] %vm2085, %v1998
        %3081 = vst.msk [vmem:[%s2955 + $0x5e0] sm:$0xff] %vm2085, %v1999
        %3082 = vst.msk [vmem:[%s2955 + $0x5e8] sm:$0xff] %vm2085, %v2000
        %3083 = vst.msk [vmem:[%s2955 + $0x5f0] sm:$0xff] %vm2085, %v2001
        %3084 = vst [vmem:[#allocation3 + $0x7] sm:$0xff] 0.0
        %3085 = vst [vmem:[#allocation3 + $0xf] sm:$0xff] 0.0
        %3086 = vst [vmem:[#allocation3 + $0x17] sm:$0xff] 0.0
        %3087 = vst [vmem:[#allocation3 + $0x1f] sm:$0xff] 0.0
        %3088 = vst [vmem:[#allocation3 + $0x27] sm:$0x3] 0.0
        %3089 = vst [vmem:[%s2955 + $0x7] sm:$0x1] 0.0
        %3090 = vst [vmem:[%s2955 + $0x37] sm:$0x1] 0.0
        %3091 = vst [vmem:[%s2955 + $0x67] sm:$0x1] 0.0
        %3092 = vst [vmem:[%s2955 + $0x97] sm:$0x1] 0.0
        %3093 = vst [vmem:[%s2955 + $0xc7] sm:$0x1] 0.0
        %3094 = vst [vmem:[%s2955 + $0xf7] sm:$0x1] 0.0
        %3095 = vst [vmem:[%s2955 + $0x127] sm:$0x1] 0.0
        %3096 = vst [vmem:[%s2955 + $0x157] sm:$0x1] 0.0
        %3097 = vst [vmem:[%s2955 + $0x187] sm:$0x1] 0.0
        %3098 = vst [vmem:[%s2955 + $0x1b7] sm:$0x1] 0.0
        %3099 = vst [vmem:[%s2955 + $0x1e7] sm:$0x1] 0.0
        %3100 = vst [vmem:[%s2955 + $0x217] sm:$0x1] 0.0
        %3101 = vst [vmem:[%s2955 + $0x247] sm:$0x1] 0.0
        %3102 = vst [vmem:[%s2955 + $0x277] sm:$0x1] 0.0
        %3103 = vst [vmem:[%s2955 + $0x2a7] sm:$0x1] 0.0
        %3104 = vst [vmem:[%s2955 + $0x2d7] sm:$0x1] 0.0
        %3105 = vst [vmem:[%s2955 + $0x307] sm:$0x1] 0.0
        %3106 = vst [vmem:[%s2955 + $0x337] sm:$0x1] 0.0
        %3107 = vst [vmem:[%s2955 + $0x367] sm:$0x1] 0.0
        %3108 = vst [vmem:[%s2955 + $0x397] sm:$0x1] 0.0
        %3109 = vst [vmem:[%s2955 + $0x3c7] sm:$0x1] 0.0
        %3110 = vst [vmem:[%s2955 + $0x3f7] sm:$0x1] 0.0
        %3111 = vst [vmem:[%s2955 + $0x427] sm:$0x1] 0.0
        %3112 = vst [vmem:[%s2955 + $0x457] sm:$0x1] 0.0
        %3113 = vst [vmem:[%s2955 + $0x487] sm:$0x1] 0.0
        %3114 = vst [vmem:[%s2955 + $0x4b7] sm:$0x1] 0.0
        %3115 = vst [vmem:[%s2955 + $0x4e7] sm:$0x1] 0.0
        %3116 = vst [vmem:[%s2955 + $0x517] sm:$0x1] 0.0
        %3117 = vst [vmem:[%s2955 + $0x547] sm:$0x1] 0.0
        %3118 = vst [vmem:[%s2955 + $0x577] sm:$0x1] 0.0
        %3119 = vst [vmem:[%s2955 + $0x5a7] sm:$0x1] 0.0
        %3120 = vst [vmem:[%s2955 + $0x5d7] sm:$0x1] 0.0
        %s3121 = scalar_lea.vmem [#allocation3], 7
        %v3122 = vld [vmem:[%s3121] ss:$2 sm:$0xff]
        %s3123 = scalar_lea.vmem [#allocation3], 23
        %v3124 = vld [vmem:[%s3123] ss:$2 sm:$0xff]
        %s3125 = scalar_lea.vmem [#allocation3], 103
        %v3126 = vld [vmem:[%s3125] ss:$2 sm:$0xff]
        %s3127 = scalar_lea.vmem [#allocation3], 119
        %v3128 = vld [vmem:[%s3127] ss:$2 sm:$0xff]
        %s3129 = scalar_lea.vmem [#allocation3], 199
        %v3130 = vld [vmem:[%s3129] ss:$2 sm:$0xff]
        %s3131 = scalar_lea.vmem [#allocation3], 215
        %v3132 = vld [vmem:[%s3131] ss:$2 sm:$0xff]
        %s3133 = scalar_lea.vmem [#allocation3], 295
        %v3134 = vld [vmem:[%s3133] ss:$2 sm:$0xff]
        %s3135 = scalar_lea.vmem [#allocation3], 311
        %v3136 = vld [vmem:[%s3135] ss:$2 sm:$0xff]
        %s3137 = scalar_lea.vmem [#allocation3], 391
        %v3138 = vld [vmem:[%s3137] ss:$2 sm:$0xff]
        %s3139 = scalar_lea.vmem [#allocation3], 407
        %v3140 = vld [vmem:[%s3139] ss:$2 sm:$0xff]
        %s3141 = scalar_lea.vmem [#allocation3], 487
        %v3142 = vld [vmem:[%s3141] ss:$2 sm:$0xff]
        %s3143 = scalar_lea.vmem [#allocation3], 503
        %v3144 = vld [vmem:[%s3143] ss:$2 sm:$0xff]
        %s3145 = scalar_lea.vmem [#allocation3], 583
        %v3146 = vld [vmem:[%s3145] ss:$2 sm:$0xff]
        %s3147 = scalar_lea.vmem [#allocation3], 599
        %v3148 = vld [vmem:[%s3147] ss:$2 sm:$0xff]
        %s3149 = scalar_lea.vmem [#allocation3], 679
        %v3150 = vld [vmem:[%s3149] ss:$2 sm:$0xff]
        %s3151 = scalar_lea.vmem [#allocation3], 695
        %v3152 = vld [vmem:[%s3151] ss:$2 sm:$0xff]
        %s3153 = scalar_lea.vmem [#allocation3], 775
        %v3154 = vld [vmem:[%s3153] ss:$2 sm:$0xff]
        %s3155 = scalar_lea.vmem [#allocation3], 791
        %v3156 = vld [vmem:[%s3155] ss:$2 sm:$0xff]
        %s3157 = scalar_lea.vmem [#allocation3], 871
        %v3158 = vld [vmem:[%s3157] ss:$2 sm:$0xff]
        %s3159 = scalar_lea.vmem [#allocation3], 887
        %v3160 = vld [vmem:[%s3159] ss:$2 sm:$0xff]
        %s3161 = scalar_lea.vmem [#allocation3], 967
        %v3162 = vld [vmem:[%s3161] ss:$2 sm:$0xff]
        %s3163 = scalar_lea.vmem [#allocation3], 983
        %v3164 = vld [vmem:[%s3163] ss:$2 sm:$0xff]
        %s3165 = scalar_lea.vmem [#allocation3], 1063
        %v3166 = vld [vmem:[%s3165] ss:$2 sm:$0xff]
        %s3167 = scalar_lea.vmem [#allocation3], 1079
        %v3168 = vld [vmem:[%s3167] ss:$2 sm:$0xff]
        %s3169 = scalar_lea.vmem [#allocation3], 1159
        %v3170 = vld [vmem:[%s3169] ss:$2 sm:$0xff]
        %s3171 = scalar_lea.vmem [#allocation3], 1175
        %v3172 = vld [vmem:[%s3171] ss:$2 sm:$0xff]
        %s3173 = scalar_lea.vmem [#allocation3], 1255
        %v3174 = vld [vmem:[%s3173] ss:$2 sm:$0xff]
        %s3175 = scalar_lea.vmem [#allocation3], 1271
        %v3176 = vld [vmem:[%s3175] ss:$2 sm:$0xff]
        %s3177 = scalar_lea.vmem [#allocation3], 1351
        %v3178 = vld [vmem:[%s3177] ss:$2 sm:$0xff]
        %s3179 = scalar_lea.vmem [#allocation3], 1367
        %v3180 = vld [vmem:[%s3179] ss:$2 sm:$0xff]
        %s3181 = scalar_lea.vmem [#allocation3], 1447
        %v3182 = vld [vmem:[%s3181] ss:$2 sm:$0xff]
        %s3183 = scalar_lea.vmem [#allocation3], 1463
        %v3184 = vld [vmem:[%s3183] ss:$2 sm:$0xff]
        %v3185 = vadd.f32 %v3122, 0.0
        %v3186 = vadd.f32 %v3124, 0.0
        %v3187 = vadd.f32 %v3126, 0.0
        %v3188 = vadd.f32 %v3128, 0.0
        %v3189 = vadd.f32 %v3130, 0.0
        %v3190 = vadd.f32 %v3132, 0.0
        %v3191 = vadd.f32 %v3134, 0.0
        %v3192 = vadd.f32 %v3136, 0.0
        %v3193 = vadd.f32 %v3138, 0.0
        %v3194 = vadd.f32 %v3140, 0.0
        %v3195 = vadd.f32 %v3142, 0.0
        %v3196 = vadd.f32 %v3144, 0.0
        %v3197 = vadd.f32 %v3146, 0.0
        %v3198 = vadd.f32 %v3148, 0.0
        %v3199 = vadd.f32 %v3150, 0.0
        %v3200 = vadd.f32 %v3152, 0.0
        %v3201 = vadd.f32 %v3154, 0.0
        %v3202 = vadd.f32 %v3156, 0.0
        %v3203 = vadd.f32 %v3158, 0.0
        %v3204 = vadd.f32 %v3160, 0.0
        %v3205 = vadd.f32 %v3162, 0.0
        %v3206 = vadd.f32 %v3164, 0.0
        %v3207 = vadd.f32 %v3166, 0.0
        %v3208 = vadd.f32 %v3168, 0.0
        %v3209 = vadd.f32 %v3170, 0.0
        %v3210 = vadd.f32 %v3172, 0.0
        %v3211 = vadd.f32 %v3174, 0.0
        %v3212 = vadd.f32 %v3176, 0.0
        %v3213 = vadd.f32 %v3178, 0.0
        %v3214 = vadd.f32 %v3180, 0.0
        %v3215 = vadd.f32 %v3182, 0.0
        %v3216 = vadd.f32 %v3184, 0.0
        %s3217 = scalar_lea.vmem [#allocation3], 8
        %v3218 = vld [vmem:[%s3217] ss:$2 sm:$0xff]
        %s3219 = scalar_lea.vmem [#allocation3], 24
        %v3220 = vld [vmem:[%s3219] ss:$2 sm:$0xff]
        %s3221 = scalar_lea.vmem [#allocation3], 104
        %v3222 = vld [vmem:[%s3221] ss:$2 sm:$0xff]
        %s3223 = scalar_lea.vmem [#allocation3], 120
        %v3224 = vld [vmem:[%s3223] ss:$2 sm:$0xff]
        %s3225 = scalar_lea.vmem [#allocation3], 200
        %v3226 = vld [vmem:[%s3225] ss:$2 sm:$0xff]
        %s3227 = scalar_lea.vmem [#allocation3], 216
        %v3228 = vld [vmem:[%s3227] ss:$2 sm:$0xff]
        %s3229 = scalar_lea.vmem [#allocation3], 296
        %v3230 = vld [vmem:[%s3229] ss:$2 sm:$0xff]
        %s3231 = scalar_lea.vmem [#allocation3], 312
        %v3232 = vld [vmem:[%s3231] ss:$2 sm:$0xff]
        %s3233 = scalar_lea.vmem [#allocation3], 392
        %v3234 = vld [vmem:[%s3233] ss:$2 sm:$0xff]
        %s3235 = scalar_lea.vmem [#allocation3], 408
        %v3236 = vld [vmem:[%s3235] ss:$2 sm:$0xff]
        %s3237 = scalar_lea.vmem [#allocation3], 488
        %v3238 = vld [vmem:[%s3237] ss:$2 sm:$0xff]
        %s3239 = scalar_lea.vmem [#allocation3], 504
        %v3240 = vld [vmem:[%s3239] ss:$2 sm:$0xff]
        %s3241 = scalar_lea.vmem [#allocation3], 584
        %v3242 = vld [vmem:[%s3241] ss:$2 sm:$0xff]
        %s3243 = scalar_lea.vmem [#allocation3], 600
        %v3244 = vld [vmem:[%s3243] ss:$2 sm:$0xff]
        %s3245 = scalar_lea.vmem [#allocation3], 680
        %v3246 = vld [vmem:[%s3245] ss:$2 sm:$0xff]
        %s3247 = scalar_lea.vmem [#allocation3], 696
        %v3248 = vld [vmem:[%s3247] ss:$2 sm:$0xff]
        %s3249 = scalar_lea.vmem [#allocation3], 776
        %v3250 = vld [vmem:[%s3249] ss:$2 sm:$0xff]
        %s3251 = scalar_lea.vmem [#allocation3], 792
        %v3252 = vld [vmem:[%s3251] ss:$2 sm:$0xff]
        %s3253 = scalar_lea.vmem [#allocation3], 872
        %v3254 = vld [vmem:[%s3253] ss:$2 sm:$0xff]
        %s3255 = scalar_lea.vmem [#allocation3], 888
        %v3256 = vld [vmem:[%s3255] ss:$2 sm:$0xff]
        %s3257 = scalar_lea.vmem [#allocation3], 968
        %v3258 = vld [vmem:[%s3257] ss:$2 sm:$0xff]
        %s3259 = scalar_lea.vmem [#allocation3], 984
        %v3260 = vld [vmem:[%s3259] ss:$2 sm:$0xff]
        %s3261 = scalar_lea.vmem [#allocation3], 1064
        %v3262 = vld [vmem:[%s3261] ss:$2 sm:$0xff]
        %s3263 = scalar_lea.vmem [#allocation3], 1080
        %v3264 = vld [vmem:[%s3263] ss:$2 sm:$0xff]
        %s3265 = scalar_lea.vmem [#allocation3], 1160
        %v3266 = vld [vmem:[%s3265] ss:$2 sm:$0xff]
        %s3267 = scalar_lea.vmem [#allocation3], 1176
        %v3268 = vld [vmem:[%s3267] ss:$2 sm:$0xff]
        %s3269 = scalar_lea.vmem [#allocation3], 1256
        %v3270 = vld [vmem:[%s3269] ss:$2 sm:$0xff]
        %s3271 = scalar_lea.vmem [#allocation3], 1272
        %v3272 = vld [vmem:[%s3271] ss:$2 sm:$0xff]
        %s3273 = scalar_lea.vmem [#allocation3], 1352
        %v3274 = vld [vmem:[%s3273] ss:$2 sm:$0xff]
        %s3275 = scalar_lea.vmem [#allocation3], 1368
        %v3276 = vld [vmem:[%s3275] ss:$2 sm:$0xff]
        %s3277 = scalar_lea.vmem [#allocation3], 1448
        %v3278 = vld [vmem:[%s3277] ss:$2 sm:$0xff]
        %s3279 = scalar_lea.vmem [#allocation3], 1464
        %v3280 = vld [vmem:[%s3279] ss:$2 sm:$0xff]
        %v3281 = vadd.f32 %v3185, %v3218
        %v3282 = vadd.f32 %v3186, %v3220
        %v3283 = vadd.f32 %v3187, %v3222
        %v3284 = vadd.f32 %v3188, %v3224
        %v3285 = vadd.f32 %v3189, %v3226
        %v3286 = vadd.f32 %v3190, %v3228
        %v3287 = vadd.f32 %v3191, %v3230
        %v3288 = vadd.f32 %v3192, %v3232
        %v3289 = vadd.f32 %v3193, %v3234
        %v3290 = vadd.f32 %v3194, %v3236
        %v3291 = vadd.f32 %v3195, %v3238
        %v3292 = vadd.f32 %v3196, %v3240
        %v3293 = vadd.f32 %v3197, %v3242
        %v3294 = vadd.f32 %v3198, %v3244
        %v3295 = vadd.f32 %v3199, %v3246
        %v3296 = vadd.f32 %v3200, %v3248
        %v3297 = vadd.f32 %v3201, %v3250
        %v3298 = vadd.f32 %v3202, %v3252
        %v3299 = vadd.f32 %v3203, %v3254
        %v3300 = vadd.f32 %v3204, %v3256
        %v3301 = vadd.f32 %v3205, %v3258
        %v3302 = vadd.f32 %v3206, %v3260
        %v3303 = vadd.f32 %v3207, %v3262
        %v3304 = vadd.f32 %v3208, %v3264
        %v3305 = vadd.f32 %v3209, %v3266
        %v3306 = vadd.f32 %v3210, %v3268
        %v3307 = vadd.f32 %v3211, %v3270
        %v3308 = vadd.f32 %v3212, %v3272
        %v3309 = vadd.f32 %v3213, %v3274
        %v3310 = vadd.f32 %v3214, %v3276
        %v3311 = vadd.f32 %v3215, %v3278
        %v3312 = vadd.f32 %v3216, %v3280
        %s3313 = scalar_lea.vmem [#allocation3], 9
        %v3314 = vld [vmem:[%s3313] ss:$2 sm:$0xff]
        %s3315 = scalar_lea.vmem [#allocation3], 25
        %v3316 = vld [vmem:[%s3315] ss:$2 sm:$0xff]
        %s3317 = scalar_lea.vmem [#allocation3], 105
        %v3318 = vld [vmem:[%s3317] ss:$2 sm:$0xff]
        %s3319 = scalar_lea.vmem [#allocation3], 121
        %v3320 = vld [vmem:[%s3319] ss:$2 sm:$0xff]
        %s3321 = scalar_lea.vmem [#allocation3], 201
        %v3322 = vld [vmem:[%s3321] ss:$2 sm:$0xff]
        %s3323 = scalar_lea.vmem [#allocation3], 217
        %v3324 = vld [vmem:[%s3323] ss:$2 sm:$0xff]
        %s3325 = scalar_lea.vmem [#allocation3], 297
        %v3326 = vld [vmem:[%s3325] ss:$2 sm:$0xff]
        %s3327 = scalar_lea.vmem [#allocation3], 313
        %v3328 = vld [vmem:[%s3327] ss:$2 sm:$0xff]
        %s3329 = scalar_lea.vmem [#allocation3], 393
        %v3330 = vld [vmem:[%s3329] ss:$2 sm:$0xff]
        %s3331 = scalar_lea.vmem [#allocation3], 409
        %v3332 = vld [vmem:[%s3331] ss:$2 sm:$0xff]
        %s3333 = scalar_lea.vmem [#allocation3], 489
        %v3334 = vld [vmem:[%s3333] ss:$2 sm:$0xff]
        %s3335 = scalar_lea.vmem [#allocation3], 505
        %v3336 = vld [vmem:[%s3335] ss:$2 sm:$0xff]
        %s3337 = scalar_lea.vmem [#allocation3], 585
        %v3338 = vld [vmem:[%s3337] ss:$2 sm:$0xff]
        %s3339 = scalar_lea.vmem [#allocation3], 601
        %v3340 = vld [vmem:[%s3339] ss:$2 sm:$0xff]
        %s3341 = scalar_lea.vmem [#allocation3], 681
        %v3342 = vld [vmem:[%s3341] ss:$2 sm:$0xff]
        %s3343 = scalar_lea.vmem [#allocation3], 697
        %v3344 = vld [vmem:[%s3343] ss:$2 sm:$0xff]
        %s3345 = scalar_lea.vmem [#allocation3], 777
        %v3346 = vld [vmem:[%s3345] ss:$2 sm:$0xff]
        %s3347 = scalar_lea.vmem [#allocation3], 793
        %v3348 = vld [vmem:[%s3347] ss:$2 sm:$0xff]
        %s3349 = scalar_lea.vmem [#allocation3], 873
        %v3350 = vld [vmem:[%s3349] ss:$2 sm:$0xff]
        %s3351 = scalar_lea.vmem [#allocation3], 889
        %v3352 = vld [vmem:[%s3351] ss:$2 sm:$0xff]
        %s3353 = scalar_lea.vmem [#allocation3], 969
        %v3354 = vld [vmem:[%s3353] ss:$2 sm:$0xff]
        %s3355 = scalar_lea.vmem [#allocation3], 985
        %v3356 = vld [vmem:[%s3355] ss:$2 sm:$0xff]
        %s3357 = scalar_lea.vmem [#allocation3], 1065
        %v3358 = vld [vmem:[%s3357] ss:$2 sm:$0xff]
        %s3359 = scalar_lea.vmem [#allocation3], 1081
        %v3360 = vld [vmem:[%s3359] ss:$2 sm:$0xff]
        %s3361 = scalar_lea.vmem [#allocation3], 1161
        %v3362 = vld [vmem:[%s3361] ss:$2 sm:$0xff]
        %s3363 = scalar_lea.vmem [#allocation3], 1177
        %v3364 = vld [vmem:[%s3363] ss:$2 sm:$0xff]
        %s3365 = scalar_lea.vmem [#allocation3], 1257
        %v3366 = vld [vmem:[%s3365] ss:$2 sm:$0xff]
        %s3367 = scalar_lea.vmem [#allocation3], 1273
        %v3368 = vld [vmem:[%s3367] ss:$2 sm:$0xff]
        %s3369 = scalar_lea.vmem [#allocation3], 1353
        %v3370 = vld [vmem:[%s3369] ss:$2 sm:$0xff]
        %s3371 = scalar_lea.vmem [#allocation3], 1369
        %v3372 = vld [vmem:[%s3371] ss:$2 sm:$0xff]
        %s3373 = scalar_lea.vmem [#allocation3], 1449
        %v3374 = vld [vmem:[%s3373] ss:$2 sm:$0xff]
        %s3375 = scalar_lea.vmem [#allocation3], 1465
        %v3376 = vld [vmem:[%s3375] ss:$2 sm:$0xff]
        %v3377 = vadd.f32 %v3281, %v3314
        %v3378 = vadd.f32 %v3282, %v3316
        %v3379 = vadd.f32 %v3283, %v3318
        %v3380 = vadd.f32 %v3284, %v3320
        %v3381 = vadd.f32 %v3285, %v3322
        %v3382 = vadd.f32 %v3286, %v3324
        %v3383 = vadd.f32 %v3287, %v3326
        %v3384 = vadd.f32 %v3288, %v3328
        %v3385 = vadd.f32 %v3289, %v3330
        %v3386 = vadd.f32 %v3290, %v3332
        %v3387 = vadd.f32 %v3291, %v3334
        %v3388 = vadd.f32 %v3292, %v3336
        %v3389 = vadd.f32 %v3293, %v3338
        %v3390 = vadd.f32 %v3294, %v3340
        %v3391 = vadd.f32 %v3295, %v3342
        %v3392 = vadd.f32 %v3296, %v3344
        %v3393 = vadd.f32 %v3297, %v3346
        %v3394 = vadd.f32 %v3298, %v3348
        %v3395 = vadd.f32 %v3299, %v3350
        %v3396 = vadd.f32 %v3300, %v3352
        %v3397 = vadd.f32 %v3301, %v3354
        %v3398 = vadd.f32 %v3302, %v3356
        %v3399 = vadd.f32 %v3303, %v3358
        %v3400 = vadd.f32 %v3304, %v3360
        %v3401 = vadd.f32 %v3305, %v3362
        %v3402 = vadd.f32 %v3306, %v3364
        %v3403 = vadd.f32 %v3307, %v3366
        %v3404 = vadd.f32 %v3308, %v3368
        %v3405 = vadd.f32 %v3309, %v3370
        %v3406 = vadd.f32 %v3310, %v3372
        %v3407 = vadd.f32 %v3311, %v3374
        %v3408 = vadd.f32 %v3312, %v3376
        %s3409 = scalar_lea.vmem %s2955, 7 [#allocation3]
        %v3410 = vld [vmem:[%s3409] ss:$2 sm:$0xff]
        %s3411 = scalar_lea.vmem %s2955, 23 [#allocation3]
        %v3412 = vld [vmem:[%s3411] ss:$2 sm:$0xff]
        %s3413 = scalar_lea.vmem %s2955, 103 [#allocation3]
        %v3414 = vld [vmem:[%s3413] ss:$2 sm:$0xff]
        %s3415 = scalar_lea.vmem %s2955, 119 [#allocation3]
        %v3416 = vld [vmem:[%s3415] ss:$2 sm:$0xff]
        %s3417 = scalar_lea.vmem %s2955, 199 [#allocation3]
        %v3418 = vld [vmem:[%s3417] ss:$2 sm:$0xff]
        %s3419 = scalar_lea.vmem %s2955, 215 [#allocation3]
        %v3420 = vld [vmem:[%s3419] ss:$2 sm:$0xff]
        %s3421 = scalar_lea.vmem %s2955, 295 [#allocation3]
        %v3422 = vld [vmem:[%s3421] ss:$2 sm:$0xff]
        %s3423 = scalar_lea.vmem %s2955, 311 [#allocation3]
        %v3424 = vld [vmem:[%s3423] ss:$2 sm:$0xff]
        %s3425 = scalar_lea.vmem %s2955, 391 [#allocation3]
        %v3426 = vld [vmem:[%s3425] ss:$2 sm:$0xff]
        %s3427 = scalar_lea.vmem %s2955, 407 [#allocation3]
        %v3428 = vld [vmem:[%s3427] ss:$2 sm:$0xff]
        %s3429 = scalar_lea.vmem %s2955, 487 [#allocation3]
        %v3430 = vld [vmem:[%s3429] ss:$2 sm:$0xff]
        %s3431 = scalar_lea.vmem %s2955, 503 [#allocation3]
        %v3432 = vld [vmem:[%s3431] ss:$2 sm:$0xff]
        %s3433 = scalar_lea.vmem %s2955, 583 [#allocation3]
        %v3434 = vld [vmem:[%s3433] ss:$2 sm:$0xff]
        %s3435 = scalar_lea.vmem %s2955, 599 [#allocation3]
        %v3436 = vld [vmem:[%s3435] ss:$2 sm:$0xff]
        %s3437 = scalar_lea.vmem %s2955, 679 [#allocation3]
        %v3438 = vld [vmem:[%s3437] ss:$2 sm:$0xff]
        %s3439 = scalar_lea.vmem %s2955, 695 [#allocation3]
        %v3440 = vld [vmem:[%s3439] ss:$2 sm:$0xff]
        %s3441 = scalar_lea.vmem %s2955, 775 [#allocation3]
        %v3442 = vld [vmem:[%s3441] ss:$2 sm:$0xff]
        %s3443 = scalar_lea.vmem %s2955, 791 [#allocation3]
        %v3444 = vld [vmem:[%s3443] ss:$2 sm:$0xff]
        %s3445 = scalar_lea.vmem %s2955, 871 [#allocation3]
        %v3446 = vld [vmem:[%s3445] ss:$2 sm:$0xff]
        %s3447 = scalar_lea.vmem %s2955, 887 [#allocation3]
        %v3448 = vld [vmem:[%s3447] ss:$2 sm:$0xff]
        %s3449 = scalar_lea.vmem %s2955, 967 [#allocation3]
        %v3450 = vld [vmem:[%s3449] ss:$2 sm:$0xff]
        %s3451 = scalar_lea.vmem %s2955, 983 [#allocation3]
        %v3452 = vld [vmem:[%s3451] ss:$2 sm:$0xff]
        %s3453 = scalar_lea.vmem %s2955, 1063 [#allocation3]
        %v3454 = vld [vmem:[%s3453] ss:$2 sm:$0xff]
        %s3455 = scalar_lea.vmem %s2955, 1079 [#allocation3]
        %v3456 = vld [vmem:[%s3455] ss:$2 sm:$0xff]
        %s3457 = scalar_lea.vmem %s2955, 1159 [#allocation3]
        %v3458 = vld [vmem:[%s3457] ss:$2 sm:$0xff]
        %s3459 = scalar_lea.vmem %s2955, 1175 [#allocation3]
        %v3460 = vld [vmem:[%s3459] ss:$2 sm:$0xff]
        %s3461 = scalar_lea.vmem %s2955, 1255 [#allocation3]
        %v3462 = vld [vmem:[%s3461] ss:$2 sm:$0xff]
        %s3463 = scalar_lea.vmem %s2955, 1271 [#allocation3]
        %v3464 = vld [vmem:[%s3463] ss:$2 sm:$0xff]
        %s3465 = scalar_lea.vmem %s2955, 1351 [#allocation3]
        %v3466 = vld [vmem:[%s3465] ss:$2 sm:$0xff]
        %s3467 = scalar_lea.vmem %s2955, 1367 [#allocation3]
        %v3468 = vld [vmem:[%s3467] ss:$2 sm:$0xff]
        %s3469 = scalar_lea.vmem %s2955, 1447 [#allocation3]
        %v3470 = vld [vmem:[%s3469] ss:$2 sm:$0xff]
        %s3471 = scalar_lea.vmem %s2955, 1463 [#allocation3]
        %v3472 = vld [vmem:[%s3471] ss:$2 sm:$0xff]
        %v3473 = vadd.f32 %v3377, %v3410
        %v3474 = vadd.f32 %v3378, %v3412
        %v3475 = vadd.f32 %v3379, %v3414
        %v3476 = vadd.f32 %v3380, %v3416
        %v3477 = vadd.f32 %v3381, %v3418
        %v3478 = vadd.f32 %v3382, %v3420
        %v3479 = vadd.f32 %v3383, %v3422
        %v3480 = vadd.f32 %v3384, %v3424
        %v3481 = vadd.f32 %v3385, %v3426
        %v3482 = vadd.f32 %v3386, %v3428
        %v3483 = vadd.f32 %v3387, %v3430
        %v3484 = vadd.f32 %v3388, %v3432
        %v3485 = vadd.f32 %v3389, %v3434
        %v3486 = vadd.f32 %v3390, %v3436
        %v3487 = vadd.f32 %v3391, %v3438
        %v3488 = vadd.f32 %v3392, %v3440
        %v3489 = vadd.f32 %v3393, %v3442
        %v3490 = vadd.f32 %v3394, %v3444
        %v3491 = vadd.f32 %v3395, %v3446
        %v3492 = vadd.f32 %v3396, %v3448
        %v3493 = vadd.f32 %v3397, %v3450
        %v3494 = vadd.f32 %v3398, %v3452
        %v3495 = vadd.f32 %v3399, %v3454
        %v3496 = vadd.f32 %v3400, %v3456
        %v3497 = vadd.f32 %v3401, %v3458
        %v3498 = vadd.f32 %v3402, %v3460
        %v3499 = vadd.f32 %v3403, %v3462
        %v3500 = vadd.f32 %v3404, %v3464
        %v3501 = vadd.f32 %v3405, %v3466
        %v3502 = vadd.f32 %v3406, %v3468
        %v3503 = vadd.f32 %v3407, %v3470
        %v3504 = vadd.f32 %v3408, %v3472
        %s3505 = scalar_lea.vmem %s2955, 8 [#allocation3]
        %v3506 = vld [vmem:[%s3505] ss:$2 sm:$0xff]
        %s3507 = scalar_lea.vmem %s2955, 24 [#allocation3]
        %v3508 = vld [vmem:[%s3507] ss:$2 sm:$0xff]
        %s3509 = scalar_lea.vmem %s2955, 104 [#allocation3]
        %v3510 = vld [vmem:[%s3509] ss:$2 sm:$0xff]
        %s3511 = scalar_lea.vmem %s2955, 120 [#allocation3]
        %v3512 = vld [vmem:[%s3511] ss:$2 sm:$0xff]
        %s3513 = scalar_lea.vmem %s2955, 200 [#allocation3]
        %v3514 = vld [vmem:[%s3513] ss:$2 sm:$0xff]
        %s3515 = scalar_lea.vmem %s2955, 216 [#allocation3]
        %v3516 = vld [vmem:[%s3515] ss:$2 sm:$0xff]
        %s3517 = scalar_lea.vmem %s2955, 296 [#allocation3]
        %v3518 = vld [vmem:[%s3517] ss:$2 sm:$0xff]
        %s3519 = scalar_lea.vmem %s2955, 312 [#allocation3]
        %v3520 = vld [vmem:[%s3519] ss:$2 sm:$0xff]
        %s3521 = scalar_lea.vmem %s2955, 392 [#allocation3]
        %v3522 = vld [vmem:[%s3521] ss:$2 sm:$0xff]
        %s3523 = scalar_lea.vmem %s2955, 408 [#allocation3]
        %v3524 = vld [vmem:[%s3523] ss:$2 sm:$0xff]
        %s3525 = scalar_lea.vmem %s2955, 488 [#allocation3]
        %v3526 = vld [vmem:[%s3525] ss:$2 sm:$0xff]
        %s3527 = scalar_lea.vmem %s2955, 504 [#allocation3]
        %v3528 = vld [vmem:[%s3527] ss:$2 sm:$0xff]
        %s3529 = scalar_lea.vmem %s2955, 584 [#allocation3]
        %v3530 = vld [vmem:[%s3529] ss:$2 sm:$0xff]
        %s3531 = scalar_lea.vmem %s2955, 600 [#allocation3]
        %v3532 = vld [vmem:[%s3531] ss:$2 sm:$0xff]
        %s3533 = scalar_lea.vmem %s2955, 680 [#allocation3]
        %v3534 = vld [vmem:[%s3533] ss:$2 sm:$0xff]
        %s3535 = scalar_lea.vmem %s2955, 696 [#allocation3]
        %v3536 = vld [vmem:[%s3535] ss:$2 sm:$0xff]
        %s3537 = scalar_lea.vmem %s2955, 776 [#allocation3]
        %v3538 = vld [vmem:[%s3537] ss:$2 sm:$0xff]
        %s3539 = scalar_lea.vmem %s2955, 792 [#allocation3]
        %v3540 = vld [vmem:[%s3539] ss:$2 sm:$0xff]
        %s3541 = scalar_lea.vmem %s2955, 872 [#allocation3]
        %v3542 = vld [vmem:[%s3541] ss:$2 sm:$0xff]
        %s3543 = scalar_lea.vmem %s2955, 888 [#allocation3]
        %v3544 = vld [vmem:[%s3543] ss:$2 sm:$0xff]
        %s3545 = scalar_lea.vmem %s2955, 968 [#allocation3]
        %v3546 = vld [vmem:[%s3545] ss:$2 sm:$0xff]
        %s3547 = scalar_lea.vmem %s2955, 984 [#allocation3]
        %v3548 = vld [vmem:[%s3547] ss:$2 sm:$0xff]
        %s3549 = scalar_lea.vmem %s2955, 1064 [#allocation3]
        %v3550 = vld [vmem:[%s3549] ss:$2 sm:$0xff]
        %s3551 = scalar_lea.vmem %s2955, 1080 [#allocation3]
        %v3552 = vld [vmem:[%s3551] ss:$2 sm:$0xff]
        %s3553 = scalar_lea.vmem %s2955, 1160 [#allocation3]
        %v3554 = vld [vmem:[%s3553] ss:$2 sm:$0xff]
        %s3555 = scalar_lea.vmem %s2955, 1176 [#allocation3]
        %v3556 = vld [vmem:[%s3555] ss:$2 sm:$0xff]
        %s3557 = scalar_lea.vmem %s2955, 1256 [#allocation3]
        %v3558 = vld [vmem:[%s3557] ss:$2 sm:$0xff]
        %s3559 = scalar_lea.vmem %s2955, 1272 [#allocation3]
        %v3560 = vld [vmem:[%s3559] ss:$2 sm:$0xff]
        %s3561 = scalar_lea.vmem %s2955, 1352 [#allocation3]
        %v3562 = vld [vmem:[%s3561] ss:$2 sm:$0xff]
        %s3563 = scalar_lea.vmem %s2955, 1368 [#allocation3]
        %v3564 = vld [vmem:[%s3563] ss:$2 sm:$0xff]
        %s3565 = scalar_lea.vmem %s2955, 1448 [#allocation3]
        %v3566 = vld [vmem:[%s3565] ss:$2 sm:$0xff]
        %s3567 = scalar_lea.vmem %s2955, 1464 [#allocation3]
        %v3568 = vld [vmem:[%s3567] ss:$2 sm:$0xff]
        %v3569 = vadd.f32 %v3473, %v3506
        %v3570 = vadd.f32 %v3474, %v3508
        %v3571 = vadd.f32 %v3475, %v3510
        %v3572 = vadd.f32 %v3476, %v3512
        %v3573 = vadd.f32 %v3477, %v3514
        %v3574 = vadd.f32 %v3478, %v3516
        %v3575 = vadd.f32 %v3479, %v3518
        %v3576 = vadd.f32 %v3480, %v3520
        %v3577 = vadd.f32 %v3481, %v3522
        %v3578 = vadd.f32 %v3482, %v3524
        %v3579 = vadd.f32 %v3483, %v3526
        %v3580 = vadd.f32 %v3484, %v3528
        %v3581 = vadd.f32 %v3485, %v3530
        %v3582 = vadd.f32 %v3486, %v3532
        %v3583 = vadd.f32 %v3487, %v3534
        %v3584 = vadd.f32 %v3488, %v3536
        %v3585 = vadd.f32 %v3489, %v3538
        %v3586 = vadd.f32 %v3490, %v3540
        %v3587 = vadd.f32 %v3491, %v3542
        %v3588 = vadd.f32 %v3492, %v3544
        %v3589 = vadd.f32 %v3493, %v3546
        %v3590 = vadd.f32 %v3494, %v3548
        %v3591 = vadd.f32 %v3495, %v3550
        %v3592 = vadd.f32 %v3496, %v3552
        %v3593 = vadd.f32 %v3497, %v3554
        %v3594 = vadd.f32 %v3498, %v3556
        %v3595 = vadd.f32 %v3499, %v3558
        %v3596 = vadd.f32 %v3500, %v3560
        %v3597 = vadd.f32 %v3501, %v3562
        %v3598 = vadd.f32 %v3502, %v3564
        %v3599 = vadd.f32 %v3503, %v3566
        %v3600 = vadd.f32 %v3504, %v3568
        %s3601 = scalar_lea.vmem %s2955, 9 [#allocation3]
        %v3602 = vld [vmem:[%s3601] ss:$2 sm:$0xff]
        %s3603 = scalar_lea.vmem %s2955, 25 [#allocation3]
        %v3604 = vld [vmem:[%s3603] ss:$2 sm:$0xff]
        %s3605 = scalar_lea.vmem %s2955, 105 [#allocation3]
        %v3606 = vld [vmem:[%s3605] ss:$2 sm:$0xff]
        %s3607 = scalar_lea.vmem %s2955, 121 [#allocation3]
        %v3608 = vld [vmem:[%s3607] ss:$2 sm:$0xff]
        %s3609 = scalar_lea.vmem %s2955, 201 [#allocation3]
        %v3610 = vld [vmem:[%s3609] ss:$2 sm:$0xff]
        %s3611 = scalar_lea.vmem %s2955, 217 [#allocation3]
        %v3612 = vld [vmem:[%s3611] ss:$2 sm:$0xff]
        %s3613 = scalar_lea.vmem %s2955, 297 [#allocation3]
        %v3614 = vld [vmem:[%s3613] ss:$2 sm:$0xff]
        %s3615 = scalar_lea.vmem %s2955, 313 [#allocation3]
        %v3616 = vld [vmem:[%s3615] ss:$2 sm:$0xff]
        %s3617 = scalar_lea.vmem %s2955, 393 [#allocation3]
        %v3618 = vld [vmem:[%s3617] ss:$2 sm:$0xff]
        %s3619 = scalar_lea.vmem %s2955, 409 [#allocation3]
        %v3620 = vld [vmem:[%s3619] ss:$2 sm:$0xff]
        %s3621 = scalar_lea.vmem %s2955, 489 [#allocation3]
        %v3622 = vld [vmem:[%s3621] ss:$2 sm:$0xff]
        %s3623 = scalar_lea.vmem %s2955, 505 [#allocation3]
        %v3624 = vld [vmem:[%s3623] ss:$2 sm:$0xff]
        %s3625 = scalar_lea.vmem %s2955, 585 [#allocation3]
        %v3626 = vld [vmem:[%s3625] ss:$2 sm:$0xff]
        %s3627 = scalar_lea.vmem %s2955, 601 [#allocation3]
        %v3628 = vld [vmem:[%s3627] ss:$2 sm:$0xff]
        %s3629 = scalar_lea.vmem %s2955, 681 [#allocation3]
        %v3630 = vld [vmem:[%s3629] ss:$2 sm:$0xff]
        %s3631 = scalar_lea.vmem %s2955, 697 [#allocation3]
        %v3632 = vld [vmem:[%s3631] ss:$2 sm:$0xff]
        %s3633 = scalar_lea.vmem %s2955, 777 [#allocation3]
        %v3634 = vld [vmem:[%s3633] ss:$2 sm:$0xff]
        %s3635 = scalar_lea.vmem %s2955, 793 [#allocation3]
        %v3636 = vld [vmem:[%s3635] ss:$2 sm:$0xff]
        %s3637 = scalar_lea.vmem %s2955, 873 [#allocation3]
        %v3638 = vld [vmem:[%s3637] ss:$2 sm:$0xff]
        %s3639 = scalar_lea.vmem %s2955, 889 [#allocation3]
        %v3640 = vld [vmem:[%s3639] ss:$2 sm:$0xff]
        %s3641 = scalar_lea.vmem %s2955, 969 [#allocation3]
        %v3642 = vld [vmem:[%s3641] ss:$2 sm:$0xff]
        %s3643 = scalar_lea.vmem %s2955, 985 [#allocation3]
        %v3644 = vld [vmem:[%s3643] ss:$2 sm:$0xff]
        %s3645 = scalar_lea.vmem %s2955, 1065 [#allocation3]
        %v3646 = vld [vmem:[%s3645] ss:$2 sm:$0xff]
        %s3647 = scalar_lea.vmem %s2955, 1081 [#allocation3]
        %v3648 = vld [vmem:[%s3647] ss:$2 sm:$0xff]
        %s3649 = scalar_lea.vmem %s2955, 1161 [#allocation3]
        %v3650 = vld [vmem:[%s3649] ss:$2 sm:$0xff]
        %s3651 = scalar_lea.vmem %s2955, 1177 [#allocation3]
        %v3652 = vld [vmem:[%s3651] ss:$2 sm:$0xff]
        %s3653 = scalar_lea.vmem %s2955, 1257 [#allocation3]
        %v3654 = vld [vmem:[%s3653] ss:$2 sm:$0xff]
        %s3655 = scalar_lea.vmem %s2955, 1273 [#allocation3]
        %v3656 = vld [vmem:[%s3655] ss:$2 sm:$0xff]
        %s3657 = scalar_lea.vmem %s2955, 1353 [#allocation3]
        %v3658 = vld [vmem:[%s3657] ss:$2 sm:$0xff]
        %s3659 = scalar_lea.vmem %s2955, 1369 [#allocation3]
        %v3660 = vld [vmem:[%s3659] ss:$2 sm:$0xff]
        %s3661 = scalar_lea.vmem %s2955, 1449 [#allocation3]
        %v3662 = vld [vmem:[%s3661] ss:$2 sm:$0xff]
        %s3663 = scalar_lea.vmem %s2955, 1465 [#allocation3]
        %v3664 = vld [vmem:[%s3663] ss:$2 sm:$0xff]
        %v3665 = vadd.f32 %v3569, %v3602
        %v3666 = vadd.f32 %v3570, %v3604
        %v3667 = vadd.f32 %v3571, %v3606
        %v3668 = vadd.f32 %v3572, %v3608
        %v3669 = vadd.f32 %v3573, %v3610
        %v3670 = vadd.f32 %v3574, %v3612
        %v3671 = vadd.f32 %v3575, %v3614
        %v3672 = vadd.f32 %v3576, %v3616
        %v3673 = vadd.f32 %v3577, %v3618
        %v3674 = vadd.f32 %v3578, %v3620
        %v3675 = vadd.f32 %v3579, %v3622
        %v3676 = vadd.f32 %v3580, %v3624
        %v3677 = vadd.f32 %v3581, %v3626
        %v3678 = vadd.f32 %v3582, %v3628
        %v3679 = vadd.f32 %v3583, %v3630
        %v3680 = vadd.f32 %v3584, %v3632
        %v3681 = vadd.f32 %v3585, %v3634
        %v3682 = vadd.f32 %v3586, %v3636
        %v3683 = vadd.f32 %v3587, %v3638
        %v3684 = vadd.f32 %v3588, %v3640
        %v3685 = vadd.f32 %v3589, %v3642
        %v3686 = vadd.f32 %v3590, %v3644
        %v3687 = vadd.f32 %v3591, %v3646
        %v3688 = vadd.f32 %v3592, %v3648
        %v3689 = vadd.f32 %v3593, %v3650
        %v3690 = vadd.f32 %v3594, %v3652
        %v3691 = vadd.f32 %v3595, %v3654
        %v3692 = vadd.f32 %v3596, %v3656
        %v3693 = vadd.f32 %v3597, %v3658
        %v3694 = vadd.f32 %v3598, %v3660
        %v3695 = vadd.f32 %v3599, %v3662
        %v3696 = vadd.f32 %v3600, %v3664
        %s3697 = scalar_lea.vmem [#allocation3], 96
        %s3698 = scalar_lea.vmem %s3697, 7 [#allocation3]
        %v3699 = vld [vmem:[%s3698] ss:$2 sm:$0xff]
        %s3700 = scalar_lea.vmem %s3697, 23 [#allocation3]
        %v3701 = vld [vmem:[%s3700] ss:$2 sm:$0xff]
        %s3702 = scalar_lea.vmem %s3697, 103 [#allocation3]
        %v3703 = vld [vmem:[%s3702] ss:$2 sm:$0xff]
        %s3704 = scalar_lea.vmem %s3697, 119 [#allocation3]
        %v3705 = vld [vmem:[%s3704] ss:$2 sm:$0xff]
        %s3706 = scalar_lea.vmem %s3697, 199 [#allocation3]
        %v3707 = vld [vmem:[%s3706] ss:$2 sm:$0xff]
        %s3708 = scalar_lea.vmem %s3697, 215 [#allocation3]
        %v3709 = vld [vmem:[%s3708] ss:$2 sm:$0xff]
        %s3710 = scalar_lea.vmem %s3697, 295 [#allocation3]
        %v3711 = vld [vmem:[%s3710] ss:$2 sm:$0xff]
        %s3712 = scalar_lea.vmem %s3697, 311 [#allocation3]
        %v3713 = vld [vmem:[%s3712] ss:$2 sm:$0xff]
        %s3714 = scalar_lea.vmem %s3697, 391 [#allocation3]
        %v3715 = vld [vmem:[%s3714] ss:$2 sm:$0xff]
        %s3716 = scalar_lea.vmem %s3697, 407 [#allocation3]
        %v3717 = vld [vmem:[%s3716] ss:$2 sm:$0xff]
        %s3718 = scalar_lea.vmem %s3697, 487 [#allocation3]
        %v3719 = vld [vmem:[%s3718] ss:$2 sm:$0xff]
        %s3720 = scalar_lea.vmem %s3697, 503 [#allocation3]
        %v3721 = vld [vmem:[%s3720] ss:$2 sm:$0xff]
        %s3722 = scalar_lea.vmem %s3697, 583 [#allocation3]
        %v3723 = vld [vmem:[%s3722] ss:$2 sm:$0xff]
        %s3724 = scalar_lea.vmem %s3697, 599 [#allocation3]
        %v3725 = vld [vmem:[%s3724] ss:$2 sm:$0xff]
        %s3726 = scalar_lea.vmem %s3697, 679 [#allocation3]
        %v3727 = vld [vmem:[%s3726] ss:$2 sm:$0xff]
        %s3728 = scalar_lea.vmem %s3697, 695 [#allocation3]
        %v3729 = vld [vmem:[%s3728] ss:$2 sm:$0xff]
        %s3730 = scalar_lea.vmem %s3697, 775 [#allocation3]
        %v3731 = vld [vmem:[%s3730] ss:$2 sm:$0xff]
        %s3732 = scalar_lea.vmem %s3697, 791 [#allocation3]
        %v3733 = vld [vmem:[%s3732] ss:$2 sm:$0xff]
        %s3734 = scalar_lea.vmem %s3697, 871 [#allocation3]
        %v3735 = vld [vmem:[%s3734] ss:$2 sm:$0xff]
        %s3736 = scalar_lea.vmem %s3697, 887 [#allocation3]
        %v3737 = vld [vmem:[%s3736] ss:$2 sm:$0xff]
        %s3738 = scalar_lea.vmem %s3697, 967 [#allocation3]
        %v3739 = vld [vmem:[%s3738] ss:$2 sm:$0xff]
        %s3740 = scalar_lea.vmem %s3697, 983 [#allocation3]
        %v3741 = vld [vmem:[%s3740] ss:$2 sm:$0xff]
        %s3742 = scalar_lea.vmem %s3697, 1063 [#allocation3]
        %v3743 = vld [vmem:[%s3742] ss:$2 sm:$0xff]
        %s3744 = scalar_lea.vmem %s3697, 1079 [#allocation3]
        %v3745 = vld [vmem:[%s3744] ss:$2 sm:$0xff]
        %s3746 = scalar_lea.vmem %s3697, 1159 [#allocation3]
        %v3747 = vld [vmem:[%s3746] ss:$2 sm:$0xff]
        %s3748 = scalar_lea.vmem %s3697, 1175 [#allocation3]
        %v3749 = vld [vmem:[%s3748] ss:$2 sm:$0xff]
        %s3750 = scalar_lea.vmem %s3697, 1255 [#allocation3]
        %v3751 = vld [vmem:[%s3750] ss:$2 sm:$0xff]
        %s3752 = scalar_lea.vmem %s3697, 1271 [#allocation3]
        %v3753 = vld [vmem:[%s3752] ss:$2 sm:$0xff]
        %s3754 = scalar_lea.vmem %s3697, 1351 [#allocation3]
        %v3755 = vld [vmem:[%s3754] ss:$2 sm:$0xff]
        %s3756 = scalar_lea.vmem %s3697, 1367 [#allocation3]
        %v3757 = vld [vmem:[%s3756] ss:$2 sm:$0xff]
        %s3758 = scalar_lea.vmem %s3697, 1447 [#allocation3]
        %v3759 = vld [vmem:[%s3758] ss:$2 sm:$0xff]
        %s3760 = scalar_lea.vmem %s3697, 1463 [#allocation3]
        %v3761 = vld [vmem:[%s3760] ss:$2 sm:$0xff]
        %v3762 = vadd.f32 %v3665, %v3699
        %v3763 = vadd.f32 %v3666, %v3701
        %v3764 = vadd.f32 %v3667, %v3703
        %v3765 = vadd.f32 %v3668, %v3705
        %v3766 = vadd.f32 %v3669, %v3707
        %v3767 = vadd.f32 %v3670, %v3709
        %v3768 = vadd.f32 %v3671, %v3711
        %v3769 = vadd.f32 %v3672, %v3713
        %v3770 = vadd.f32 %v3673, %v3715
        %v3771 = vadd.f32 %v3674, %v3717
        %v3772 = vadd.f32 %v3675, %v3719
        %v3773 = vadd.f32 %v3676, %v3721
        %v3774 = vadd.f32 %v3677, %v3723
        %v3775 = vadd.f32 %v3678, %v3725
        %v3776 = vadd.f32 %v3679, %v3727
        %v3777 = vadd.f32 %v3680, %v3729
        %v3778 = vadd.f32 %v3681, %v3731
        %v3779 = vadd.f32 %v3682, %v3733
        %v3780 = vadd.f32 %v3683, %v3735
        %v3781 = vadd.f32 %v3684, %v3737
        %v3782 = vadd.f32 %v3685, %v3739
        %v3783 = vadd.f32 %v3686, %v3741
        %v3784 = vadd.f32 %v3687, %v3743
        %v3785 = vadd.f32 %v3688, %v3745
        %v3786 = vadd.f32 %v3689, %v3747
        %v3787 = vadd.f32 %v3690, %v3749
        %v3788 = vadd.f32 %v3691, %v3751
        %v3789 = vadd.f32 %v3692, %v3753
        %v3790 = vadd.f32 %v3693, %v3755
        %v3791 = vadd.f32 %v3694, %v3757
        %v3792 = vadd.f32 %v3695, %v3759
        %v3793 = vadd.f32 %v3696, %v3761
        %s3794 = scalar_lea.vmem %s3697, 8 [#allocation3]
        %v3795 = vld [vmem:[%s3794] ss:$2 sm:$0xff]
        %s3796 = scalar_lea.vmem %s3697, 24 [#allocation3]
        %v3797 = vld [vmem:[%s3796] ss:$2 sm:$0xff]
        %s3798 = scalar_lea.vmem %s3697, 104 [#allocation3]
        %v3799 = vld [vmem:[%s3798] ss:$2 sm:$0xff]
        %s3800 = scalar_lea.vmem %s3697, 120 [#allocation3]
        %v3801 = vld [vmem:[%s3800] ss:$2 sm:$0xff]
        %s3802 = scalar_lea.vmem %s3697, 200 [#allocation3]
        %v3803 = vld [vmem:[%s3802] ss:$2 sm:$0xff]
        %s3804 = scalar_lea.vmem %s3697, 216 [#allocation3]
        %v3805 = vld [vmem:[%s3804] ss:$2 sm:$0xff]
        %s3806 = scalar_lea.vmem %s3697, 296 [#allocation3]
        %v3807 = vld [vmem:[%s3806] ss:$2 sm:$0xff]
        %s3808 = scalar_lea.vmem %s3697, 312 [#allocation3]
        %v3809 = vld [vmem:[%s3808] ss:$2 sm:$0xff]
        %s3810 = scalar_lea.vmem %s3697, 392 [#allocation3]
        %v3811 = vld [vmem:[%s3810] ss:$2 sm:$0xff]
        %s3812 = scalar_lea.vmem %s3697, 408 [#allocation3]
        %v3813 = vld [vmem:[%s3812] ss:$2 sm:$0xff]
        %s3814 = scalar_lea.vmem %s3697, 488 [#allocation3]
        %v3815 = vld [vmem:[%s3814] ss:$2 sm:$0xff]
        %s3816 = scalar_lea.vmem %s3697, 504 [#allocation3]
        %v3817 = vld [vmem:[%s3816] ss:$2 sm:$0xff]
        %s3818 = scalar_lea.vmem %s3697, 584 [#allocation3]
        %v3819 = vld [vmem:[%s3818] ss:$2 sm:$0xff]
        %s3820 = scalar_lea.vmem %s3697, 600 [#allocation3]
        %v3821 = vld [vmem:[%s3820] ss:$2 sm:$0xff]
        %s3822 = scalar_lea.vmem %s3697, 680 [#allocation3]
        %v3823 = vld [vmem:[%s3822] ss:$2 sm:$0xff]
        %s3824 = scalar_lea.vmem %s3697, 696 [#allocation3]
        %v3825 = vld [vmem:[%s3824] ss:$2 sm:$0xff]
        %s3826 = scalar_lea.vmem %s3697, 776 [#allocation3]
        %v3827 = vld [vmem:[%s3826] ss:$2 sm:$0xff]
        %s3828 = scalar_lea.vmem %s3697, 792 [#allocation3]
        %v3829 = vld [vmem:[%s3828] ss:$2 sm:$0xff]
        %s3830 = scalar_lea.vmem %s3697, 872 [#allocation3]
        %v3831 = vld [vmem:[%s3830] ss:$2 sm:$0xff]
        %s3832 = scalar_lea.vmem %s3697, 888 [#allocation3]
        %v3833 = vld [vmem:[%s3832] ss:$2 sm:$0xff]
        %s3834 = scalar_lea.vmem %s3697, 968 [#allocation3]
        %v3835 = vld [vmem:[%s3834] ss:$2 sm:$0xff]
        %s3836 = scalar_lea.vmem %s3697, 984 [#allocation3]
        %v3837 = vld [vmem:[%s3836] ss:$2 sm:$0xff]
        %s3838 = scalar_lea.vmem %s3697, 1064 [#allocation3]
        %v3839 = vld [vmem:[%s3838] ss:$2 sm:$0xff]
        %s3840 = scalar_lea.vmem %s3697, 1080 [#allocation3]
        %v3841 = vld [vmem:[%s3840] ss:$2 sm:$0xff]
        %s3842 = scalar_lea.vmem %s3697, 1160 [#allocation3]
        %v3843 = vld [vmem:[%s3842] ss:$2 sm:$0xff]
        %s3844 = scalar_lea.vmem %s3697, 1176 [#allocation3]
        %v3845 = vld [vmem:[%s3844] ss:$2 sm:$0xff]
        %s3846 = scalar_lea.vmem %s3697, 1256 [#allocation3]
        %v3847 = vld [vmem:[%s3846] ss:$2 sm:$0xff]
        %s3848 = scalar_lea.vmem %s3697, 1272 [#allocation3]
        %v3849 = vld [vmem:[%s3848] ss:$2 sm:$0xff]
        %s3850 = scalar_lea.vmem %s3697, 1352 [#allocation3]
        %v3851 = vld [vmem:[%s3850] ss:$2 sm:$0xff]
        %s3852 = scalar_lea.vmem %s3697, 1368 [#allocation3]
        %v3853 = vld [vmem:[%s3852] ss:$2 sm:$0xff]
        %s3854 = scalar_lea.vmem %s3697, 1448 [#allocation3]
        %v3855 = vld [vmem:[%s3854] ss:$2 sm:$0xff]
        %s3856 = scalar_lea.vmem %s3697, 1464 [#allocation3]
        %v3857 = vld [vmem:[%s3856] ss:$2 sm:$0xff]
        %v3858 = vadd.f32 %v3762, %v3795
        %v3859 = vadd.f32 %v3763, %v3797
        %v3860 = vadd.f32 %v3764, %v3799
        %v3861 = vadd.f32 %v3765, %v3801
        %v3862 = vadd.f32 %v3766, %v3803
        %v3863 = vadd.f32 %v3767, %v3805
        %v3864 = vadd.f32 %v3768, %v3807
        %v3865 = vadd.f32 %v3769, %v3809
        %v3866 = vadd.f32 %v3770, %v3811
        %v3867 = vadd.f32 %v3771, %v3813
        %v3868 = vadd.f32 %v3772, %v3815
        %v3869 = vadd.f32 %v3773, %v3817
        %v3870 = vadd.f32 %v3774, %v3819
        %v3871 = vadd.f32 %v3775, %v3821
        %v3872 = vadd.f32 %v3776, %v3823
        %v3873 = vadd.f32 %v3777, %v3825
        %v3874 = vadd.f32 %v3778, %v3827
        %v3875 = vadd.f32 %v3779, %v3829
        %v3876 = vadd.f32 %v3780, %v3831
        %v3877 = vadd.f32 %v3781, %v3833
        %v3878 = vadd.f32 %v3782, %v3835
        %v3879 = vadd.f32 %v3783, %v3837
        %v3880 = vadd.f32 %v3784, %v3839
        %v3881 = vadd.f32 %v3785, %v3841
        %v3882 = vadd.f32 %v3786, %v3843
        %v3883 = vadd.f32 %v3787, %v3845
        %v3884 = vadd.f32 %v3788, %v3847
        %v3885 = vadd.f32 %v3789, %v3849
        %v3886 = vadd.f32 %v3790, %v3851
        %v3887 = vadd.f32 %v3791, %v3853
        %v3888 = vadd.f32 %v3792, %v3855
        %v3889 = vadd.f32 %v3793, %v3857
        %s3890 = scalar_lea.vmem %s3697, 9 [#allocation3]
        %v3891 = vld [vmem:[%s3890] ss:$2 sm:$0xff]
        %s3892 = scalar_lea.vmem %s3697, 25 [#allocation3]
        %v3893 = vld [vmem:[%s3892] ss:$2 sm:$0xff]
        %s3894 = scalar_lea.vmem %s3697, 105 [#allocation3]
        %v3895 = vld [vmem:[%s3894] ss:$2 sm:$0xff]
        %s3896 = scalar_lea.vmem %s3697, 121 [#allocation3]
        %v3897 = vld [vmem:[%s3896] ss:$2 sm:$0xff]
        %s3898 = scalar_lea.vmem %s3697, 201 [#allocation3]
        %v3899 = vld [vmem:[%s3898] ss:$2 sm:$0xff]
        %s3900 = scalar_lea.vmem %s3697, 217 [#allocation3]
        %v3901 = vld [vmem:[%s3900] ss:$2 sm:$0xff]
        %s3902 = scalar_lea.vmem %s3697, 297 [#allocation3]
        %v3903 = vld [vmem:[%s3902] ss:$2 sm:$0xff]
        %s3904 = scalar_lea.vmem %s3697, 313 [#allocation3]
        %v3905 = vld [vmem:[%s3904] ss:$2 sm:$0xff]
        %s3906 = scalar_lea.vmem %s3697, 393 [#allocation3]
        %v3907 = vld [vmem:[%s3906] ss:$2 sm:$0xff]
        %s3908 = scalar_lea.vmem %s3697, 409 [#allocation3]
        %v3909 = vld [vmem:[%s3908] ss:$2 sm:$0xff]
        %s3910 = scalar_lea.vmem %s3697, 489 [#allocation3]
        %v3911 = vld [vmem:[%s3910] ss:$2 sm:$0xff]
        %s3912 = scalar_lea.vmem %s3697, 505 [#allocation3]
        %v3913 = vld [vmem:[%s3912] ss:$2 sm:$0xff]
        %s3914 = scalar_lea.vmem %s3697, 585 [#allocation3]
        %v3915 = vld [vmem:[%s3914] ss:$2 sm:$0xff]
        %s3916 = scalar_lea.vmem %s3697, 601 [#allocation3]
        %v3917 = vld [vmem:[%s3916] ss:$2 sm:$0xff]
        %s3918 = scalar_lea.vmem %s3697, 681 [#allocation3]
        %v3919 = vld [vmem:[%s3918] ss:$2 sm:$0xff]
        %s3920 = scalar_lea.vmem %s3697, 697 [#allocation3]
        %v3921 = vld [vmem:[%s3920] ss:$2 sm:$0xff]
        %s3922 = scalar_lea.vmem %s3697, 777 [#allocation3]
        %v3923 = vld [vmem:[%s3922] ss:$2 sm:$0xff]
        %s3924 = scalar_lea.vmem %s3697, 793 [#allocation3]
        %v3925 = vld [vmem:[%s3924] ss:$2 sm:$0xff]
        %s3926 = scalar_lea.vmem %s3697, 873 [#allocation3]
        %v3927 = vld [vmem:[%s3926] ss:$2 sm:$0xff]
        %s3928 = scalar_lea.vmem %s3697, 889 [#allocation3]
        %v3929 = vld [vmem:[%s3928] ss:$2 sm:$0xff]
        %s3930 = scalar_lea.vmem %s3697, 969 [#allocation3]
        %v3931 = vld [vmem:[%s3930] ss:$2 sm:$0xff]
        %s3932 = scalar_lea.vmem %s3697, 985 [#allocation3]
        %v3933 = vld [vmem:[%s3932] ss:$2 sm:$0xff]
        %s3934 = scalar_lea.vmem %s3697, 1065 [#allocation3]
        %v3935 = vld [vmem:[%s3934] ss:$2 sm:$0xff]
        %s3936 = scalar_lea.vmem %s3697, 1081 [#allocation3]
        %v3937 = vld [vmem:[%s3936] ss:$2 sm:$0xff]
        %s3938 = scalar_lea.vmem %s3697, 1161 [#allocation3]
        %v3939 = vld [vmem:[%s3938] ss:$2 sm:$0xff]
        %s3940 = scalar_lea.vmem %s3697, 1177 [#allocation3]
        %v3941 = vld [vmem:[%s3940] ss:$2 sm:$0xff]
        %s3942 = scalar_lea.vmem %s3697, 1257 [#allocation3]
        %v3943 = vld [vmem:[%s3942] ss:$2 sm:$0xff]
        %s3944 = scalar_lea.vmem %s3697, 1273 [#allocation3]
        %v3945 = vld [vmem:[%s3944] ss:$2 sm:$0xff]
        %s3946 = scalar_lea.vmem %s3697, 1353 [#allocation3]
        %v3947 = vld [vmem:[%s3946] ss:$2 sm:$0xff]
        %s3948 = scalar_lea.vmem %s3697, 1369 [#allocation3]
        %v3949 = vld [vmem:[%s3948] ss:$2 sm:$0xff]
        %s3950 = scalar_lea.vmem %s3697, 1449 [#allocation3]
        %v3951 = vld [vmem:[%s3950] ss:$2 sm:$0xff]
        %s3952 = scalar_lea.vmem %s3697, 1465 [#allocation3]
        %v3953 = vld [vmem:[%s3952] ss:$2 sm:$0xff]
        %v3954 = vadd.f32 %v3858, %v3891
        %v3955 = vadd.f32 %v3859, %v3893
        %v3956 = vadd.f32 %v3860, %v3895
        %v3957 = vadd.f32 %v3861, %v3897
        %v3958 = vadd.f32 %v3862, %v3899
        %v3959 = vadd.f32 %v3863, %v3901
        %v3960 = vadd.f32 %v3864, %v3903
        %v3961 = vadd.f32 %v3865, %v3905
        %v3962 = vadd.f32 %v3866, %v3907
        %v3963 = vadd.f32 %v3867, %v3909
        %v3964 = vadd.f32 %v3868, %v3911
        %v3965 = vadd.f32 %v3869, %v3913
        %v3966 = vadd.f32 %v3870, %v3915
        %v3967 = vadd.f32 %v3871, %v3917
        %v3968 = vadd.f32 %v3872, %v3919
        %v3969 = vadd.f32 %v3873, %v3921
        %v3970 = vadd.f32 %v3874, %v3923
        %v3971 = vadd.f32 %v3875, %v3925
        %v3972 = vadd.f32 %v3876, %v3927
        %v3973 = vadd.f32 %v3877, %v3929
        %v3974 = vadd.f32 %v3878, %v3931
        %v3975 = vadd.f32 %v3879, %v3933
        %v3976 = vadd.f32 %v3880, %v3935
        %v3977 = vadd.f32 %v3881, %v3937
        %v3978 = vadd.f32 %v3882, %v3939
        %v3979 = vadd.f32 %v3883, %v3941
        %v3980 = vadd.f32 %v3884, %v3943
        %v3981 = vadd.f32 %v3885, %v3945
        %v3982 = vadd.f32 %v3886, %v3947
        %v3983 = vadd.f32 %v3887, %v3949
        %v3984 = vadd.f32 %v3888, %v3951
        %v3985 = vadd.f32 %v3889, %v3953
        %v3986 = vmul.f32 %v3954, 0.11111111
        %v3987 = vmul.f32 %v3955, 0.11111111
        %v3988 = vmul.f32 %v3956, 0.11111111
        %v3989 = vmul.f32 %v3957, 0.11111111
        %v3990 = vmul.f32 %v3958, 0.11111111
        %v3991 = vmul.f32 %v3959, 0.11111111
        %v3992 = vmul.f32 %v3960, 0.11111111
        %v3993 = vmul.f32 %v3961, 0.11111111
        %v3994 = vmul.f32 %v3962, 0.11111111
        %v3995 = vmul.f32 %v3963, 0.11111111
        %v3996 = vmul.f32 %v3964, 0.11111111
        %v3997 = vmul.f32 %v3965, 0.11111111
        %v3998 = vmul.f32 %v3966, 0.11111111
        %v3999 = vmul.f32 %v3967, 0.11111111
        %v4000 = vmul.f32 %v3968, 0.11111111
        %v4001 = vmul.f32 %v3969, 0.11111111
        %v4002 = vmul.f32 %v3970, 0.11111111
        %v4003 = vmul.f32 %v3971, 0.11111111
        %v4004 = vmul.f32 %v3972, 0.11111111
        %v4005 = vmul.f32 %v3973, 0.11111111
        %v4006 = vmul.f32 %v3974, 0.11111111
        %v4007 = vmul.f32 %v3975, 0.11111111
        %v4008 = vmul.f32 %v3976, 0.11111111
        %v4009 = vmul.f32 %v3977, 0.11111111
        %v4010 = vmul.f32 %v3978, 0.11111111
        %v4011 = vmul.f32 %v3979, 0.11111111
        %v4012 = vmul.f32 %v3980, 0.11111111
        %v4013 = vmul.f32 %v3981, 0.11111111
        %v4014 = vmul.f32 %v3982, 0.11111111
        %v4015 = vmul.f32 %v3983, 0.11111111
        %v4016 = vmul.f32 %v3984, 0.11111111
        %v4017 = vmul.f32 %v3985, 0.11111111
        %v4018 = vmax.f32 %v3986, 0.0
        %v4019 = vmax.f32 %v3987, 0.0
        %v4020 = vmax.f32 %v3988, 0.0
        %v4021 = vmax.f32 %v3989, 0.0
        %v4022 = vmax.f32 %v3990, 0.0
        %v4023 = vmax.f32 %v3991, 0.0
        %v4024 = vmax.f32 %v3992, 0.0
        %v4025 = vmax.f32 %v3993, 0.0
        %v4026 = vmax.f32 %v3994, 0.0
        %v4027 = vmax.f32 %v3995, 0.0
        %v4028 = vmax.f32 %v3996, 0.0
        %v4029 = vmax.f32 %v3997, 0.0
        %v4030 = vmax.f32 %v3998, 0.0
        %v4031 = vmax.f32 %v3999, 0.0
        %v4032 = vmax.f32 %v4000, 0.0
        %v4033 = vmax.f32 %v4001, 0.0
        %v4034 = vmax.f32 %v4002, 0.0
        %v4035 = vmax.f32 %v4003, 0.0
        %v4036 = vmax.f32 %v4004, 0.0
        %v4037 = vmax.f32 %v4005, 0.0
        %v4038 = vmax.f32 %v4006, 0.0
        %v4039 = vmax.f32 %v4007, 0.0
        %v4040 = vmax.f32 %v4008, 0.0
        %v4041 = vmax.f32 %v4009, 0.0
        %v4042 = vmax.f32 %v4010, 0.0
        %v4043 = vmax.f32 %v4011, 0.0
        %v4044 = vmax.f32 %v4012, 0.0
        %v4045 = vmax.f32 %v4013, 0.0
        %v4046 = vmax.f32 %v4014, 0.0
        %v4047 = vmax.f32 %v4015, 0.0
        %v4048 = vmax.f32 %v4016, 0.0
        %v4049 = vmax.f32 %v4017, 0.0
        %v4050 = vld [vmem:[%s11] sm:$0xff]
        %v4051 = vld [vmem:[%s11 + $0x8] sm:$0xff]
        %v4052 = vld [vmem:[%s11 + $0x10] sm:$0xff]
        %v4053 = vld [vmem:[%s11 + $0x18] sm:$0xff]
        %v4054 = vld [vmem:[%s11 + $0x20] sm:$0xff]
        %v4055 = vld [vmem:[%s11 + $0x28] sm:$0xff]
        %v4056 = vld [vmem:[%s11 + $0x30] sm:$0xff]
        %v4057 = vld [vmem:[%s11 + $0x38] sm:$0xff]
        %v4058 = vld [vmem:[%s11 + $0x40] sm:$0xff]
        %v4059 = vld [vmem:[%s11 + $0x48] sm:$0xff]
        %v4060 = vld [vmem:[%s11 + $0x50] sm:$0xff]
        %v4061 = vld [vmem:[%s11 + $0x58] sm:$0xff]
        %v4062 = vld [vmem:[%s11 + $0x60] sm:$0xff]
        %v4063 = vld [vmem:[%s11 + $0x68] sm:$0xff]
        %v4064 = vld [vmem:[%s11 + $0x70] sm:$0xff]
        %v4065 = vld [vmem:[%s11 + $0x78] sm:$0xff]
        %v4066 = vld [vmem:[%s11 + $0x80] sm:$0xff]
        %v4067 = vld [vmem:[%s11 + $0x88] sm:$0xff]
        %v4068 = vld [vmem:[%s13] sm:$0x1]
        %s4069 = scalar_lea.vmem [#allocation2], 48
        %4070 = vst [vmem:[%s4069 + $0x8] sm:$0xff] %v2827
        %4071 = vst [vmem:[%s4069 + $0x10] sm:$0xff] %v2828
        %4072 = vst [vmem:[%s4069 + $0x18] sm:$0xff] %v2829
        %4073 = vst [vmem:[%s4069 + $0x20] sm:$0xff] %v2830
        %4074 = vst [vmem:[%s4069 + $0x38] sm:$0xff] %v2831
        %4075 = vst [vmem:[%s4069 + $0x40] sm:$0xff] %v2832
        %4076 = vst [vmem:[%s4069 + $0x48] sm:$0xff] %v2833
        %4077 = vst [vmem:[%s4069 + $0x50] sm:$0xff] %v2834
        %4078 = vst [vmem:[%s4069 + $0x68] sm:$0xff] %v2835
        %4079 = vst [vmem:[%s4069 + $0x70] sm:$0xff] %v2836
        %4080 = vst [vmem:[%s4069 + $0x78] sm:$0xff] %v2837
        %4081 = vst [vmem:[%s4069 + $0x80] sm:$0xff] %v2838
        %4082 = vst [vmem:[%s4069 + $0x98] sm:$0xff] %v2839
        %4083 = vst [vmem:[%s4069 + $0xa0] sm:$0xff] %v2840
        %4084 = vst [vmem:[%s4069 + $0xa8] sm:$0xff] %v2841
        %4085 = vst [vmem:[%s4069 + $0xb0] sm:$0xff] %v2842
        %4086 = vst [vmem:[%s4069 + $0xc8] sm:$0xff] %v2843
        %4087 = vst [vmem:[%s4069 + $0xd0] sm:$0xff] %v2844
        %4088 = vst [vmem:[%s4069 + $0xd8] sm:$0xff] %v2845
        %4089 = vst [vmem:[%s4069 + $0xe0] sm:$0xff] %v2846
        %4090 = vst [vmem:[%s4069 + $0xf8] sm:$0xff] %v2847
        %4091 = vst [vmem:[%s4069 + $0x100] sm:$0xff] %v2848
        %4092 = vst [vmem:[%s4069 + $0x108] sm:$0xff] %v2849
        %4093 = vst [vmem:[%s4069 + $0x110] sm:$0xff] %v2850
        %4094 = vst [vmem:[%s4069 + $0x128] sm:$0xff] %v2851
        %4095 = vst [vmem:[%s4069 + $0x130] sm:$0xff] %v2852
        %4096 = vst [vmem:[%s4069 + $0x138] sm:$0xff] %v2853
        %4097 = vst [vmem:[%s4069 + $0x140] sm:$0xff] %v2854
        %4098 = vst [vmem:[%s4069 + $0x158] sm:$0xff] %v2855
        %4099 = vst [vmem:[%s4069 + $0x160] sm:$0xff] %v2856
        %4100 = vst [vmem:[%s4069 + $0x168] sm:$0xff] %v2857
        %4101 = vst [vmem:[%s4069 + $0x170] sm:$0xff] %v2858
        %4102 = vst [vmem:[%s4069 + $0x188] sm:$0xff] %v2859
        %4103 = vst [vmem:[%s4069 + $0x190] sm:$0xff] %v2860
        %4104 = vst [vmem:[%s4069 + $0x198] sm:$0xff] %v2861
        %4105 = vst [vmem:[%s4069 + $0x1a0] sm:$0xff] %v2862
        %4106 = vst [vmem:[%s4069 + $0x1b8] sm:$0xff] %v2863
        %4107 = vst [vmem:[%s4069 + $0x1c0] sm:$0xff] %v2864
        %4108 = vst [vmem:[%s4069 + $0x1c8] sm:$0xff] %v2865
        %4109 = vst [vmem:[%s4069 + $0x1d0] sm:$0xff] %v2866
        %4110 = vst [vmem:[%s4069 + $0x1e8] sm:$0xff] %v2867
        %4111 = vst [vmem:[%s4069 + $0x1f0] sm:$0xff] %v2868
        %4112 = vst [vmem:[%s4069 + $0x1f8] sm:$0xff] %v2869
        %4113 = vst [vmem:[%s4069 + $0x200] sm:$0xff] %v2870
        %4114 = vst [vmem:[%s4069 + $0x218] sm:$0xff] %v2871
        %4115 = vst [vmem:[%s4069 + $0x220] sm:$0xff] %v2872
        %4116 = vst [vmem:[%s4069 + $0x228] sm:$0xff] %v2873
        %4117 = vst [vmem:[%s4069 + $0x230] sm:$0xff] %v2874
        %4118 = vst [vmem:[%s4069 + $0x248] sm:$0xff] %v2875
        %4119 = vst [vmem:[%s4069 + $0x250] sm:$0xff] %v2876
        %4120 = vst [vmem:[%s4069 + $0x258] sm:$0xff] %v2877
        %4121 = vst [vmem:[%s4069 + $0x260] sm:$0xff] %v2878
        %4122 = vst [vmem:[%s4069 + $0x278] sm:$0xff] %v2879
        %4123 = vst [vmem:[%s4069 + $0x280] sm:$0xff] %v2880
        %4124 = vst [vmem:[%s4069 + $0x288] sm:$0xff] %v2881
        %4125 = vst [vmem:[%s4069 + $0x290] sm:$0xff] %v2882
        %4126 = vst [vmem:[%s4069 + $0x2a8] sm:$0xff] %v2883
        %4127 = vst [vmem:[%s4069 + $0x2b0] sm:$0xff] %v2884
        %4128 = vst [vmem:[%s4069 + $0x2b8] sm:$0xff] %v2885
        %4129 = vst [vmem:[%s4069 + $0x2c0] sm:$0xff] %v2886
        %4130 = vst [vmem:[%s4069 + $0x2d8] sm:$0xff] %v2887
        %4131 = vst [vmem:[%s4069 + $0x2e0] sm:$0xff] %v2888
        %4132 = vst [vmem:[%s4069 + $0x2e8] sm:$0xff] %v2889
        %4133 = vst [vmem:[%s4069 + $0x2f0] sm:$0xff] %v2890
        %4134 = vst [vmem:[%s4069 + $0x308] sm:$0xff] %v2891
        %4135 = vst [vmem:[%s4069 + $0x310] sm:$0xff] %v2892
        %4136 = vst [vmem:[%s4069 + $0x318] sm:$0xff] %v2893
        %4137 = vst [vmem:[%s4069 + $0x320] sm:$0xff] %v2894
        %4138 = vst [vmem:[%s4069 + $0x338] sm:$0xff] %v2895
        %4139 = vst [vmem:[%s4069 + $0x340] sm:$0xff] %v2896
        %4140 = vst [vmem:[%s4069 + $0x348] sm:$0xff] %v2897
        %4141 = vst [vmem:[%s4069 + $0x350] sm:$0xff] %v2898
        %4142 = vst [vmem:[%s4069 + $0x368] sm:$0xff] %v2899
        %4143 = vst [vmem:[%s4069 + $0x370] sm:$0xff] %v2900
        %4144 = vst [vmem:[%s4069 + $0x378] sm:$0xff] %v2901
        %4145 = vst [vmem:[%s4069 + $0x380] sm:$0xff] %v2902
        %4146 = vst [vmem:[%s4069 + $0x398] sm:$0xff] %v2903
        %4147 = vst [vmem:[%s4069 + $0x3a0] sm:$0xff] %v2904
        %4148 = vst [vmem:[%s4069 + $0x3a8] sm:$0xff] %v2905
        %4149 = vst [vmem:[%s4069 + $0x3b0] sm:$0xff] %v2906
        %4150 = vst [vmem:[%s4069 + $0x3c8] sm:$0xff] %v2907
        %4151 = vst [vmem:[%s4069 + $0x3d0] sm:$0xff] %v2908
        %4152 = vst [vmem:[%s4069 + $0x3d8] sm:$0xff] %v2909
        %4153 = vst [vmem:[%s4069 + $0x3e0] sm:$0xff] %v2910
        %4154 = vst [vmem:[%s4069 + $0x3f8] sm:$0xff] %v2911
        %4155 = vst [vmem:[%s4069 + $0x400] sm:$0xff] %v2912
        %4156 = vst [vmem:[%s4069 + $0x408] sm:$0xff] %v2913
        %4157 = vst [vmem:[%s4069 + $0x410] sm:$0xff] %v2914
        %4158 = vst [vmem:[%s4069 + $0x428] sm:$0xff] %v2915
        %4159 = vst [vmem:[%s4069 + $0x430] sm:$0xff] %v2916
        %4160 = vst [vmem:[%s4069 + $0x438] sm:$0xff] %v2917
        %4161 = vst [vmem:[%s4069 + $0x440] sm:$0xff] %v2918
        %4162 = vst [vmem:[%s4069 + $0x458] sm:$0xff] %v2919
        %4163 = vst [vmem:[%s4069 + $0x460] sm:$0xff] %v2920
        %4164 = vst [vmem:[%s4069 + $0x468] sm:$0xff] %v2921
        %4165 = vst [vmem:[%s4069 + $0x470] sm:$0xff] %v2922
        %4166 = vst [vmem:[%s4069 + $0x488] sm:$0xff] %v2923
        %4167 = vst [vmem:[%s4069 + $0x490] sm:$0xff] %v2924
        %4168 = vst [vmem:[%s4069 + $0x498] sm:$0xff] %v2925
        %4169 = vst [vmem:[%s4069 + $0x4a0] sm:$0xff] %v2926
        %4170 = vst [vmem:[%s4069 + $0x4b8] sm:$0xff] %v2927
        %4171 = vst [vmem:[%s4069 + $0x4c0] sm:$0xff] %v2928
        %4172 = vst [vmem:[%s4069 + $0x4c8] sm:$0xff] %v2929
        %4173 = vst [vmem:[%s4069 + $0x4d0] sm:$0xff] %v2930
        %4174 = vst [vmem:[%s4069 + $0x4e8] sm:$0xff] %v2931
        %4175 = vst [vmem:[%s4069 + $0x4f0] sm:$0xff] %v2932
        %4176 = vst [vmem:[%s4069 + $0x4f8] sm:$0xff] %v2933
        %4177 = vst [vmem:[%s4069 + $0x500] sm:$0xff] %v2934
        %4178 = vst [vmem:[%s4069 + $0x518] sm:$0xff] %v2935
        %4179 = vst [vmem:[%s4069 + $0x520] sm:$0xff] %v2936
        %4180 = vst [vmem:[%s4069 + $0x528] sm:$0xff] %v2937
        %4181 = vst [vmem:[%s4069 + $0x530] sm:$0xff] %v2938
        %4182 = vst [vmem:[%s4069 + $0x548] sm:$0xff] %v2939
        %4183 = vst [vmem:[%s4069 + $0x550] sm:$0xff] %v2940
        %4184 = vst [vmem:[%s4069 + $0x558] sm:$0xff] %v2941
        %4185 = vst [vmem:[%s4069 + $0x560] sm:$0xff] %v2942
        %4186 = vst [vmem:[%s4069 + $0x578] sm:$0xff] %v2943
        %4187 = vst [vmem:[%s4069 + $0x580] sm:$0xff] %v2944
        %4188 = vst [vmem:[%s4069 + $0x588] sm:$0xff] %v2945
        %4189 = vst [vmem:[%s4069 + $0x590] sm:$0xff] %v2946
        %4190 = vst [vmem:[%s4069 + $0x5a8] sm:$0xff] %v2947
        %4191 = vst [vmem:[%s4069 + $0x5b0] sm:$0xff] %v2948
        %4192 = vst [vmem:[%s4069 + $0x5b8] sm:$0xff] %v2949
        %4193 = vst [vmem:[%s4069 + $0x5c0] sm:$0xff] %v2950
        %4194 = vst [vmem:[%s4069 + $0x5d8] sm:$0xff] %v2951
        %4195 = vst [vmem:[%s4069 + $0x5e0] sm:$0xff] %v2952
        %4196 = vst [vmem:[%s4069 + $0x5e8] sm:$0xff] %v2953
        %4197 = vst [vmem:[%s4069 + $0x5f0] sm:$0xff] %v2954
        %4198 = vst [vmem:[#allocation2 + $0x7] sm:$0xff] 0.0
        %4199 = vst [vmem:[#allocation2 + $0xf] sm:$0xff] 0.0
        %4200 = vst [vmem:[#allocation2 + $0x17] sm:$0xff] 0.0
        %4201 = vst [vmem:[#allocation2 + $0x1f] sm:$0xff] 0.0
        %4202 = vst [vmem:[#allocation2 + $0x27] sm:$0x3] 0.0
        %4203 = vst [vmem:[%s4069 + $0x7] sm:$0x1] 0.0
        %4204 = vst [vmem:[%s4069 + $0x37] sm:$0x1] 0.0
        %4205 = vst [vmem:[%s4069 + $0x67] sm:$0x1] 0.0
        %4206 = vst [vmem:[%s4069 + $0x97] sm:$0x1] 0.0
        %4207 = vst [vmem:[%s4069 + $0xc7] sm:$0x1] 0.0
        %4208 = vst [vmem:[%s4069 + $0xf7] sm:$0x1] 0.0
        %4209 = vst [vmem:[%s4069 + $0x127] sm:$0x1] 0.0
        %4210 = vst [vmem:[%s4069 + $0x157] sm:$0x1] 0.0
        %4211 = vst [vmem:[%s4069 + $0x187] sm:$0x1] 0.0
        %4212 = vst [vmem:[%s4069 + $0x1b7] sm:$0x1] 0.0
        %4213 = vst [vmem:[%s4069 + $0x1e7] sm:$0x1] 0.0
        %4214 = vst [vmem:[%s4069 + $0x217] sm:$0x1] 0.0
        %4215 = vst [vmem:[%s4069 + $0x247] sm:$0x1] 0.0
        %4216 = vst [vmem:[%s4069 + $0x277] sm:$0x1] 0.0
        %4217 = vst [vmem:[%s4069 + $0x2a7] sm:$0x1] 0.0
        %4218 = vst [vmem:[%s4069 + $0x2d7] sm:$0x1] 0.0
        %4219 = vst [vmem:[%s4069 + $0x307] sm:$0x1] 0.0
        %4220 = vst [vmem:[%s4069 + $0x337] sm:$0x1] 0.0
        %4221 = vst [vmem:[%s4069 + $0x367] sm:$0x1] 0.0
        %4222 = vst [vmem:[%s4069 + $0x397] sm:$0x1] 0.0
        %4223 = vst [vmem:[%s4069 + $0x3c7] sm:$0x1] 0.0
        %4224 = vst [vmem:[%s4069 + $0x3f7] sm:$0x1] 0.0
        %4225 = vst [vmem:[%s4069 + $0x427] sm:$0x1] 0.0
        %4226 = vst [vmem:[%s4069 + $0x457] sm:$0x1] 0.0
        %4227 = vst [vmem:[%s4069 + $0x487] sm:$0x1] 0.0
        %4228 = vst [vmem:[%s4069 + $0x4b7] sm:$0x1] 0.0
        %4229 = vst [vmem:[%s4069 + $0x4e7] sm:$0x1] 0.0
        %4230 = vst [vmem:[%s4069 + $0x517] sm:$0x1] 0.0
        %4231 = vst [vmem:[%s4069 + $0x547] sm:$0x1] 0.0
        %4232 = vst [vmem:[%s4069 + $0x577] sm:$0x1] 0.0
        %4233 = vst [vmem:[%s4069 + $0x5a7] sm:$0x1] 0.0
        %4234 = vst [vmem:[%s4069 + $0x5d7] sm:$0x1] 0.0
        %s4235 = scalar_lea.vmem [#allocation2], 7
        %v4236 = vld [vmem:[%s4235] ss:$2 sm:$0xff]
        %s4237 = scalar_lea.vmem [#allocation2], 23
        %v4238 = vld [vmem:[%s4237] ss:$2 sm:$0xff]
        %s4239 = scalar_lea.vmem [#allocation2], 103
        %v4240 = vld [vmem:[%s4239] ss:$2 sm:$0xff]
        %s4241 = scalar_lea.vmem [#allocation2], 119
        %v4242 = vld [vmem:[%s4241] ss:$2 sm:$0xff]
        %s4243 = scalar_lea.vmem [#allocation2], 199
        %v4244 = vld [vmem:[%s4243] ss:$2 sm:$0xff]
        %s4245 = scalar_lea.vmem [#allocation2], 215
        %v4246 = vld [vmem:[%s4245] ss:$2 sm:$0xff]
        %s4247 = scalar_lea.vmem [#allocation2], 295
        %v4248 = vld [vmem:[%s4247] ss:$2 sm:$0xff]
        %s4249 = scalar_lea.vmem [#allocation2], 311
        %v4250 = vld [vmem:[%s4249] ss:$2 sm:$0xff]
        %s4251 = scalar_lea.vmem [#allocation2], 391
        %v4252 = vld [vmem:[%s4251] ss:$2 sm:$0xff]
        %s4253 = scalar_lea.vmem [#allocation2], 407
        %v4254 = vld [vmem:[%s4253] ss:$2 sm:$0xff]
        %s4255 = scalar_lea.vmem [#allocation2], 487
        %v4256 = vld [vmem:[%s4255] ss:$2 sm:$0xff]
        %s4257 = scalar_lea.vmem [#allocation2], 503
        %v4258 = vld [vmem:[%s4257] ss:$2 sm:$0xff]
        %s4259 = scalar_lea.vmem [#allocation2], 583
        %v4260 = vld [vmem:[%s4259] ss:$2 sm:$0xff]
        %s4261 = scalar_lea.vmem [#allocation2], 599
        %v4262 = vld [vmem:[%s4261] ss:$2 sm:$0xff]
        %s4263 = scalar_lea.vmem [#allocation2], 679
        %v4264 = vld [vmem:[%s4263] ss:$2 sm:$0xff]
        %s4265 = scalar_lea.vmem [#allocation2], 695
        %v4266 = vld [vmem:[%s4265] ss:$2 sm:$0xff]
        %s4267 = scalar_lea.vmem [#allocation2], 775
        %v4268 = vld [vmem:[%s4267] ss:$2 sm:$0xff]
        %s4269 = scalar_lea.vmem [#allocation2], 791
        %v4270 = vld [vmem:[%s4269] ss:$2 sm:$0xff]
        %s4271 = scalar_lea.vmem [#allocation2], 871
        %v4272 = vld [vmem:[%s4271] ss:$2 sm:$0xff]
        %s4273 = scalar_lea.vmem [#allocation2], 887
        %v4274 = vld [vmem:[%s4273] ss:$2 sm:$0xff]
        %s4275 = scalar_lea.vmem [#allocation2], 967
        %v4276 = vld [vmem:[%s4275] ss:$2 sm:$0xff]
        %s4277 = scalar_lea.vmem [#allocation2], 983
        %v4278 = vld [vmem:[%s4277] ss:$2 sm:$0xff]
        %s4279 = scalar_lea.vmem [#allocation2], 1063
        %v4280 = vld [vmem:[%s4279] ss:$2 sm:$0xff]
        %s4281 = scalar_lea.vmem [#allocation2], 1079
        %v4282 = vld [vmem:[%s4281] ss:$2 sm:$0xff]
        %s4283 = scalar_lea.vmem [#allocation2], 1159
        %v4284 = vld [vmem:[%s4283] ss:$2 sm:$0xff]
        %s4285 = scalar_lea.vmem [#allocation2], 1175
        %v4286 = vld [vmem:[%s4285] ss:$2 sm:$0xff]
        %s4287 = scalar_lea.vmem [#allocation2], 1255
        %v4288 = vld [vmem:[%s4287] ss:$2 sm:$0xff]
        %s4289 = scalar_lea.vmem [#allocation2], 1271
        %v4290 = vld [vmem:[%s4289] ss:$2 sm:$0xff]
        %s4291 = scalar_lea.vmem [#allocation2], 1351
        %v4292 = vld [vmem:[%s4291] ss:$2 sm:$0xff]
        %s4293 = scalar_lea.vmem [#allocation2], 1367
        %v4294 = vld [vmem:[%s4293] ss:$2 sm:$0xff]
        %s4295 = scalar_lea.vmem [#allocation2], 1447
        %v4296 = vld [vmem:[%s4295] ss:$2 sm:$0xff]
        %s4297 = scalar_lea.vmem [#allocation2], 1463
        %v4298 = vld [vmem:[%s4297] ss:$2 sm:$0xff]
        %v4299 = vmul.f32 %v4236, %v4050
        %v4300 = vmul.f32 %v4238, %v4051
        %v4301 = vmul.f32 %v4240, %v4050
        %v4302 = vmul.f32 %v4242, %v4051
        %v4303 = vmul.f32 %v4244, %v4050
        %v4304 = vmul.f32 %v4246, %v4051
        %v4305 = vmul.f32 %v4248, %v4050
        %v4306 = vmul.f32 %v4250, %v4051
        %v4307 = vmul.f32 %v4252, %v4050
        %v4308 = vmul.f32 %v4254, %v4051
        %v4309 = vmul.f32 %v4256, %v4050
        %v4310 = vmul.f32 %v4258, %v4051
        %v4311 = vmul.f32 %v4260, %v4050
        %v4312 = vmul.f32 %v4262, %v4051
        %v4313 = vmul.f32 %v4264, %v4050
        %v4314 = vmul.f32 %v4266, %v4051
        %v4315 = vmul.f32 %v4268, %v4050
        %v4316 = vmul.f32 %v4270, %v4051
        %v4317 = vmul.f32 %v4272, %v4050
        %v4318 = vmul.f32 %v4274, %v4051
        %v4319 = vmul.f32 %v4276, %v4050
        %v4320 = vmul.f32 %v4278, %v4051
        %v4321 = vmul.f32 %v4280, %v4050
        %v4322 = vmul.f32 %v4282, %v4051
        %v4323 = vmul.f32 %v4284, %v4050
        %v4324 = vmul.f32 %v4286, %v4051
        %v4325 = vmul.f32 %v4288, %v4050
        %v4326 = vmul.f32 %v4290, %v4051
        %v4327 = vmul.f32 %v4292, %v4050
        %v4328 = vmul.f32 %v4294, %v4051
        %v4329 = vmul.f32 %v4296, %v4050
        %v4330 = vmul.f32 %v4298, %v4051
        %v4331 = vadd.f32 %v4299, 0.0
        %v4332 = vadd.f32 %v4300, 0.0
        %v4333 = vadd.f32 %v4301, 0.0
        %v4334 = vadd.f32 %v4302, 0.0
        %v4335 = vadd.f32 %v4303, 0.0
        %v4336 = vadd.f32 %v4304, 0.0
        %v4337 = vadd.f32 %v4305, 0.0
        %v4338 = vadd.f32 %v4306, 0.0
        %v4339 = vadd.f32 %v4307, 0.0
        %v4340 = vadd.f32 %v4308, 0.0
        %v4341 = vadd.f32 %v4309, 0.0
        %v4342 = vadd.f32 %v4310, 0.0
        %v4343 = vadd.f32 %v4311, 0.0
        %v4344 = vadd.f32 %v4312, 0.0
        %v4345 = vadd.f32 %v4313, 0.0
        %v4346 = vadd.f32 %v4314, 0.0
        %v4347 = vadd.f32 %v4315, 0.0
        %v4348 = vadd.f32 %v4316, 0.0
        %v4349 = vadd.f32 %v4317, 0.0
        %v4350 = vadd.f32 %v4318, 0.0
        %v4351 = vadd.f32 %v4319, 0.0
        %v4352 = vadd.f32 %v4320, 0.0
        %v4353 = vadd.f32 %v4321, 0.0
        %v4354 = vadd.f32 %v4322, 0.0
        %v4355 = vadd.f32 %v4323, 0.0
        %v4356 = vadd.f32 %v4324, 0.0
        %v4357 = vadd.f32 %v4325, 0.0
        %v4358 = vadd.f32 %v4326, 0.0
        %v4359 = vadd.f32 %v4327, 0.0
        %v4360 = vadd.f32 %v4328, 0.0
        %v4361 = vadd.f32 %v4329, 0.0
        %v4362 = vadd.f32 %v4330, 0.0
        %s4363 = scalar_lea.vmem [#allocation2], 8
        %v4364 = vld [vmem:[%s4363] ss:$2 sm:$0xff]
        %s4365 = scalar_lea.vmem [#allocation2], 24
        %v4366 = vld [vmem:[%s4365] ss:$2 sm:$0xff]
        %s4367 = scalar_lea.vmem [#allocation2], 104
        %v4368 = vld [vmem:[%s4367] ss:$2 sm:$0xff]
        %s4369 = scalar_lea.vmem [#allocation2], 120
        %v4370 = vld [vmem:[%s4369] ss:$2 sm:$0xff]
        %s4371 = scalar_lea.vmem [#allocation2], 200
        %v4372 = vld [vmem:[%s4371] ss:$2 sm:$0xff]
        %s4373 = scalar_lea.vmem [#allocation2], 216
        %v4374 = vld [vmem:[%s4373] ss:$2 sm:$0xff]
        %s4375 = scalar_lea.vmem [#allocation2], 296
        %v4376 = vld [vmem:[%s4375] ss:$2 sm:$0xff]
        %s4377 = scalar_lea.vmem [#allocation2], 312
        %v4378 = vld [vmem:[%s4377] ss:$2 sm:$0xff]
        %s4379 = scalar_lea.vmem [#allocation2], 392
        %v4380 = vld [vmem:[%s4379] ss:$2 sm:$0xff]
        %s4381 = scalar_lea.vmem [#allocation2], 408
        %v4382 = vld [vmem:[%s4381] ss:$2 sm:$0xff]
        %s4383 = scalar_lea.vmem [#allocation2], 488
        %v4384 = vld [vmem:[%s4383] ss:$2 sm:$0xff]
        %s4385 = scalar_lea.vmem [#allocation2], 504
        %v4386 = vld [vmem:[%s4385] ss:$2 sm:$0xff]
        %s4387 = scalar_lea.vmem [#allocation2], 584
        %v4388 = vld [vmem:[%s4387] ss:$2 sm:$0xff]
        %s4389 = scalar_lea.vmem [#allocation2], 600
        %v4390 = vld [vmem:[%s4389] ss:$2 sm:$0xff]
        %s4391 = scalar_lea.vmem [#allocation2], 680
        %v4392 = vld [vmem:[%s4391] ss:$2 sm:$0xff]
        %s4393 = scalar_lea.vmem [#allocation2], 696
        %v4394 = vld [vmem:[%s4393] ss:$2 sm:$0xff]
        %s4395 = scalar_lea.vmem [#allocation2], 776
        %v4396 = vld [vmem:[%s4395] ss:$2 sm:$0xff]
        %s4397 = scalar_lea.vmem [#allocation2], 792
        %v4398 = vld [vmem:[%s4397] ss:$2 sm:$0xff]
        %s4399 = scalar_lea.vmem [#allocation2], 872
        %v4400 = vld [vmem:[%s4399] ss:$2 sm:$0xff]
        %s4401 = scalar_lea.vmem [#allocation2], 888
        %v4402 = vld [vmem:[%s4401] ss:$2 sm:$0xff]
        %s4403 = scalar_lea.vmem [#allocation2], 968
        %v4404 = vld [vmem:[%s4403] ss:$2 sm:$0xff]
        %s4405 = scalar_lea.vmem [#allocation2], 984
        %v4406 = vld [vmem:[%s4405] ss:$2 sm:$0xff]
        %s4407 = scalar_lea.vmem [#allocation2], 1064
        %v4408 = vld [vmem:[%s4407] ss:$2 sm:$0xff]
        %s4409 = scalar_lea.vmem [#allocation2], 1080
        %v4410 = vld [vmem:[%s4409] ss:$2 sm:$0xff]
        %s4411 = scalar_lea.vmem [#allocation2], 1160
        %v4412 = vld [vmem:[%s4411] ss:$2 sm:$0xff]
        %s4413 = scalar_lea.vmem [#allocation2], 1176
        %v4414 = vld [vmem:[%s4413] ss:$2 sm:$0xff]
        %s4415 = scalar_lea.vmem [#allocation2], 1256
        %v4416 = vld [vmem:[%s4415] ss:$2 sm:$0xff]
        %s4417 = scalar_lea.vmem [#allocation2], 1272
        %v4418 = vld [vmem:[%s4417] ss:$2 sm:$0xff]
        %s4419 = scalar_lea.vmem [#allocation2], 1352
        %v4420 = vld [vmem:[%s4419] ss:$2 sm:$0xff]
        %s4421 = scalar_lea.vmem [#allocation2], 1368
        %v4422 = vld [vmem:[%s4421] ss:$2 sm:$0xff]
        %s4423 = scalar_lea.vmem [#allocation2], 1448
        %v4424 = vld [vmem:[%s4423] ss:$2 sm:$0xff]
        %s4425 = scalar_lea.vmem [#allocation2], 1464
        %v4426 = vld [vmem:[%s4425] ss:$2 sm:$0xff]
        %v4427 = vmul.f32 %v4364, %v4052
        %v4428 = vmul.f32 %v4366, %v4053
        %v4429 = vmul.f32 %v4368, %v4052
        %v4430 = vmul.f32 %v4370, %v4053
        %v4431 = vmul.f32 %v4372, %v4052
        %v4432 = vmul.f32 %v4374, %v4053
        %v4433 = vmul.f32 %v4376, %v4052
        %v4434 = vmul.f32 %v4378, %v4053
        %v4435 = vmul.f32 %v4380, %v4052
        %v4436 = vmul.f32 %v4382, %v4053
        %v4437 = vmul.f32 %v4384, %v4052
        %v4438 = vmul.f32 %v4386, %v4053
        %v4439 = vmul.f32 %v4388, %v4052
        %v4440 = vmul.f32 %v4390, %v4053
        %v4441 = vmul.f32 %v4392, %v4052
        %v4442 = vmul.f32 %v4394, %v4053
        %v4443 = vmul.f32 %v4396, %v4052
        %v4444 = vmul.f32 %v4398, %v4053
        %v4445 = vmul.f32 %v4400, %v4052
        %v4446 = vmul.f32 %v4402, %v4053
        %v4447 = vmul.f32 %v4404, %v4052
        %v4448 = vmul.f32 %v4406, %v4053
        %v4449 = vmul.f32 %v4408, %v4052
        %v4450 = vmul.f32 %v4410, %v4053
        %v4451 = vmul.f32 %v4412, %v4052
        %v4452 = vmul.f32 %v4414, %v4053
        %v4453 = vmul.f32 %v4416, %v4052
        %v4454 = vmul.f32 %v4418, %v4053
        %v4455 = vmul.f32 %v4420, %v4052
        %v4456 = vmul.f32 %v4422, %v4053
        %v4457 = vmul.f32 %v4424, %v4052
        %v4458 = vmul.f32 %v4426, %v4053
        %v4459 = vadd.f32 %v4331, %v4427
        %v4460 = vadd.f32 %v4332, %v4428
        %v4461 = vadd.f32 %v4333, %v4429
        %v4462 = vadd.f32 %v4334, %v4430
        %v4463 = vadd.f32 %v4335, %v4431
        %v4464 = vadd.f32 %v4336, %v4432
        %v4465 = vadd.f32 %v4337, %v4433
        %v4466 = vadd.f32 %v4338, %v4434
        %v4467 = vadd.f32 %v4339, %v4435
        %v4468 = vadd.f32 %v4340, %v4436
        %v4469 = vadd.f32 %v4341, %v4437
        %v4470 = vadd.f32 %v4342, %v4438
        %v4471 = vadd.f32 %v4343, %v4439
        %v4472 = vadd.f32 %v4344, %v4440
        %v4473 = vadd.f32 %v4345, %v4441
        %v4474 = vadd.f32 %v4346, %v4442
        %v4475 = vadd.f32 %v4347, %v4443
        %v4476 = vadd.f32 %v4348, %v4444
        %v4477 = vadd.f32 %v4349, %v4445
        %v4478 = vadd.f32 %v4350, %v4446
        %v4479 = vadd.f32 %v4351, %v4447
        %v4480 = vadd.f32 %v4352, %v4448
        %v4481 = vadd.f32 %v4353, %v4449
        %v4482 = vadd.f32 %v4354, %v4450
        %v4483 = vadd.f32 %v4355, %v4451
        %v4484 = vadd.f32 %v4356, %v4452
        %v4485 = vadd.f32 %v4357, %v4453
        %v4486 = vadd.f32 %v4358, %v4454
        %v4487 = vadd.f32 %v4359, %v4455
        %v4488 = vadd.f32 %v4360, %v4456
        %v4489 = vadd.f32 %v4361, %v4457
        %v4490 = vadd.f32 %v4362, %v4458
        %s4491 = scalar_lea.vmem [#allocation2], 9
        %v4492 = vld [vmem:[%s4491] ss:$2 sm:$0xff]
        %s4493 = scalar_lea.vmem [#allocation2], 25
        %v4494 = vld [vmem:[%s4493] ss:$2 sm:$0xff]
        %s4495 = scalar_lea.vmem [#allocation2], 105
        %v4496 = vld [vmem:[%s4495] ss:$2 sm:$0xff]
        %s4497 = scalar_lea.vmem [#allocation2], 121
        %v4498 = vld [vmem:[%s4497] ss:$2 sm:$0xff]
        %s4499 = scalar_lea.vmem [#allocation2], 201
        %v4500 = vld [vmem:[%s4499] ss:$2 sm:$0xff]
        %s4501 = scalar_lea.vmem [#allocation2], 217
        %v4502 = vld [vmem:[%s4501] ss:$2 sm:$0xff]
        %s4503 = scalar_lea.vmem [#allocation2], 297
        %v4504 = vld [vmem:[%s4503] ss:$2 sm:$0xff]
        %s4505 = scalar_lea.vmem [#allocation2], 313
        %v4506 = vld [vmem:[%s4505] ss:$2 sm:$0xff]
        %s4507 = scalar_lea.vmem [#allocation2], 393
        %v4508 = vld [vmem:[%s4507] ss:$2 sm:$0xff]
        %s4509 = scalar_lea.vmem [#allocation2], 409
        %v4510 = vld [vmem:[%s4509] ss:$2 sm:$0xff]
        %s4511 = scalar_lea.vmem [#allocation2], 489
        %v4512 = vld [vmem:[%s4511] ss:$2 sm:$0xff]
        %s4513 = scalar_lea.vmem [#allocation2], 505
        %v4514 = vld [vmem:[%s4513] ss:$2 sm:$0xff]
        %s4515 = scalar_lea.vmem [#allocation2], 585
        %v4516 = vld [vmem:[%s4515] ss:$2 sm:$0xff]
        %s4517 = scalar_lea.vmem [#allocation2], 601
        %v4518 = vld [vmem:[%s4517] ss:$2 sm:$0xff]
        %s4519 = scalar_lea.vmem [#allocation2], 681
        %v4520 = vld [vmem:[%s4519] ss:$2 sm:$0xff]
        %s4521 = scalar_lea.vmem [#allocation2], 697
        %v4522 = vld [vmem:[%s4521] ss:$2 sm:$0xff]
        %s4523 = scalar_lea.vmem [#allocation2], 777
        %v4524 = vld [vmem:[%s4523] ss:$2 sm:$0xff]
        %s4525 = scalar_lea.vmem [#allocation2], 793
        %v4526 = vld [vmem:[%s4525] ss:$2 sm:$0xff]
        %s4527 = scalar_lea.vmem [#allocation2], 873
        %v4528 = vld [vmem:[%s4527] ss:$2 sm:$0xff]
        %s4529 = scalar_lea.vmem [#allocation2], 889
        %v4530 = vld [vmem:[%s4529] ss:$2 sm:$0xff]
        %s4531 = scalar_lea.vmem [#allocation2], 969
        %v4532 = vld [vmem:[%s4531] ss:$2 sm:$0xff]
        %s4533 = scalar_lea.vmem [#allocation2], 985
        %v4534 = vld [vmem:[%s4533] ss:$2 sm:$0xff]
        %s4535 = scalar_lea.vmem [#allocation2], 1065
        %v4536 = vld [vmem:[%s4535] ss:$2 sm:$0xff]
        %s4537 = scalar_lea.vmem [#allocation2], 1081
        %v4538 = vld [vmem:[%s4537] ss:$2 sm:$0xff]
        %s4539 = scalar_lea.vmem [#allocation2], 1161
        %v4540 = vld [vmem:[%s4539] ss:$2 sm:$0xff]
        %s4541 = scalar_lea.vmem [#allocation2], 1177
        %v4542 = vld [vmem:[%s4541] ss:$2 sm:$0xff]
        %s4543 = scalar_lea.vmem [#allocation2], 1257
        %v4544 = vld [vmem:[%s4543] ss:$2 sm:$0xff]
        %s4545 = scalar_lea.vmem [#allocation2], 1273
        %v4546 = vld [vmem:[%s4545] ss:$2 sm:$0xff]
        %s4547 = scalar_lea.vmem [#allocation2], 1353
        %v4548 = vld [vmem:[%s4547] ss:$2 sm:$0xff]
        %s4549 = scalar_lea.vmem [#allocation2], 1369
        %v4550 = vld [vmem:[%s4549] ss:$2 sm:$0xff]
        %s4551 = scalar_lea.vmem [#allocation2], 1449
        %v4552 = vld [vmem:[%s4551] ss:$2 sm:$0xff]
        %s4553 = scalar_lea.vmem [#allocation2], 1465
        %v4554 = vld [vmem:[%s4553] ss:$2 sm:$0xff]
        %v4555 = vmul.f32 %v4492, %v4054
        %v4556 = vmul.f32 %v4494, %v4055
        %v4557 = vmul.f32 %v4496, %v4054
        %v4558 = vmul.f32 %v4498, %v4055
        %v4559 = vmul.f32 %v4500, %v4054
        %v4560 = vmul.f32 %v4502, %v4055
        %v4561 = vmul.f32 %v4504, %v4054
        %v4562 = vmul.f32 %v4506, %v4055
        %v4563 = vmul.f32 %v4508, %v4054
        %v4564 = vmul.f32 %v4510, %v4055
        %v4565 = vmul.f32 %v4512, %v4054
        %v4566 = vmul.f32 %v4514, %v4055
        %v4567 = vmul.f32 %v4516, %v4054
        %v4568 = vmul.f32 %v4518, %v4055
        %v4569 = vmul.f32 %v4520, %v4054
        %v4570 = vmul.f32 %v4522, %v4055
        %v4571 = vmul.f32 %v4524, %v4054
        %v4572 = vmul.f32 %v4526, %v4055
        %v4573 = vmul.f32 %v4528, %v4054
        %v4574 = vmul.f32 %v4530, %v4055
        %v4575 = vmul.f32 %v4532, %v4054
        %v4576 = vmul.f32 %v4534, %v4055
        %v4577 = vmul.f32 %v4536, %v4054
        %v4578 = vmul.f32 %v4538, %v4055
        %v4579 = vmul.f32 %v4540, %v4054
        %v4580 = vmul.f32 %v4542, %v4055
        %v4581 = vmul.f32 %v4544, %v4054
        %v4582 = vmul.f32 %v4546, %v4055
        %v4583 = vmul.f32 %v4548, %v4054
        %v4584 = vmul.f32 %v4550, %v4055
        %v4585 = vmul.f32 %v4552, %v4054
        %v4586 = vmul.f32 %v4554, %v4055
        %v4587 = vadd.f32 %v4459, %v4555
        %v4588 = vadd.f32 %v4460, %v4556
        %v4589 = vadd.f32 %v4461, %v4557
        %v4590 = vadd.f32 %v4462, %v4558
        %v4591 = vadd.f32 %v4463, %v4559
        %v4592 = vadd.f32 %v4464, %v4560
        %v4593 = vadd.f32 %v4465, %v4561
        %v4594 = vadd.f32 %v4466, %v4562
        %v4595 = vadd.f32 %v4467, %v4563
        %v4596 = vadd.f32 %v4468, %v4564
        %v4597 = vadd.f32 %v4469, %v4565
        %v4598 = vadd.f32 %v4470, %v4566
        %v4599 = vadd.f32 %v4471, %v4567
        %v4600 = vadd.f32 %v4472, %v4568
        %v4601 = vadd.f32 %v4473, %v4569
        %v4602 = vadd.f32 %v4474, %v4570
        %v4603 = vadd.f32 %v4475, %v4571
        %v4604 = vadd.f32 %v4476, %v4572
        %v4605 = vadd.f32 %v4477, %v4573
        %v4606 = vadd.f32 %v4478, %v4574
        %v4607 = vadd.f32 %v4479, %v4575
        %v4608 = vadd.f32 %v4480, %v4576
        %v4609 = vadd.f32 %v4481, %v4577
        %v4610 = vadd.f32 %v4482, %v4578
        %v4611 = vadd.f32 %v4483, %v4579
        %v4612 = vadd.f32 %v4484, %v4580
        %v4613 = vadd.f32 %v4485, %v4581
        %v4614 = vadd.f32 %v4486, %v4582
        %v4615 = vadd.f32 %v4487, %v4583
        %v4616 = vadd.f32 %v4488, %v4584
        %v4617 = vadd.f32 %v4489, %v4585
        %v4618 = vadd.f32 %v4490, %v4586
        %s4619 = scalar_lea.vmem %s4069, 7 [#allocation2]
        %v4620 = vld [vmem:[%s4619] ss:$2 sm:$0xff]
        %s4621 = scalar_lea.vmem %s4069, 23 [#allocation2]
        %v4622 = vld [vmem:[%s4621] ss:$2 sm:$0xff]
        %s4623 = scalar_lea.vmem %s4069, 103 [#allocation2]
        %v4624 = vld [vmem:[%s4623] ss:$2 sm:$0xff]
        %s4625 = scalar_lea.vmem %s4069, 119 [#allocation2]
        %v4626 = vld [vmem:[%s4625] ss:$2 sm:$0xff]
        %s4627 = scalar_lea.vmem %s4069, 199 [#allocation2]
        %v4628 = vld [vmem:[%s4627] ss:$2 sm:$0xff]
        %s4629 = scalar_lea.vmem %s4069, 215 [#allocation2]
        %v4630 = vld [vmem:[%s4629] ss:$2 sm:$0xff]
        %s4631 = scalar_lea.vmem %s4069, 295 [#allocation2]
        %v4632 = vld [vmem:[%s4631] ss:$2 sm:$0xff]
        %s4633 = scalar_lea.vmem %s4069, 311 [#allocation2]
        %v4634 = vld [vmem:[%s4633] ss:$2 sm:$0xff]
        %s4635 = scalar_lea.vmem %s4069, 391 [#allocation2]
        %v4636 = vld [vmem:[%s4635] ss:$2 sm:$0xff]
        %s4637 = scalar_lea.vmem %s4069, 407 [#allocation2]
        %v4638 = vld [vmem:[%s4637] ss:$2 sm:$0xff]
        %s4639 = scalar_lea.vmem %s4069, 487 [#allocation2]
        %v4640 = vld [vmem:[%s4639] ss:$2 sm:$0xff]
        %s4641 = scalar_lea.vmem %s4069, 503 [#allocation2]
        %v4642 = vld [vmem:[%s4641] ss:$2 sm:$0xff]
        %s4643 = scalar_lea.vmem %s4069, 583 [#allocation2]
        %v4644 = vld [vmem:[%s4643] ss:$2 sm:$0xff]
        %s4645 = scalar_lea.vmem %s4069, 599 [#allocation2]
        %v4646 = vld [vmem:[%s4645] ss:$2 sm:$0xff]
        %s4647 = scalar_lea.vmem %s4069, 679 [#allocation2]
        %v4648 = vld [vmem:[%s4647] ss:$2 sm:$0xff]
        %s4649 = scalar_lea.vmem %s4069, 695 [#allocation2]
        %v4650 = vld [vmem:[%s4649] ss:$2 sm:$0xff]
        %s4651 = scalar_lea.vmem %s4069, 775 [#allocation2]
        %v4652 = vld [vmem:[%s4651] ss:$2 sm:$0xff]
        %s4653 = scalar_lea.vmem %s4069, 791 [#allocation2]
        %v4654 = vld [vmem:[%s4653] ss:$2 sm:$0xff]
        %s4655 = scalar_lea.vmem %s4069, 871 [#allocation2]
        %v4656 = vld [vmem:[%s4655] ss:$2 sm:$0xff]
        %s4657 = scalar_lea.vmem %s4069, 887 [#allocation2]
        %v4658 = vld [vmem:[%s4657] ss:$2 sm:$0xff]
        %s4659 = scalar_lea.vmem %s4069, 967 [#allocation2]
        %v4660 = vld [vmem:[%s4659] ss:$2 sm:$0xff]
        %s4661 = scalar_lea.vmem %s4069, 983 [#allocation2]
        %v4662 = vld [vmem:[%s4661] ss:$2 sm:$0xff]
        %s4663 = scalar_lea.vmem %s4069, 1063 [#allocation2]
        %v4664 = vld [vmem:[%s4663] ss:$2 sm:$0xff]
        %s4665 = scalar_lea.vmem %s4069, 1079 [#allocation2]
        %v4666 = vld [vmem:[%s4665] ss:$2 sm:$0xff]
        %s4667 = scalar_lea.vmem %s4069, 1159 [#allocation2]
        %v4668 = vld [vmem:[%s4667] ss:$2 sm:$0xff]
        %s4669 = scalar_lea.vmem %s4069, 1175 [#allocation2]
        %v4670 = vld [vmem:[%s4669] ss:$2 sm:$0xff]
        %s4671 = scalar_lea.vmem %s4069, 1255 [#allocation2]
        %v4672 = vld [vmem:[%s4671] ss:$2 sm:$0xff]
        %s4673 = scalar_lea.vmem %s4069, 1271 [#allocation2]
        %v4674 = vld [vmem:[%s4673] ss:$2 sm:$0xff]
        %s4675 = scalar_lea.vmem %s4069, 1351 [#allocation2]
        %v4676 = vld [vmem:[%s4675] ss:$2 sm:$0xff]
        %s4677 = scalar_lea.vmem %s4069, 1367 [#allocation2]
        %v4678 = vld [vmem:[%s4677] ss:$2 sm:$0xff]
        %s4679 = scalar_lea.vmem %s4069, 1447 [#allocation2]
        %v4680 = vld [vmem:[%s4679] ss:$2 sm:$0xff]
        %s4681 = scalar_lea.vmem %s4069, 1463 [#allocation2]
        %v4682 = vld [vmem:[%s4681] ss:$2 sm:$0xff]
        %v4683 = vmul.f32 %v4620, %v4056
        %v4684 = vmul.f32 %v4622, %v4057
        %v4685 = vmul.f32 %v4624, %v4056
        %v4686 = vmul.f32 %v4626, %v4057
        %v4687 = vmul.f32 %v4628, %v4056
        %v4688 = vmul.f32 %v4630, %v4057
        %v4689 = vmul.f32 %v4632, %v4056
        %v4690 = vmul.f32 %v4634, %v4057
        %v4691 = vmul.f32 %v4636, %v4056
        %v4692 = vmul.f32 %v4638, %v4057
        %v4693 = vmul.f32 %v4640, %v4056
        %v4694 = vmul.f32 %v4642, %v4057
        %v4695 = vmul.f32 %v4644, %v4056
        %v4696 = vmul.f32 %v4646, %v4057
        %v4697 = vmul.f32 %v4648, %v4056
        %v4698 = vmul.f32 %v4650, %v4057
        %v4699 = vmul.f32 %v4652, %v4056
        %v4700 = vmul.f32 %v4654, %v4057
        %v4701 = vmul.f32 %v4656, %v4056
        %v4702 = vmul.f32 %v4658, %v4057
        %v4703 = vmul.f32 %v4660, %v4056
        %v4704 = vmul.f32 %v4662, %v4057
        %v4705 = vmul.f32 %v4664, %v4056
        %v4706 = vmul.f32 %v4666, %v4057
        %v4707 = vmul.f32 %v4668, %v4056
        %v4708 = vmul.f32 %v4670, %v4057
        %v4709 = vmul.f32 %v4672, %v4056
        %v4710 = vmul.f32 %v4674, %v4057
        %v4711 = vmul.f32 %v4676, %v4056
        %v4712 = vmul.f32 %v4678, %v4057
        %v4713 = vmul.f32 %v4680, %v4056
        %v4714 = vmul.f32 %v4682, %v4057
        %v4715 = vadd.f32 %v4587, %v4683
        %v4716 = vadd.f32 %v4588, %v4684
        %v4717 = vadd.f32 %v4589, %v4685
        %v4718 = vadd.f32 %v4590, %v4686
        %v4719 = vadd.f32 %v4591, %v4687
        %v4720 = vadd.f32 %v4592, %v4688
        %v4721 = vadd.f32 %v4593, %v4689
        %v4722 = vadd.f32 %v4594, %v4690
        %v4723 = vadd.f32 %v4595, %v4691
        %v4724 = vadd.f32 %v4596, %v4692
        %v4725 = vadd.f32 %v4597, %v4693
        %v4726 = vadd.f32 %v4598, %v4694
        %v4727 = vadd.f32 %v4599, %v4695
        %v4728 = vadd.f32 %v4600, %v4696
        %v4729 = vadd.f32 %v4601, %v4697
        %v4730 = vadd.f32 %v4602, %v4698
        %v4731 = vadd.f32 %v4603, %v4699
        %v4732 = vadd.f32 %v4604, %v4700
        %v4733 = vadd.f32 %v4605, %v4701
        %v4734 = vadd.f32 %v4606, %v4702
        %v4735 = vadd.f32 %v4607, %v4703
        %v4736 = vadd.f32 %v4608, %v4704
        %v4737 = vadd.f32 %v4609, %v4705
        %v4738 = vadd.f32 %v4610, %v4706
        %v4739 = vadd.f32 %v4611, %v4707
        %v4740 = vadd.f32 %v4612, %v4708
        %v4741 = vadd.f32 %v4613, %v4709
        %v4742 = vadd.f32 %v4614, %v4710
        %v4743 = vadd.f32 %v4615, %v4711
        %v4744 = vadd.f32 %v4616, %v4712
        %v4745 = vadd.f32 %v4617, %v4713
        %v4746 = vadd.f32 %v4618, %v4714
        %s4747 = scalar_lea.vmem %s4069, 8 [#allocation2]
        %v4748 = vld [vmem:[%s4747] ss:$2 sm:$0xff]
        %s4749 = scalar_lea.vmem %s4069, 24 [#allocation2]
        %v4750 = vld [vmem:[%s4749] ss:$2 sm:$0xff]
        %s4751 = scalar_lea.vmem %s4069, 104 [#allocation2]
        %v4752 = vld [vmem:[%s4751] ss:$2 sm:$0xff]
        %s4753 = scalar_lea.vmem %s4069, 120 [#allocation2]
        %v4754 = vld [vmem:[%s4753] ss:$2 sm:$0xff]
        %s4755 = scalar_lea.vmem %s4069, 200 [#allocation2]
        %v4756 = vld [vmem:[%s4755] ss:$2 sm:$0xff]
        %s4757 = scalar_lea.vmem %s4069, 216 [#allocation2]
        %v4758 = vld [vmem:[%s4757] ss:$2 sm:$0xff]
        %s4759 = scalar_lea.vmem %s4069, 296 [#allocation2]
        %v4760 = vld [vmem:[%s4759] ss:$2 sm:$0xff]
        %s4761 = scalar_lea.vmem %s4069, 312 [#allocation2]
        %v4762 = vld [vmem:[%s4761] ss:$2 sm:$0xff]
        %s4763 = scalar_lea.vmem %s4069, 392 [#allocation2]
        %v4764 = vld [vmem:[%s4763] ss:$2 sm:$0xff]
        %s4765 = scalar_lea.vmem %s4069, 408 [#allocation2]
        %v4766 = vld [vmem:[%s4765] ss:$2 sm:$0xff]
        %s4767 = scalar_lea.vmem %s4069, 488 [#allocation2]
        %v4768 = vld [vmem:[%s4767] ss:$2 sm:$0xff]
        %s4769 = scalar_lea.vmem %s4069, 504 [#allocation2]
        %v4770 = vld [vmem:[%s4769] ss:$2 sm:$0xff]
        %s4771 = scalar_lea.vmem %s4069, 584 [#allocation2]
        %v4772 = vld [vmem:[%s4771] ss:$2 sm:$0xff]
        %s4773 = scalar_lea.vmem %s4069, 600 [#allocation2]
        %v4774 = vld [vmem:[%s4773] ss:$2 sm:$0xff]
        %s4775 = scalar_lea.vmem %s4069, 680 [#allocation2]
        %v4776 = vld [vmem:[%s4775] ss:$2 sm:$0xff]
        %s4777 = scalar_lea.vmem %s4069, 696 [#allocation2]
        %v4778 = vld [vmem:[%s4777] ss:$2 sm:$0xff]
        %s4779 = scalar_lea.vmem %s4069, 776 [#allocation2]
        %v4780 = vld [vmem:[%s4779] ss:$2 sm:$0xff]
        %s4781 = scalar_lea.vmem %s4069, 792 [#allocation2]
        %v4782 = vld [vmem:[%s4781] ss:$2 sm:$0xff]
        %s4783 = scalar_lea.vmem %s4069, 872 [#allocation2]
        %v4784 = vld [vmem:[%s4783] ss:$2 sm:$0xff]
        %s4785 = scalar_lea.vmem %s4069, 888 [#allocation2]
        %v4786 = vld [vmem:[%s4785] ss:$2 sm:$0xff]
        %s4787 = scalar_lea.vmem %s4069, 968 [#allocation2]
        %v4788 = vld [vmem:[%s4787] ss:$2 sm:$0xff]
        %s4789 = scalar_lea.vmem %s4069, 984 [#allocation2]
        %v4790 = vld [vmem:[%s4789] ss:$2 sm:$0xff]
        %s4791 = scalar_lea.vmem %s4069, 1064 [#allocation2]
        %v4792 = vld [vmem:[%s4791] ss:$2 sm:$0xff]
        %s4793 = scalar_lea.vmem %s4069, 1080 [#allocation2]
        %v4794 = vld [vmem:[%s4793] ss:$2 sm:$0xff]
        %s4795 = scalar_lea.vmem %s4069, 1160 [#allocation2]
        %v4796 = vld [vmem:[%s4795] ss:$2 sm:$0xff]
        %s4797 = scalar_lea.vmem %s4069, 1176 [#allocation2]
        %v4798 = vld [vmem:[%s4797] ss:$2 sm:$0xff]
        %s4799 = scalar_lea.vmem %s4069, 1256 [#allocation2]
        %v4800 = vld [vmem:[%s4799] ss:$2 sm:$0xff]
        %s4801 = scalar_lea.vmem %s4069, 1272 [#allocation2]
        %v4802 = vld [vmem:[%s4801] ss:$2 sm:$0xff]
        %s4803 = scalar_lea.vmem %s4069, 1352 [#allocation2]
        %v4804 = vld [vmem:[%s4803] ss:$2 sm:$0xff]
        %s4805 = scalar_lea.vmem %s4069, 1368 [#allocation2]
        %v4806 = vld [vmem:[%s4805] ss:$2 sm:$0xff]
        %s4807 = scalar_lea.vmem %s4069, 1448 [#allocation2]
        %v4808 = vld [vmem:[%s4807] ss:$2 sm:$0xff]
        %s4809 = scalar_lea.vmem %s4069, 1464 [#allocation2]
        %v4810 = vld [vmem:[%s4809] ss:$2 sm:$0xff]
        %v4811 = vmul.f32 %v4748, %v4058
        %v4812 = vmul.f32 %v4750, %v4059
        %v4813 = vmul.f32 %v4752, %v4058
        %v4814 = vmul.f32 %v4754, %v4059
        %v4815 = vmul.f32 %v4756, %v4058
        %v4816 = vmul.f32 %v4758, %v4059
        %v4817 = vmul.f32 %v4760, %v4058
        %v4818 = vmul.f32 %v4762, %v4059
        %v4819 = vmul.f32 %v4764, %v4058
        %v4820 = vmul.f32 %v4766, %v4059
        %v4821 = vmul.f32 %v4768, %v4058
        %v4822 = vmul.f32 %v4770, %v4059
        %v4823 = vmul.f32 %v4772, %v4058
        %v4824 = vmul.f32 %v4774, %v4059
        %v4825 = vmul.f32 %v4776, %v4058
        %v4826 = vmul.f32 %v4778, %v4059
        %v4827 = vmul.f32 %v4780, %v4058
        %v4828 = vmul.f32 %v4782, %v4059
        %v4829 = vmul.f32 %v4784, %v4058
        %v4830 = vmul.f32 %v4786, %v4059
        %v4831 = vmul.f32 %v4788, %v4058
        %v4832 = vmul.f32 %v4790, %v4059
        %v4833 = vmul.f32 %v4792, %v4058
        %v4834 = vmul.f32 %v4794, %v4059
        %v4835 = vmul.f32 %v4796, %v4058
        %v4836 = vmul.f32 %v4798, %v4059
        %v4837 = vmul.f32 %v4800, %v4058
        %v4838 = vmul.f32 %v4802, %v4059
        %v4839 = vmul.f32 %v4804, %v4058
        %v4840 = vmul.f32 %v4806, %v4059
        %v4841 = vmul.f32 %v4808, %v4058
        %v4842 = vmul.f32 %v4810, %v4059
        %v4843 = vadd.f32 %v4715, %v4811
        %v4844 = vadd.f32 %v4716, %v4812
        %v4845 = vadd.f32 %v4717, %v4813
        %v4846 = vadd.f32 %v4718, %v4814
        %v4847 = vadd.f32 %v4719, %v4815
        %v4848 = vadd.f32 %v4720, %v4816
        %v4849 = vadd.f32 %v4721, %v4817
        %v4850 = vadd.f32 %v4722, %v4818
        %v4851 = vadd.f32 %v4723, %v4819
        %v4852 = vadd.f32 %v4724, %v4820
        %v4853 = vadd.f32 %v4725, %v4821
        %v4854 = vadd.f32 %v4726, %v4822
        %v4855 = vadd.f32 %v4727, %v4823
        %v4856 = vadd.f32 %v4728, %v4824
        %v4857 = vadd.f32 %v4729, %v4825
        %v4858 = vadd.f32 %v4730, %v4826
        %v4859 = vadd.f32 %v4731, %v4827
        %v4860 = vadd.f32 %v4732, %v4828
        %v4861 = vadd.f32 %v4733, %v4829
        %v4862 = vadd.f32 %v4734, %v4830
        %v4863 = vadd.f32 %v4735, %v4831
        %v4864 = vadd.f32 %v4736, %v4832
        %v4865 = vadd.f32 %v4737, %v4833
        %v4866 = vadd.f32 %v4738, %v4834
        %v4867 = vadd.f32 %v4739, %v4835
        %v4868 = vadd.f32 %v4740, %v4836
        %v4869 = vadd.f32 %v4741, %v4837
        %v4870 = vadd.f32 %v4742, %v4838
        %v4871 = vadd.f32 %v4743, %v4839
        %v4872 = vadd.f32 %v4744, %v4840
        %v4873 = vadd.f32 %v4745, %v4841
        %v4874 = vadd.f32 %v4746, %v4842
        %s4875 = scalar_lea.vmem %s4069, 9 [#allocation2]
        %v4876 = vld [vmem:[%s4875] ss:$2 sm:$0xff]
        %s4877 = scalar_lea.vmem %s4069, 25 [#allocation2]
        %v4878 = vld [vmem:[%s4877] ss:$2 sm:$0xff]
        %s4879 = scalar_lea.vmem %s4069, 105 [#allocation2]
        %v4880 = vld [vmem:[%s4879] ss:$2 sm:$0xff]
        %s4881 = scalar_lea.vmem %s4069, 121 [#allocation2]
        %v4882 = vld [vmem:[%s4881] ss:$2 sm:$0xff]
        %s4883 = scalar_lea.vmem %s4069, 201 [#allocation2]
        %v4884 = vld [vmem:[%s4883] ss:$2 sm:$0xff]
        %s4885 = scalar_lea.vmem %s4069, 217 [#allocation2]
        %v4886 = vld [vmem:[%s4885] ss:$2 sm:$0xff]
        %s4887 = scalar_lea.vmem %s4069, 297 [#allocation2]
        %v4888 = vld [vmem:[%s4887] ss:$2 sm:$0xff]
        %s4889 = scalar_lea.vmem %s4069, 313 [#allocation2]
        %v4890 = vld [vmem:[%s4889] ss:$2 sm:$0xff]
        %s4891 = scalar_lea.vmem %s4069, 393 [#allocation2]
        %v4892 = vld [vmem:[%s4891] ss:$2 sm:$0xff]
        %s4893 = scalar_lea.vmem %s4069, 409 [#allocation2]
        %v4894 = vld [vmem:[%s4893] ss:$2 sm:$0xff]
        %s4895 = scalar_lea.vmem %s4069, 489 [#allocation2]
        %v4896 = vld [vmem:[%s4895] ss:$2 sm:$0xff]
        %s4897 = scalar_lea.vmem %s4069, 505 [#allocation2]
        %v4898 = vld [vmem:[%s4897] ss:$2 sm:$0xff]
        %s4899 = scalar_lea.vmem %s4069, 585 [#allocation2]
        %v4900 = vld [vmem:[%s4899] ss:$2 sm:$0xff]
        %s4901 = scalar_lea.vmem %s4069, 601 [#allocation2]
        %v4902 = vld [vmem:[%s4901] ss:$2 sm:$0xff]
        %s4903 = scalar_lea.vmem %s4069, 681 [#allocation2]
        %v4904 = vld [vmem:[%s4903] ss:$2 sm:$0xff]
        %s4905 = scalar_lea.vmem %s4069, 697 [#allocation2]
        %v4906 = vld [vmem:[%s4905] ss:$2 sm:$0xff]
        %s4907 = scalar_lea.vmem %s4069, 777 [#allocation2]
        %v4908 = vld [vmem:[%s4907] ss:$2 sm:$0xff]
        %s4909 = scalar_lea.vmem %s4069, 793 [#allocation2]
        %v4910 = vld [vmem:[%s4909] ss:$2 sm:$0xff]
        %s4911 = scalar_lea.vmem %s4069, 873 [#allocation2]
        %v4912 = vld [vmem:[%s4911] ss:$2 sm:$0xff]
        %s4913 = scalar_lea.vmem %s4069, 889 [#allocation2]
        %v4914 = vld [vmem:[%s4913] ss:$2 sm:$0xff]
        %s4915 = scalar_lea.vmem %s4069, 969 [#allocation2]
        %v4916 = vld [vmem:[%s4915] ss:$2 sm:$0xff]
        %s4917 = scalar_lea.vmem %s4069, 985 [#allocation2]
        %v4918 = vld [vmem:[%s4917] ss:$2 sm:$0xff]
        %s4919 = scalar_lea.vmem %s4069, 1065 [#allocation2]
        %v4920 = vld [vmem:[%s4919] ss:$2 sm:$0xff]
        %s4921 = scalar_lea.vmem %s4069, 1081 [#allocation2]
        %v4922 = vld [vmem:[%s4921] ss:$2 sm:$0xff]
        %s4923 = scalar_lea.vmem %s4069, 1161 [#allocation2]
        %v4924 = vld [vmem:[%s4923] ss:$2 sm:$0xff]
        %s4925 = scalar_lea.vmem %s4069, 1177 [#allocation2]
        %v4926 = vld [vmem:[%s4925] ss:$2 sm:$0xff]
        %s4927 = scalar_lea.vmem %s4069, 1257 [#allocation2]
        %v4928 = vld [vmem:[%s4927] ss:$2 sm:$0xff]
        %s4929 = scalar_lea.vmem %s4069, 1273 [#allocation2]
        %v4930 = vld [vmem:[%s4929] ss:$2 sm:$0xff]
        %s4931 = scalar_lea.vmem %s4069, 1353 [#allocation2]
        %v4932 = vld [vmem:[%s4931] ss:$2 sm:$0xff]
        %s4933 = scalar_lea.vmem %s4069, 1369 [#allocation2]
        %v4934 = vld [vmem:[%s4933] ss:$2 sm:$0xff]
        %s4935 = scalar_lea.vmem %s4069, 1449 [#allocation2]
        %v4936 = vld [vmem:[%s4935] ss:$2 sm:$0xff]
        %s4937 = scalar_lea.vmem %s4069, 1465 [#allocation2]
        %v4938 = vld [vmem:[%s4937] ss:$2 sm:$0xff]
        %v4939 = vmul.f32 %v4876, %v4060
        %v4940 = vmul.f32 %v4878, %v4061
        %v4941 = vmul.f32 %v4880, %v4060
        %v4942 = vmul.f32 %v4882, %v4061
        %v4943 = vmul.f32 %v4884, %v4060
        %v4944 = vmul.f32 %v4886, %v4061
        %v4945 = vmul.f32 %v4888, %v4060
        %v4946 = vmul.f32 %v4890, %v4061
        %v4947 = vmul.f32 %v4892, %v4060
        %v4948 = vmul.f32 %v4894, %v4061
        %v4949 = vmul.f32 %v4896, %v4060
        %v4950 = vmul.f32 %v4898, %v4061
        %v4951 = vmul.f32 %v4900, %v4060
        %v4952 = vmul.f32 %v4902, %v4061
        %v4953 = vmul.f32 %v4904, %v4060
        %v4954 = vmul.f32 %v4906, %v4061
        %v4955 = vmul.f32 %v4908, %v4060
        %v4956 = vmul.f32 %v4910, %v4061
        %v4957 = vmul.f32 %v4912, %v4060
        %v4958 = vmul.f32 %v4914, %v4061
        %v4959 = vmul.f32 %v4916, %v4060
        %v4960 = vmul.f32 %v4918, %v4061
        %v4961 = vmul.f32 %v4920, %v4060
        %v4962 = vmul.f32 %v4922, %v4061
        %v4963 = vmul.f32 %v4924, %v4060
        %v4964 = vmul.f32 %v4926, %v4061
        %v4965 = vmul.f32 %v4928, %v4060
        %v4966 = vmul.f32 %v4930, %v4061
        %v4967 = vmul.f32 %v4932, %v4060
        %v4968 = vmul.f32 %v4934, %v4061
        %v4969 = vmul.f32 %v4936, %v4060
        %v4970 = vmul.f32 %v4938, %v4061
        %v4971 = vadd.f32 %v4843, %v4939
        %v4972 = vadd.f32 %v4844, %v4940
        %v4973 = vadd.f32 %v4845, %v4941
        %v4974 = vadd.f32 %v4846, %v4942
        %v4975 = vadd.f32 %v4847, %v4943
        %v4976 = vadd.f32 %v4848, %v4944
        %v4977 = vadd.f32 %v4849, %v4945
        %v4978 = vadd.f32 %v4850, %v4946
        %v4979 = vadd.f32 %v4851, %v4947
        %v4980 = vadd.f32 %v4852, %v4948
        %v4981 = vadd.f32 %v4853, %v4949
        %v4982 = vadd.f32 %v4854, %v4950
        %v4983 = vadd.f32 %v4855, %v4951
        %v4984 = vadd.f32 %v4856, %v4952
        %v4985 = vadd.f32 %v4857, %v4953
        %v4986 = vadd.f32 %v4858, %v4954
        %v4987 = vadd.f32 %v4859, %v4955
        %v4988 = vadd.f32 %v4860, %v4956
        %v4989 = vadd.f32 %v4861, %v4957
        %v4990 = vadd.f32 %v4862, %v4958
        %v4991 = vadd.f32 %v4863, %v4959
        %v4992 = vadd.f32 %v4864, %v4960
        %v4993 = vadd.f32 %v4865, %v4961
        %v4994 = vadd.f32 %v4866, %v4962
        %v4995 = vadd.f32 %v4867, %v4963
        %v4996 = vadd.f32 %v4868, %v4964
        %v4997 = vadd.f32 %v4869, %v4965
        %v4998 = vadd.f32 %v4870, %v4966
        %v4999 = vadd.f32 %v4871, %v4967
        %v5000 = vadd.f32 %v4872, %v4968
        %v5001 = vadd.f32 %v4873, %v4969
        %v5002 = vadd.f32 %v4874, %v4970
        %s5003 = scalar_lea.vmem [#allocation2], 96
        %s5004 = scalar_lea.vmem %s5003, 7 [#allocation2]
        %v5005 = vld [vmem:[%s5004] ss:$2 sm:$0xff]
        %s5006 = scalar_lea.vmem %s5003, 23 [#allocation2]
        %v5007 = vld [vmem:[%s5006] ss:$2 sm:$0xff]
        %s5008 = scalar_lea.vmem %s5003, 103 [#allocation2]
        %v5009 = vld [vmem:[%s5008] ss:$2 sm:$0xff]
        %s5010 = scalar_lea.vmem %s5003, 119 [#allocation2]
        %v5011 = vld [vmem:[%s5010] ss:$2 sm:$0xff]
        %s5012 = scalar_lea.vmem %s5003, 199 [#allocation2]
        %v5013 = vld [vmem:[%s5012] ss:$2 sm:$0xff]
        %s5014 = scalar_lea.vmem %s5003, 215 [#allocation2]
        %v5015 = vld [vmem:[%s5014] ss:$2 sm:$0xff]
        %s5016 = scalar_lea.vmem %s5003, 295 [#allocation2]
        %v5017 = vld [vmem:[%s5016] ss:$2 sm:$0xff]
        %s5018 = scalar_lea.vmem %s5003, 311 [#allocation2]
        %v5019 = vld [vmem:[%s5018] ss:$2 sm:$0xff]
        %s5020 = scalar_lea.vmem %s5003, 391 [#allocation2]
        %v5021 = vld [vmem:[%s5020] ss:$2 sm:$0xff]
        %s5022 = scalar_lea.vmem %s5003, 407 [#allocation2]
        %v5023 = vld [vmem:[%s5022] ss:$2 sm:$0xff]
        %s5024 = scalar_lea.vmem %s5003, 487 [#allocation2]
        %v5025 = vld [vmem:[%s5024] ss:$2 sm:$0xff]
        %s5026 = scalar_lea.vmem %s5003, 503 [#allocation2]
        %v5027 = vld [vmem:[%s5026] ss:$2 sm:$0xff]
        %s5028 = scalar_lea.vmem %s5003, 583 [#allocation2]
        %v5029 = vld [vmem:[%s5028] ss:$2 sm:$0xff]
        %s5030 = scalar_lea.vmem %s5003, 599 [#allocation2]
        %v5031 = vld [vmem:[%s5030] ss:$2 sm:$0xff]
        %s5032 = scalar_lea.vmem %s5003, 679 [#allocation2]
        %v5033 = vld [vmem:[%s5032] ss:$2 sm:$0xff]
        %s5034 = scalar_lea.vmem %s5003, 695 [#allocation2]
        %v5035 = vld [vmem:[%s5034] ss:$2 sm:$0xff]
        %s5036 = scalar_lea.vmem %s5003, 775 [#allocation2]
        %v5037 = vld [vmem:[%s5036] ss:$2 sm:$0xff]
        %s5038 = scalar_lea.vmem %s5003, 791 [#allocation2]
        %v5039 = vld [vmem:[%s5038] ss:$2 sm:$0xff]
        %s5040 = scalar_lea.vmem %s5003, 871 [#allocation2]
        %v5041 = vld [vmem:[%s5040] ss:$2 sm:$0xff]
        %s5042 = scalar_lea.vmem %s5003, 887 [#allocation2]
        %v5043 = vld [vmem:[%s5042] ss:$2 sm:$0xff]
        %s5044 = scalar_lea.vmem %s5003, 967 [#allocation2]
        %v5045 = vld [vmem:[%s5044] ss:$2 sm:$0xff]
        %s5046 = scalar_lea.vmem %s5003, 983 [#allocation2]
        %v5047 = vld [vmem:[%s5046] ss:$2 sm:$0xff]
        %s5048 = scalar_lea.vmem %s5003, 1063 [#allocation2]
        %v5049 = vld [vmem:[%s5048] ss:$2 sm:$0xff]
        %s5050 = scalar_lea.vmem %s5003, 1079 [#allocation2]
        %v5051 = vld [vmem:[%s5050] ss:$2 sm:$0xff]
        %s5052 = scalar_lea.vmem %s5003, 1159 [#allocation2]
        %v5053 = vld [vmem:[%s5052] ss:$2 sm:$0xff]
        %s5054 = scalar_lea.vmem %s5003, 1175 [#allocation2]
        %v5055 = vld [vmem:[%s5054] ss:$2 sm:$0xff]
        %s5056 = scalar_lea.vmem %s5003, 1255 [#allocation2]
        %v5057 = vld [vmem:[%s5056] ss:$2 sm:$0xff]
        %s5058 = scalar_lea.vmem %s5003, 1271 [#allocation2]
        %v5059 = vld [vmem:[%s5058] ss:$2 sm:$0xff]
        %s5060 = scalar_lea.vmem %s5003, 1351 [#allocation2]
        %v5061 = vld [vmem:[%s5060] ss:$2 sm:$0xff]
        %s5062 = scalar_lea.vmem %s5003, 1367 [#allocation2]
        %v5063 = vld [vmem:[%s5062] ss:$2 sm:$0xff]
        %s5064 = scalar_lea.vmem %s5003, 1447 [#allocation2]
        %v5065 = vld [vmem:[%s5064] ss:$2 sm:$0xff]
        %s5066 = scalar_lea.vmem %s5003, 1463 [#allocation2]
        %v5067 = vld [vmem:[%s5066] ss:$2 sm:$0xff]
        %v5068 = vmul.f32 %v5005, %v4062
        %v5069 = vmul.f32 %v5007, %v4063
        %v5070 = vmul.f32 %v5009, %v4062
        %v5071 = vmul.f32 %v5011, %v4063
        %v5072 = vmul.f32 %v5013, %v4062
        %v5073 = vmul.f32 %v5015, %v4063
        %v5074 = vmul.f32 %v5017, %v4062
        %v5075 = vmul.f32 %v5019, %v4063
        %v5076 = vmul.f32 %v5021, %v4062
        %v5077 = vmul.f32 %v5023, %v4063
        %v5078 = vmul.f32 %v5025, %v4062
        %v5079 = vmul.f32 %v5027, %v4063
        %v5080 = vmul.f32 %v5029, %v4062
        %v5081 = vmul.f32 %v5031, %v4063
        %v5082 = vmul.f32 %v5033, %v4062
        %v5083 = vmul.f32 %v5035, %v4063
        %v5084 = vmul.f32 %v5037, %v4062
        %v5085 = vmul.f32 %v5039, %v4063
        %v5086 = vmul.f32 %v5041, %v4062
        %v5087 = vmul.f32 %v5043, %v4063
        %v5088 = vmul.f32 %v5045, %v4062
        %v5089 = vmul.f32 %v5047, %v4063
        %v5090 = vmul.f32 %v5049, %v4062
        %v5091 = vmul.f32 %v5051, %v4063
        %v5092 = vmul.f32 %v5053, %v4062
        %v5093 = vmul.f32 %v5055, %v4063
        %v5094 = vmul.f32 %v5057, %v4062
        %v5095 = vmul.f32 %v5059, %v4063
        %v5096 = vmul.f32 %v5061, %v4062
        %v5097 = vmul.f32 %v5063, %v4063
        %v5098 = vmul.f32 %v5065, %v4062
        %v5099 = vmul.f32 %v5067, %v4063
        %v5100 = vadd.f32 %v4971, %v5068
        %v5101 = vadd.f32 %v4972, %v5069
        %v5102 = vadd.f32 %v4973, %v5070
        %v5103 = vadd.f32 %v4974, %v5071
        %v5104 = vadd.f32 %v4975, %v5072
        %v5105 = vadd.f32 %v4976, %v5073
        %v5106 = vadd.f32 %v4977, %v5074
        %v5107 = vadd.f32 %v4978, %v5075
        %v5108 = vadd.f32 %v4979, %v5076
        %v5109 = vadd.f32 %v4980, %v5077
        %v5110 = vadd.f32 %v4981, %v5078
        %v5111 = vadd.f32 %v4982, %v5079
        %v5112 = vadd.f32 %v4983, %v5080
        %v5113 = vadd.f32 %v4984, %v5081
        %v5114 = vadd.f32 %v4985, %v5082
        %v5115 = vadd.f32 %v4986, %v5083
        %v5116 = vadd.f32 %v4987, %v5084
        %v5117 = vadd.f32 %v4988, %v5085
        %v5118 = vadd.f32 %v4989, %v5086
        %v5119 = vadd.f32 %v4990, %v5087
        %v5120 = vadd.f32 %v4991, %v5088
        %v5121 = vadd.f32 %v4992, %v5089
        %v5122 = vadd.f32 %v4993, %v5090
        %v5123 = vadd.f32 %v4994, %v5091
        %v5124 = vadd.f32 %v4995, %v5092
        %v5125 = vadd.f32 %v4996, %v5093
        %v5126 = vadd.f32 %v4997, %v5094
        %v5127 = vadd.f32 %v4998, %v5095
        %v5128 = vadd.f32 %v4999, %v5096
        %v5129 = vadd.f32 %v5000, %v5097
        %v5130 = vadd.f32 %v5001, %v5098
        %v5131 = vadd.f32 %v5002, %v5099
        %s5132 = scalar_lea.vmem %s5003, 8 [#allocation2]
        %v5133 = vld [vmem:[%s5132] ss:$2 sm:$0xff]
        %s5134 = scalar_lea.vmem %s5003, 24 [#allocation2]
        %v5135 = vld [vmem:[%s5134] ss:$2 sm:$0xff]
        %s5136 = scalar_lea.vmem %s5003, 104 [#allocation2]
        %v5137 = vld [vmem:[%s5136] ss:$2 sm:$0xff]
        %s5138 = scalar_lea.vmem %s5003, 120 [#allocation2]
        %v5139 = vld [vmem:[%s5138] ss:$2 sm:$0xff]
        %s5140 = scalar_lea.vmem %s5003, 200 [#allocation2]
        %v5141 = vld [vmem:[%s5140] ss:$2 sm:$0xff]
        %s5142 = scalar_lea.vmem %s5003, 216 [#allocation2]
        %v5143 = vld [vmem:[%s5142] ss:$2 sm:$0xff]
        %s5144 = scalar_lea.vmem %s5003, 296 [#allocation2]
        %v5145 = vld [vmem:[%s5144] ss:$2 sm:$0xff]
        %s5146 = scalar_lea.vmem %s5003, 312 [#allocation2]
        %v5147 = vld [vmem:[%s5146] ss:$2 sm:$0xff]
        %s5148 = scalar_lea.vmem %s5003, 392 [#allocation2]
        %v5149 = vld [vmem:[%s5148] ss:$2 sm:$0xff]
        %s5150 = scalar_lea.vmem %s5003, 408 [#allocation2]
        %v5151 = vld [vmem:[%s5150] ss:$2 sm:$0xff]
        %s5152 = scalar_lea.vmem %s5003, 488 [#allocation2]
        %v5153 = vld [vmem:[%s5152] ss:$2 sm:$0xff]
        %s5154 = scalar_lea.vmem %s5003, 504 [#allocation2]
        %v5155 = vld [vmem:[%s5154] ss:$2 sm:$0xff]
        %s5156 = scalar_lea.vmem %s5003, 584 [#allocation2]
        %v5157 = vld [vmem:[%s5156] ss:$2 sm:$0xff]
        %s5158 = scalar_lea.vmem %s5003, 600 [#allocation2]
        %v5159 = vld [vmem:[%s5158] ss:$2 sm:$0xff]
        %s5160 = scalar_lea.vmem %s5003, 680 [#allocation2]
        %v5161 = vld [vmem:[%s5160] ss:$2 sm:$0xff]
        %s5162 = scalar_lea.vmem %s5003, 696 [#allocation2]
        %v5163 = vld [vmem:[%s5162] ss:$2 sm:$0xff]
        %s5164 = scalar_lea.vmem %s5003, 776 [#allocation2]
        %v5165 = vld [vmem:[%s5164] ss:$2 sm:$0xff]
        %s5166 = scalar_lea.vmem %s5003, 792 [#allocation2]
        %v5167 = vld [vmem:[%s5166] ss:$2 sm:$0xff]
        %s5168 = scalar_lea.vmem %s5003, 872 [#allocation2]
        %v5169 = vld [vmem:[%s5168] ss:$2 sm:$0xff]
        %s5170 = scalar_lea.vmem %s5003, 888 [#allocation2]
        %v5171 = vld [vmem:[%s5170] ss:$2 sm:$0xff]
        %s5172 = scalar_lea.vmem %s5003, 968 [#allocation2]
        %v5173 = vld [vmem:[%s5172] ss:$2 sm:$0xff]
        %s5174 = scalar_lea.vmem %s5003, 984 [#allocation2]
        %v5175 = vld [vmem:[%s5174] ss:$2 sm:$0xff]
        %s5176 = scalar_lea.vmem %s5003, 1064 [#allocation2]
        %v5177 = vld [vmem:[%s5176] ss:$2 sm:$0xff]
        %s5178 = scalar_lea.vmem %s5003, 1080 [#allocation2]
        %v5179 = vld [vmem:[%s5178] ss:$2 sm:$0xff]
        %s5180 = scalar_lea.vmem %s5003, 1160 [#allocation2]
        %v5181 = vld [vmem:[%s5180] ss:$2 sm:$0xff]
        %s5182 = scalar_lea.vmem %s5003, 1176 [#allocation2]
        %v5183 = vld [vmem:[%s5182] ss:$2 sm:$0xff]
        %s5184 = scalar_lea.vmem %s5003, 1256 [#allocation2]
        %v5185 = vld [vmem:[%s5184] ss:$2 sm:$0xff]
        %s5186 = scalar_lea.vmem %s5003, 1272 [#allocation2]
        %v5187 = vld [vmem:[%s5186] ss:$2 sm:$0xff]
        %s5188 = scalar_lea.vmem %s5003, 1352 [#allocation2]
        %v5189 = vld [vmem:[%s5188] ss:$2 sm:$0xff]
        %s5190 = scalar_lea.vmem %s5003, 1368 [#allocation2]
        %v5191 = vld [vmem:[%s5190] ss:$2 sm:$0xff]
        %s5192 = scalar_lea.vmem %s5003, 1448 [#allocation2]
        %v5193 = vld [vmem:[%s5192] ss:$2 sm:$0xff]
        %s5194 = scalar_lea.vmem %s5003, 1464 [#allocation2]
        %v5195 = vld [vmem:[%s5194] ss:$2 sm:$0xff]
        %v5196 = vmul.f32 %v5133, %v4064
        %v5197 = vmul.f32 %v5135, %v4065
        %v5198 = vmul.f32 %v5137, %v4064
        %v5199 = vmul.f32 %v5139, %v4065
        %v5200 = vmul.f32 %v5141, %v4064
        %v5201 = vmul.f32 %v5143, %v4065
        %v5202 = vmul.f32 %v5145, %v4064
        %v5203 = vmul.f32 %v5147, %v4065
        %v5204 = vmul.f32 %v5149, %v4064
        %v5205 = vmul.f32 %v5151, %v4065
        %v5206 = vmul.f32 %v5153, %v4064
        %v5207 = vmul.f32 %v5155, %v4065
        %v5208 = vmul.f32 %v5157, %v4064
        %v5209 = vmul.f32 %v5159, %v4065
        %v5210 = vmul.f32 %v5161, %v4064
        %v5211 = vmul.f32 %v5163, %v4065
        %v5212 = vmul.f32 %v5165, %v4064
        %v5213 = vmul.f32 %v5167, %v4065
        %v5214 = vmul.f32 %v5169, %v4064
        %v5215 = vmul.f32 %v5171, %v4065
        %v5216 = vmul.f32 %v5173, %v4064
        %v5217 = vmul.f32 %v5175, %v4065
        %v5218 = vmul.f32 %v5177, %v4064
        %v5219 = vmul.f32 %v5179, %v4065
        %v5220 = vmul.f32 %v5181, %v4064
        %v5221 = vmul.f32 %v5183, %v4065
        %v5222 = vmul.f32 %v5185, %v4064
        %v5223 = vmul.f32 %v5187, %v4065
        %v5224 = vmul.f32 %v5189, %v4064
        %v5225 = vmul.f32 %v5191, %v4065
        %v5226 = vmul.f32 %v5193, %v4064
        %v5227 = vmul.f32 %v5195, %v4065
        %v5228 = vadd.f32 %v5100, %v5196
        %v5229 = vadd.f32 %v5101, %v5197
        %v5230 = vadd.f32 %v5102, %v5198
        %v5231 = vadd.f32 %v5103, %v5199
        %v5232 = vadd.f32 %v5104, %v5200
        %v5233 = vadd.f32 %v5105, %v5201
        %v5234 = vadd.f32 %v5106, %v5202
        %v5235 = vadd.f32 %v5107, %v5203
        %v5236 = vadd.f32 %v5108, %v5204
        %v5237 = vadd.f32 %v5109, %v5205
        %v5238 = vadd.f32 %v5110, %v5206
        %v5239 = vadd.f32 %v5111, %v5207
        %v5240 = vadd.f32 %v5112, %v5208
        %v5241 = vadd.f32 %v5113, %v5209
        %v5242 = vadd.f32 %v5114, %v5210
        %v5243 = vadd.f32 %v5115, %v5211
        %v5244 = vadd.f32 %v5116, %v5212
        %v5245 = vadd.f32 %v5117, %v5213
        %v5246 = vadd.f32 %v5118, %v5214
        %v5247 = vadd.f32 %v5119, %v5215
        %v5248 = vadd.f32 %v5120, %v5216
        %v5249 = vadd.f32 %v5121, %v5217
        %v5250 = vadd.f32 %v5122, %v5218
        %v5251 = vadd.f32 %v5123, %v5219
        %v5252 = vadd.f32 %v5124, %v5220
        %v5253 = vadd.f32 %v5125, %v5221
        %v5254 = vadd.f32 %v5126, %v5222
        %v5255 = vadd.f32 %v5127, %v5223
        %v5256 = vadd.f32 %v5128, %v5224
        %v5257 = vadd.f32 %v5129, %v5225
        %v5258 = vadd.f32 %v5130, %v5226
        %v5259 = vadd.f32 %v5131, %v5227
        %s5260 = scalar_lea.vmem %s5003, 9 [#allocation2]
        %v5261 = vld [vmem:[%s5260] ss:$2 sm:$0xff]
        %s5262 = scalar_lea.vmem %s5003, 25 [#allocation2]
        %v5263 = vld [vmem:[%s5262] ss:$2 sm:$0xff]
        %s5264 = scalar_lea.vmem %s5003, 105 [#allocation2]
        %v5265 = vld [vmem:[%s5264] ss:$2 sm:$0xff]
        %s5266 = scalar_lea.vmem %s5003, 121 [#allocation2]
        %v5267 = vld [vmem:[%s5266] ss:$2 sm:$0xff]
        %s5268 = scalar_lea.vmem %s5003, 201 [#allocation2]
        %v5269 = vld [vmem:[%s5268] ss:$2 sm:$0xff]
        %s5270 = scalar_lea.vmem %s5003, 217 [#allocation2]
        %v5271 = vld [vmem:[%s5270] ss:$2 sm:$0xff]
        %s5272 = scalar_lea.vmem %s5003, 297 [#allocation2]
        %v5273 = vld [vmem:[%s5272] ss:$2 sm:$0xff]
        %s5274 = scalar_lea.vmem %s5003, 313 [#allocation2]
        %v5275 = vld [vmem:[%s5274] ss:$2 sm:$0xff]
        %s5276 = scalar_lea.vmem %s5003, 393 [#allocation2]
        %v5277 = vld [vmem:[%s5276] ss:$2 sm:$0xff]
        %s5278 = scalar_lea.vmem %s5003, 409 [#allocation2]
        %v5279 = vld [vmem:[%s5278] ss:$2 sm:$0xff]
        %s5280 = scalar_lea.vmem %s5003, 489 [#allocation2]
        %v5281 = vld [vmem:[%s5280] ss:$2 sm:$0xff]
        %s5282 = scalar_lea.vmem %s5003, 505 [#allocation2]
        %v5283 = vld [vmem:[%s5282] ss:$2 sm:$0xff]
        %s5284 = scalar_lea.vmem %s5003, 585 [#allocation2]
        %v5285 = vld [vmem:[%s5284] ss:$2 sm:$0xff]
        %s5286 = scalar_lea.vmem %s5003, 601 [#allocation2]
        %v5287 = vld [vmem:[%s5286] ss:$2 sm:$0xff]
        %s5288 = scalar_lea.vmem %s5003, 681 [#allocation2]
        %v5289 = vld [vmem:[%s5288] ss:$2 sm:$0xff]
        %s5290 = scalar_lea.vmem %s5003, 697 [#allocation2]
        %v5291 = vld [vmem:[%s5290] ss:$2 sm:$0xff]
        %s5292 = scalar_lea.vmem %s5003, 777 [#allocation2]
        %v5293 = vld [vmem:[%s5292] ss:$2 sm:$0xff]
        %s5294 = scalar_lea.vmem %s5003, 793 [#allocation2]
        %v5295 = vld [vmem:[%s5294] ss:$2 sm:$0xff]
        %s5296 = scalar_lea.vmem %s5003, 873 [#allocation2]
        %v5297 = vld [vmem:[%s5296] ss:$2 sm:$0xff]
        %s5298 = scalar_lea.vmem %s5003, 889 [#allocation2]
        %v5299 = vld [vmem:[%s5298] ss:$2 sm:$0xff]
        %s5300 = scalar_lea.vmem %s5003, 969 [#allocation2]
        %v5301 = vld [vmem:[%s5300] ss:$2 sm:$0xff]
        %s5302 = scalar_lea.vmem %s5003, 985 [#allocation2]
        %v5303 = vld [vmem:[%s5302] ss:$2 sm:$0xff]
        %s5304 = scalar_lea.vmem %s5003, 1065 [#allocation2]
        %v5305 = vld [vmem:[%s5304] ss:$2 sm:$0xff]
        %s5306 = scalar_lea.vmem %s5003, 1081 [#allocation2]
        %v5307 = vld [vmem:[%s5306] ss:$2 sm:$0xff]
        %s5308 = scalar_lea.vmem %s5003, 1161 [#allocation2]
        %v5309 = vld [vmem:[%s5308] ss:$2 sm:$0xff]
        %s5310 = scalar_lea.vmem %s5003, 1177 [#allocation2]
        %v5311 = vld [vmem:[%s5310] ss:$2 sm:$0xff]
        %s5312 = scalar_lea.vmem %s5003, 1257 [#allocation2]
        %v5313 = vld [vmem:[%s5312] ss:$2 sm:$0xff]
        %s5314 = scalar_lea.vmem %s5003, 1273 [#allocation2]
        %v5315 = vld [vmem:[%s5314] ss:$2 sm:$0xff]
        %s5316 = scalar_lea.vmem %s5003, 1353 [#allocation2]
        %v5317 = vld [vmem:[%s5316] ss:$2 sm:$0xff]
        %s5318 = scalar_lea.vmem %s5003, 1369 [#allocation2]
        %v5319 = vld [vmem:[%s5318] ss:$2 sm:$0xff]
        %s5320 = scalar_lea.vmem %s5003, 1449 [#allocation2]
        %v5321 = vld [vmem:[%s5320] ss:$2 sm:$0xff]
        %s5322 = scalar_lea.vmem %s5003, 1465 [#allocation2]
        %v5323 = vld [vmem:[%s5322] ss:$2 sm:$0xff]
        %v5324 = vmul.f32 %v5261, %v4066
        %v5325 = vmul.f32 %v5263, %v4067
        %v5326 = vmul.f32 %v5265, %v4066
        %v5327 = vmul.f32 %v5267, %v4067
        %v5328 = vmul.f32 %v5269, %v4066
        %v5329 = vmul.f32 %v5271, %v4067
        %v5330 = vmul.f32 %v5273, %v4066
        %v5331 = vmul.f32 %v5275, %v4067
        %v5332 = vmul.f32 %v5277, %v4066
        %v5333 = vmul.f32 %v5279, %v4067
        %v5334 = vmul.f32 %v5281, %v4066
        %v5335 = vmul.f32 %v5283, %v4067
        %v5336 = vmul.f32 %v5285, %v4066
        %v5337 = vmul.f32 %v5287, %v4067
        %v5338 = vmul.f32 %v5289, %v4066
        %v5339 = vmul.f32 %v5291, %v4067
        %v5340 = vmul.f32 %v5293, %v4066
        %v5341 = vmul.f32 %v5295, %v4067
        %v5342 = vmul.f32 %v5297, %v4066
        %v5343 = vmul.f32 %v5299, %v4067
        %v5344 = vmul.f32 %v5301, %v4066
        %v5345 = vmul.f32 %v5303, %v4067
        %v5346 = vmul.f32 %v5305, %v4066
        %v5347 = vmul.f32 %v5307, %v4067
        %v5348 = vmul.f32 %v5309, %v4066
        %v5349 = vmul.f32 %v5311, %v4067
        %v5350 = vmul.f32 %v5313, %v4066
        %v5351 = vmul.f32 %v5315, %v4067
        %v5352 = vmul.f32 %v5317, %v4066
        %v5353 = vmul.f32 %v5319, %v4067
        %v5354 = vmul.f32 %v5321, %v4066
        %v5355 = vmul.f32 %v5323, %v4067
        %v5356 = vadd.f32 %v5228, %v5324
        %v5357 = vadd.f32 %v5229, %v5325
        %v5358 = vadd.f32 %v5230, %v5326
        %v5359 = vadd.f32 %v5231, %v5327
        %v5360 = vadd.f32 %v5232, %v5328
        %v5361 = vadd.f32 %v5233, %v5329
        %v5362 = vadd.f32 %v5234, %v5330
        %v5363 = vadd.f32 %v5235, %v5331
        %v5364 = vadd.f32 %v5236, %v5332
        %v5365 = vadd.f32 %v5237, %v5333
        %v5366 = vadd.f32 %v5238, %v5334
        %v5367 = vadd.f32 %v5239, %v5335
        %v5368 = vadd.f32 %v5240, %v5336
        %v5369 = vadd.f32 %v5241, %v5337
        %v5370 = vadd.f32 %v5242, %v5338
        %v5371 = vadd.f32 %v5243, %v5339
        %v5372 = vadd.f32 %v5244, %v5340
        %v5373 = vadd.f32 %v5245, %v5341
        %v5374 = vadd.f32 %v5246, %v5342
        %v5375 = vadd.f32 %v5247, %v5343
        %v5376 = vadd.f32 %v5248, %v5344
        %v5377 = vadd.f32 %v5249, %v5345
        %v5378 = vadd.f32 %v5250, %v5346
        %v5379 = vadd.f32 %v5251, %v5347
        %v5380 = vadd.f32 %v5252, %v5348
        %v5381 = vadd.f32 %v5253, %v5349
        %v5382 = vadd.f32 %v5254, %v5350
        %v5383 = vadd.f32 %v5255, %v5351
        %v5384 = vadd.f32 %v5256, %v5352
        %v5385 = vadd.f32 %v5257, %v5353
        %v5386 = vadd.f32 %v5258, %v5354
        %v5387 = vadd.f32 %v5259, %v5355
        %v5389 = vlaneseq
        %v5390 = vshrl.u32 %v5389, 7
        %v5391 = vsub.s32 0, %v5390
        %v5392 = vrot.slane %v4068, %v5391
        %v5394 = vadd.f32 %v5356, %v5392
        %v5395 = vadd.f32 %v5357, %v5392
        %v5396 = vadd.f32 %v5358, %v5392
        %v5397 = vadd.f32 %v5359, %v5392
        %v5398 = vadd.f32 %v5360, %v5392
        %v5399 = vadd.f32 %v5361, %v5392
        %v5400 = vadd.f32 %v5362, %v5392
        %v5401 = vadd.f32 %v5363, %v5392
        %v5402 = vadd.f32 %v5364, %v5392
        %v5403 = vadd.f32 %v5365, %v5392
        %v5404 = vadd.f32 %v5366, %v5392
        %v5405 = vadd.f32 %v5367, %v5392
        %v5406 = vadd.f32 %v5368, %v5392
        %v5407 = vadd.f32 %v5369, %v5392
        %v5408 = vadd.f32 %v5370, %v5392
        %v5409 = vadd.f32 %v5371, %v5392
        %v5410 = vadd.f32 %v5372, %v5392
        %v5411 = vadd.f32 %v5373, %v5392
        %v5412 = vadd.f32 %v5374, %v5392
        %v5413 = vadd.f32 %v5375, %v5392
        %v5414 = vadd.f32 %v5376, %v5392
        %v5415 = vadd.f32 %v5377, %v5392
        %v5416 = vadd.f32 %v5378, %v5392
        %v5417 = vadd.f32 %v5379, %v5392
        %v5418 = vadd.f32 %v5380, %v5392
        %v5419 = vadd.f32 %v5381, %v5392
        %v5420 = vadd.f32 %v5382, %v5392
        %v5421 = vadd.f32 %v5383, %v5392
        %v5422 = vadd.f32 %v5384, %v5392
        %v5423 = vadd.f32 %v5385, %v5392
        %v5424 = vadd.f32 %v5386, %v5392
        %v5425 = vadd.f32 %v5387, %v5392
        %v5426 = vmax.f32 %v5394, 0.0
        %v5427 = vmax.f32 %v5395, 0.0
        %v5428 = vmax.f32 %v5396, 0.0
        %v5429 = vmax.f32 %v5397, 0.0
        %v5430 = vmax.f32 %v5398, 0.0
        %v5431 = vmax.f32 %v5399, 0.0
        %v5432 = vmax.f32 %v5400, 0.0
        %v5433 = vmax.f32 %v5401, 0.0
        %v5434 = vmax.f32 %v5402, 0.0
        %v5435 = vmax.f32 %v5403, 0.0
        %v5436 = vmax.f32 %v5404, 0.0
        %v5437 = vmax.f32 %v5405, 0.0
        %v5438 = vmax.f32 %v5406, 0.0
        %v5439 = vmax.f32 %v5407, 0.0
        %v5440 = vmax.f32 %v5408, 0.0
        %v5441 = vmax.f32 %v5409, 0.0
        %v5442 = vmax.f32 %v5410, 0.0
        %v5443 = vmax.f32 %v5411, 0.0
        %v5444 = vmax.f32 %v5412, 0.0
        %v5445 = vmax.f32 %v5413, 0.0
        %v5446 = vmax.f32 %v5414, 0.0
        %v5447 = vmax.f32 %v5415, 0.0
        %v5448 = vmax.f32 %v5416, 0.0
        %v5449 = vmax.f32 %v5417, 0.0
        %v5450 = vmax.f32 %v5418, 0.0
        %v5451 = vmax.f32 %v5419, 0.0
        %v5452 = vmax.f32 %v5420, 0.0
        %v5453 = vmax.f32 %v5421, 0.0
        %v5454 = vmax.f32 %v5422, 0.0
        %v5455 = vmax.f32 %v5423, 0.0
        %v5456 = vmax.f32 %v5424, 0.0
        %v5457 = vmax.f32 %v5425, 0.0
        %v5458 = vpack.c.bf16 %v5427, %v5426
        %v5459 = vpack.c.bf16 %v5429, %v5428
        %v5460 = vpack.c.bf16 %v5431, %v5430
        %v5461 = vpack.c.bf16 %v5433, %v5432
        %v5462 = vpack.c.bf16 %v5435, %v5434
        %v5463 = vpack.c.bf16 %v5437, %v5436
        %v5464 = vpack.c.bf16 %v5439, %v5438
        %v5465 = vpack.c.bf16 %v5441, %v5440
        %v5466 = vpack.c.bf16 %v5443, %v5442
        %v5467 = vpack.c.bf16 %v5445, %v5444
        %v5468 = vpack.c.bf16 %v5447, %v5446
        %v5469 = vpack.c.bf16 %v5449, %v5448
        %v5470 = vpack.c.bf16 %v5451, %v5450
        %v5471 = vpack.c.bf16 %v5453, %v5452
        %v5472 = vpack.c.bf16 %v5455, %v5454
        %v5473 = vpack.c.bf16 %v5457, %v5456
        %v5474 = vld [vmem:[%s15] sm:$0xf]
        %v5475 = vld [vmem:[%s15 + $0x4] sm:$0xf]
        %v5476 = vld [vmem:[%s15 + $0x8] sm:$0xf]
        %v5477 = vld [vmem:[%s15 + $0xc] sm:$0xf]
        %v5478 = vld [vmem:[%s15 + $0x10] sm:$0xf]
        %v5479 = vld [vmem:[%s15 + $0x14] sm:$0xf]
        %v5480 = vld [vmem:[%s15 + $0x18] sm:$0xf]
        %v5481 = vld [vmem:[%s15 + $0x1c] sm:$0xf]
        %v5482 = vld [vmem:[%s15 + $0x20] sm:$0xf]
        %v5483 = vld [vmem:[%s15 + $0x24] sm:$0xf]
        %v5484 = vld [vmem:[%s15 + $0x28] sm:$0xf]
        %v5485 = vld [vmem:[%s15 + $0x2c] sm:$0xf]
        %v5486 = vld [vmem:[%s15 + $0x30] sm:$0xf]
        %v5487 = vld [vmem:[%s15 + $0x34] sm:$0xf]
        %v5488 = vld [vmem:[%s15 + $0x38] sm:$0xf]
        %v5489 = vld [vmem:[%s15 + $0x3c] sm:$0xf]
        %v5490 = vld [vmem:[%s17] sm:$0x1]
        %v5492 = vlaneseq
        %v5493 = vshrl.u32 %v5492, 7
        %v5494 = vsub.s32 0, %v5493
        %v5495 = vrot.slane %v5490, %v5494
        %v5513 = vunpack.c.l.b16 %v5474
        %v5514 = vunpack.c.l.b16 %v5475
        %v5515 = vunpack.c.l.b16 %v5476
        %v5516 = vunpack.c.l.b16 %v5477
        %v5517 = vunpack.c.l.b16 %v5478
        %v5518 = vunpack.c.l.b16 %v5479
        %v5519 = vunpack.c.l.b16 %v5480
        %v5520 = vunpack.c.l.b16 %v5481
        %v5521 = vunpack.c.l.b16 %v5482
        %v5522 = vunpack.c.l.b16 %v5483
        %v5523 = vunpack.c.l.b16 %v5484
        %v5524 = vunpack.c.l.b16 %v5485
        %v5525 = vunpack.c.l.b16 %v5486
        %v5526 = vunpack.c.l.b16 %v5487
        %v5527 = vunpack.c.l.b16 %v5488
        %v5528 = vunpack.c.l.b16 %v5489
        %v5529 = vpack.c.b16 %v5514, %v5513
        %v5530 = vpack.c.b16 %v5516, %v5515
        %v5531 = vpack.c.b16 %v5518, %v5517
        %v5532 = vpack.c.b16 %v5520, %v5519
        %v5533 = vpack.c.b16 %v5522, %v5521
        %v5534 = vpack.c.b16 %v5524, %v5523
        %v5535 = vpack.c.b16 %v5526, %v5525
        %v5536 = vpack.c.b16 %v5528, %v5527
        %5545 = vmatprep.subr.bf16.mxu0 0
        %5546 = vmatpush1.bf16.msra.mxu0 %v5536
        %5547 = vmatprep.subr.bf16.mxu0 0
        %5548 = vmatpush1.bf16.msra.mxu0 %v5535
        %5549 = vmatprep.subr.bf16.mxu0 0
        %5550 = vmatpush1.bf16.msra.mxu0 %v5534
        %5551 = vmatprep.subr.bf16.mxu0 0
        %5552 = vmatpush1.bf16.msra.mxu0 %v5533
        %5553 = vmatprep.subr.bf16.mxu0 0
        %5554 = vmatpush1.bf16.msra.mxu0 %v5532
        %5555 = vmatprep.subr.bf16.mxu0 0
        %5556 = vmatpush1.bf16.msra.mxu0 %v5531
        %5557 = vmatprep.subr.bf16.mxu0 0
        %5558 = vmatpush1.bf16.msra.mxu0 %v5530
        %5559 = vmatprep.subr.bf16.mxu0 0
        %5560 = vmatpush1.bf16.msra.mxu0 %v5529
        %5561 = vmatprep.subr.bf16.mxu0 0
        %5562 = vmatpush2.bf16.msra.mxu0 0
        %5563 = vmatprep.subr.bf16.mxu0 0
        %5564 = vmatpush2.bf16.msra.mxu0 0
        %5565 = vmatprep.subr.bf16.mxu0 0
        %5566 = vmatpush2.bf16.msra.mxu0 0
        %5567 = vmatprep.subr.bf16.mxu0 0
        %5568 = vmatpush2.bf16.msra.mxu0 0
        %5569 = vmatprep.subr.bf16.mxu0 0
        %5570 = vmatpush2.bf16.msra.mxu0 0
        %5571 = vmatprep.subr.bf16.mxu0 0
        %5572 = vmatpush2.bf16.msra.mxu0 0
        %5573 = vmatprep.subr.bf16.mxu0 0
        %5574 = vmatpush2.bf16.msra.mxu0 0
        %5575 = vmatprep.subr.bf16.mxu0 0
        %5576 = vmatpush2.bf16.msra.mxu0 0
        %5577 = vmatprep.mubr.bf16.mxu0 0
        %5578 = vmatmul.mubr.bf16.gmra.mxu0 %v5458
        %v5579 = vpop.f32.mrf.mxu0
        %v5580 = vadd.f32 %v5495, %v5579
        %v5581 = vpop.f32.mrf.mxu0
        %v5582 = vpop.f32.mrf.mxu0
        %v5583 = vadd.f32 %v5495, %v5582
        %v5584 = vpop.f32.mrf.mxu0
        %5585 = vmatprep.mubr.bf16.mxu0 0
        %5586 = vmatmul.mubr.bf16.gmra.mxu0 %v5459
        %v5587 = vpop.f32.mrf.mxu0
        %v5588 = vadd.f32 %v5495, %v5587
        %v5589 = vpop.f32.mrf.mxu0
        %v5590 = vpop.f32.mrf.mxu0
        %v5591 = vadd.f32 %v5495, %v5590
        %v5592 = vpop.f32.mrf.mxu0
        %5593 = vmatprep.mubr.bf16.mxu0 0
        %5594 = vmatmul.mubr.bf16.gmra.mxu0 %v5460
        %v5595 = vpop.f32.mrf.mxu0
        %v5596 = vadd.f32 %v5495, %v5595
        %v5597 = vpop.f32.mrf.mxu0
        %v5598 = vpop.f32.mrf.mxu0
        %v5599 = vadd.f32 %v5495, %v5598
        %v5600 = vpop.f32.mrf.mxu0
        %5601 = vmatprep.mubr.bf16.mxu0 0
        %5602 = vmatmul.mubr.bf16.gmra.mxu0 %v5461
        %v5603 = vpop.f32.mrf.mxu0
        %v5604 = vadd.f32 %v5495, %v5603
        %v5605 = vpop.f32.mrf.mxu0
        %v5606 = vpop.f32.mrf.mxu0
        %v5607 = vadd.f32 %v5495, %v5606
        %v5608 = vpop.f32.mrf.mxu0
        %5609 = vmatprep.mubr.bf16.mxu0 0
        %5610 = vmatmul.mubr.bf16.gmra.mxu0 %v5462
        %v5611 = vpop.f32.mrf.mxu0
        %v5612 = vadd.f32 %v5495, %v5611
        %v5613 = vpop.f32.mrf.mxu0
        %v5614 = vpop.f32.mrf.mxu0
        %v5615 = vadd.f32 %v5495, %v5614
        %v5616 = vpop.f32.mrf.mxu0
        %5617 = vmatprep.mubr.bf16.mxu0 0
        %5618 = vmatmul.mubr.bf16.gmra.mxu0 %v5463
        %v5619 = vpop.f32.mrf.mxu0
        %v5620 = vadd.f32 %v5495, %v5619
        %v5621 = vpop.f32.mrf.mxu0
        %v5622 = vpop.f32.mrf.mxu0
        %v5623 = vadd.f32 %v5495, %v5622
        %v5624 = vpop.f32.mrf.mxu0
        %5625 = vmatprep.mubr.bf16.mxu0 0
        %5626 = vmatmul.mubr.bf16.gmra.mxu0 %v5464
        %v5627 = vpop.f32.mrf.mxu0
        %v5628 = vadd.f32 %v5495, %v5627
        %v5629 = vpop.f32.mrf.mxu0
        %v5630 = vpop.f32.mrf.mxu0
        %v5631 = vadd.f32 %v5495, %v5630
        %v5632 = vpop.f32.mrf.mxu0
        %5633 = vmatprep.mubr.bf16.mxu0 0
        %5634 = vmatmul.mubr.bf16.gmra.mxu0 %v5465
        %v5635 = vpop.f32.mrf.mxu0
        %v5636 = vadd.f32 %v5495, %v5635
        %v5637 = vpop.f32.mrf.mxu0
        %v5638 = vpop.f32.mrf.mxu0
        %v5639 = vadd.f32 %v5495, %v5638
        %v5640 = vpop.f32.mrf.mxu0
        %5641 = vmatprep.mubr.bf16.mxu0 0
        %5642 = vmatmul.mubr.bf16.gmra.mxu0 %v5466
        %v5643 = vpop.f32.mrf.mxu0
        %v5644 = vadd.f32 %v5495, %v5643
        %v5645 = vpop.f32.mrf.mxu0
        %v5646 = vpop.f32.mrf.mxu0
        %v5647 = vadd.f32 %v5495, %v5646
        %v5648 = vpop.f32.mrf.mxu0
        %5649 = vmatprep.mubr.bf16.mxu0 0
        %5650 = vmatmul.mubr.bf16.gmra.mxu0 %v5467
        %v5651 = vpop.f32.mrf.mxu0
        %v5652 = vadd.f32 %v5495, %v5651
        %v5653 = vpop.f32.mrf.mxu0
        %v5654 = vpop.f32.mrf.mxu0
        %v5655 = vadd.f32 %v5495, %v5654
        %v5656 = vpop.f32.mrf.mxu0
        %5657 = vmatprep.mubr.bf16.mxu0 0
        %5658 = vmatmul.mubr.bf16.gmra.mxu0 %v5468
        %v5659 = vpop.f32.mrf.mxu0
        %v5660 = vadd.f32 %v5495, %v5659
        %v5661 = vpop.f32.mrf.mxu0
        %v5662 = vpop.f32.mrf.mxu0
        %v5663 = vadd.f32 %v5495, %v5662
        %v5664 = vpop.f32.mrf.mxu0
        %5665 = vmatprep.mubr.bf16.mxu0 0
        %5666 = vmatmul.mubr.bf16.gmra.mxu0 %v5469
        %v5667 = vpop.f32.mrf.mxu0
        %v5668 = vadd.f32 %v5495, %v5667
        %v5669 = vpop.f32.mrf.mxu0
        %v5670 = vpop.f32.mrf.mxu0
        %v5671 = vadd.f32 %v5495, %v5670
        %v5672 = vpop.f32.mrf.mxu0
        %5673 = vmatprep.mubr.bf16.mxu0 0
        %5674 = vmatmul.mubr.bf16.gmra.mxu0 %v5470
        %v5675 = vpop.f32.mrf.mxu0
        %v5676 = vadd.f32 %v5495, %v5675
        %v5677 = vpop.f32.mrf.mxu0
        %v5678 = vpop.f32.mrf.mxu0
        %v5679 = vadd.f32 %v5495, %v5678
        %v5680 = vpop.f32.mrf.mxu0
        %5681 = vmatprep.mubr.bf16.mxu0 0
        %5682 = vmatmul.mubr.bf16.gmra.mxu0 %v5471
        %v5683 = vpop.f32.mrf.mxu0
        %v5684 = vadd.f32 %v5495, %v5683
        %v5685 = vpop.f32.mrf.mxu0
        %v5686 = vpop.f32.mrf.mxu0
        %v5687 = vadd.f32 %v5495, %v5686
        %v5688 = vpop.f32.mrf.mxu0
        %5689 = vmatprep.mubr.bf16.mxu0 0
        %5690 = vmatmul.mubr.bf16.gmra.mxu0 %v5472
        %v5691 = vpop.f32.mrf.mxu0
        %v5692 = vadd.f32 %v5495, %v5691
        %v5693 = vpop.f32.mrf.mxu0
        %v5694 = vpop.f32.mrf.mxu0
        %v5695 = vadd.f32 %v5495, %v5694
        %v5696 = vpop.f32.mrf.mxu0
        %5697 = vmatprep.mubr.bf16.mxu0 0
        %5698 = vmatmul.mubr.bf16.gmra.mxu0 %v5473
        %v5699 = vpop.f32.mrf.mxu0
        %v5700 = vadd.f32 %v5495, %v5699
        %v5701 = vpop.f32.mrf.mxu0
        %v5702 = vpop.f32.mrf.mxu0
        %v5703 = vadd.f32 %v5495, %v5702
        %v5704 = vpop.f32.mrf.mxu0
        %5705 = vdwg.mxu0
        %v5706 = vmax.f32 %v5580, 0.0
        %v5707 = vmax.f32 %v5583, 0.0
        %v5708 = vmax.f32 %v5588, 0.0
        %v5709 = vmax.f32 %v5591, 0.0
        %v5710 = vmax.f32 %v5596, 0.0
        %v5711 = vmax.f32 %v5599, 0.0
        %v5712 = vmax.f32 %v5604, 0.0
        %v5713 = vmax.f32 %v5607, 0.0
        %v5714 = vmax.f32 %v5612, 0.0
        %v5715 = vmax.f32 %v5615, 0.0
        %v5716 = vmax.f32 %v5620, 0.0
        %v5717 = vmax.f32 %v5623, 0.0
        %v5718 = vmax.f32 %v5628, 0.0
        %v5719 = vmax.f32 %v5631, 0.0
        %v5720 = vmax.f32 %v5636, 0.0
        %v5721 = vmax.f32 %v5639, 0.0
        %v5722 = vmax.f32 %v5644, 0.0
        %v5723 = vmax.f32 %v5647, 0.0
        %v5724 = vmax.f32 %v5652, 0.0
        %v5725 = vmax.f32 %v5655, 0.0
        %v5726 = vmax.f32 %v5660, 0.0
        %v5727 = vmax.f32 %v5663, 0.0
        %v5728 = vmax.f32 %v5668, 0.0
        %v5729 = vmax.f32 %v5671, 0.0
        %v5730 = vmax.f32 %v5676, 0.0
        %v5731 = vmax.f32 %v5679, 0.0
        %v5732 = vmax.f32 %v5684, 0.0
        %v5733 = vmax.f32 %v5687, 0.0
        %v5734 = vmax.f32 %v5692, 0.0
        %v5735 = vmax.f32 %v5695, 0.0
        %v5736 = vmax.f32 %v5700, 0.0
        %v5737 = vmax.f32 %v5703, 0.0
        %vm5738 = vcmask 130048
        %5739 = vst.msk [vmem:[#allocation4] sm:$0xff] %vm5738, %v5706
        %5740 = vst.msk [vmem:[#allocation4 + $0x8] sm:$0xff] %vm5738, %v5707
        %5741 = vst.msk [vmem:[#allocation4 + $0x10] sm:$0xff] %vm5738, %v5708
        %5742 = vst.msk [vmem:[#allocation4 + $0x18] sm:$0xff] %vm5738, %v5709
        %5743 = vst.msk [vmem:[#allocation4 + $0x20] sm:$0xff] %vm5738, %v5710
        %5744 = vst.msk [vmem:[#allocation4 + $0x28] sm:$0xff] %vm5738, %v5711
        %5745 = vst.msk [vmem:[#allocation4 + $0x30] sm:$0xff] %vm5738, %v5712
        %5746 = vst.msk [vmem:[#allocation4 + $0x38] sm:$0xff] %vm5738, %v5713
        %5747 = vst.msk [vmem:[#allocation4 + $0x40] sm:$0xff] %vm5738, %v5714
        %5748 = vst.msk [vmem:[#allocation4 + $0x48] sm:$0xff] %vm5738, %v5715
        %5749 = vst.msk [vmem:[#allocation4 + $0x50] sm:$0xff] %vm5738, %v5716
        %5750 = vst.msk [vmem:[#allocation4 + $0x58] sm:$0xff] %vm5738, %v5717
        %5751 = vst.msk [vmem:[#allocation4 + $0x60] sm:$0xff] %vm5738, %v5718
        %5752 = vst.msk [vmem:[#allocation4 + $0x68] sm:$0xff] %vm5738, %v5719
        %5753 = vst.msk [vmem:[#allocation4 + $0x70] sm:$0xff] %vm5738, %v5720
        %5754 = vst.msk [vmem:[#allocation4 + $0x78] sm:$0xff] %vm5738, %v5721
        %5755 = vst.msk [vmem:[#allocation4 + $0x80] sm:$0xff] %vm5738, %v5722
        %5756 = vst.msk [vmem:[#allocation4 + $0x88] sm:$0xff] %vm5738, %v5723
        %5757 = vst.msk [vmem:[#allocation4 + $0x90] sm:$0xff] %vm5738, %v5724
        %5758 = vst.msk [vmem:[#allocation4 + $0x98] sm:$0xff] %vm5738, %v5725
        %5759 = vst.msk [vmem:[#allocation4 + $0xa0] sm:$0xff] %vm5738, %v5726
        %5760 = vst.msk [vmem:[#allocation4 + $0xa8] sm:$0xff] %vm5738, %v5727
        %5761 = vst.msk [vmem:[#allocation4 + $0xb0] sm:$0xff] %vm5738, %v5728
        %5762 = vst.msk [vmem:[#allocation4 + $0xb8] sm:$0xff] %vm5738, %v5729
        %5763 = vst.msk [vmem:[#allocation4 + $0xc0] sm:$0xff] %vm5738, %v5730
        %5764 = vst.msk [vmem:[#allocation4 + $0xc8] sm:$0xff] %vm5738, %v5731
        %5765 = vst.msk [vmem:[#allocation4 + $0xd0] sm:$0xff] %vm5738, %v5732
        %5766 = vst.msk [vmem:[#allocation4 + $0xd8] sm:$0xff] %vm5738, %v5733
        %5767 = vst.msk [vmem:[#allocation4 + $0xe0] sm:$0xff] %vm5738, %v5734
        %5768 = vst.msk [vmem:[#allocation4 + $0xe8] sm:$0xff] %vm5738, %v5735
        %5769 = vst.msk [vmem:[#allocation4 + $0xf0] sm:$0xff] %vm5738, %v5736
        %5770 = vst.msk [vmem:[#allocation4 + $0xf8] sm:$0xff] %vm5738, %v5737
        %5803 = vrot.lane.b32.xlu0 %v4018, 16
        %v5804 = vpop.permute.xlu0 %5803
        %5805 = vrot.lane.b32.xlu0 %v4019, 16
        %v5806 = vpop.permute.xlu0 %5805
        %5807 = vrot.lane.b32.xlu0 %v4020, 16
        %v5808 = vpop.permute.xlu0 %5807
        %5809 = vrot.lane.b32.xlu0 %v4021, 16
        %v5810 = vpop.permute.xlu0 %5809
        %5811 = vrot.lane.b32.xlu0 %v4022, 16
        %v5812 = vpop.permute.xlu0 %5811
        %5813 = vrot.lane.b32.xlu0 %v4023, 16
        %v5814 = vpop.permute.xlu0 %5813
        %5815 = vrot.lane.b32.xlu0 %v4024, 16
        %v5816 = vpop.permute.xlu0 %5815
        %5817 = vrot.lane.b32.xlu0 %v4025, 16
        %v5818 = vpop.permute.xlu0 %5817
        %5819 = vrot.lane.b32.xlu0 %v4026, 16
        %v5820 = vpop.permute.xlu0 %5819
        %5821 = vrot.lane.b32.xlu0 %v4027, 16
        %v5822 = vpop.permute.xlu0 %5821
        %5823 = vrot.lane.b32.xlu0 %v4028, 16
        %v5824 = vpop.permute.xlu0 %5823
        %5825 = vrot.lane.b32.xlu0 %v4029, 16
        %v5826 = vpop.permute.xlu0 %5825
        %5827 = vrot.lane.b32.xlu0 %v4030, 16
        %v5828 = vpop.permute.xlu0 %5827
        %5829 = vrot.lane.b32.xlu0 %v4031, 16
        %v5830 = vpop.permute.xlu0 %5829
        %5831 = vrot.lane.b32.xlu0 %v4032, 16
        %v5832 = vpop.permute.xlu0 %5831
        %5833 = vrot.lane.b32.xlu0 %v4033, 16
        %v5834 = vpop.permute.xlu0 %5833
        %5835 = vrot.lane.b32.xlu0 %v4034, 16
        %v5836 = vpop.permute.xlu0 %5835
        %5837 = vrot.lane.b32.xlu0 %v4035, 16
        %v5838 = vpop.permute.xlu0 %5837
        %5839 = vrot.lane.b32.xlu0 %v4036, 16
        %v5840 = vpop.permute.xlu0 %5839
        %5841 = vrot.lane.b32.xlu0 %v4037, 16
        %v5842 = vpop.permute.xlu0 %5841
        %5843 = vrot.lane.b32.xlu0 %v4038, 16
        %v5844 = vpop.permute.xlu0 %5843
        %5845 = vrot.lane.b32.xlu0 %v4039, 16
        %v5846 = vpop.permute.xlu0 %5845
        %5847 = vrot.lane.b32.xlu0 %v4040, 16
        %v5848 = vpop.permute.xlu0 %5847
        %5849 = vrot.lane.b32.xlu0 %v4041, 16
        %v5850 = vpop.permute.xlu0 %5849
        %5851 = vrot.lane.b32.xlu0 %v4042, 16
        %v5852 = vpop.permute.xlu0 %5851
        %5853 = vrot.lane.b32.xlu0 %v4043, 16
        %v5854 = vpop.permute.xlu0 %5853
        %5855 = vrot.lane.b32.xlu0 %v4044, 16
        %v5856 = vpop.permute.xlu0 %5855
        %5857 = vrot.lane.b32.xlu0 %v4045, 16
        %v5858 = vpop.permute.xlu0 %5857
        %5859 = vrot.lane.b32.xlu0 %v4046, 16
        %v5860 = vpop.permute.xlu0 %5859
        %5861 = vrot.lane.b32.xlu0 %v4047, 16
        %v5862 = vpop.permute.xlu0 %5861
        %5863 = vrot.lane.b32.xlu0 %v4048, 16
        %v5864 = vpop.permute.xlu0 %5863
        %5865 = vrot.lane.b32.xlu0 %v4049, 16
        %v5866 = vpop.permute.xlu0 %5865
        %vm5899 = vcmask 326784
        %5900 = vst.msk [vmem:[#allocation4] sm:$0xff] %vm5899, %v5804
        %5901 = vst.msk [vmem:[#allocation4 + $0x8] sm:$0xff] %vm5899, %v5806
        %5902 = vst.msk [vmem:[#allocation4 + $0x10] sm:$0xff] %vm5899, %v5808
        %5903 = vst.msk [vmem:[#allocation4 + $0x18] sm:$0xff] %vm5899, %v5810
        %5904 = vst.msk [vmem:[#allocation4 + $0x20] sm:$0xff] %vm5899, %v5812
        %5905 = vst.msk [vmem:[#allocation4 + $0x28] sm:$0xff] %vm5899, %v5814
        %5906 = vst.msk [vmem:[#allocation4 + $0x30] sm:$0xff] %vm5899, %v5816
        %5907 = vst.msk [vmem:[#allocation4 + $0x38] sm:$0xff] %vm5899, %v5818
        %5908 = vst.msk [vmem:[#allocation4 + $0x40] sm:$0xff] %vm5899, %v5820
        %5909 = vst.msk [vmem:[#allocation4 + $0x48] sm:$0xff] %vm5899, %v5822
        %5910 = vst.msk [vmem:[#allocation4 + $0x50] sm:$0xff] %vm5899, %v5824
        %5911 = vst.msk [vmem:[#allocation4 + $0x58] sm:$0xff] %vm5899, %v5826
        %5912 = vst.msk [vmem:[#allocation4 + $0x60] sm:$0xff] %vm5899, %v5828
        %5913 = vst.msk [vmem:[#allocation4 + $0x68] sm:$0xff] %vm5899, %v5830
        %5914 = vst.msk [vmem:[#allocation4 + $0x70] sm:$0xff] %vm5899, %v5832
        %5915 = vst.msk [vmem:[#allocation4 + $0x78] sm:$0xff] %vm5899, %v5834
        %5916 = vst.msk [vmem:[#allocation4 + $0x80] sm:$0xff] %vm5899, %v5836
        %5917 = vst.msk [vmem:[#allocation4 + $0x88] sm:$0xff] %vm5899, %v5838
        %5918 = vst.msk [vmem:[#allocation4 + $0x90] sm:$0xff] %vm5899, %v5840
        %5919 = vst.msk [vmem:[#allocation4 + $0x98] sm:$0xff] %vm5899, %v5842
        %5920 = vst.msk [vmem:[#allocation4 + $0xa0] sm:$0xff] %vm5899, %v5844
        %5921 = vst.msk [vmem:[#allocation4 + $0xa8] sm:$0xff] %vm5899, %v5846
        %5922 = vst.msk [vmem:[#allocation4 + $0xb0] sm:$0xff] %vm5899, %v5848
        %5923 = vst.msk [vmem:[#allocation4 + $0xb8] sm:$0xff] %vm5899, %v5850
        %5924 = vst.msk [vmem:[#allocation4 + $0xc0] sm:$0xff] %vm5899, %v5852
        %5925 = vst.msk [vmem:[#allocation4 + $0xc8] sm:$0xff] %vm5899, %v5854
        %5926 = vst.msk [vmem:[#allocation4 + $0xd0] sm:$0xff] %vm5899, %v5856
        %5927 = vst.msk [vmem:[#allocation4 + $0xd8] sm:$0xff] %vm5899, %v5858
        %5928 = vst.msk [vmem:[#allocation4 + $0xe0] sm:$0xff] %vm5899, %v5860
        %5929 = vst.msk [vmem:[#allocation4 + $0xe8] sm:$0xff] %vm5899, %v5862
        %5930 = vst.msk [vmem:[#allocation4 + $0xf0] sm:$0xff] %vm5899, %v5864
        %5931 = vst.msk [vmem:[#allocation4 + $0xf8] sm:$0xff] %vm5899, %v5866
        %v5932 = vld [vmem:[#allocation4] sm:$0xff]
        %v5933 = vld [vmem:[#allocation4 + $0x8] sm:$0xff]
        %v5934 = vld [vmem:[#allocation4 + $0x10] sm:$0xff]
        %v5935 = vld [vmem:[#allocation4 + $0x18] sm:$0xff]
        %v5936 = vld [vmem:[#allocation4 + $0x20] sm:$0xff]
        %v5937 = vld [vmem:[#allocation4 + $0x28] sm:$0xff]
        %v5938 = vld [vmem:[#allocation4 + $0x30] sm:$0xff]
        %v5939 = vld [vmem:[#allocation4 + $0x38] sm:$0xff]
        %v5940 = vld [vmem:[#allocation4 + $0x40] sm:$0xff]
        %v5941 = vld [vmem:[#allocation4 + $0x48] sm:$0xff]
        %v5942 = vld [vmem:[#allocation4 + $0x50] sm:$0xff]
        %v5943 = vld [vmem:[#allocation4 + $0x58] sm:$0xff]
        %v5944 = vld [vmem:[#allocation4 + $0x60] sm:$0xff]
        %v5945 = vld [vmem:[#allocation4 + $0x68] sm:$0xff]
        %v5946 = vld [vmem:[#allocation4 + $0x70] sm:$0xff]
        %v5947 = vld [vmem:[#allocation4 + $0x78] sm:$0xff]
        %v5948 = vld [vmem:[#allocation4 + $0x80] sm:$0xff]
        %v5949 = vld [vmem:[#allocation4 + $0x88] sm:$0xff]
        %v5950 = vld [vmem:[#allocation4 + $0x90] sm:$0xff]
        %v5951 = vld [vmem:[#allocation4 + $0x98] sm:$0xff]
        %v5952 = vld [vmem:[#allocation4 + $0xa0] sm:$0xff]
        %v5953 = vld [vmem:[#allocation4 + $0xa8] sm:$0xff]
        %v5954 = vld [vmem:[#allocation4 + $0xb0] sm:$0xff]
        %v5955 = vld [vmem:[#allocation4 + $0xb8] sm:$0xff]
        %v5956 = vld [vmem:[#allocation4 + $0xc0] sm:$0xff]
        %v5957 = vld [vmem:[#allocation4 + $0xc8] sm:$0xff]
        %v5958 = vld [vmem:[#allocation4 + $0xd0] sm:$0xff]
        %v5959 = vld [vmem:[#allocation4 + $0xd8] sm:$0xff]
        %v5960 = vld [vmem:[#allocation4 + $0xe0] sm:$0xff]
        %v5961 = vld [vmem:[#allocation4 + $0xe8] sm:$0xff]
        %v5962 = vld [vmem:[#allocation4 + $0xf0] sm:$0xff]
        %v5963 = vld [vmem:[#allocation4 + $0xf8] sm:$0xff]
        %v5964 = vpack.c.bf16 %v5933, %v5932
        %v5965 = vpack.c.bf16 %v5935, %v5934
        %v5966 = vpack.c.bf16 %v5937, %v5936
        %v5967 = vpack.c.bf16 %v5939, %v5938
        %v5968 = vpack.c.bf16 %v5941, %v5940
        %v5969 = vpack.c.bf16 %v5943, %v5942
        %v5970 = vpack.c.bf16 %v5945, %v5944
        %v5971 = vpack.c.bf16 %v5947, %v5946
        %v5972 = vpack.c.bf16 %v5949, %v5948
        %v5973 = vpack.c.bf16 %v5951, %v5950
        %v5974 = vpack.c.bf16 %v5953, %v5952
        %v5975 = vpack.c.bf16 %v5955, %v5954
        %v5976 = vpack.c.bf16 %v5957, %v5956
        %v5977 = vpack.c.bf16 %v5959, %v5958
        %v5978 = vpack.c.bf16 %v5961, %v5960
        %v5979 = vpack.c.bf16 %v5963, %v5962
        %v5980 = vld [vmem:[%s19] sm:$0xf]
        %v5981 = vld [vmem:[%s19 + $0x4] sm:$0xf]
        %v5982 = vld [vmem:[%s19 + $0x8] sm:$0xf]
        %v5983 = vld [vmem:[%s19 + $0xc] sm:$0xf]
        %v5984 = vld [vmem:[%s19 + $0x10] sm:$0xf]
        %v5985 = vld [vmem:[%s21] sm:$0x1]
        %v5987 = vlaneseq
        %v5988 = vshrl.u32 %v5987, 7
        %v5989 = vsub.s32 0, %v5988
        %v5990 = vrot.slane %v5985, %v5989
        %v5997 = vunpack.c.l.b16 %v5980
        %v5998 = vunpack.c.l.b16 %v5981
        %v5999 = vunpack.c.l.b16 %v5982
        %v6000 = vunpack.c.l.b16 %v5983
        %v6001 = vunpack.c.l.b16 %v5984
        %v6002 = vpack.c.b16 %v5998, %v5997
        %v6003 = vpack.c.b16 %v6000, %v5999
        %v6004 = vpack.c.b16 %v6001, %v6001
        %vm6007 = vcmask 326656
        %v6009 = vsel %vm6007, %v5964, 0
        %v6012 = vsel %vm6007, %v5965, 0
        %v6015 = vsel %vm6007, %v5966, 0
        %v6018 = vsel %vm6007, %v5967, 0
        %v6021 = vsel %vm6007, %v5968, 0
        %v6024 = vsel %vm6007, %v5969, 0
        %v6027 = vsel %vm6007, %v5970, 0
        %v6030 = vsel %vm6007, %v5971, 0
        %v6033 = vsel %vm6007, %v5972, 0
        %v6036 = vsel %vm6007, %v5973, 0
        %v6039 = vsel %vm6007, %v5974, 0
        %v6042 = vsel %vm6007, %v5975, 0
        %v6045 = vsel %vm6007, %v5976, 0
        %v6048 = vsel %vm6007, %v5977, 0
        %v6051 = vsel %vm6007, %v5978, 0
        %v6054 = vsel %vm6007, %v5979, 0
        %v6057 = vsel %vm2278, %v6004, 0
        %6059 = vmatprep.subr.bf16.mxu0 0
        %6060 = vmatpush1.bf16.msra.mxu0 0
        %6061 = vmatprep.subr.bf16.mxu0 0
        %6062 = vmatpush1.bf16.msra.mxu0 0
        %6063 = vmatprep.subr.bf16.mxu0 0
        %6064 = vmatpush1.bf16.msra.mxu0 0
        %6065 = vmatprep.subr.bf16.mxu0 0
        %6066 = vmatpush1.bf16.msra.mxu0 0
        %6067 = vmatprep.subr.bf16.mxu0 0
        %6068 = vmatpush1.bf16.msra.mxu0 0
        %6069 = vmatprep.subr.bf16.mxu0 0
        %6070 = vmatpush1.bf16.msra.mxu0 %v6057
        %6071 = vmatprep.subr.bf16.mxu0 0
        %6072 = vmatpush1.bf16.msra.mxu0 %v6003
        %6073 = vmatprep.subr.bf16.mxu0 0
        %6074 = vmatpush1.bf16.msra.mxu0 %v6002
        %6075 = vmatprep.subr.bf16.mxu0 0
        %6076 = vmatpush2.bf16.msra.mxu0 0
        %6077 = vmatprep.subr.bf16.mxu0 0
        %6078 = vmatpush2.bf16.msra.mxu0 0
        %6079 = vmatprep.subr.bf16.mxu0 0
        %6080 = vmatpush2.bf16.msra.mxu0 0
        %6081 = vmatprep.subr.bf16.mxu0 0
        %6082 = vmatpush2.bf16.msra.mxu0 0
        %6083 = vmatprep.subr.bf16.mxu0 0
        %6084 = vmatpush2.bf16.msra.mxu0 0
        %6085 = vmatprep.subr.bf16.mxu0 0
        %6086 = vmatpush2.bf16.msra.mxu0 0
        %6087 = vmatprep.subr.bf16.mxu0 0
        %6088 = vmatpush2.bf16.msra.mxu0 0
        %6089 = vmatprep.subr.bf16.mxu0 0
        %6090 = vmatpush2.bf16.msra.mxu0 0
        %6091 = vmatprep.mubr.bf16.mxu0 0
        %6092 = vmatmul.mubr.bf16.gmra.mxu0 %v6009
        %v6093 = vpop.f32.mrf.mxu0
        %v6094 = vadd.f32 %v5990, %v6093
        %v6095 = vpop.f32.mrf.mxu0
        %v6096 = vpop.f32.mrf.mxu0
        %v6097 = vadd.f32 %v5990, %v6096
        %v6098 = vpop.f32.mrf.mxu0
        %6099 = vmatprep.mubr.bf16.mxu0 0
        %6100 = vmatmul.mubr.bf16.gmra.mxu0 %v6012
        %v6101 = vpop.f32.mrf.mxu0
        %v6102 = vadd.f32 %v5990, %v6101
        %v6103 = vpop.f32.mrf.mxu0
        %v6104 = vpop.f32.mrf.mxu0
        %v6105 = vadd.f32 %v5990, %v6104
        %v6106 = vpop.f32.mrf.mxu0
        %6107 = vmatprep.mubr.bf16.mxu0 0
        %6108 = vmatmul.mubr.bf16.gmra.mxu0 %v6015
        %v6109 = vpop.f32.mrf.mxu0
        %v6110 = vadd.f32 %v5990, %v6109
        %v6111 = vpop.f32.mrf.mxu0
        %v6112 = vpop.f32.mrf.mxu0
        %v6113 = vadd.f32 %v5990, %v6112
        %v6114 = vpop.f32.mrf.mxu0
        %6115 = vmatprep.mubr.bf16.mxu0 0
        %6116 = vmatmul.mubr.bf16.gmra.mxu0 %v6018
        %v6117 = vpop.f32.mrf.mxu0
        %v6118 = vadd.f32 %v5990, %v6117
        %v6119 = vpop.f32.mrf.mxu0
        %v6120 = vpop.f32.mrf.mxu0
        %v6121 = vadd.f32 %v5990, %v6120
        %v6122 = vpop.f32.mrf.mxu0
        %6123 = vmatprep.mubr.bf16.mxu0 0
        %6124 = vmatmul.mubr.bf16.gmra.mxu0 %v6021
        %v6125 = vpop.f32.mrf.mxu0
        %v6126 = vadd.f32 %v5990, %v6125
        %v6127 = vpop.f32.mrf.mxu0
        %v6128 = vpop.f32.mrf.mxu0
        %v6129 = vadd.f32 %v5990, %v6128
        %v6130 = vpop.f32.mrf.mxu0
        %6131 = vmatprep.mubr.bf16.mxu0 0
        %6132 = vmatmul.mubr.bf16.gmra.mxu0 %v6024
        %v6133 = vpop.f32.mrf.mxu0
        %v6134 = vadd.f32 %v5990, %v6133
        %v6135 = vpop.f32.mrf.mxu0
        %v6136 = vpop.f32.mrf.mxu0
        %v6137 = vadd.f32 %v5990, %v6136
        %v6138 = vpop.f32.mrf.mxu0
        %6139 = vmatprep.mubr.bf16.mxu0 0
        %6140 = vmatmul.mubr.bf16.gmra.mxu0 %v6027
        %v6141 = vpop.f32.mrf.mxu0
        %v6142 = vadd.f32 %v5990, %v6141
        %v6143 = vpop.f32.mrf.mxu0
        %v6144 = vpop.f32.mrf.mxu0
        %v6145 = vadd.f32 %v5990, %v6144
        %v6146 = vpop.f32.mrf.mxu0
        %6147 = vmatprep.mubr.bf16.mxu0 0
        %6148 = vmatmul.mubr.bf16.gmra.mxu0 %v6030
        %v6149 = vpop.f32.mrf.mxu0
        %v6150 = vadd.f32 %v5990, %v6149
        %v6151 = vpop.f32.mrf.mxu0
        %v6152 = vpop.f32.mrf.mxu0
        %v6153 = vadd.f32 %v5990, %v6152
        %v6154 = vpop.f32.mrf.mxu0
        %6155 = vmatprep.mubr.bf16.mxu0 0
        %6156 = vmatmul.mubr.bf16.gmra.mxu0 %v6033
        %v6157 = vpop.f32.mrf.mxu0
        %v6158 = vadd.f32 %v5990, %v6157
        %v6159 = vpop.f32.mrf.mxu0
        %v6160 = vpop.f32.mrf.mxu0
        %v6161 = vadd.f32 %v5990, %v6160
        %v6162 = vpop.f32.mrf.mxu0
        %6163 = vmatprep.mubr.bf16.mxu0 0
        %6164 = vmatmul.mubr.bf16.gmra.mxu0 %v6036
        %v6165 = vpop.f32.mrf.mxu0
        %v6166 = vadd.f32 %v5990, %v6165
        %v6167 = vpop.f32.mrf.mxu0
        %v6168 = vpop.f32.mrf.mxu0
        %v6169 = vadd.f32 %v5990, %v6168
        %v6170 = vpop.f32.mrf.mxu0
        %6171 = vmatprep.mubr.bf16.mxu0 0
        %6172 = vmatmul.mubr.bf16.gmra.mxu0 %v6039
        %v6173 = vpop.f32.mrf.mxu0
        %v6174 = vadd.f32 %v5990, %v6173
        %v6175 = vpop.f32.mrf.mxu0
        %v6176 = vpop.f32.mrf.mxu0
        %v6177 = vadd.f32 %v5990, %v6176
        %v6178 = vpop.f32.mrf.mxu0
        %6179 = vmatprep.mubr.bf16.mxu0 0
        %6180 = vmatmul.mubr.bf16.gmra.mxu0 %v6042
        %v6181 = vpop.f32.mrf.mxu0
        %v6182 = vadd.f32 %v5990, %v6181
        %v6183 = vpop.f32.mrf.mxu0
        %v6184 = vpop.f32.mrf.mxu0
        %v6185 = vadd.f32 %v5990, %v6184
        %v6186 = vpop.f32.mrf.mxu0
        %6187 = vmatprep.mubr.bf16.mxu0 0
        %6188 = vmatmul.mubr.bf16.gmra.mxu0 %v6045
        %v6189 = vpop.f32.mrf.mxu0
        %v6190 = vadd.f32 %v5990, %v6189
        %v6191 = vpop.f32.mrf.mxu0
        %v6192 = vpop.f32.mrf.mxu0
        %v6193 = vadd.f32 %v5990, %v6192
        %v6194 = vpop.f32.mrf.mxu0
        %6195 = vmatprep.mubr.bf16.mxu0 0
        %6196 = vmatmul.mubr.bf16.gmra.mxu0 %v6048
        %v6197 = vpop.f32.mrf.mxu0
        %v6198 = vadd.f32 %v5990, %v6197
        %v6199 = vpop.f32.mrf.mxu0
        %v6200 = vpop.f32.mrf.mxu0
        %v6201 = vadd.f32 %v5990, %v6200
        %v6202 = vpop.f32.mrf.mxu0
        %6203 = vmatprep.mubr.bf16.mxu0 0
        %6204 = vmatmul.mubr.bf16.gmra.mxu0 %v6051
        %v6205 = vpop.f32.mrf.mxu0
        %v6206 = vadd.f32 %v5990, %v6205
        %v6207 = vpop.f32.mrf.mxu0
        %v6208 = vpop.f32.mrf.mxu0
        %v6209 = vadd.f32 %v5990, %v6208
        %v6210 = vpop.f32.mrf.mxu0
        %6211 = vmatprep.mubr.bf16.mxu0 0
        %6212 = vmatmul.mubr.bf16.gmra.mxu0 %v6054
        %v6213 = vpop.f32.mrf.mxu0
        %v6214 = vadd.f32 %v5990, %v6213
        %v6215 = vpop.f32.mrf.mxu0
        %v6216 = vpop.f32.mrf.mxu0
        %v6217 = vadd.f32 %v5990, %v6216
        %v6218 = vpop.f32.mrf.mxu0
        %6219 = vdwg.mxu0
        %v6220 = vmax.f32 %v6094, 0.0
        %v6221 = vmax.f32 %v6097, 0.0
        %v6222 = vmax.f32 %v6102, 0.0
        %v6223 = vmax.f32 %v6105, 0.0
        %v6224 = vmax.f32 %v6110, 0.0
        %v6225 = vmax.f32 %v6113, 0.0
        %v6226 = vmax.f32 %v6118, 0.0
        %v6227 = vmax.f32 %v6121, 0.0
        %v6228 = vmax.f32 %v6126, 0.0
        %v6229 = vmax.f32 %v6129, 0.0
        %v6230 = vmax.f32 %v6134, 0.0
        %v6231 = vmax.f32 %v6137, 0.0
        %v6232 = vmax.f32 %v6142, 0.0
        %v6233 = vmax.f32 %v6145, 0.0
        %v6234 = vmax.f32 %v6150, 0.0
        %v6235 = vmax.f32 %v6153, 0.0
        %v6236 = vmax.f32 %v6158, 0.0
        %v6237 = vmax.f32 %v6161, 0.0
        %v6238 = vmax.f32 %v6166, 0.0
        %v6239 = vmax.f32 %v6169, 0.0
        %v6240 = vmax.f32 %v6174, 0.0
        %v6241 = vmax.f32 %v6177, 0.0
        %v6242 = vmax.f32 %v6182, 0.0
        %v6243 = vmax.f32 %v6185, 0.0
        %v6244 = vmax.f32 %v6190, 0.0
        %v6245 = vmax.f32 %v6193, 0.0
        %v6246 = vmax.f32 %v6198, 0.0
        %v6247 = vmax.f32 %v6201, 0.0
        %v6248 = vmax.f32 %v6206, 0.0
        %v6249 = vmax.f32 %v6209, 0.0
        %v6250 = vmax.f32 %v6214, 0.0
        %v6251 = vmax.f32 %v6217, 0.0
        %6252 = vst.msk [vmem:[%s2955 + $0x8] sm:$0xff] %vm6007, %v5932
        %6253 = vst.msk [vmem:[%s2955 + $0x10] sm:$0xff] %vm6007, %v5933
        %6254 = vst.msk [vmem:[%s2955 + $0x38] sm:$0xff] %vm6007, %v5934
        %6255 = vst.msk [vmem:[%s2955 + $0x40] sm:$0xff] %vm6007, %v5935
        %6256 = vst.msk [vmem:[%s2955 + $0x68] sm:$0xff] %vm6007, %v5936
        %6257 = vst.msk [vmem:[%s2955 + $0x70] sm:$0xff] %vm6007, %v5937
        %6258 = vst.msk [vmem:[%s2955 + $0x98] sm:$0xff] %vm6007, %v5938
        %6259 = vst.msk [vmem:[%s2955 + $0xa0] sm:$0xff] %vm6007, %v5939
        %6260 = vst.msk [vmem:[%s2955 + $0xc8] sm:$0xff] %vm6007, %v5940
        %6261 = vst.msk [vmem:[%s2955 + $0xd0] sm:$0xff] %vm6007, %v5941
        %6262 = vst.msk [vmem:[%s2955 + $0xf8] sm:$0xff] %vm6007, %v5942
        %6263 = vst.msk [vmem:[%s2955 + $0x100] sm:$0xff] %vm6007, %v5943
        %6264 = vst.msk [vmem:[%s2955 + $0x128] sm:$0xff] %vm6007, %v5944
        %6265 = vst.msk [vmem:[%s2955 + $0x130] sm:$0xff] %vm6007, %v5945
        %6266 = vst.msk [vmem:[%s2955 + $0x158] sm:$0xff] %vm6007, %v5946
        %6267 = vst.msk [vmem:[%s2955 + $0x160] sm:$0xff] %vm6007, %v5947
        %6268 = vst.msk [vmem:[%s2955 + $0x188] sm:$0xff] %vm6007, %v5948
        %6269 = vst.msk [vmem:[%s2955 + $0x190] sm:$0xff] %vm6007, %v5949
        %6270 = vst.msk [vmem:[%s2955 + $0x1b8] sm:$0xff] %vm6007, %v5950
        %6271 = vst.msk [vmem:[%s2955 + $0x1c0] sm:$0xff] %vm6007, %v5951
        %6272 = vst.msk [vmem:[%s2955 + $0x1e8] sm:$0xff] %vm6007, %v5952
        %6273 = vst.msk [vmem:[%s2955 + $0x1f0] sm:$0xff] %vm6007, %v5953
        %6274 = vst.msk [vmem:[%s2955 + $0x218] sm:$0xff] %vm6007, %v5954
        %6275 = vst.msk [vmem:[%s2955 + $0x220] sm:$0xff] %vm6007, %v5955
        %6276 = vst.msk [vmem:[%s2955 + $0x248] sm:$0xff] %vm6007, %v5956
        %6277 = vst.msk [vmem:[%s2955 + $0x250] sm:$0xff] %vm6007, %v5957
        %6278 = vst.msk [vmem:[%s2955 + $0x278] sm:$0xff] %vm6007, %v5958
        %6279 = vst.msk [vmem:[%s2955 + $0x280] sm:$0xff] %vm6007, %v5959
        %6280 = vst.msk [vmem:[%s2955 + $0x2a8] sm:$0xff] %vm6007, %v5960
        %6281 = vst.msk [vmem:[%s2955 + $0x2b0] sm:$0xff] %vm6007, %v5961
        %6282 = vst.msk [vmem:[%s2955 + $0x2d8] sm:$0xff] %vm6007, %v5962
        %6283 = vst.msk [vmem:[%s2955 + $0x2e0] sm:$0xff] %vm6007, %v5963
        %6284 = vst [vmem:[#allocation3 + $0x7] sm:$0xff] 0.0
        %6285 = vst [vmem:[#allocation3 + $0xf] sm:$0xff] 0.0
        %6286 = vst [vmem:[#allocation3 + $0x17] sm:$0x3] 0.0
        %6287 = vst [vmem:[%s2955 + $0x7] sm:$0x1] 0.0
        %6288 = vst [vmem:[%s2955 + $0x37] sm:$0x1] 0.0
        %6289 = vst [vmem:[%s2955 + $0x67] sm:$0x1] 0.0
        %6290 = vst [vmem:[%s2955 + $0x97] sm:$0x1] 0.0
        %6291 = vst [vmem:[%s2955 + $0xc7] sm:$0x1] 0.0
        %6292 = vst [vmem:[%s2955 + $0xf7] sm:$0x1] 0.0
        %6293 = vst [vmem:[%s2955 + $0x127] sm:$0x1] 0.0
        %6294 = vst [vmem:[%s2955 + $0x157] sm:$0x1] 0.0
        %6295 = vst [vmem:[%s2955 + $0x187] sm:$0x1] 0.0
        %6296 = vst [vmem:[%s2955 + $0x1b7] sm:$0x1] 0.0
        %6297 = vst [vmem:[%s2955 + $0x1e7] sm:$0x1] 0.0
        %6298 = vst [vmem:[%s2955 + $0x217] sm:$0x1] 0.0
        %6299 = vst [vmem:[%s2955 + $0x247] sm:$0x1] 0.0
        %6300 = vst [vmem:[%s2955 + $0x277] sm:$0x1] 0.0
        %6301 = vst [vmem:[%s2955 + $0x2a7] sm:$0x1] 0.0
        %6302 = vst [vmem:[%s2955 + $0x2d7] sm:$0x1] 0.0
        %v6303 = vld [vmem:[%s3121] ss:$2 sm:$0xff]
        %v6304 = vld [vmem:[%s3125] ss:$2 sm:$0xff]
        %v6305 = vld [vmem:[%s3129] ss:$2 sm:$0xff]
        %v6306 = vld [vmem:[%s3133] ss:$2 sm:$0xff]
        %v6307 = vld [vmem:[%s3137] ss:$2 sm:$0xff]
        %v6308 = vld [vmem:[%s3141] ss:$2 sm:$0xff]
        %v6309 = vld [vmem:[%s3145] ss:$2 sm:$0xff]
        %v6310 = vld [vmem:[%s3149] ss:$2 sm:$0xff]
        %v6311 = vadd.f32 %v6303, 0.0
        %v6312 = vadd.f32 %v6304, 0.0
        %v6313 = vadd.f32 %v6305, 0.0
        %v6314 = vadd.f32 %v6306, 0.0
        %v6315 = vadd.f32 %v6307, 0.0
        %v6316 = vadd.f32 %v6308, 0.0
        %v6317 = vadd.f32 %v6309, 0.0
        %v6318 = vadd.f32 %v6310, 0.0
        %v6319 = vld [vmem:[%s3217] ss:$2 sm:$0xff]
        %v6320 = vld [vmem:[%s3221] ss:$2 sm:$0xff]
        %v6321 = vld [vmem:[%s3225] ss:$2 sm:$0xff]
        %v6322 = vld [vmem:[%s3229] ss:$2 sm:$0xff]
        %v6323 = vld [vmem:[%s3233] ss:$2 sm:$0xff]
        %v6324 = vld [vmem:[%s3237] ss:$2 sm:$0xff]
        %v6325 = vld [vmem:[%s3241] ss:$2 sm:$0xff]
        %v6326 = vld [vmem:[%s3245] ss:$2 sm:$0xff]
        %v6327 = vadd.f32 %v6311, %v6319
        %v6328 = vadd.f32 %v6312, %v6320
        %v6329 = vadd.f32 %v6313, %v6321
        %v6330 = vadd.f32 %v6314, %v6322
        %v6331 = vadd.f32 %v6315, %v6323
        %v6332 = vadd.f32 %v6316, %v6324
        %v6333 = vadd.f32 %v6317, %v6325
        %v6334 = vadd.f32 %v6318, %v6326
        %v6335 = vld [vmem:[%s3313] ss:$2 sm:$0xff]
        %v6336 = vld [vmem:[%s3317] ss:$2 sm:$0xff]
        %v6337 = vld [vmem:[%s3321] ss:$2 sm:$0xff]
        %v6338 = vld [vmem:[%s3325] ss:$2 sm:$0xff]
        %v6339 = vld [vmem:[%s3329] ss:$2 sm:$0xff]
        %v6340 = vld [vmem:[%s3333] ss:$2 sm:$0xff]
        %v6341 = vld [vmem:[%s3337] ss:$2 sm:$0xff]
        %v6342 = vld [vmem:[%s3341] ss:$2 sm:$0xff]
        %v6343 = vadd.f32 %v6327, %v6335
        %v6344 = vadd.f32 %v6328, %v6336
        %v6345 = vadd.f32 %v6329, %v6337
        %v6346 = vadd.f32 %v6330, %v6338
        %v6347 = vadd.f32 %v6331, %v6339
        %v6348 = vadd.f32 %v6332, %v6340
        %v6349 = vadd.f32 %v6333, %v6341
        %v6350 = vadd.f32 %v6334, %v6342
        %v6351 = vld [vmem:[%s3409] ss:$2 sm:$0xff]
        %v6352 = vld [vmem:[%s3413] ss:$2 sm:$0xff]
        %v6353 = vld [vmem:[%s3417] ss:$2 sm:$0xff]
        %v6354 = vld [vmem:[%s3421] ss:$2 sm:$0xff]
        %v6355 = vld [vmem:[%s3425] ss:$2 sm:$0xff]
        %v6356 = vld [vmem:[%s3429] ss:$2 sm:$0xff]
        %v6357 = vld [vmem:[%s3433] ss:$2 sm:$0xff]
        %v6358 = vld [vmem:[%s3437] ss:$2 sm:$0xff]
        %v6359 = vadd.f32 %v6343, %v6351
        %v6360 = vadd.f32 %v6344, %v6352
        %v6361 = vadd.f32 %v6345, %v6353
        %v6362 = vadd.f32 %v6346, %v6354
        %v6363 = vadd.f32 %v6347, %v6355
        %v6364 = vadd.f32 %v6348, %v6356
        %v6365 = vadd.f32 %v6349, %v6357
        %v6366 = vadd.f32 %v6350, %v6358
        %v6367 = vld [vmem:[%s3505] ss:$2 sm:$0xff]
        %v6368 = vld [vmem:[%s3509] ss:$2 sm:$0xff]
        %v6369 = vld [vmem:[%s3513] ss:$2 sm:$0xff]
        %v6370 = vld [vmem:[%s3517] ss:$2 sm:$0xff]
        %v6371 = vld [vmem:[%s3521] ss:$2 sm:$0xff]
        %v6372 = vld [vmem:[%s3525] ss:$2 sm:$0xff]
        %v6373 = vld [vmem:[%s3529] ss:$2 sm:$0xff]
        %v6374 = vld [vmem:[%s3533] ss:$2 sm:$0xff]
        %v6375 = vadd.f32 %v6359, %v6367
        %v6376 = vadd.f32 %v6360, %v6368
        %v6377 = vadd.f32 %v6361, %v6369
        %v6378 = vadd.f32 %v6362, %v6370
        %v6379 = vadd.f32 %v6363, %v6371
        %v6380 = vadd.f32 %v6364, %v6372
        %v6381 = vadd.f32 %v6365, %v6373
        %v6382 = vadd.f32 %v6366, %v6374
        %v6383 = vld [vmem:[%s3601] ss:$2 sm:$0xff]
        %v6384 = vld [vmem:[%s3605] ss:$2 sm:$0xff]
        %v6385 = vld [vmem:[%s3609] ss:$2 sm:$0xff]
        %v6386 = vld [vmem:[%s3613] ss:$2 sm:$0xff]
        %v6387 = vld [vmem:[%s3617] ss:$2 sm:$0xff]
        %v6388 = vld [vmem:[%s3621] ss:$2 sm:$0xff]
        %v6389 = vld [vmem:[%s3625] ss:$2 sm:$0xff]
        %v6390 = vld [vmem:[%s3629] ss:$2 sm:$0xff]
        %v6391 = vadd.f32 %v6375, %v6383
        %v6392 = vadd.f32 %v6376, %v6384
        %v6393 = vadd.f32 %v6377, %v6385
        %v6394 = vadd.f32 %v6378, %v6386
        %v6395 = vadd.f32 %v6379, %v6387
        %v6396 = vadd.f32 %v6380, %v6388
        %v6397 = vadd.f32 %v6381, %v6389
        %v6398 = vadd.f32 %v6382, %v6390
        %v6399 = vld [vmem:[%s3698] ss:$2 sm:$0xff]
        %v6400 = vld [vmem:[%s3702] ss:$2 sm:$0xff]
        %v6401 = vld [vmem:[%s3706] ss:$2 sm:$0xff]
        %v6402 = vld [vmem:[%s3710] ss:$2 sm:$0xff]
        %v6403 = vld [vmem:[%s3714] ss:$2 sm:$0xff]
        %v6404 = vld [vmem:[%s3718] ss:$2 sm:$0xff]
        %v6405 = vld [vmem:[%s3722] ss:$2 sm:$0xff]
        %v6406 = vld [vmem:[%s3726] ss:$2 sm:$0xff]
        %v6407 = vadd.f32 %v6391, %v6399
        %v6408 = vadd.f32 %v6392, %v6400
        %v6409 = vadd.f32 %v6393, %v6401
        %v6410 = vadd.f32 %v6394, %v6402
        %v6411 = vadd.f32 %v6395, %v6403
        %v6412 = vadd.f32 %v6396, %v6404
        %v6413 = vadd.f32 %v6397, %v6405
        %v6414 = vadd.f32 %v6398, %v6406
        %v6415 = vld [vmem:[%s3794] ss:$2 sm:$0xff]
        %v6416 = vld [vmem:[%s3798] ss:$2 sm:$0xff]
        %v6417 = vld [vmem:[%s3802] ss:$2 sm:$0xff]
        %v6418 = vld [vmem:[%s3806] ss:$2 sm:$0xff]
        %v6419 = vld [vmem:[%s3810] ss:$2 sm:$0xff]
        %v6420 = vld [vmem:[%s3814] ss:$2 sm:$0xff]
        %v6421 = vld [vmem:[%s3818] ss:$2 sm:$0xff]
        %v6422 = vld [vmem:[%s3822] ss:$2 sm:$0xff]
        %v6423 = vadd.f32 %v6407, %v6415
        %v6424 = vadd.f32 %v6408, %v6416
        %v6425 = vadd.f32 %v6409, %v6417
        %v6426 = vadd.f32 %v6410, %v6418
        %v6427 = vadd.f32 %v6411, %v6419
        %v6428 = vadd.f32 %v6412, %v6420
        %v6429 = vadd.f32 %v6413, %v6421
        %v6430 = vadd.f32 %v6414, %v6422
        %v6431 = vld [vmem:[%s3890] ss:$2 sm:$0xff]
        %v6432 = vld [vmem:[%s3894] ss:$2 sm:$0xff]
        %v6433 = vld [vmem:[%s3898] ss:$2 sm:$0xff]
        %v6434 = vld [vmem:[%s3902] ss:$2 sm:$0xff]
        %v6435 = vld [vmem:[%s3906] ss:$2 sm:$0xff]
        %v6436 = vld [vmem:[%s3910] ss:$2 sm:$0xff]
        %v6437 = vld [vmem:[%s3914] ss:$2 sm:$0xff]
        %v6438 = vld [vmem:[%s3918] ss:$2 sm:$0xff]
        %v6439 = vadd.f32 %v6423, %v6431
        %v6440 = vadd.f32 %v6424, %v6432
        %v6441 = vadd.f32 %v6425, %v6433
        %v6442 = vadd.f32 %v6426, %v6434
        %v6443 = vadd.f32 %v6427, %v6435
        %v6444 = vadd.f32 %v6428, %v6436
        %v6445 = vadd.f32 %v6429, %v6437
        %v6446 = vadd.f32 %v6430, %v6438
        %v6447 = vmul.f32 %v6439, 0.11111111
        %v6448 = vmul.f32 %v6440, 0.11111111
        %v6449 = vmul.f32 %v6441, 0.11111111
        %v6450 = vmul.f32 %v6442, 0.11111111
        %v6451 = vmul.f32 %v6443, 0.11111111
        %v6452 = vmul.f32 %v6444, 0.11111111
        %v6453 = vmul.f32 %v6445, 0.11111111
        %v6454 = vmul.f32 %v6446, 0.11111111
        %v6455 = vmax.f32 %v6447, 0.0
        %v6456 = vmax.f32 %v6448, 0.0
        %v6457 = vmax.f32 %v6449, 0.0
        %v6458 = vmax.f32 %v6450, 0.0
        %v6459 = vmax.f32 %v6451, 0.0
        %v6460 = vmax.f32 %v6452, 0.0
        %v6461 = vmax.f32 %v6453, 0.0
        %v6462 = vmax.f32 %v6454, 0.0
        %v6463 = vld [vmem:[%s23] sm:$0xff]
        %v6464 = vld [vmem:[%s23 + $0x8] sm:$0xff]
        %v6465 = vld [vmem:[%s23 + $0x10] sm:$0xff]
        %v6466 = vld [vmem:[%s23 + $0x18] sm:$0xff]
        %v6467 = vld [vmem:[%s23 + $0x20] sm:$0xff]
        %v6468 = vld [vmem:[%s23 + $0x28] sm:$0xff]
        %v6469 = vld [vmem:[%s23 + $0x30] sm:$0xff]
        %v6470 = vld [vmem:[%s23 + $0x38] sm:$0xff]
        %v6471 = vld [vmem:[%s23 + $0x40] sm:$0xff]
        %v6472 = vld [vmem:[%s25] sm:$0x1]
        %6473 = vst [vmem:[%s4069 + $0x8] sm:$0xff] %v6220
        %6474 = vst [vmem:[%s4069 + $0x10] sm:$0xff] %v6221
        %6475 = vst [vmem:[%s4069 + $0x38] sm:$0xff] %v6222
        %6476 = vst [vmem:[%s4069 + $0x40] sm:$0xff] %v6223
        %6477 = vst [vmem:[%s4069 + $0x68] sm:$0xff] %v6224
        %6478 = vst [vmem:[%s4069 + $0x70] sm:$0xff] %v6225
        %6479 = vst [vmem:[%s4069 + $0x98] sm:$0xff] %v6226
        %6480 = vst [vmem:[%s4069 + $0xa0] sm:$0xff] %v6227
        %6481 = vst [vmem:[%s4069 + $0xc8] sm:$0xff] %v6228
        %6482 = vst [vmem:[%s4069 + $0xd0] sm:$0xff] %v6229
        %6483 = vst [vmem:[%s4069 + $0xf8] sm:$0xff] %v6230
        %6484 = vst [vmem:[%s4069 + $0x100] sm:$0xff] %v6231
        %6485 = vst [vmem:[%s4069 + $0x128] sm:$0xff] %v6232
        %6486 = vst [vmem:[%s4069 + $0x130] sm:$0xff] %v6233
        %6487 = vst [vmem:[%s4069 + $0x158] sm:$0xff] %v6234
        %6488 = vst [vmem:[%s4069 + $0x160] sm:$0xff] %v6235
        %6489 = vst [vmem:[%s4069 + $0x188] sm:$0xff] %v6236
        %6490 = vst [vmem:[%s4069 + $0x190] sm:$0xff] %v6237
        %6491 = vst [vmem:[%s4069 + $0x1b8] sm:$0xff] %v6238
        %6492 = vst [vmem:[%s4069 + $0x1c0] sm:$0xff] %v6239
        %6493 = vst [vmem:[%s4069 + $0x1e8] sm:$0xff] %v6240
        %6494 = vst [vmem:[%s4069 + $0x1f0] sm:$0xff] %v6241
        %6495 = vst [vmem:[%s4069 + $0x218] sm:$0xff] %v6242
        %6496 = vst [vmem:[%s4069 + $0x220] sm:$0xff] %v6243
        %6497 = vst [vmem:[%s4069 + $0x248] sm:$0xff] %v6244
        %6498 = vst [vmem:[%s4069 + $0x250] sm:$0xff] %v6245
        %6499 = vst [vmem:[%s4069 + $0x278] sm:$0xff] %v6246
        %6500 = vst [vmem:[%s4069 + $0x280] sm:$0xff] %v6247
        %6501 = vst [vmem:[%s4069 + $0x2a8] sm:$0xff] %v6248
        %6502 = vst [vmem:[%s4069 + $0x2b0] sm:$0xff] %v6249
        %6503 = vst [vmem:[%s4069 + $0x2d8] sm:$0xff] %v6250
        %6504 = vst [vmem:[%s4069 + $0x2e0] sm:$0xff] %v6251
        %6505 = vst [vmem:[#allocation2 + $0x7] sm:$0xff] 0.0
        %6506 = vst [vmem:[#allocation2 + $0xf] sm:$0xff] 0.0
        %6507 = vst [vmem:[#allocation2 + $0x17] sm:$0x3] 0.0
        %6508 = vst [vmem:[%s4069 + $0x7] sm:$0x1] 0.0
        %6509 = vst [vmem:[%s4069 + $0x37] sm:$0x1] 0.0
        %6510 = vst [vmem:[%s4069 + $0x67] sm:$0x1] 0.0
        %6511 = vst [vmem:[%s4069 + $0x97] sm:$0x1] 0.0
        %6512 = vst [vmem:[%s4069 + $0xc7] sm:$0x1] 0.0
        %6513 = vst [vmem:[%s4069 + $0xf7] sm:$0x1] 0.0
        %6514 = vst [vmem:[%s4069 + $0x127] sm:$0x1] 0.0
        %6515 = vst [vmem:[%s4069 + $0x157] sm:$0x1] 0.0
        %6516 = vst [vmem:[%s4069 + $0x187] sm:$0x1] 0.0
        %6517 = vst [vmem:[%s4069 + $0x1b7] sm:$0x1] 0.0
        %6518 = vst [vmem:[%s4069 + $0x1e7] sm:$0x1] 0.0
        %6519 = vst [vmem:[%s4069 + $0x217] sm:$0x1] 0.0
        %6520 = vst [vmem:[%s4069 + $0x247] sm:$0x1] 0.0
        %6521 = vst [vmem:[%s4069 + $0x277] sm:$0x1] 0.0
        %6522 = vst [vmem:[%s4069 + $0x2a7] sm:$0x1] 0.0
        %6523 = vst [vmem:[%s4069 + $0x2d7] sm:$0x1] 0.0
        %v6524 = vld [vmem:[%s4235] ss:$2 sm:$0xff]
        %v6525 = vld [vmem:[%s4239] ss:$2 sm:$0xff]
        %v6526 = vld [vmem:[%s4243] ss:$2 sm:$0xff]
        %v6527 = vld [vmem:[%s4247] ss:$2 sm:$0xff]
        %v6528 = vld [vmem:[%s4251] ss:$2 sm:$0xff]
        %v6529 = vld [vmem:[%s4255] ss:$2 sm:$0xff]
        %v6530 = vld [vmem:[%s4259] ss:$2 sm:$0xff]
        %v6531 = vld [vmem:[%s4263] ss:$2 sm:$0xff]
        %v6532 = vmul.f32 %v6524, %v6463
        %v6533 = vmul.f32 %v6525, %v6463
        %v6534 = vmul.f32 %v6526, %v6463
        %v6535 = vmul.f32 %v6527, %v6463
        %v6536 = vmul.f32 %v6528, %v6463
        %v6537 = vmul.f32 %v6529, %v6463
        %v6538 = vmul.f32 %v6530, %v6463
        %v6539 = vmul.f32 %v6531, %v6463
        %v6540 = vadd.f32 %v6532, 0.0
        %v6541 = vadd.f32 %v6533, 0.0
        %v6542 = vadd.f32 %v6534, 0.0
        %v6543 = vadd.f32 %v6535, 0.0
        %v6544 = vadd.f32 %v6536, 0.0
        %v6545 = vadd.f32 %v6537, 0.0
        %v6546 = vadd.f32 %v6538, 0.0
        %v6547 = vadd.f32 %v6539, 0.0
        %v6548 = vld [vmem:[%s4363] ss:$2 sm:$0xff]
        %v6549 = vld [vmem:[%s4367] ss:$2 sm:$0xff]
        %v6550 = vld [vmem:[%s4371] ss:$2 sm:$0xff]
        %v6551 = vld [vmem:[%s4375] ss:$2 sm:$0xff]
        %v6552 = vld [vmem:[%s4379] ss:$2 sm:$0xff]
        %v6553 = vld [vmem:[%s4383] ss:$2 sm:$0xff]
        %v6554 = vld [vmem:[%s4387] ss:$2 sm:$0xff]
        %v6555 = vld [vmem:[%s4391] ss:$2 sm:$0xff]
        %v6556 = vmul.f32 %v6548, %v6464
        %v6557 = vmul.f32 %v6549, %v6464
        %v6558 = vmul.f32 %v6550, %v6464
        %v6559 = vmul.f32 %v6551, %v6464
        %v6560 = vmul.f32 %v6552, %v6464
        %v6561 = vmul.f32 %v6553, %v6464
        %v6562 = vmul.f32 %v6554, %v6464
        %v6563 = vmul.f32 %v6555, %v6464
        %v6564 = vadd.f32 %v6540, %v6556
        %v6565 = vadd.f32 %v6541, %v6557
        %v6566 = vadd.f32 %v6542, %v6558
        %v6567 = vadd.f32 %v6543, %v6559
        %v6568 = vadd.f32 %v6544, %v6560
        %v6569 = vadd.f32 %v6545, %v6561
        %v6570 = vadd.f32 %v6546, %v6562
        %v6571 = vadd.f32 %v6547, %v6563
        %v6572 = vld [vmem:[%s4491] ss:$2 sm:$0xff]
        %v6573 = vld [vmem:[%s4495] ss:$2 sm:$0xff]
        %v6574 = vld [vmem:[%s4499] ss:$2 sm:$0xff]
        %v6575 = vld [vmem:[%s4503] ss:$2 sm:$0xff]
        %v6576 = vld [vmem:[%s4507] ss:$2 sm:$0xff]
        %v6577 = vld [vmem:[%s4511] ss:$2 sm:$0xff]
        %v6578 = vld [vmem:[%s4515] ss:$2 sm:$0xff]
        %v6579 = vld [vmem:[%s4519] ss:$2 sm:$0xff]
        %v6580 = vmul.f32 %v6572, %v6465
        %v6581 = vmul.f32 %v6573, %v6465
        %v6582 = vmul.f32 %v6574, %v6465
        %v6583 = vmul.f32 %v6575, %v6465
        %v6584 = vmul.f32 %v6576, %v6465
        %v6585 = vmul.f32 %v6577, %v6465
        %v6586 = vmul.f32 %v6578, %v6465
        %v6587 = vmul.f32 %v6579, %v6465
        %v6588 = vadd.f32 %v6564, %v6580
        %v6589 = vadd.f32 %v6565, %v6581
        %v6590 = vadd.f32 %v6566, %v6582
        %v6591 = vadd.f32 %v6567, %v6583
        %v6592 = vadd.f32 %v6568, %v6584
        %v6593 = vadd.f32 %v6569, %v6585
        %v6594 = vadd.f32 %v6570, %v6586
        %v6595 = vadd.f32 %v6571, %v6587
        %v6596 = vld [vmem:[%s4619] ss:$2 sm:$0xff]
        %v6597 = vld [vmem:[%s4623] ss:$2 sm:$0xff]
        %v6598 = vld [vmem:[%s4627] ss:$2 sm:$0xff]
        %v6599 = vld [vmem:[%s4631] ss:$2 sm:$0xff]
        %v6600 = vld [vmem:[%s4635] ss:$2 sm:$0xff]
        %v6601 = vld [vmem:[%s4639] ss:$2 sm:$0xff]
        %v6602 = vld [vmem:[%s4643] ss:$2 sm:$0xff]
        %v6603 = vld [vmem:[%s4647] ss:$2 sm:$0xff]
        %v6604 = vmul.f32 %v6596, %v6466
        %v6605 = vmul.f32 %v6597, %v6466
        %v6606 = vmul.f32 %v6598, %v6466
        %v6607 = vmul.f32 %v6599, %v6466
        %v6608 = vmul.f32 %v6600, %v6466
        %v6609 = vmul.f32 %v6601, %v6466
        %v6610 = vmul.f32 %v6602, %v6466
        %v6611 = vmul.f32 %v6603, %v6466
        %v6612 = vadd.f32 %v6588, %v6604
        %v6613 = vadd.f32 %v6589, %v6605
        %v6614 = vadd.f32 %v6590, %v6606
        %v6615 = vadd.f32 %v6591, %v6607
        %v6616 = vadd.f32 %v6592, %v6608
        %v6617 = vadd.f32 %v6593, %v6609
        %v6618 = vadd.f32 %v6594, %v6610
        %v6619 = vadd.f32 %v6595, %v6611
        %v6620 = vld [vmem:[%s4747] ss:$2 sm:$0xff]
        %v6621 = vld [vmem:[%s4751] ss:$2 sm:$0xff]
        %v6622 = vld [vmem:[%s4755] ss:$2 sm:$0xff]
        %v6623 = vld [vmem:[%s4759] ss:$2 sm:$0xff]
        %v6624 = vld [vmem:[%s4763] ss:$2 sm:$0xff]
        %v6625 = vld [vmem:[%s4767] ss:$2 sm:$0xff]
        %v6626 = vld [vmem:[%s4771] ss:$2 sm:$0xff]
        %v6627 = vld [vmem:[%s4775] ss:$2 sm:$0xff]
        %v6628 = vmul.f32 %v6620, %v6467
        %v6629 = vmul.f32 %v6621, %v6467
        %v6630 = vmul.f32 %v6622, %v6467
        %v6631 = vmul.f32 %v6623, %v6467
        %v6632 = vmul.f32 %v6624, %v6467
        %v6633 = vmul.f32 %v6625, %v6467
        %v6634 = vmul.f32 %v6626, %v6467
        %v6635 = vmul.f32 %v6627, %v6467
        %v6636 = vadd.f32 %v6612, %v6628
        %v6637 = vadd.f32 %v6613, %v6629
        %v6638 = vadd.f32 %v6614, %v6630
        %v6639 = vadd.f32 %v6615, %v6631
        %v6640 = vadd.f32 %v6616, %v6632
        %v6641 = vadd.f32 %v6617, %v6633
        %v6642 = vadd.f32 %v6618, %v6634
        %v6643 = vadd.f32 %v6619, %v6635
        %v6644 = vld [vmem:[%s4875] ss:$2 sm:$0xff]
        %v6645 = vld [vmem:[%s4879] ss:$2 sm:$0xff]
        %v6646 = vld [vmem:[%s4883] ss:$2 sm:$0xff]
        %v6647 = vld [vmem:[%s4887] ss:$2 sm:$0xff]
        %v6648 = vld [vmem:[%s4891] ss:$2 sm:$0xff]
        %v6649 = vld [vmem:[%s4895] ss:$2 sm:$0xff]
        %v6650 = vld [vmem:[%s4899] ss:$2 sm:$0xff]
        %v6651 = vld [vmem:[%s4903] ss:$2 sm:$0xff]
        %v6652 = vmul.f32 %v6644, %v6468
        %v6653 = vmul.f32 %v6645, %v6468
        %v6654 = vmul.f32 %v6646, %v6468
        %v6655 = vmul.f32 %v6647, %v6468
        %v6656 = vmul.f32 %v6648, %v6468
        %v6657 = vmul.f32 %v6649, %v6468
        %v6658 = vmul.f32 %v6650, %v6468
        %v6659 = vmul.f32 %v6651, %v6468
        %v6660 = vadd.f32 %v6636, %v6652
        %v6661 = vadd.f32 %v6637, %v6653
        %v6662 = vadd.f32 %v6638, %v6654
        %v6663 = vadd.f32 %v6639, %v6655
        %v6664 = vadd.f32 %v6640, %v6656
        %v6665 = vadd.f32 %v6641, %v6657
        %v6666 = vadd.f32 %v6642, %v6658
        %v6667 = vadd.f32 %v6643, %v6659
        %v6668 = vld [vmem:[%s5004] ss:$2 sm:$0xff]
        %v6669 = vld [vmem:[%s5008] ss:$2 sm:$0xff]
        %v6670 = vld [vmem:[%s5012] ss:$2 sm:$0xff]
        %v6671 = vld [vmem:[%s5016] ss:$2 sm:$0xff]
        %v6672 = vld [vmem:[%s5020] ss:$2 sm:$0xff]
        %v6673 = vld [vmem:[%s5024] ss:$2 sm:$0xff]
        %v6674 = vld [vmem:[%s5028] ss:$2 sm:$0xff]
        %v6675 = vld [vmem:[%s5032] ss:$2 sm:$0xff]
        %v6676 = vmul.f32 %v6668, %v6469
        %v6677 = vmul.f32 %v6669, %v6469
        %v6678 = vmul.f32 %v6670, %v6469
        %v6679 = vmul.f32 %v6671, %v6469
        %v6680 = vmul.f32 %v6672, %v6469
        %v6681 = vmul.f32 %v6673, %v6469
        %v6682 = vmul.f32 %v6674, %v6469
        %v6683 = vmul.f32 %v6675, %v6469
        %v6684 = vadd.f32 %v6660, %v6676
        %v6685 = vadd.f32 %v6661, %v6677
        %v6686 = vadd.f32 %v6662, %v6678
        %v6687 = vadd.f32 %v6663, %v6679
        %v6688 = vadd.f32 %v6664, %v6680
        %v6689 = vadd.f32 %v6665, %v6681
        %v6690 = vadd.f32 %v6666, %v6682
        %v6691 = vadd.f32 %v6667, %v6683
        %v6692 = vld [vmem:[%s5132] ss:$2 sm:$0xff]
        %v6693 = vld [vmem:[%s5136] ss:$2 sm:$0xff]
        %v6694 = vld [vmem:[%s5140] ss:$2 sm:$0xff]
        %v6695 = vld [vmem:[%s5144] ss:$2 sm:$0xff]
        %v6696 = vld [vmem:[%s5148] ss:$2 sm:$0xff]
        %v6697 = vld [vmem:[%s5152] ss:$2 sm:$0xff]
        %v6698 = vld [vmem:[%s5156] ss:$2 sm:$0xff]
        %v6699 = vld [vmem:[%s5160] ss:$2 sm:$0xff]
        %v6700 = vmul.f32 %v6692, %v6470
        %v6701 = vmul.f32 %v6693, %v6470
        %v6702 = vmul.f32 %v6694, %v6470
        %v6703 = vmul.f32 %v6695, %v6470
        %v6704 = vmul.f32 %v6696, %v6470
        %v6705 = vmul.f32 %v6697, %v6470
        %v6706 = vmul.f32 %v6698, %v6470
        %v6707 = vmul.f32 %v6699, %v6470
        %v6708 = vadd.f32 %v6684, %v6700
        %v6709 = vadd.f32 %v6685, %v6701
        %v6710 = vadd.f32 %v6686, %v6702
        %v6711 = vadd.f32 %v6687, %v6703
        %v6712 = vadd.f32 %v6688, %v6704
        %v6713 = vadd.f32 %v6689, %v6705
        %v6714 = vadd.f32 %v6690, %v6706
        %v6715 = vadd.f32 %v6691, %v6707
        %v6716 = vld [vmem:[%s5260] ss:$2 sm:$0xff]
        %v6717 = vld [vmem:[%s5264] ss:$2 sm:$0xff]
        %v6718 = vld [vmem:[%s5268] ss:$2 sm:$0xff]
        %v6719 = vld [vmem:[%s5272] ss:$2 sm:$0xff]
        %v6720 = vld [vmem:[%s5276] ss:$2 sm:$0xff]
        %v6721 = vld [vmem:[%s5280] ss:$2 sm:$0xff]
        %v6722 = vld [vmem:[%s5284] ss:$2 sm:$0xff]
        %v6723 = vld [vmem:[%s5288] ss:$2 sm:$0xff]
        %v6724 = vmul.f32 %v6716, %v6471
        %v6725 = vmul.f32 %v6717, %v6471
        %v6726 = vmul.f32 %v6718, %v6471
        %v6727 = vmul.f32 %v6719, %v6471
        %v6728 = vmul.f32 %v6720, %v6471
        %v6729 = vmul.f32 %v6721, %v6471
        %v6730 = vmul.f32 %v6722, %v6471
        %v6731 = vmul.f32 %v6723, %v6471
        %v6732 = vadd.f32 %v6708, %v6724
        %v6733 = vadd.f32 %v6709, %v6725
        %v6734 = vadd.f32 %v6710, %v6726
        %v6735 = vadd.f32 %v6711, %v6727
        %v6736 = vadd.f32 %v6712, %v6728
        %v6737 = vadd.f32 %v6713, %v6729
        %v6738 = vadd.f32 %v6714, %v6730
        %v6739 = vadd.f32 %v6715, %v6731
        %v6741 = vlaneseq
        %v6742 = vshrl.u32 %v6741, 7
        %v6743 = vsub.s32 0, %v6742
        %v6744 = vrot.slane %v6472, %v6743
        %v6746 = vadd.f32 %v6732, %v6744
        %v6747 = vadd.f32 %v6733, %v6744
        %v6748 = vadd.f32 %v6734, %v6744
        %v6749 = vadd.f32 %v6735, %v6744
        %v6750 = vadd.f32 %v6736, %v6744
        %v6751 = vadd.f32 %v6737, %v6744
        %v6752 = vadd.f32 %v6738, %v6744
        %v6753 = vadd.f32 %v6739, %v6744
        %v6754 = vmax.f32 %v6746, 0.0
        %v6755 = vmax.f32 %v6747, 0.0
        %v6756 = vmax.f32 %v6748, 0.0
        %v6757 = vmax.f32 %v6749, 0.0
        %v6758 = vmax.f32 %v6750, 0.0
        %v6759 = vmax.f32 %v6751, 0.0
        %v6760 = vmax.f32 %v6752, 0.0
        %v6761 = vmax.f32 %v6753, 0.0
        %v6762 = vpack.c.bf16 %v6755, %v6754
        %v6763 = vpack.c.bf16 %v6757, %v6756
        %v6764 = vpack.c.bf16 %v6759, %v6758
        %v6765 = vpack.c.bf16 %v6761, %v6760
        %v6766 = vld [vmem:[%s27] sm:$0xf]
        %v6767 = vld [vmem:[%s27 + $0x4] sm:$0xf]
        %v6768 = vld [vmem:[%s27 + $0x8] sm:$0xf]
        %v6769 = vld [vmem:[%s27 + $0xc] sm:$0xf]
        %v6770 = vld [vmem:[%s27 + $0x10] sm:$0xf]
        %v6771 = vld [vmem:[%s27 + $0x14] sm:$0xf]
        %v6772 = vld [vmem:[%s27 + $0x18] sm:$0xf]
        %v6773 = vld [vmem:[%s27 + $0x1c] sm:$0xf]
        %v6774 = vld [vmem:[%s27 + $0x20] sm:$0xf]
        %v6775 = vld [vmem:[%s27 + $0x24] sm:$0xf]
        %v6776 = vld [vmem:[%s27 + $0x28] sm:$0xf]
        %v6777 = vld [vmem:[%s27 + $0x2c] sm:$0xf]
        %v6778 = vld [vmem:[%s27 + $0x30] sm:$0xf]
        %v6779 = vld [vmem:[%s27 + $0x34] sm:$0xf]
        %v6780 = vld [vmem:[%s27 + $0x38] sm:$0xf]
        %v6781 = vld [vmem:[%s27 + $0x3c] sm:$0xf]
        %v6782 = vld [vmem:[%s29] sm:$0x1]
        %v6784 = vlaneseq
        %v6785 = vshrl.u32 %v6784, 7
        %v6786 = vsub.s32 0, %v6785
        %v6787 = vrot.slane %v6782, %v6786
        %v6805 = vunpack.c.l.b16 %v6766
        %v6806 = vunpack.c.l.b16 %v6767
        %v6807 = vunpack.c.l.b16 %v6768
        %v6808 = vunpack.c.l.b16 %v6769
        %v6809 = vunpack.c.l.b16 %v6770
        %v6810 = vunpack.c.l.b16 %v6771
        %v6811 = vunpack.c.l.b16 %v6772
        %v6812 = vunpack.c.l.b16 %v6773
        %v6813 = vunpack.c.l.b16 %v6774
        %v6814 = vunpack.c.l.b16 %v6775
        %v6815 = vunpack.c.l.b16 %v6776
        %v6816 = vunpack.c.l.b16 %v6777
        %v6817 = vunpack.c.l.b16 %v6778
        %v6818 = vunpack.c.l.b16 %v6779
        %v6819 = vunpack.c.l.b16 %v6780
        %v6820 = vunpack.c.l.b16 %v6781
        %v6821 = vpack.c.b16 %v6806, %v6805
        %v6822 = vpack.c.b16 %v6808, %v6807
        %v6823 = vpack.c.b16 %v6810, %v6809
        %v6824 = vpack.c.b16 %v6812, %v6811
        %v6825 = vpack.c.b16 %v6814, %v6813
        %v6826 = vpack.c.b16 %v6816, %v6815
        %v6827 = vpack.c.b16 %v6818, %v6817
        %v6828 = vpack.c.b16 %v6820, %v6819
        %6837 = vmatprep.subr.bf16.mxu0 0
        %6838 = vmatpush1.bf16.msra.mxu0 %v6828
        %6839 = vmatprep.subr.bf16.mxu0 0
        %6840 = vmatpush1.bf16.msra.mxu0 %v6827
        %6841 = vmatprep.subr.bf16.mxu0 0
        %6842 = vmatpush1.bf16.msra.mxu0 %v6826
        %6843 = vmatprep.subr.bf16.mxu0 0
        %6844 = vmatpush1.bf16.msra.mxu0 %v6825
        %6845 = vmatprep.subr.bf16.mxu0 0
        %6846 = vmatpush1.bf16.msra.mxu0 %v6824
        %6847 = vmatprep.subr.bf16.mxu0 0
        %6848 = vmatpush1.bf16.msra.mxu0 %v6823
        %6849 = vmatprep.subr.bf16.mxu0 0
        %6850 = vmatpush1.bf16.msra.mxu0 %v6822
        %6851 = vmatprep.subr.bf16.mxu0 0
        %6852 = vmatpush1.bf16.msra.mxu0 %v6821
        %6853 = vmatprep.subr.bf16.mxu0 0
        %6854 = vmatpush2.bf16.msra.mxu0 0
        %6855 = vmatprep.subr.bf16.mxu0 0
        %6856 = vmatpush2.bf16.msra.mxu0 0
        %6857 = vmatprep.subr.bf16.mxu0 0
        %6858 = vmatpush2.bf16.msra.mxu0 0
        %6859 = vmatprep.subr.bf16.mxu0 0
        %6860 = vmatpush2.bf16.msra.mxu0 0
        %6861 = vmatprep.subr.bf16.mxu0 0
        %6862 = vmatpush2.bf16.msra.mxu0 0
        %6863 = vmatprep.subr.bf16.mxu0 0
        %6864 = vmatpush2.bf16.msra.mxu0 0
        %6865 = vmatprep.subr.bf16.mxu0 0
        %6866 = vmatpush2.bf16.msra.mxu0 0
        %6867 = vmatprep.subr.bf16.mxu0 0
        %6868 = vmatpush2.bf16.msra.mxu0 0
        %6869 = vmatprep.mubr.bf16.mxu0 0
        %6870 = vmatmul.mubr.bf16.gmra.mxu0 %v6762
        %v6871 = vpop.f32.mrf.mxu0
        %v6872 = vadd.f32 %v6787, %v6871
        %v6873 = vpop.f32.mrf.mxu0
        %v6874 = vpop.f32.mrf.mxu0
        %v6875 = vadd.f32 %v6787, %v6874
        %v6876 = vpop.f32.mrf.mxu0
        %6877 = vmatprep.mubr.bf16.mxu0 0
        %6878 = vmatmul.mubr.bf16.gmra.mxu0 %v6763
        %v6879 = vpop.f32.mrf.mxu0
        %v6880 = vadd.f32 %v6787, %v6879
        %v6881 = vpop.f32.mrf.mxu0
        %v6882 = vpop.f32.mrf.mxu0
        %v6883 = vadd.f32 %v6787, %v6882
        %v6884 = vpop.f32.mrf.mxu0
        %6885 = vmatprep.mubr.bf16.mxu0 0
        %6886 = vmatmul.mubr.bf16.gmra.mxu0 %v6764
        %v6887 = vpop.f32.mrf.mxu0
        %v6888 = vadd.f32 %v6787, %v6887
        %v6889 = vpop.f32.mrf.mxu0
        %v6890 = vpop.f32.mrf.mxu0
        %v6891 = vadd.f32 %v6787, %v6890
        %v6892 = vpop.f32.mrf.mxu0
        %6893 = vmatprep.mubr.bf16.mxu0 0
        %6894 = vmatmul.mubr.bf16.gmra.mxu0 %v6765
        %v6895 = vpop.f32.mrf.mxu0
        %v6896 = vadd.f32 %v6787, %v6895
        %v6897 = vpop.f32.mrf.mxu0
        %v6898 = vpop.f32.mrf.mxu0
        %v6899 = vadd.f32 %v6787, %v6898
        %v6900 = vpop.f32.mrf.mxu0
        %6901 = vdwg.mxu0
        %v6902 = vmax.f32 %v6872, 0.0
        %v6903 = vmax.f32 %v6875, 0.0
        %v6904 = vmax.f32 %v6880, 0.0
        %v6905 = vmax.f32 %v6883, 0.0
        %v6906 = vmax.f32 %v6888, 0.0
        %v6907 = vmax.f32 %v6891, 0.0
        %v6908 = vmax.f32 %v6896, 0.0
        %v6909 = vmax.f32 %v6899, 0.0
        %6910 = vst.msk [vmem:[#allocation5] sm:$0xff] %vm6007, %v6902
        %6911 = vst.msk [vmem:[#allocation5 + $0x8] sm:$0xff] %vm6007, %v6903
        %6912 = vst.msk [vmem:[#allocation5 + $0x10] sm:$0xff] %vm6007, %v6904
        %6913 = vst.msk [vmem:[#allocation5 + $0x18] sm:$0xff] %vm6007, %v6905
        %6914 = vst.msk [vmem:[#allocation5 + $0x20] sm:$0xff] %vm6007, %v6906
        %6915 = vst.msk [vmem:[#allocation5 + $0x28] sm:$0xff] %vm6007, %v6907
        %6916 = vst.msk [vmem:[#allocation5 + $0x30] sm:$0xff] %vm6007, %v6908
        %6917 = vst.msk [vmem:[#allocation5 + $0x38] sm:$0xff] %vm6007, %v6909
        %6926 = vrot.lane.b32.xlu0 %v6455, 40
        %v6927 = vpop.permute.xlu0 %6926
        %6928 = vrot.lane.b32.xlu0 %v6456, 40
        %v6929 = vpop.permute.xlu0 %6928
        %6930 = vrot.lane.b32.xlu0 %v6457, 40
        %v6931 = vpop.permute.xlu0 %6930
        %6932 = vrot.lane.b32.xlu0 %v6458, 40
        %v6933 = vpop.permute.xlu0 %6932
        %6934 = vrot.lane.b32.xlu0 %v6459, 40
        %v6935 = vpop.permute.xlu0 %6934
        %6936 = vrot.lane.b32.xlu0 %v6460, 40
        %v6937 = vpop.permute.xlu0 %6936
        %6938 = vrot.lane.b32.xlu0 %v6461, 40
        %v6939 = vpop.permute.xlu0 %6938
        %6940 = vrot.lane.b32.xlu0 %v6462, 40
        %v6941 = vpop.permute.xlu0 %6940
        %vm6950 = vcmask 654656
        %6951 = vst.msk [vmem:[#allocation5] sm:$0xff] %vm6950, %v6927
        %6952 = vst.msk [vmem:[#allocation5 + $0x8] sm:$0xff] %vm6950, %v6929
        %6953 = vst.msk [vmem:[#allocation5 + $0x10] sm:$0xff] %vm6950, %v6931
        %6954 = vst.msk [vmem:[#allocation5 + $0x18] sm:$0xff] %vm6950, %v6933
        %6955 = vst.msk [vmem:[#allocation5 + $0x20] sm:$0xff] %vm6950, %v6935
        %6956 = vst.msk [vmem:[#allocation5 + $0x28] sm:$0xff] %vm6950, %v6937
        %6957 = vst.msk [vmem:[#allocation5 + $0x30] sm:$0xff] %vm6950, %v6939
        %6958 = vst.msk [vmem:[#allocation5 + $0x38] sm:$0xff] %vm6950, %v6941
        %v6959 = vld [vmem:[#allocation5] sm:$0xff]
        %v6960 = vld [vmem:[#allocation5 + $0x8] sm:$0xff]
        %v6961 = vld [vmem:[#allocation5 + $0x10] sm:$0xff]
        %v6962 = vld [vmem:[#allocation5 + $0x18] sm:$0xff]
        %v6963 = vld [vmem:[#allocation5 + $0x20] sm:$0xff]
        %v6964 = vld [vmem:[#allocation5 + $0x28] sm:$0xff]
        %v6965 = vld [vmem:[#allocation5 + $0x30] sm:$0xff]
        %v6966 = vld [vmem:[#allocation5 + $0x38] sm:$0xff]
        %v6967 = vpack.c.bf16 %v6960, %v6959
        %v6968 = vpack.c.bf16 %v6962, %v6961
        %v6969 = vpack.c.bf16 %v6964, %v6963
        %v6970 = vpack.c.bf16 %v6966, %v6965
        %v6971 = vld [vmem:[%s31] sm:$0xf]
        %v6972 = vld [vmem:[%s31 + $0x4] sm:$0xf]
        %v6973 = vld [vmem:[%s31 + $0x8] sm:$0xf]
        %v6974 = vld [vmem:[%s31 + $0xc] sm:$0xf]
        %v6975 = vld [vmem:[%s31 + $0x10] sm:$0xf]
        %v6976 = vld [vmem:[%s31 + $0x14] sm:$0xf]
        %v6977 = vld [vmem:[%s31 + $0x18] sm:$0xf]
        %v6978 = vld [vmem:[%s31 + $0x1c] sm:$0xf]
        %v6979 = vld [vmem:[%s31 + $0x20] sm:$0xf]
        %v6980 = vld [vmem:[%s31 + $0x24] sm:$0xf]
        %v6981 = vld [vmem:[%s33] sm:$0x1]
        %v6983 = vlaneseq
        %v6984 = vshrl.u32 %v6983, 7
        %v6985 = vsub.s32 0, %v6984
        %v6986 = vrot.slane %v6981, %v6985
        %v6998 = vunpack.c.l.b16 %v6971
        %v6999 = vunpack.c.l.b16 %v6972
        %v7000 = vunpack.c.l.b16 %v6973
        %v7001 = vunpack.c.l.b16 %v6974
        %v7002 = vunpack.c.l.b16 %v6975
        %v7003 = vunpack.c.l.b16 %v6976
        %v7004 = vunpack.c.l.b16 %v6977
        %v7005 = vunpack.c.l.b16 %v6978
        %v7006 = vunpack.c.l.b16 %v6979
        %v7007 = vunpack.c.l.b16 %v6980
        %v7008 = vpack.c.b16 %v6999, %v6998
        %v7009 = vpack.c.b16 %v7001, %v7000
        %v7010 = vpack.c.b16 %v7003, %v7002
        %v7011 = vpack.c.b16 %v7005, %v7004
        %v7012 = vpack.c.b16 %v7007, %v7006
        %vm7018 = vcmask 654336
        %v7020 = vsel %vm7018, %v6967, 0
        %v7023 = vsel %vm7018, %v6968, 0
        %v7026 = vsel %vm7018, %v6969, 0
        %v7029 = vsel %vm7018, %v6970, 0
        %7031 = vmatprep.subr.bf16.mxu0 0
        %7032 = vmatpush1.bf16.msra.mxu0 0
        %7033 = vmatprep.subr.bf16.mxu0 0
        %7034 = vmatpush1.bf16.msra.mxu0 0
        %7035 = vmatprep.subr.bf16.mxu0 0
        %7036 = vmatpush1.bf16.msra.mxu0 0
        %7037 = vmatprep.subr.bf16.mxu0 0
        %7038 = vmatpush1.bf16.msra.mxu0 %v7012
        %7039 = vmatprep.subr.bf16.mxu0 0
        %7040 = vmatpush1.bf16.msra.mxu0 %v7011
        %7041 = vmatprep.subr.bf16.mxu0 0
        %7042 = vmatpush1.bf16.msra.mxu0 %v7010
        %7043 = vmatprep.subr.bf16.mxu0 0
        %7044 = vmatpush1.bf16.msra.mxu0 %v7009
        %7045 = vmatprep.subr.bf16.mxu0 0
        %7046 = vmatpush1.bf16.msra.mxu0 %v7008
        %7047 = vmatprep.subr.bf16.mxu0 0
        %7048 = vmatpush2.bf16.msra.mxu0 0
        %7049 = vmatprep.subr.bf16.mxu0 0
        %7050 = vmatpush2.bf16.msra.mxu0 0
        %7051 = vmatprep.subr.bf16.mxu0 0
        %7052 = vmatpush2.bf16.msra.mxu0 0
        %7053 = vmatprep.subr.bf16.mxu0 0
        %7054 = vmatpush2.bf16.msra.mxu0 0
        %7055 = vmatprep.subr.bf16.mxu0 0
        %7056 = vmatpush2.bf16.msra.mxu0 0
        %7057 = vmatprep.subr.bf16.mxu0 0
        %7058 = vmatpush2.bf16.msra.mxu0 0
        %7059 = vmatprep.subr.bf16.mxu0 0
        %7060 = vmatpush2.bf16.msra.mxu0 0
        %7061 = vmatprep.subr.bf16.mxu0 0
        %7062 = vmatpush2.bf16.msra.mxu0 0
        %7063 = vmatprep.mubr.bf16.mxu0 0
        %7064 = vmatmul.mubr.bf16.gmra.mxu0 %v7020
        %v7065 = vpop.f32.mrf.mxu0
        %v7066 = vadd.f32 %v6986, %v7065
        %v7067 = vpop.f32.mrf.mxu0
        %v7068 = vpop.f32.mrf.mxu0
        %v7069 = vadd.f32 %v6986, %v7068
        %v7070 = vpop.f32.mrf.mxu0
        %7071 = vmatprep.mubr.bf16.mxu0 0
        %7072 = vmatmul.mubr.bf16.gmra.mxu0 %v7023
        %v7073 = vpop.f32.mrf.mxu0
        %v7074 = vadd.f32 %v6986, %v7073
        %v7075 = vpop.f32.mrf.mxu0
        %v7076 = vpop.f32.mrf.mxu0
        %v7077 = vadd.f32 %v6986, %v7076
        %v7078 = vpop.f32.mrf.mxu0
        %7079 = vmatprep.mubr.bf16.mxu0 0
        %7080 = vmatmul.mubr.bf16.gmra.mxu0 %v7026
        %v7081 = vpop.f32.mrf.mxu0
        %v7082 = vadd.f32 %v6986, %v7081
        %v7083 = vpop.f32.mrf.mxu0
        %v7084 = vpop.f32.mrf.mxu0
        %v7085 = vadd.f32 %v6986, %v7084
        %v7086 = vpop.f32.mrf.mxu0
        %7087 = vmatprep.mubr.bf16.mxu0 0
        %7088 = vmatmul.mubr.bf16.gmra.mxu0 %v7029
        %v7089 = vpop.f32.mrf.mxu0
        %v7090 = vadd.f32 %v6986, %v7089
        %v7091 = vpop.f32.mrf.mxu0
        %v7092 = vpop.f32.mrf.mxu0
        %v7093 = vadd.f32 %v6986, %v7092
        %v7094 = vpop.f32.mrf.mxu0
        %7095 = vdwg.mxu0
        %v7096 = vmax.f32 %v7066, 0.0
        %v7097 = vmax.f32 %v7069, 0.0
        %v7098 = vmax.f32 %v7074, 0.0
        %v7099 = vmax.f32 %v7077, 0.0
        %v7100 = vmax.f32 %v7082, 0.0
        %v7101 = vmax.f32 %v7085, 0.0
        %v7102 = vmax.f32 %v7090, 0.0
        %v7103 = vmax.f32 %v7093, 0.0
        %v7104 = vld [vmem:[%s35] sm:$0xff]
        %v7105 = vld [vmem:[%s35 + $0x8] sm:$0xff]
        %v7106 = vld [vmem:[%s35 + $0x10] sm:$0xff]
        %v7107 = vld [vmem:[%s35 + $0x18] sm:$0xff]
        %v7108 = vld [vmem:[%s35 + $0x20] sm:$0xff]
        %v7109 = vld [vmem:[%s35 + $0x28] sm:$0xff]
        %v7110 = vld [vmem:[%s35 + $0x30] sm:$0xff]
        %v7111 = vld [vmem:[%s35 + $0x38] sm:$0xff]
        %v7112 = vld [vmem:[%s35 + $0x40] sm:$0xff]
        %v7113 = vld [vmem:[%s37] sm:$0x1]
        %7114 = vst [vmem:[%s4069 + $0x8] sm:$0xff] %v7096
        %7115 = vst [vmem:[%s4069 + $0x38] sm:$0xff] %v7097
        %7116 = vst [vmem:[%s4069 + $0x68] sm:$0xff] %v7098
        %7117 = vst [vmem:[%s4069 + $0x98] sm:$0xff] %v7099
        %7118 = vst [vmem:[%s4069 + $0xc8] sm:$0xff] %v7100
        %7119 = vst [vmem:[%s4069 + $0xf8] sm:$0xff] %v7101
        %7120 = vst [vmem:[%s4069 + $0x128] sm:$0xff] %v7102
        %7121 = vst [vmem:[%s4069 + $0x158] sm:$0xff] %v7103
        %7122 = vst [vmem:[#allocation2 + $0x7] sm:$0xff] 0.0
        %7123 = vst [vmem:[#allocation2 + $0xf] sm:$0x3] 0.0
        %7124 = vst [vmem:[%s4069 + $0x7] sm:$0x1] 0.0
        %7125 = vst [vmem:[%s4069 + $0x37] sm:$0x1] 0.0
        %7126 = vst [vmem:[%s4069 + $0x67] sm:$0x1] 0.0
        %7127 = vst [vmem:[%s4069 + $0x97] sm:$0x1] 0.0
        %7128 = vst [vmem:[%s4069 + $0xc7] sm:$0x1] 0.0
        %7129 = vst [vmem:[%s4069 + $0xf7] sm:$0x1] 0.0
        %7130 = vst [vmem:[%s4069 + $0x127] sm:$0x1] 0.0
        %7131 = vst [vmem:[%s4069 + $0x157] sm:$0x1] 0.0
        %s7132 = scalar_lea.vmem [#allocation2], 432
        %7133 = vst [vmem:[%s7132 + $0x7] sm:$0xff] 0.0
        %7134 = vst [vmem:[%s7132 + $0xf] sm:$0x3] 0.0
        %7135 = vst [vmem:[%s4069 + $0x10] sm:$0x1] 0.0
        %7136 = vst [vmem:[%s4069 + $0x40] sm:$0x1] 0.0
        %7137 = vst [vmem:[%s4069 + $0x70] sm:$0x1] 0.0
        %7138 = vst [vmem:[%s4069 + $0xa0] sm:$0x1] 0.0
        %7139 = vst [vmem:[%s4069 + $0xd0] sm:$0x1] 0.0
        %7140 = vst [vmem:[%s4069 + $0x100] sm:$0x1] 0.0
        %7141 = vst [vmem:[%s4069 + $0x130] sm:$0x1] 0.0
        %7142 = vst [vmem:[%s4069 + $0x160] sm:$0x1] 0.0
        %v7143 = vld [vmem:[#allocation2 + $0x7] sm:$0xff]
        %v7144 = vld [vmem:[#allocation2 + $0x37] sm:$0xff]
        %v7145 = vld [vmem:[#allocation2 + $0x67] sm:$0xff]
        %v7146 = vld [vmem:[#allocation2 + $0x97] sm:$0xff]
        %v7147 = vld [vmem:[#allocation2 + $0xc7] sm:$0xff]
        %v7148 = vld [vmem:[#allocation2 + $0xf7] sm:$0xff]
        %v7149 = vld [vmem:[#allocation2 + $0x127] sm:$0xff]
        %v7150 = vld [vmem:[#allocation2 + $0x157] sm:$0xff]
        %v7151 = vmul.f32 %v7143, %v7104
        %v7152 = vmul.f32 %v7144, %v7104
        %v7153 = vmul.f32 %v7145, %v7104
        %v7154 = vmul.f32 %v7146, %v7104
        %v7155 = vmul.f32 %v7147, %v7104
        %v7156 = vmul.f32 %v7148, %v7104
        %v7157 = vmul.f32 %v7149, %v7104
        %v7158 = vmul.f32 %v7150, %v7104
        %v7159 = vadd.f32 %v7151, 0.0
        %v7160 = vadd.f32 %v7152, 0.0
        %v7161 = vadd.f32 %v7153, 0.0
        %v7162 = vadd.f32 %v7154, 0.0
        %v7163 = vadd.f32 %v7155, 0.0
        %v7164 = vadd.f32 %v7156, 0.0
        %v7165 = vadd.f32 %v7157, 0.0
        %v7166 = vadd.f32 %v7158, 0.0
        %v7167 = vld [vmem:[#allocation2 + $0x8] sm:$0xff]
        %v7168 = vld [vmem:[#allocation2 + $0x38] sm:$0xff]
        %v7169 = vld [vmem:[#allocation2 + $0x68] sm:$0xff]
        %v7170 = vld [vmem:[#allocation2 + $0x98] sm:$0xff]
        %v7171 = vld [vmem:[#allocation2 + $0xc8] sm:$0xff]
        %v7172 = vld [vmem:[#allocation2 + $0xf8] sm:$0xff]
        %v7173 = vld [vmem:[#allocation2 + $0x128] sm:$0xff]
        %v7174 = vld [vmem:[#allocation2 + $0x158] sm:$0xff]
        %v7175 = vmul.f32 %v7167, %v7105
        %v7176 = vmul.f32 %v7168, %v7105
        %v7177 = vmul.f32 %v7169, %v7105
        %v7178 = vmul.f32 %v7170, %v7105
        %v7179 = vmul.f32 %v7171, %v7105
        %v7180 = vmul.f32 %v7172, %v7105
        %v7181 = vmul.f32 %v7173, %v7105
        %v7182 = vmul.f32 %v7174, %v7105
        %v7183 = vadd.f32 %v7159, %v7175
        %v7184 = vadd.f32 %v7160, %v7176
        %v7185 = vadd.f32 %v7161, %v7177
        %v7186 = vadd.f32 %v7162, %v7178
        %v7187 = vadd.f32 %v7163, %v7179
        %v7188 = vadd.f32 %v7164, %v7180
        %v7189 = vadd.f32 %v7165, %v7181
        %v7190 = vadd.f32 %v7166, %v7182
        %v7191 = vld [vmem:[#allocation2 + $0x9] sm:$0xff]
        %v7192 = vld [vmem:[#allocation2 + $0x39] sm:$0xff]
        %v7193 = vld [vmem:[#allocation2 + $0x69] sm:$0xff]
        %v7194 = vld [vmem:[#allocation2 + $0x99] sm:$0xff]
        %v7195 = vld [vmem:[#allocation2 + $0xc9] sm:$0xff]
        %v7196 = vld [vmem:[#allocation2 + $0xf9] sm:$0xff]
        %v7197 = vld [vmem:[#allocation2 + $0x129] sm:$0xff]
        %v7198 = vld [vmem:[#allocation2 + $0x159] sm:$0xff]
        %v7199 = vmul.f32 %v7191, %v7106
        %v7200 = vmul.f32 %v7192, %v7106
        %v7201 = vmul.f32 %v7193, %v7106
        %v7202 = vmul.f32 %v7194, %v7106
        %v7203 = vmul.f32 %v7195, %v7106
        %v7204 = vmul.f32 %v7196, %v7106
        %v7205 = vmul.f32 %v7197, %v7106
        %v7206 = vmul.f32 %v7198, %v7106
        %v7207 = vadd.f32 %v7183, %v7199
        %v7208 = vadd.f32 %v7184, %v7200
        %v7209 = vadd.f32 %v7185, %v7201
        %v7210 = vadd.f32 %v7186, %v7202
        %v7211 = vadd.f32 %v7187, %v7203
        %v7212 = vadd.f32 %v7188, %v7204
        %v7213 = vadd.f32 %v7189, %v7205
        %v7214 = vadd.f32 %v7190, %v7206
        %v7215 = vld [vmem:[%s4069 + $0x7] sm:$0xff]
        %v7216 = vld [vmem:[%s4069 + $0x37] sm:$0xff]
        %v7217 = vld [vmem:[%s4069 + $0x67] sm:$0xff]
        %v7218 = vld [vmem:[%s4069 + $0x97] sm:$0xff]
        %v7219 = vld [vmem:[%s4069 + $0xc7] sm:$0xff]
        %v7220 = vld [vmem:[%s4069 + $0xf7] sm:$0xff]
        %v7221 = vld [vmem:[%s4069 + $0x127] sm:$0xff]
        %v7222 = vld [vmem:[%s4069 + $0x157] sm:$0xff]
        %v7223 = vmul.f32 %v7215, %v7107
        %v7224 = vmul.f32 %v7216, %v7107
        %v7225 = vmul.f32 %v7217, %v7107
        %v7226 = vmul.f32 %v7218, %v7107
        %v7227 = vmul.f32 %v7219, %v7107
        %v7228 = vmul.f32 %v7220, %v7107
        %v7229 = vmul.f32 %v7221, %v7107
        %v7230 = vmul.f32 %v7222, %v7107
        %v7231 = vadd.f32 %v7207, %v7223
        %v7232 = vadd.f32 %v7208, %v7224
        %v7233 = vadd.f32 %v7209, %v7225
        %v7234 = vadd.f32 %v7210, %v7226
        %v7235 = vadd.f32 %v7211, %v7227
        %v7236 = vadd.f32 %v7212, %v7228
        %v7237 = vadd.f32 %v7213, %v7229
        %v7238 = vadd.f32 %v7214, %v7230
        %v7239 = vld [vmem:[%s4069 + $0x8] sm:$0xff]
        %v7240 = vld [vmem:[%s4069 + $0x38] sm:$0xff]
        %v7241 = vld [vmem:[%s4069 + $0x68] sm:$0xff]
        %v7242 = vld [vmem:[%s4069 + $0x98] sm:$0xff]
        %v7243 = vld [vmem:[%s4069 + $0xc8] sm:$0xff]
        %v7244 = vld [vmem:[%s4069 + $0xf8] sm:$0xff]
        %v7245 = vld [vmem:[%s4069 + $0x128] sm:$0xff]
        %v7246 = vld [vmem:[%s4069 + $0x158] sm:$0xff]
        %v7247 = vmul.f32 %v7239, %v7108
        %v7248 = vmul.f32 %v7240, %v7108
        %v7249 = vmul.f32 %v7241, %v7108
        %v7250 = vmul.f32 %v7242, %v7108
        %v7251 = vmul.f32 %v7243, %v7108
        %v7252 = vmul.f32 %v7244, %v7108
        %v7253 = vmul.f32 %v7245, %v7108
        %v7254 = vmul.f32 %v7246, %v7108
        %v7255 = vadd.f32 %v7231, %v7247
        %v7256 = vadd.f32 %v7232, %v7248
        %v7257 = vadd.f32 %v7233, %v7249
        %v7258 = vadd.f32 %v7234, %v7250
        %v7259 = vadd.f32 %v7235, %v7251
        %v7260 = vadd.f32 %v7236, %v7252
        %v7261 = vadd.f32 %v7237, %v7253
        %v7262 = vadd.f32 %v7238, %v7254
        %v7263 = vld [vmem:[%s4069 + $0x9] sm:$0xff]
        %v7264 = vld [vmem:[%s4069 + $0x39] sm:$0xff]
        %v7265 = vld [vmem:[%s4069 + $0x69] sm:$0xff]
        %v7266 = vld [vmem:[%s4069 + $0x99] sm:$0xff]
        %v7267 = vld [vmem:[%s4069 + $0xc9] sm:$0xff]
        %v7268 = vld [vmem:[%s4069 + $0xf9] sm:$0xff]
        %v7269 = vld [vmem:[%s4069 + $0x129] sm:$0xff]
        %v7270 = vld [vmem:[%s4069 + $0x159] sm:$0xff]
        %v7271 = vmul.f32 %v7263, %v7109
        %v7272 = vmul.f32 %v7264, %v7109
        %v7273 = vmul.f32 %v7265, %v7109
        %v7274 = vmul.f32 %v7266, %v7109
        %v7275 = vmul.f32 %v7267, %v7109
        %v7276 = vmul.f32 %v7268, %v7109
        %v7277 = vmul.f32 %v7269, %v7109
        %v7278 = vmul.f32 %v7270, %v7109
        %v7279 = vadd.f32 %v7255, %v7271
        %v7280 = vadd.f32 %v7256, %v7272
        %v7281 = vadd.f32 %v7257, %v7273
        %v7282 = vadd.f32 %v7258, %v7274
        %v7283 = vadd.f32 %v7259, %v7275
        %v7284 = vadd.f32 %v7260, %v7276
        %v7285 = vadd.f32 %v7261, %v7277
        %v7286 = vadd.f32 %v7262, %v7278
        %v7287 = vld [vmem:[%s5003 + $0x7] sm:$0xff]
        %v7288 = vld [vmem:[%s5003 + $0x37] sm:$0xff]
        %v7289 = vld [vmem:[%s5003 + $0x67] sm:$0xff]
        %v7290 = vld [vmem:[%s5003 + $0x97] sm:$0xff]
        %v7291 = vld [vmem:[%s5003 + $0xc7] sm:$0xff]
        %v7292 = vld [vmem:[%s5003 + $0xf7] sm:$0xff]
        %v7293 = vld [vmem:[%s5003 + $0x127] sm:$0xff]
        %v7294 = vld [vmem:[%s5003 + $0x157] sm:$0xff]
        %v7295 = vmul.f32 %v7287, %v7110
        %v7296 = vmul.f32 %v7288, %v7110
        %v7297 = vmul.f32 %v7289, %v7110
        %v7298 = vmul.f32 %v7290, %v7110
        %v7299 = vmul.f32 %v7291, %v7110
        %v7300 = vmul.f32 %v7292, %v7110
        %v7301 = vmul.f32 %v7293, %v7110
        %v7302 = vmul.f32 %v7294, %v7110
        %v7303 = vadd.f32 %v7279, %v7295
        %v7304 = vadd.f32 %v7280, %v7296
        %v7305 = vadd.f32 %v7281, %v7297
        %v7306 = vadd.f32 %v7282, %v7298
        %v7307 = vadd.f32 %v7283, %v7299
        %v7308 = vadd.f32 %v7284, %v7300
        %v7309 = vadd.f32 %v7285, %v7301
        %v7310 = vadd.f32 %v7286, %v7302
        %v7311 = vld [vmem:[%s5003 + $0x8] sm:$0xff]
        %v7312 = vld [vmem:[%s5003 + $0x38] sm:$0xff]
        %v7313 = vld [vmem:[%s5003 + $0x68] sm:$0xff]
        %v7314 = vld [vmem:[%s5003 + $0x98] sm:$0xff]
        %v7315 = vld [vmem:[%s5003 + $0xc8] sm:$0xff]
        %v7316 = vld [vmem:[%s5003 + $0xf8] sm:$0xff]
        %v7317 = vld [vmem:[%s5003 + $0x128] sm:$0xff]
        %v7318 = vld [vmem:[%s5003 + $0x158] sm:$0xff]
        %v7319 = vmul.f32 %v7311, %v7111
        %v7320 = vmul.f32 %v7312, %v7111
        %v7321 = vmul.f32 %v7313, %v7111
        %v7322 = vmul.f32 %v7314, %v7111
        %v7323 = vmul.f32 %v7315, %v7111
        %v7324 = vmul.f32 %v7316, %v7111
        %v7325 = vmul.f32 %v7317, %v7111
        %v7326 = vmul.f32 %v7318, %v7111
        %v7327 = vadd.f32 %v7303, %v7319
        %v7328 = vadd.f32 %v7304, %v7320
        %v7329 = vadd.f32 %v7305, %v7321
        %v7330 = vadd.f32 %v7306, %v7322
        %v7331 = vadd.f32 %v7307, %v7323
        %v7332 = vadd.f32 %v7308, %v7324
        %v7333 = vadd.f32 %v7309, %v7325
        %v7334 = vadd.f32 %v7310, %v7326
        %v7335 = vld [vmem:[%s5003 + $0x9] sm:$0xff]
        %v7336 = vld [vmem:[%s5003 + $0x39] sm:$0xff]
        %v7337 = vld [vmem:[%s5003 + $0x69] sm:$0xff]
        %v7338 = vld [vmem:[%s5003 + $0x99] sm:$0xff]
        %v7339 = vld [vmem:[%s5003 + $0xc9] sm:$0xff]
        %v7340 = vld [vmem:[%s5003 + $0xf9] sm:$0xff]
        %v7341 = vld [vmem:[%s5003 + $0x129] sm:$0xff]
        %v7342 = vld [vmem:[%s5003 + $0x159] sm:$0xff]
        %v7343 = vmul.f32 %v7335, %v7112
        %v7344 = vmul.f32 %v7336, %v7112
        %v7345 = vmul.f32 %v7337, %v7112
        %v7346 = vmul.f32 %v7338, %v7112
        %v7347 = vmul.f32 %v7339, %v7112
        %v7348 = vmul.f32 %v7340, %v7112
        %v7349 = vmul.f32 %v7341, %v7112
        %v7350 = vmul.f32 %v7342, %v7112
        %v7351 = vadd.f32 %v7327, %v7343
        %v7352 = vadd.f32 %v7328, %v7344
        %v7353 = vadd.f32 %v7329, %v7345
        %v7354 = vadd.f32 %v7330, %v7346
        %v7355 = vadd.f32 %v7331, %v7347
        %v7356 = vadd.f32 %v7332, %v7348
        %v7357 = vadd.f32 %v7333, %v7349
        %v7358 = vadd.f32 %v7334, %v7350
        %v7360 = vlaneseq
        %v7361 = vshrl.u32 %v7360, 7
        %v7362 = vsub.s32 0, %v7361
        %v7363 = vrot.slane %v7113, %v7362
        %v7365 = vadd.f32 %v7351, %v7363
        %v7366 = vadd.f32 %v7352, %v7363
        %v7367 = vadd.f32 %v7353, %v7363
        %v7368 = vadd.f32 %v7354, %v7363
        %v7369 = vadd.f32 %v7355, %v7363
        %v7370 = vadd.f32 %v7356, %v7363
        %v7371 = vadd.f32 %v7357, %v7363
        %v7372 = vadd.f32 %v7358, %v7363
        %v7373 = vmax.f32 %v7365, 0.0
        %v7374 = vmax.f32 %v7366, 0.0
        %v7375 = vmax.f32 %v7367, 0.0
        %v7376 = vmax.f32 %v7368, 0.0
        %v7377 = vmax.f32 %v7369, 0.0
        %v7378 = vmax.f32 %v7370, 0.0
        %v7379 = vmax.f32 %v7371, 0.0
        %v7380 = vmax.f32 %v7372, 0.0
        %v7381 = vpack.c.bf16 %v7374, %v7373
        %v7382 = vpack.c.bf16 %v7376, %v7375
        %v7383 = vpack.c.bf16 %v7378, %v7377
        %v7384 = vpack.c.bf16 %v7380, %v7379
        %v7385 = vld [vmem:[%s39] sm:$0xf]
        %v7386 = vld [vmem:[%s39 + $0x4] sm:$0xf]
        %v7387 = vld [vmem:[%s39 + $0x8] sm:$0xf]
        %v7388 = vld [vmem:[%s39 + $0xc] sm:$0xf]
        %v7389 = vld [vmem:[%s39 + $0x10] sm:$0xf]
        %v7390 = vld [vmem:[%s39 + $0x14] sm:$0xf]
        %v7391 = vld [vmem:[%s39 + $0x18] sm:$0xf]
        %v7392 = vld [vmem:[%s39 + $0x1c] sm:$0xf]
        %v7393 = vld [vmem:[%s39 + $0x20] sm:$0xf]
        %v7394 = vld [vmem:[%s39 + $0x24] sm:$0xf]
        %v7395 = vld [vmem:[%s39 + $0x28] sm:$0xf]
        %v7396 = vld [vmem:[%s39 + $0x2c] sm:$0xf]
        %v7397 = vld [vmem:[%s39 + $0x30] sm:$0xf]
        %v7398 = vld [vmem:[%s39 + $0x34] sm:$0xf]
        %v7399 = vld [vmem:[%s39 + $0x38] sm:$0xf]
        %v7400 = vld [vmem:[%s39 + $0x3c] sm:$0xf]
        %v7401 = vld [vmem:[%s41] sm:$0x1]
        %v7403 = vlaneseq
        %v7404 = vshrl.u32 %v7403, 7
        %v7405 = vsub.s32 0, %v7404
        %v7406 = vrot.slane %v7401, %v7405
        %v7424 = vunpack.c.l.b16 %v7385
        %v7425 = vunpack.c.l.b16 %v7386
        %v7426 = vunpack.c.l.b16 %v7387
        %v7427 = vunpack.c.l.b16 %v7388
        %v7428 = vunpack.c.l.b16 %v7389
        %v7429 = vunpack.c.l.b16 %v7390
        %v7430 = vunpack.c.l.b16 %v7391
        %v7431 = vunpack.c.l.b16 %v7392
        %v7432 = vunpack.c.l.b16 %v7393
        %v7433 = vunpack.c.l.b16 %v7394
        %v7434 = vunpack.c.l.b16 %v7395
        %v7435 = vunpack.c.l.b16 %v7396
        %v7436 = vunpack.c.l.b16 %v7397
        %v7437 = vunpack.c.l.b16 %v7398
        %v7438 = vunpack.c.l.b16 %v7399
        %v7439 = vunpack.c.l.b16 %v7400
        %v7440 = vpack.c.b16 %v7425, %v7424
        %v7441 = vpack.c.b16 %v7427, %v7426
        %v7442 = vpack.c.b16 %v7429, %v7428
        %v7443 = vpack.c.b16 %v7431, %v7430
        %v7444 = vpack.c.b16 %v7433, %v7432
        %v7445 = vpack.c.b16 %v7435, %v7434
        %v7446 = vpack.c.b16 %v7437, %v7436
        %v7447 = vpack.c.b16 %v7439, %v7438
        %7456 = vmatprep.subr.bf16.mxu0 0
        %7457 = vmatpush1.bf16.msra.mxu0 %v7447
        %7458 = vmatprep.subr.bf16.mxu0 0
        %7459 = vmatpush1.bf16.msra.mxu0 %v7446
        %7460 = vmatprep.subr.bf16.mxu0 0
        %7461 = vmatpush1.bf16.msra.mxu0 %v7445
        %7462 = vmatprep.subr.bf16.mxu0 0
        %7463 = vmatpush1.bf16.msra.mxu0 %v7444
        %7464 = vmatprep.subr.bf16.mxu0 0
        %7465 = vmatpush1.bf16.msra.mxu0 %v7443
        %7466 = vmatprep.subr.bf16.mxu0 0
        %7467 = vmatpush1.bf16.msra.mxu0 %v7442
        %7468 = vmatprep.subr.bf16.mxu0 0
        %7469 = vmatpush1.bf16.msra.mxu0 %v7441
        %7470 = vmatprep.subr.bf16.mxu0 0
        %7471 = vmatpush1.bf16.msra.mxu0 %v7440
        %7472 = vmatprep.subr.bf16.mxu0 0
        %7473 = vmatpush2.bf16.msra.mxu0 0
        %7474 = vmatprep.subr.bf16.mxu0 0
        %7475 = vmatpush2.bf16.msra.mxu0 0
        %7476 = vmatprep.subr.bf16.mxu0 0
        %7477 = vmatpush2.bf16.msra.mxu0 0
        %7478 = vmatprep.subr.bf16.mxu0 0
        %7479 = vmatpush2.bf16.msra.mxu0 0
        %7480 = vmatprep.subr.bf16.mxu0 0
        %7481 = vmatpush2.bf16.msra.mxu0 0
        %7482 = vmatprep.subr.bf16.mxu0 0
        %7483 = vmatpush2.bf16.msra.mxu0 0
        %7484 = vmatprep.subr.bf16.mxu0 0
        %7485 = vmatpush2.bf16.msra.mxu0 0
        %7486 = vmatprep.subr.bf16.mxu0 0
        %7487 = vmatpush2.bf16.msra.mxu0 0
        %7488 = vmatprep.mubr.bf16.mxu0 0
        %7489 = vmatmul.mubr.bf16.gmra.mxu0 %v7381
        %v7490 = vpop.f32.mrf.mxu0
        %v7491 = vadd.f32 %v7406, %v7490
        %v7492 = vpop.f32.mrf.mxu0
        %v7493 = vpop.f32.mrf.mxu0
        %v7494 = vadd.f32 %v7406, %v7493
        %v7495 = vpop.f32.mrf.mxu0
        %7496 = vmatprep.mubr.bf16.mxu0 0
        %7497 = vmatmul.mubr.bf16.gmra.mxu0 %v7382
        %v7498 = vpop.f32.mrf.mxu0
        %v7499 = vadd.f32 %v7406, %v7498
        %v7500 = vpop.f32.mrf.mxu0
        %v7501 = vpop.f32.mrf.mxu0
        %v7502 = vadd.f32 %v7406, %v7501
        %v7503 = vpop.f32.mrf.mxu0
        %7504 = vmatprep.mubr.bf16.mxu0 0
        %7505 = vmatmul.mubr.bf16.gmra.mxu0 %v7383
        %v7506 = vpop.f32.mrf.mxu0
        %v7507 = vadd.f32 %v7406, %v7506
        %v7508 = vpop.f32.mrf.mxu0
        %v7509 = vpop.f32.mrf.mxu0
        %v7510 = vadd.f32 %v7406, %v7509
        %v7511 = vpop.f32.mrf.mxu0
        %7512 = vmatprep.mubr.bf16.mxu0 0
        %7513 = vmatmul.mubr.bf16.gmra.mxu0 %v7384
        %v7514 = vpop.f32.mrf.mxu0
        %v7515 = vadd.f32 %v7406, %v7514
        %v7516 = vpop.f32.mrf.mxu0
        %v7517 = vpop.f32.mrf.mxu0
        %v7518 = vadd.f32 %v7406, %v7517
        %v7519 = vpop.f32.mrf.mxu0
        %7520 = vdwg.mxu0
        %v7521 = vadd.f32 %v7491, %v6959
        %v7522 = vadd.f32 %v7494, %v6960
        %v7523 = vadd.f32 %v7499, %v6961
        %v7524 = vadd.f32 %v7502, %v6962
        %v7525 = vadd.f32 %v7507, %v6963
        %v7526 = vadd.f32 %v7510, %v6964
        %v7527 = vadd.f32 %v7515, %v6965
        %v7528 = vadd.f32 %v7518, %v6966
        %v7529 = vmax.f32 %v7521, 0.0
        %v7530 = vmax.f32 %v7522, 0.0
        %v7531 = vmax.f32 %v7523, 0.0
        %v7532 = vmax.f32 %v7524, 0.0
        %v7533 = vmax.f32 %v7525, 0.0
        %v7534 = vmax.f32 %v7526, 0.0
        %v7535 = vmax.f32 %v7527, 0.0
        %v7536 = vmax.f32 %v7528, 0.0
        %v7537 = vpack.c.bf16 %v7530, %v7529
        %v7538 = vpack.c.bf16 %v7532, %v7531
        %v7539 = vpack.c.bf16 %v7534, %v7533
        %v7540 = vpack.c.bf16 %v7536, %v7535
        %v7541 = vld [vmem:[%s43] sm:$0xf]
        %v7542 = vld [vmem:[%s43 + $0x4] sm:$0xf]
        %v7543 = vld [vmem:[%s43 + $0x8] sm:$0xf]
        %v7544 = vld [vmem:[%s43 + $0xc] sm:$0xf]
        %v7545 = vld [vmem:[%s43 + $0x10] sm:$0xf]
        %v7546 = vld [vmem:[%s43 + $0x14] sm:$0xf]
        %v7547 = vld [vmem:[%s43 + $0x18] sm:$0xf]
        %v7548 = vld [vmem:[%s43 + $0x1c] sm:$0xf]
        %v7549 = vld [vmem:[%s43 + $0x20] sm:$0xf]
        %v7550 = vld [vmem:[%s43 + $0x24] sm:$0xf]
        %v7551 = vld [vmem:[%s45] sm:$0x1]
        %v7553 = vlaneseq
        %v7554 = vshrl.u32 %v7553, 7
        %v7555 = vsub.s32 0, %v7554
        %v7556 = vrot.slane %v7551, %v7555
        %v7568 = vunpack.c.l.b16 %v7541
        %v7569 = vunpack.c.l.b16 %v7542
        %v7570 = vunpack.c.l.b16 %v7543
        %v7571 = vunpack.c.l.b16 %v7544
        %v7572 = vunpack.c.l.b16 %v7545
        %v7573 = vunpack.c.l.b16 %v7546
        %v7574 = vunpack.c.l.b16 %v7547
        %v7575 = vunpack.c.l.b16 %v7548
        %v7576 = vunpack.c.l.b16 %v7549
        %v7577 = vunpack.c.l.b16 %v7550
        %v7578 = vpack.c.b16 %v7569, %v7568
        %v7579 = vpack.c.b16 %v7571, %v7570
        %v7580 = vpack.c.b16 %v7573, %v7572
        %v7581 = vpack.c.b16 %v7575, %v7574
        %v7582 = vpack.c.b16 %v7577, %v7576
        %v7589 = vsel %vm7018, %v7537, 0
        %v7592 = vsel %vm7018, %v7538, 0
        %v7595 = vsel %vm7018, %v7539, 0
        %v7598 = vsel %vm7018, %v7540, 0
        %7600 = vmatprep.subr.bf16.mxu0 0
        %7601 = vmatpush1.bf16.msra.mxu0 0
        %7602 = vmatprep.subr.bf16.mxu0 0
        %7603 = vmatpush1.bf16.msra.mxu0 0
        %7604 = vmatprep.subr.bf16.mxu0 0
        %7605 = vmatpush1.bf16.msra.mxu0 0
        %7606 = vmatprep.subr.bf16.mxu0 0
        %7607 = vmatpush1.bf16.msra.mxu0 %v7582
        %7608 = vmatprep.subr.bf16.mxu0 0
        %7609 = vmatpush1.bf16.msra.mxu0 %v7581
        %7610 = vmatprep.subr.bf16.mxu0 0
        %7611 = vmatpush1.bf16.msra.mxu0 %v7580
        %7612 = vmatprep.subr.bf16.mxu0 0
        %7613 = vmatpush1.bf16.msra.mxu0 %v7579
        %7614 = vmatprep.subr.bf16.mxu0 0
        %7615 = vmatpush1.bf16.msra.mxu0 %v7578
        %7616 = vmatprep.subr.bf16.mxu0 0
        %7617 = vmatpush2.bf16.msra.mxu0 0
        %7618 = vmatprep.subr.bf16.mxu0 0
        %7619 = vmatpush2.bf16.msra.mxu0 0
        %7620 = vmatprep.subr.bf16.mxu0 0
        %7621 = vmatpush2.bf16.msra.mxu0 0
        %7622 = vmatprep.subr.bf16.mxu0 0
        %7623 = vmatpush2.bf16.msra.mxu0 0
        %7624 = vmatprep.subr.bf16.mxu0 0
        %7625 = vmatpush2.bf16.msra.mxu0 0
        %7626 = vmatprep.subr.bf16.mxu0 0
        %7627 = vmatpush2.bf16.msra.mxu0 0
        %7628 = vmatprep.subr.bf16.mxu0 0
        %7629 = vmatpush2.bf16.msra.mxu0 0
        %7630 = vmatprep.subr.bf16.mxu0 0
        %7631 = vmatpush2.bf16.msra.mxu0 0
        %7632 = vmatprep.mubr.bf16.mxu0 0
        %7633 = vmatmul.mubr.bf16.gmra.mxu0 %v7589
        %v7634 = vpop.f32.mrf.mxu0
        %v7635 = vadd.f32 %v7556, %v7634
        %v7636 = vpop.f32.mrf.mxu0
        %v7637 = vpop.f32.mrf.mxu0
        %v7638 = vadd.f32 %v7556, %v7637
        %v7639 = vpop.f32.mrf.mxu0
        %7640 = vmatprep.mubr.bf16.mxu0 0
        %7641 = vmatmul.mubr.bf16.gmra.mxu0 %v7592
        %v7642 = vpop.f32.mrf.mxu0
        %v7643 = vadd.f32 %v7556, %v7642
        %v7644 = vpop.f32.mrf.mxu0
        %v7645 = vpop.f32.mrf.mxu0
        %v7646 = vadd.f32 %v7556, %v7645
        %v7647 = vpop.f32.mrf.mxu0
        %7648 = vmatprep.mubr.bf16.mxu0 0
        %7649 = vmatmul.mubr.bf16.gmra.mxu0 %v7595
        %v7650 = vpop.f32.mrf.mxu0
        %v7651 = vadd.f32 %v7556, %v7650
        %v7652 = vpop.f32.mrf.mxu0
        %v7653 = vpop.f32.mrf.mxu0
        %v7654 = vadd.f32 %v7556, %v7653
        %v7655 = vpop.f32.mrf.mxu0
        %7656 = vmatprep.mubr.bf16.mxu0 0
        %7657 = vmatmul.mubr.bf16.gmra.mxu0 %v7598
        %v7658 = vpop.f32.mrf.mxu0
        %v7659 = vadd.f32 %v7556, %v7658
        %v7660 = vpop.f32.mrf.mxu0
        %v7661 = vpop.f32.mrf.mxu0
        %v7662 = vadd.f32 %v7556, %v7661
        %v7663 = vpop.f32.mrf.mxu0
        %7664 = vdwg.mxu0
        %v7665 = vmax.f32 %v7635, 0.0
        %v7666 = vmax.f32 %v7638, 0.0
        %v7667 = vmax.f32 %v7643, 0.0
        %v7668 = vmax.f32 %v7646, 0.0
        %v7669 = vmax.f32 %v7651, 0.0
        %v7670 = vmax.f32 %v7654, 0.0
        %v7671 = vmax.f32 %v7659, 0.0
        %v7672 = vmax.f32 %v7662, 0.0
        %7673 = vst.msk [vmem:[%s2955 + $0x8] sm:$0xff] %vm7018, %v7529
        %7674 = vst.msk [vmem:[%s2955 + $0x38] sm:$0xff] %vm7018, %v7530
        %7675 = vst.msk [vmem:[%s2955 + $0x68] sm:$0xff] %vm7018, %v7531
        %7676 = vst.msk [vmem:[%s2955 + $0x98] sm:$0xff] %vm7018, %v7532
        %7677 = vst.msk [vmem:[%s2955 + $0xc8] sm:$0xff] %vm7018, %v7533
        %7678 = vst.msk [vmem:[%s2955 + $0xf8] sm:$0xff] %vm7018, %v7534
        %7679 = vst.msk [vmem:[%s2955 + $0x128] sm:$0xff] %vm7018, %v7535
        %7680 = vst.msk [vmem:[%s2955 + $0x158] sm:$0xff] %vm7018, %v7536
        %7681 = vst [vmem:[#allocation3 + $0x7] sm:$0xff] 0.0
        %7682 = vst [vmem:[#allocation3 + $0xf] sm:$0x3] 0.0
        %7683 = vst [vmem:[%s2955 + $0x7] sm:$0x1] 0.0
        %7684 = vst [vmem:[%s2955 + $0x37] sm:$0x1] 0.0
        %7685 = vst [vmem:[%s2955 + $0x67] sm:$0x1] 0.0
        %7686 = vst [vmem:[%s2955 + $0x97] sm:$0x1] 0.0
        %7687 = vst [vmem:[%s2955 + $0xc7] sm:$0x1] 0.0
        %7688 = vst [vmem:[%s2955 + $0xf7] sm:$0x1] 0.0
        %7689 = vst [vmem:[%s2955 + $0x127] sm:$0x1] 0.0
        %7690 = vst [vmem:[%s2955 + $0x157] sm:$0x1] 0.0
        %v7691 = vld [vmem:[%s3121] ss:$2 sm:$0xf]
        %v7692 = vld [vmem:[%s3125] ss:$2 sm:$0xf]
        %v7693 = vld [vmem:[%s3129] ss:$2 sm:$0xf]
        %v7694 = vld [vmem:[%s3133] ss:$2 sm:$0xf]
        %v7695 = vadd.f32 %v7691, 0.0
        %v7696 = vadd.f32 %v7692, 0.0
        %v7697 = vadd.f32 %v7693, 0.0
        %v7698 = vadd.f32 %v7694, 0.0
        %v7699 = vld [vmem:[%s3217] ss:$2 sm:$0xf]
        %v7700 = vld [vmem:[%s3221] ss:$2 sm:$0xf]
        %v7701 = vld [vmem:[%s3225] ss:$2 sm:$0xf]
        %v7702 = vld [vmem:[%s3229] ss:$2 sm:$0xf]
        %v7703 = vadd.f32 %v7695, %v7699
        %v7704 = vadd.f32 %v7696, %v7700
        %v7705 = vadd.f32 %v7697, %v7701
        %v7706 = vadd.f32 %v7698, %v7702
        %v7707 = vld [vmem:[%s3313] ss:$2 sm:$0xf]
        %v7708 = vld [vmem:[%s3317] ss:$2 sm:$0xf]
        %v7709 = vld [vmem:[%s3321] ss:$2 sm:$0xf]
        %v7710 = vld [vmem:[%s3325] ss:$2 sm:$0xf]
        %v7711 = vadd.f32 %v7703, %v7707
        %v7712 = vadd.f32 %v7704, %v7708
        %v7713 = vadd.f32 %v7705, %v7709
        %v7714 = vadd.f32 %v7706, %v7710
        %v7715 = vld [vmem:[%s3409] ss:$2 sm:$0xf]
        %v7716 = vld [vmem:[%s3413] ss:$2 sm:$0xf]
        %v7717 = vld [vmem:[%s3417] ss:$2 sm:$0xf]
        %v7718 = vld [vmem:[%s3421] ss:$2 sm:$0xf]
        %v7719 = vadd.f32 %v7711, %v7715
        %v7720 = vadd.f32 %v7712, %v7716
        %v7721 = vadd.f32 %v7713, %v7717
        %v7722 = vadd.f32 %v7714, %v7718
        %v7723 = vld [vmem:[%s3505] ss:$2 sm:$0xf]
        %v7724 = vld [vmem:[%s3509] ss:$2 sm:$0xf]
        %v7725 = vld [vmem:[%s3513] ss:$2 sm:$0xf]
        %v7726 = vld [vmem:[%s3517] ss:$2 sm:$0xf]
        %v7727 = vadd.f32 %v7719, %v7723
        %v7728 = vadd.f32 %v7720, %v7724
        %v7729 = vadd.f32 %v7721, %v7725
        %v7730 = vadd.f32 %v7722, %v7726
        %v7731 = vld [vmem:[%s3601] ss:$2 sm:$0xf]
        %v7732 = vld [vmem:[%s3605] ss:$2 sm:$0xf]
        %v7733 = vld [vmem:[%s3609] ss:$2 sm:$0xf]
        %v7734 = vld [vmem:[%s3613] ss:$2 sm:$0xf]
        %v7735 = vadd.f32 %v7727, %v7731
        %v7736 = vadd.f32 %v7728, %v7732
        %v7737 = vadd.f32 %v7729, %v7733
        %v7738 = vadd.f32 %v7730, %v7734
        %v7739 = vld [vmem:[%s3698] ss:$2 sm:$0xf]
        %v7740 = vld [vmem:[%s3702] ss:$2 sm:$0xf]
        %v7741 = vld [vmem:[%s3706] ss:$2 sm:$0xf]
        %v7742 = vld [vmem:[%s3710] ss:$2 sm:$0xf]
        %v7743 = vadd.f32 %v7735, %v7739
        %v7744 = vadd.f32 %v7736, %v7740
        %v7745 = vadd.f32 %v7737, %v7741
        %v7746 = vadd.f32 %v7738, %v7742
        %v7747 = vld [vmem:[%s3794] ss:$2 sm:$0xf]
        %v7748 = vld [vmem:[%s3798] ss:$2 sm:$0xf]
        %v7749 = vld [vmem:[%s3802] ss:$2 sm:$0xf]
        %v7750 = vld [vmem:[%s3806] ss:$2 sm:$0xf]
        %v7751 = vadd.f32 %v7743, %v7747
        %v7752 = vadd.f32 %v7744, %v7748
        %v7753 = vadd.f32 %v7745, %v7749
        %v7754 = vadd.f32 %v7746, %v7750
        %v7755 = vld [vmem:[%s3890] ss:$2 sm:$0xf]
        %v7756 = vld [vmem:[%s3894] ss:$2 sm:$0xf]
        %v7757 = vld [vmem:[%s3898] ss:$2 sm:$0xf]
        %v7758 = vld [vmem:[%s3902] ss:$2 sm:$0xf]
        %v7759 = vadd.f32 %v7751, %v7755
        %v7760 = vadd.f32 %v7752, %v7756
        %v7761 = vadd.f32 %v7753, %v7757
        %v7762 = vadd.f32 %v7754, %v7758
        %v7763 = vmul.f32 %v7759, 0.11111111
        %v7764 = vmul.f32 %v7760, 0.11111111
        %v7765 = vmul.f32 %v7761, 0.11111111
        %v7766 = vmul.f32 %v7762, 0.11111111
        %v7767 = vmax.f32 %v7763, 0.0
        %v7768 = vmax.f32 %v7764, 0.0
        %v7769 = vmax.f32 %v7765, 0.0
        %v7770 = vmax.f32 %v7766, 0.0
        %v7771 = vld [vmem:[%s47] sm:$0xf]
        %v7772 = vld [vmem:[%s47 + $0x4] sm:$0xf]
        %v7773 = vld [vmem:[%s47 + $0x8] sm:$0xf]
        %v7774 = vld [vmem:[%s47 + $0xc] sm:$0xf]
        %v7775 = vld [vmem:[%s47 + $0x10] sm:$0xf]
        %v7776 = vld [vmem:[%s47 + $0x14] sm:$0xf]
        %v7777 = vld [vmem:[%s47 + $0x18] sm:$0xf]
        %v7778 = vld [vmem:[%s47 + $0x1c] sm:$0xf]
        %v7779 = vld [vmem:[%s47 + $0x20] sm:$0xf]
        %v7780 = vld [vmem:[%s49] sm:$0x1]
        %7781 = vst [vmem:[%s4069 + $0x8] sm:$0xff] %v7665
        %7782 = vst [vmem:[%s4069 + $0x38] sm:$0xff] %v7666
        %7783 = vst [vmem:[%s4069 + $0x68] sm:$0xff] %v7667
        %7784 = vst [vmem:[%s4069 + $0x98] sm:$0xff] %v7668
        %7785 = vst [vmem:[%s4069 + $0xc8] sm:$0xff] %v7669
        %7786 = vst [vmem:[%s4069 + $0xf8] sm:$0xff] %v7670
        %7787 = vst [vmem:[%s4069 + $0x128] sm:$0xff] %v7671
        %7788 = vst [vmem:[%s4069 + $0x158] sm:$0xff] %v7672
        %7789 = vst [vmem:[#allocation2 + $0x7] sm:$0xff] 0.0
        %7790 = vst [vmem:[#allocation2 + $0xf] sm:$0x3] 0.0
        %7791 = vst [vmem:[%s4069 + $0x7] sm:$0x1] 0.0
        %7792 = vst [vmem:[%s4069 + $0x37] sm:$0x1] 0.0
        %7793 = vst [vmem:[%s4069 + $0x67] sm:$0x1] 0.0
        %7794 = vst [vmem:[%s4069 + $0x97] sm:$0x1] 0.0
        %7795 = vst [vmem:[%s4069 + $0xc7] sm:$0x1] 0.0
        %7796 = vst [vmem:[%s4069 + $0xf7] sm:$0x1] 0.0
        %7797 = vst [vmem:[%s4069 + $0x127] sm:$0x1] 0.0
        %7798 = vst [vmem:[%s4069 + $0x157] sm:$0x1] 0.0
        %v7799 = vld [vmem:[%s4235] ss:$2 sm:$0xf]
        %v7800 = vld [vmem:[%s4239] ss:$2 sm:$0xf]
        %v7801 = vld [vmem:[%s4243] ss:$2 sm:$0xf]
        %v7802 = vld [vmem:[%s4247] ss:$2 sm:$0xf]
        %v7803 = vmul.f32 %v7799, %v7771
        %v7804 = vmul.f32 %v7800, %v7771
        %v7805 = vmul.f32 %v7801, %v7771
        %v7806 = vmul.f32 %v7802, %v7771
        %v7807 = vadd.f32 %v7803, 0.0
        %v7808 = vadd.f32 %v7804, 0.0
        %v7809 = vadd.f32 %v7805, 0.0
        %v7810 = vadd.f32 %v7806, 0.0
        %v7811 = vld [vmem:[%s4363] ss:$2 sm:$0xf]
        %v7812 = vld [vmem:[%s4367] ss:$2 sm:$0xf]
        %v7813 = vld [vmem:[%s4371] ss:$2 sm:$0xf]
        %v7814 = vld [vmem:[%s4375] ss:$2 sm:$0xf]
        %v7815 = vmul.f32 %v7811, %v7772
        %v7816 = vmul.f32 %v7812, %v7772
        %v7817 = vmul.f32 %v7813, %v7772
        %v7818 = vmul.f32 %v7814, %v7772
        %v7819 = vadd.f32 %v7807, %v7815
        %v7820 = vadd.f32 %v7808, %v7816
        %v7821 = vadd.f32 %v7809, %v7817
        %v7822 = vadd.f32 %v7810, %v7818
        %v7823 = vld [vmem:[%s4491] ss:$2 sm:$0xf]
        %v7824 = vld [vmem:[%s4495] ss:$2 sm:$0xf]
        %v7825 = vld [vmem:[%s4499] ss:$2 sm:$0xf]
        %v7826 = vld [vmem:[%s4503] ss:$2 sm:$0xf]
        %v7827 = vmul.f32 %v7823, %v7773
        %v7828 = vmul.f32 %v7824, %v7773
        %v7829 = vmul.f32 %v7825, %v7773
        %v7830 = vmul.f32 %v7826, %v7773
        %v7831 = vadd.f32 %v7819, %v7827
        %v7832 = vadd.f32 %v7820, %v7828
        %v7833 = vadd.f32 %v7821, %v7829
        %v7834 = vadd.f32 %v7822, %v7830
        %v7835 = vld [vmem:[%s4619] ss:$2 sm:$0xf]
        %v7836 = vld [vmem:[%s4623] ss:$2 sm:$0xf]
        %v7837 = vld [vmem:[%s4627] ss:$2 sm:$0xf]
        %v7838 = vld [vmem:[%s4631] ss:$2 sm:$0xf]
        %v7839 = vmul.f32 %v7835, %v7774
        %v7840 = vmul.f32 %v7836, %v7774
        %v7841 = vmul.f32 %v7837, %v7774
        %v7842 = vmul.f32 %v7838, %v7774
        %v7843 = vadd.f32 %v7831, %v7839
        %v7844 = vadd.f32 %v7832, %v7840
        %v7845 = vadd.f32 %v7833, %v7841
        %v7846 = vadd.f32 %v7834, %v7842
        %v7847 = vld [vmem:[%s4747] ss:$2 sm:$0xf]
        %v7848 = vld [vmem:[%s4751] ss:$2 sm:$0xf]
        %v7849 = vld [vmem:[%s4755] ss:$2 sm:$0xf]
        %v7850 = vld [vmem:[%s4759] ss:$2 sm:$0xf]
        %v7851 = vmul.f32 %v7847, %v7775
        %v7852 = vmul.f32 %v7848, %v7775
        %v7853 = vmul.f32 %v7849, %v7775
        %v7854 = vmul.f32 %v7850, %v7775
        %v7855 = vadd.f32 %v7843, %v7851
        %v7856 = vadd.f32 %v7844, %v7852
        %v7857 = vadd.f32 %v7845, %v7853
        %v7858 = vadd.f32 %v7846, %v7854
        %v7859 = vld [vmem:[%s4875] ss:$2 sm:$0xf]
        %v7860 = vld [vmem:[%s4879] ss:$2 sm:$0xf]
        %v7861 = vld [vmem:[%s4883] ss:$2 sm:$0xf]
        %v7862 = vld [vmem:[%s4887] ss:$2 sm:$0xf]
        %v7863 = vmul.f32 %v7859, %v7776
        %v7864 = vmul.f32 %v7860, %v7776
        %v7865 = vmul.f32 %v7861, %v7776
        %v7866 = vmul.f32 %v7862, %v7776
        %v7867 = vadd.f32 %v7855, %v7863
        %v7868 = vadd.f32 %v7856, %v7864
        %v7869 = vadd.f32 %v7857, %v7865
        %v7870 = vadd.f32 %v7858, %v7866
        %v7871 = vld [vmem:[%s5004] ss:$2 sm:$0xf]
        %v7872 = vld [vmem:[%s5008] ss:$2 sm:$0xf]
        %v7873 = vld [vmem:[%s5012] ss:$2 sm:$0xf]
        %v7874 = vld [vmem:[%s5016] ss:$2 sm:$0xf]
        %v7875 = vmul.f32 %v7871, %v7777
        %v7876 = vmul.f32 %v7872, %v7777
        %v7877 = vmul.f32 %v7873, %v7777
        %v7878 = vmul.f32 %v7874, %v7777
        %v7879 = vadd.f32 %v7867, %v7875
        %v7880 = vadd.f32 %v7868, %v7876
        %v7881 = vadd.f32 %v7869, %v7877
        %v7882 = vadd.f32 %v7870, %v7878
        %v7883 = vld [vmem:[%s5132] ss:$2 sm:$0xf]
        %v7884 = vld [vmem:[%s5136] ss:$2 sm:$0xf]
        %v7885 = vld [vmem:[%s5140] ss:$2 sm:$0xf]
        %v7886 = vld [vmem:[%s5144] ss:$2 sm:$0xf]
        %v7887 = vmul.f32 %v7883, %v7778
        %v7888 = vmul.f32 %v7884, %v7778
        %v7889 = vmul.f32 %v7885, %v7778
        %v7890 = vmul.f32 %v7886, %v7778
        %v7891 = vadd.f32 %v7879, %v7887
        %v7892 = vadd.f32 %v7880, %v7888
        %v7893 = vadd.f32 %v7881, %v7889
        %v7894 = vadd.f32 %v7882, %v7890
        %v7895 = vld [vmem:[%s5260] ss:$2 sm:$0xf]
        %v7896 = vld [vmem:[%s5264] ss:$2 sm:$0xf]
        %v7897 = vld [vmem:[%s5268] ss:$2 sm:$0xf]
        %v7898 = vld [vmem:[%s5272] ss:$2 sm:$0xf]
        %v7899 = vmul.f32 %v7895, %v7779
        %v7900 = vmul.f32 %v7896, %v7779
        %v7901 = vmul.f32 %v7897, %v7779
        %v7902 = vmul.f32 %v7898, %v7779
        %v7903 = vadd.f32 %v7891, %v7899
        %v7904 = vadd.f32 %v7892, %v7900
        %v7905 = vadd.f32 %v7893, %v7901
        %v7906 = vadd.f32 %v7894, %v7902
        %v7908 = vlaneseq
        %v7909 = vshrl.u32 %v7908, 7
        %v7910 = vsub.s32 0, %v7909
        %v7911 = vrot.slane %v7780, %v7910
        %v7913 = vadd.f32 %v7903, %v7911
        %v7914 = vadd.f32 %v7904, %v7911
        %v7915 = vadd.f32 %v7905, %v7911
        %v7916 = vadd.f32 %v7906, %v7911
        %v7917 = vmax.f32 %v7913, 0.0
        %v7918 = vmax.f32 %v7914, 0.0
        %v7919 = vmax.f32 %v7915, 0.0
        %v7920 = vmax.f32 %v7916, 0.0
        %7921 = vst [vmem:[#allocation2] sm:$0xf] %v7917
        %7922 = vst [vmem:[#allocation2 + $0x4] sm:$0xf] %v7918
        %7923 = vst [vmem:[#allocation2 + $0x8] sm:$0xf] %v7919
        %7924 = vst [vmem:[#allocation2 + $0xc] sm:$0xf] %v7920
        %v7925 = vld [vmem:[#allocation2] sm:$0xff]
        %v7926 = vld [vmem:[#allocation2 + $0x8] sm:$0xff]
        %v7927 = vpack.c.bf16 %v7926, %v7925
        %v7928 = vld [vmem:[%s51] sm:$0xf]
        %v7929 = vld [vmem:[%s51 + $0x4] sm:$0xf]
        %v7930 = vld [vmem:[%s51 + $0x8] sm:$0xf]
        %v7931 = vld [vmem:[%s51 + $0xc] sm:$0xf]
        %v7932 = vld [vmem:[%s51 + $0x10] sm:$0xf]
        %v7933 = vld [vmem:[%s51 + $0x14] sm:$0xf]
        %v7934 = vld [vmem:[%s51 + $0x18] sm:$0xf]
        %v7935 = vld [vmem:[%s51 + $0x1c] sm:$0xf]
        %v7936 = vld [vmem:[%s51 + $0x20] sm:$0xf]
        %v7937 = vld [vmem:[%s51 + $0x24] sm:$0xf]
        %v7938 = vld [vmem:[%s51 + $0x28] sm:$0xf]
        %v7939 = vld [vmem:[%s51 + $0x2c] sm:$0xf]
        %v7940 = vld [vmem:[%s51 + $0x30] sm:$0xf]
        %v7941 = vld [vmem:[%s51 + $0x34] sm:$0xf]
        %v7942 = vld [vmem:[%s51 + $0x38] sm:$0xf]
        %v7943 = vld [vmem:[%s51 + $0x3c] sm:$0xf]
        %v7944 = vld [vmem:[%s53] sm:$0x1]
        %v7946 = vlaneseq
        %v7947 = vshrl.u32 %v7946, 7
        %v7948 = vsub.s32 0, %v7947
        %v7949 = vrot.slane %v7944, %v7948
        %v7967 = vunpack.c.l.b16 %v7928
        %v7968 = vunpack.c.l.b16 %v7929
        %v7969 = vunpack.c.l.b16 %v7930
        %v7970 = vunpack.c.l.b16 %v7931
        %v7971 = vunpack.c.l.b16 %v7932
        %v7972 = vunpack.c.l.b16 %v7933
        %v7973 = vunpack.c.l.b16 %v7934
        %v7974 = vunpack.c.l.b16 %v7935
        %v7975 = vunpack.c.l.b16 %v7936
        %v7976 = vunpack.c.l.b16 %v7937
        %v7977 = vunpack.c.l.b16 %v7938
        %v7978 = vunpack.c.l.b16 %v7939
        %v7979 = vunpack.c.l.b16 %v7940
        %v7980 = vunpack.c.l.b16 %v7941
        %v7981 = vunpack.c.l.b16 %v7942
        %v7982 = vunpack.c.l.b16 %v7943
        %v7983 = vpack.c.b16 %v7968, %v7967
        %v7984 = vpack.c.b16 %v7970, %v7969
        %v7985 = vpack.c.b16 %v7972, %v7971
        %v7986 = vpack.c.b16 %v7974, %v7973
        %v7987 = vpack.c.b16 %v7976, %v7975
        %v7988 = vpack.c.b16 %v7978, %v7977
        %v7989 = vpack.c.b16 %v7980, %v7979
        %v7990 = vpack.c.b16 %v7982, %v7981
        %7999 = vmatprep.subr.bf16.mxu0 0
        %8000 = vmatpush1.bf16.msra.mxu0 %v7990
        %8001 = vmatprep.subr.bf16.mxu0 0
        %8002 = vmatpush1.bf16.msra.mxu0 %v7989
        %8003 = vmatprep.subr.bf16.mxu0 0
        %8004 = vmatpush1.bf16.msra.mxu0 %v7988
        %8005 = vmatprep.subr.bf16.mxu0 0
        %8006 = vmatpush1.bf16.msra.mxu0 %v7987
        %8007 = vmatprep.subr.bf16.mxu0 0
        %8008 = vmatpush1.bf16.msra.mxu0 %v7986
        %8009 = vmatprep.subr.bf16.mxu0 0
        %8010 = vmatpush1.bf16.msra.mxu0 %v7985
        %8011 = vmatprep.subr.bf16.mxu0 0
        %8012 = vmatpush1.bf16.msra.mxu0 %v7984
        %8013 = vmatprep.subr.bf16.mxu0 0
        %8014 = vmatpush1.bf16.msra.mxu0 %v7983
        %8015 = vmatprep.subr.bf16.mxu0 0
        %8016 = vmatpush2.bf16.msra.mxu0 0
        %8017 = vmatprep.subr.bf16.mxu0 0
        %8018 = vmatpush2.bf16.msra.mxu0 0
        %8019 = vmatprep.subr.bf16.mxu0 0
        %8020 = vmatpush2.bf16.msra.mxu0 0
        %8021 = vmatprep.subr.bf16.mxu0 0
        %8022 = vmatpush2.bf16.msra.mxu0 0
        %8023 = vmatprep.subr.bf16.mxu0 0
        %8024 = vmatpush2.bf16.msra.mxu0 0
        %8025 = vmatprep.subr.bf16.mxu0 0
        %8026 = vmatpush2.bf16.msra.mxu0 0
        %8027 = vmatprep.subr.bf16.mxu0 0
        %8028 = vmatpush2.bf16.msra.mxu0 0
        %8029 = vmatprep.subr.bf16.mxu0 0
        %8030 = vmatpush2.bf16.msra.mxu0 0
        %8031 = vmatprep.mubr.bf16.mxu0 0
        %8032 = vmatmul.mubr.bf16.gmra.mxu0 %v7927
        %v8033 = vpop.f32.mrf.mxu0
        %v8034 = vadd.f32 %v7949, %v8033
        %v8035 = vpop.f32.mrf.mxu0
        %v8036 = vpop.f32.mrf.mxu0
        %v8037 = vadd.f32 %v7949, %v8036
        %v8038 = vpop.f32.mrf.mxu0
        %8039 = vdwg.mxu0
        %v8040 = vmax.f32 %v8034, 0.0
        %v8041 = vmax.f32 %v8037, 0.0
        %v8042 = vld [vmem:[%s59] sm:$0x1]
        %v8043 = vsel %vm7018, %v8040, 0.0
        %v8044 = vsel %vm7018, %v8041, 0.0
        %v8045 = vadd.f32 %v8043, %v8044
        %v8046 = vrot.slane %v8045, 4
        %v8047 = vadd.f32 %v8045, %v8046
        %v8048 = vrot.slane %v8047, 2
        %v8049 = vadd.f32 %v8047, %v8048
        %v8050 = vrot.slane %v8049, 1
        %v8051 = vadd.f32 %v8049, %v8050
        %v8052 = vmul.f32 %v8051, 0.0625
        %v8053 = vld [vmem:[%s55] sm:$0xff]
        %v8054 = vld [vmem:[%s55 + $0x8] sm:$0xff]
        %v8055 = vld [vmem:[%s55 + $0x10] sm:$0xff]
        %v8056 = vld [vmem:[%s55 + $0x18] sm:$0xff]
        %v8057 = vld [vmem:[%s55 + $0x20] sm:$0xff]
        %v8058 = vld [vmem:[%s55 + $0x28] sm:$0xff]
        %v8059 = vld [vmem:[%s55 + $0x30] sm:$0xff]
        %v8060 = vld [vmem:[%s55 + $0x38] sm:$0xff]
        %v8061 = vld [vmem:[%s55 + $0x40] sm:$0xff]
        %v8062 = vld [vmem:[%s55 + $0x48] sm:$0xff]
        %v8064 = vsel %vm7018, %v8052, 0
        %8066 = vmatprep.subr.mxu0 0.0
        %8067 = vmatpush1.msra.mxu0 0.0
        %8068 = vmatprep.subr.mxu0 0.0
        %8069 = vmatpush1.msra.mxu0 0.0
        %8070 = vmatprep.subr.mxu0 0.0
        %8071 = vmatpush1.msra.mxu0 0.0
        %8072 = vmatprep.subr.mxu0 0.0
        %8073 = vmatpush1.msra.mxu0 0.0
        %8074 = vmatprep.subr.mxu0 0.0
        %8075 = vmatpush1.msra.mxu0 0.0
        %8076 = vmatprep.subr.mxu0 0.0
        %8077 = vmatpush1.msra.mxu0 0.0
        %8078 = vmatprep.subr.mxu0 0.0
        %8079 = vmatpush1.msra.mxu0 %v8062
        %8080 = vmatprep.subr.mxu0 0.0
        %8081 = vmatpush1.msra.mxu0 %v8061
        %8082 = vmatprep.subr.mxu0 0.0
        %8083 = vmatpush1.msra.mxu0 %v8060
        %8084 = vmatprep.subr.mxu0 0.0
        %8085 = vmatpush1.msra.mxu0 %v8059
        %8086 = vmatprep.subr.mxu0 0.0
        %8087 = vmatpush1.msra.mxu0 %v8058
        %8088 = vmatprep.subr.mxu0 0.0
        %8089 = vmatpush1.msra.mxu0 %v8057
        %8090 = vmatprep.subr.mxu0 0.0
        %8091 = vmatpush1.msra.mxu0 %v8056
        %8092 = vmatprep.subr.mxu0 0.0
        %8093 = vmatpush1.msra.mxu0 %v8055
        %8094 = vmatprep.subr.mxu0 0.0
        %8095 = vmatpush1.msra.mxu0 %v8054
        %8096 = vmatprep.subr.mxu0 0.0
        %8097 = vmatpush1.msra.mxu0 %v8053
        %8098 = vmatprep.subr.mxu0 0.0
        %8099 = vmatpush2.msra.mxu0 0.0
        %8100 = vmatprep.subr.mxu0 0.0
        %8101 = vmatpush2.msra.mxu0 0.0
        %8102 = vmatprep.subr.mxu0 0.0
        %8103 = vmatpush2.msra.mxu0 0.0
        %8104 = vmatprep.subr.mxu0 0.0
        %8105 = vmatpush2.msra.mxu0 0.0
        %8106 = vmatprep.subr.mxu0 0.0
        %8107 = vmatpush2.msra.mxu0 0.0
        %8108 = vmatprep.subr.mxu0 0.0
        %8109 = vmatpush2.msra.mxu0 0.0
        %8110 = vmatprep.subr.mxu0 0.0
        %8111 = vmatpush2.msra.mxu0 0.0
        %8112 = vmatprep.subr.mxu0 0.0
        %8113 = vmatpush2.msra.mxu0 0.0
        %8114 = vmatprep.subr.mxu0 0.0
        %8115 = vmatpush2.msra.mxu0 0.0
        %8116 = vmatprep.subr.mxu0 0.0
        %8117 = vmatpush2.msra.mxu0 0.0
        %8118 = vmatprep.subr.mxu0 0.0
        %8119 = vmatpush2.msra.mxu0 0.0
        %8120 = vmatprep.subr.mxu0 0.0
        %8121 = vmatpush2.msra.mxu0 0.0
        %8122 = vmatprep.subr.mxu0 0.0
        %8123 = vmatpush2.msra.mxu0 0.0
        %8124 = vmatprep.subr.mxu0 0.0
        %8125 = vmatpush2.msra.mxu0 0.0
        %8126 = vmatprep.subr.mxu0 0.0
        %8127 = vmatpush2.msra.mxu0 0.0
        %8128 = vmatprep.subr.mxu0 0.0
        %8129 = vmatpush2.msra.mxu0 0.0
        %8130 = vmatprep.mubr.f32.mxu0 0.0
        %8131 = vmatmul.mubr.f32.gmra.mxu0 %v8064
        %v8132 = vpop.f32.mrf.mxu0
        %v8133 = vadd.f32 0.0, %v8132
        %v8134 = vpop.f32.mrf.mxu0
        %8135 = vdwg.mxu0
        %v8136 = vadd.f32 %v8042, %v8133
        %v8137 = vadd.f32 %v7767, %v7768
        %v8138 = vadd.f32 %v8137, %v7769
        %v8139 = vadd.f32 %v8138, %v7770
        %vm8140 = vcmask 650240
        %v8141 = vsel %vm8140, %v8139, 0.0
        %v8142 = vrot.slane %v8141, 4
        %v8143 = vadd.f32 %v8141, %v8142
        %v8144 = vrot.slane %v8143, 2
        %v8145 = vadd.f32 %v8143, %v8144
        %v8146 = vrot.slane %v8145, 1
        %v8147 = vadd.f32 %v8145, %v8146
        %v8148 = vmul.f32 %v8147, 0.0625
        %v8149 = vld [vmem:[%s57] sm:$0xff]
        %v8150 = vld [vmem:[%s57 + $0x8] sm:$0xff]
        %v8151 = vld [vmem:[%s57 + $0x10] sm:$0xff]
        %v8152 = vld [vmem:[%s57 + $0x18] sm:$0xff]
        %v8153 = vld [vmem:[%s57 + $0x20] sm:$0xff]
        %v8154 = vld [vmem:[%s57 + $0x28] sm:$0xff]
        %v8155 = vld [vmem:[%s57 + $0x30] sm:$0xff]
        %v8156 = vld [vmem:[%s57 + $0x38] sm:$0xff]
        %v8157 = vld [vmem:[%s57 + $0x40] sm:$0xff]
        %v8158 = vld [vmem:[%s57 + $0x48] sm:$0xff]
        %v8160 = vsel %vm7018, %v8148, 0
        %8162 = vmatprep.subr.mxu0 0.0
        %8163 = vmatpush1.msra.mxu0 0.0
        %8164 = vmatprep.subr.mxu0 0.0
        %8165 = vmatpush1.msra.mxu0 0.0
        %8166 = vmatprep.subr.mxu0 0.0
        %8167 = vmatpush1.msra.mxu0 0.0
        %8168 = vmatprep.subr.mxu0 0.0
        %8169 = vmatpush1.msra.mxu0 0.0
        %8170 = vmatprep.subr.mxu0 0.0
        %8171 = vmatpush1.msra.mxu0 0.0
        %8172 = vmatprep.subr.mxu0 0.0
        %8173 = vmatpush1.msra.mxu0 0.0
        %8174 = vmatprep.subr.mxu0 0.0
        %8175 = vmatpush1.msra.mxu0 %v8158
        %8176 = vmatprep.subr.mxu0 0.0
        %8177 = vmatpush1.msra.mxu0 %v8157
        %8178 = vmatprep.subr.mxu0 0.0
        %8179 = vmatpush1.msra.mxu0 %v8156
        %8180 = vmatprep.subr.mxu0 0.0
        %8181 = vmatpush1.msra.mxu0 %v8155
        %8182 = vmatprep.subr.mxu0 0.0
        %8183 = vmatpush1.msra.mxu0 %v8154
        %8184 = vmatprep.subr.mxu0 0.0
        %8185 = vmatpush1.msra.mxu0 %v8153
        %8186 = vmatprep.subr.mxu0 0.0
        %8187 = vmatpush1.msra.mxu0 %v8152
        %8188 = vmatprep.subr.mxu0 0.0
        %8189 = vmatpush1.msra.mxu0 %v8151
        %8190 = vmatprep.subr.mxu0 0.0
        %8191 = vmatpush1.msra.mxu0 %v8150
        %8192 = vmatprep.subr.mxu0 0.0
        %8193 = vmatpush1.msra.mxu0 %v8149
        %8194 = vmatprep.subr.mxu0 0.0
        %8195 = vmatpush2.msra.mxu0 0.0
        %8196 = vmatprep.subr.mxu0 0.0
        %8197 = vmatpush2.msra.mxu0 0.0
        %8198 = vmatprep.subr.mxu0 0.0
        %8199 = vmatpush2.msra.mxu0 0.0
        %8200 = vmatprep.subr.mxu0 0.0
        %8201 = vmatpush2.msra.mxu0 0.0
        %8202 = vmatprep.subr.mxu0 0.0
        %8203 = vmatpush2.msra.mxu0 0.0
        %8204 = vmatprep.subr.mxu0 0.0
        %8205 = vmatpush2.msra.mxu0 0.0
        %8206 = vmatprep.subr.mxu0 0.0
        %8207 = vmatpush2.msra.mxu0 0.0
        %8208 = vmatprep.subr.mxu0 0.0
        %8209 = vmatpush2.msra.mxu0 0.0
        %8210 = vmatprep.subr.mxu0 0.0
        %8211 = vmatpush2.msra.mxu0 0.0
        %8212 = vmatprep.subr.mxu0 0.0
        %8213 = vmatpush2.msra.mxu0 0.0
        %8214 = vmatprep.subr.mxu0 0.0
        %8215 = vmatpush2.msra.mxu0 0.0
        %8216 = vmatprep.subr.mxu0 0.0
        %8217 = vmatpush2.msra.mxu0 0.0
        %8218 = vmatprep.subr.mxu0 0.0
        %8219 = vmatpush2.msra.mxu0 0.0
        %8220 = vmatprep.subr.mxu0 0.0
        %8221 = vmatpush2.msra.mxu0 0.0
        %8222 = vmatprep.subr.mxu0 0.0
        %8223 = vmatpush2.msra.mxu0 0.0
        %8224 = vmatprep.subr.mxu0 0.0
        %8225 = vmatpush2.msra.mxu0 0.0
        %8226 = vmatprep.mubr.f32.mxu0 0.0
        %8227 = vmatmul.mubr.f32.gmra.mxu0 %v8160
        %v8228 = vpop.f32.mrf.mxu0
        %v8229 = vadd.f32 0.0, %v8228
        %v8230 = vpop.f32.mrf.mxu0
        %8231 = vdwg.mxu0
        %v8232 = vadd.f32 %v8136, %v8229
        %vm8233 = vcmask 73728
        %8234 = vst.msk [vmem:[%s922] sm:$0x1] %vm8233, %v8232
        %s8235 = sand.u32 %s718, 1
        %s8236 = scalar_lea.sflag [#allocation7], %s8235
        %s8237 = sand.u32 %s718, 1
        %s8238 = scalar_lea.vmem [#allocation6], %s8237
        // Predicated region
        $region141: #{shufflenet_forward.1} parent=139 // pred_check
          %p8239 = pneg %p728
        $region142: #{shufflenet_forward.1} parent=139 // pred_check_branch
          %8241 = sbr.rel (%p8239) target = $region144
        $region143: #{shufflenet_forward.1} parent=139 // pred_region
          %s8243 = ssub.s32 16, 16
          %8244 = vsyncadd %s8236, %s8243
          %s8245 = smul.addr %s75, 16
          %s8246 = scalar_lea.hbm %s61, %s8245
          %s8248 = sshll.u32 %s8238, 4
          %s8249 = int_to_ptr.vmem [resolvable:$true] %s8248
          %8251 = dma.vmem_to_hbm [thread:$0]  %s8249, 16, %s8246, %s8236
        $region144: #{shufflenet_forward.1} parent=139 // pred_fallthru
          _
      $region140: #{shufflenet_forward.1} parent=5 // pred_fallthru
        _
      %p8252 = scmp.le.s32.totalorder 2, %s70
      // Predicated region
      $region145: #{shufflenet_forward.1} parent=5 // pred_check
        %p8253 = pneg %p8252
      $region146: #{shufflenet_forward.1} parent=5 // pred_check_branch
        %8255 = sbr.rel (%p8253) target = $region148
      $region147: #{shufflenet_forward.1} parent=5 // pred_region
        %s8256 = ssub.s32 %s70, 2
        // Predicated region
        $region149: #{shufflenet_forward.1} parent=147 // pred_check
          %p8257 = pneg %p734
        $region150: #{shufflenet_forward.1} parent=147 // pred_check_branch
          %8259 = sbr.rel (%p8257) target = $region152
        $region151: #{shufflenet_forward.1} parent=147 // pred_region
          %s8260 = sand.u32 %s719, 1
          %s8261 = scalar_lea.sflag [#allocation7], %s8260
          %s8262 = sand.u32 %s719, 1
          %s8263 = scalar_lea.vmem [#allocation6], %s8262
          %8264 = dma.done %s8261, 16
        $region152: #{shufflenet_forward.1} parent=147 // pred_fallthru
          _
      $region148: #{shufflenet_forward.1} parent=5 // pred_fallthru
        _
    $region6: #{shufflenet_forward.1} parent=1 // loop_footer
      %s74 = sadd.s32 1, %s70
    $region7: #{shufflenet_forward.1} parent=1 // loop_footer_branch
      %69 = sbr.rel target = $region3
    $region8: #{shufflenet_forward.1} parent=1 // loop_exit
      _
    %8265 = vsyncpa [#allocation7], 1
    %s8266 = scalar_lea.sflag [#allocation7], 1
    %8267 = vsyncpa %s8266, 1

</llo_original>
